<compile_context>
chip_gen: v6e
topology: v6e:2x2x1
jax: 0.10.0
libtpu: 0.0.40
codegen_flags: <defaults>
</compile_context>

<pallas_src>
import math

import jax
import jax.numpy as jnp
import numpy as np
from jax import lax
from jax.experimental import pallas as pl
from jax.experimental.pallas import tpu as pltpu


# ------------- fused conv2d 3x3 (VALID) + bias + ReLU + maxpool 2x2 (stride 2) -------------
def _conv3x3_relu_pool_kernel(x_ref, w_ref, b_ref, o_ref):
    # x_ref: (H, W, Cin)   w_ref: (3, 3, Cin, Cout)   b_ref: (1, Cout)
    # o_ref: (Hp, Wp, Cout) with Hp = (H-2)//2, Wp = (W-2)//2
    Hp, Wp, Cout = o_ref.shape
    Wout = 2 * Wp

    # Hoist loop invariants: the 9 weight taps, the bias, and the two 0/1 selection
    # matrices that implement the stride-2 W-pooling as small exact matmuls.
    ws = [[w_ref[dy, dx] for dx in range(3)] for dy in range(3)]   # each (Cin, Cout)
    bias = b_ref[...]                                              # (1, Cout)
    jj = lax.broadcasted_iota(jnp.int32, (Wp, Wout), 0)
    ii = lax.broadcasted_iota(jnp.int32, (Wp, Wout), 1)
    sel_even = (ii == 2 * jj).astype(jnp.float32)                  # (Wp, Wout)
    sel_odd = (ii == 2 * jj + 1).astype(jnp.float32)               # (Wp, Wout)

    def body(p, carry):
        r0 = pl.multiple_of(2 * p, 2)          # first of the two conv rows pooled here
        acc0 = jnp.zeros((Wout, Cout), jnp.float32)   # conv row r0
        acc1 = jnp.zeros((Wout, Cout), jnp.float32)   # conv row r0 + 1
        # Conv rows r0 and r0+1 share input rows r0+1..r0+2: load each (row, dx) patch once.
        for t in range(4):
            for dx in range(3):
                patch = x_ref[pl.ds(r0 + t, 1), pl.ds(dx, Wout), :][0]   # (Wout, Cin)
                if t <= 2:
                    acc0 = acc0 + jnp.dot(patch, ws[t][dx],
                                          preferred_element_type=jnp.float32)
                if t >= 1:
                    acc1 = acc1 + jnp.dot(patch, ws[t - 1][dx],
                                          preferred_element_type=jnp.float32)
        # bias + ReLU, then 2x1 pool along H (free elementwise max of the two conv rows).
        m = jnp.maximum(jnp.maximum(acc0, acc1) + bias, 0.0)             # (Wout, Cout)
        # 1x2 pool along W via two 0/1-selection matmuls (exact; avoids strided value ops).
        pooled = jnp.maximum(
            jnp.dot(sel_even, m, preferred_element_type=jnp.float32),
            jnp.dot(sel_odd, m, preferred_element_type=jnp.float32))     # (Wp, Cout)
        o_ref[pl.ds(p, 1), :, :] = pooled[None]
        return carry

    lax.fori_loop(0, Hp, body, 0)


def conv3x3_relu_pool(x, w, b):
    # x: (N, H, W, Cin), w: (3, 3, Cin, Cout) [HWIO], b: (1, Cout)
    N, H, W, Cin = x.shape
    Cout = w.shape[-1]
    Hp, Wp = (H - 2) // 2, (W - 2) // 2
    return pl.pallas_call(
        _conv3x3_relu_pool_kernel,
        out_shape=jax.ShapeDtypeStruct((N, Hp, Wp, Cout), jnp.float32),
        grid=(N,),
        in_specs=[
            pl.BlockSpec((None, H, W, Cin), lambda n: (n, 0, 0, 0)),
            pl.BlockSpec((3, 3, Cin, Cout), lambda n: (0, 0, 0, 0)),
            pl.BlockSpec((1, Cout), lambda n: (0, 0)),
        ],
        out_specs=pl.BlockSpec((None, Hp, Wp, Cout), lambda n: (n, 0, 0, 0)),
        compiler_params=pltpu.CompilerParams(
            dimension_semantics=("parallel",),   # N=2 -> one image per TensorCore on v7x
            vmem_limit_bytes=32 * 1024 * 1024,   # v5e's 16 MiB scoped default is too small
        ),
    )(x, w, b)


# ------------------------- fc1 + ReLU + fc2 (K-tiled, fused epilogue) -----------------------
def _mlp_kernel(x_ref, w1_ref, b1_ref, w2_ref, b2_ref, o_ref, acc_ref):
    k = pl.program_id(0)

    @pl.when(k == 0)
    def _init():
        acc_ref[...] = jnp.zeros_like(acc_ref)

    acc_ref[...] += jnp.dot(x_ref[...], w1_ref[...],
                            preferred_element_type=jnp.float32)

    @pl.when(k == pl.num_programs(0) - 1)
    def _finish():
        h = jnp.maximum(acc_ref[...] + b1_ref[...], 0.0)
        o_ref[...] = jnp.dot(h, w2_ref[...],
                             preferred_element_type=jnp.float32) + b2_ref[...]


def _pick_k_tile(K, max_tile=2048):
    # Largest divisor of K that is a multiple of 128 (lane-aligned blocks); fall back to the
    # full K (a block equal to the full array dim is always legal).
    for cand in range(max_tile - max_tile % 128, 0, -128):
        if K % cand == 0:
            return cand
    return K


def mlp(xf, w1, b1, w2, b2):
    # xf: (N, K), w1: (K, H), b1: (1, H), w2: (H, O), b2: (1, O)
    N, K = xf.shape
    Hdim = w1.shape[1]
    O = w2.shape[1]
    tk = _pick_k_tile(K)                     # 12544 -> 1792 (7 pipelined K steps)
    return pl.pallas_call(
        _mlp_kernel,
        out_shape=jax.ShapeDtypeStruct((N, O), jnp.float32),
        grid=(K // tk,),
        in_specs=[
            pl.BlockSpec((N, tk), lambda k: (0, k)),
            pl.BlockSpec((tk, Hdim), lambda k: (k, 0)),
            pl.BlockSpec((1, Hdim), lambda k: (0, 0)),
            pl.BlockSpec((Hdim, O), lambda k: (0, 0)),
            pl.BlockSpec((1, O), lambda k: (0, 0)),
        ],
        out_specs=pl.BlockSpec((N, O), lambda k: (0, 0)),
        scratch_shapes=[pltpu.VMEM((N, Hdim), jnp.float32)],
        compiler_params=pltpu.CompilerParams(
            dimension_semantics=("arbitrary",),
            vmem_limit_bytes=32 * 1024 * 1024,
        ),
    )(xf, w1, b1, w2, b2)


# ----------------------------------------- model --------------------------------------------
def init_params(key):
    ks = jax.random.split(key, 10)

    def u(k, shape, fan_in):
        bound = 1.0 / math.sqrt(fan_in)
        return jax.random.uniform(k, shape, jnp.float32, -bound, bound)

    return {
        "c1w": u(ks[0], (3, 3, 3, 16), 3 * 3 * 3),
        "c1b": u(ks[1], (1, 16), 3 * 3 * 3),
        "c2w": u(ks[2], (3, 3, 16, 32), 16 * 3 * 3),
        "c2b": u(ks[3], (1, 32), 16 * 3 * 3),
        "c3w": u(ks[4], (3, 3, 32, 64), 32 * 3 * 3),
        "c3b": u(ks[5], (1, 64), 32 * 3 * 3),
        # fc1w rows are in PyTorch's CHW flatten order (c*14*14 + h*14 + w).
        "fc1w": u(ks[6], (64 * 14 * 14, 128), 64 * 14 * 14),
        "fc1b": u(ks[7], (1, 128), 64 * 14 * 14),
        "fc2w": u(ks[8], (128, 2), 128),
        "fc2b": u(ks[9], (1, 2), 128),
    }


def prepare_params(p):
    # One-time weight transform: permute fc1 rows from CHW-flatten order (PyTorch) to the
    # HWC-flatten order produced by the NHWC conv pipeline, so no runtime activation
    # transpose is needed before the MLP.
    q = dict(p)
    q["fc1w"] = (p["fc1w"].reshape(64, 14, 14, 128)
                          .transpose(1, 2, 0, 3)
                          .reshape(64 * 14 * 14, 128))
    return q


def cnn1_forward(x_nchw, p):
    # PyTorch-equivalent inference forward. Dropout(0.2) is identity in eval mode.
    # TODO(synk): training-mode dropout would need pltpu.prng_seed/prng_random_bits masking.
    x = jnp.transpose(x_nchw, (0, 2, 3, 1))                       # NCHW -> NHWC (edge only)
    x = conv3x3_relu_pool(x, p["c1w"], p["c1b"])                  # (N, 62, 62, 16)
    x = conv3x3_relu_pool(x, p["c2w"], p["c2b"])                  # (N, 30, 30, 32)
    x = conv3x3_relu_pool(x, p["c3w"], p["c3b"])                  # (N, 14, 14, 64)
    xf = x.reshape(x.shape[0], -1)                                # contiguous HWC flatten
    return mlp(xf, p["fc1w"], p["fc1b"], p["fc2w"], p["fc2b"])    # (N, 2)


# ------------------------------------ pure-JAX reference ------------------------------------
def reference_forward(x_nchw, p):
    # Uses the ORIGINAL (CHW-ordered) fc1w, so it also validates prepare_params.
    x = jnp.transpose(x_nchw, (0, 2, 3, 1))

    def conv(x, w, b):
        y = lax.conv_general_dilated(x, w, (1, 1), "VALID",
                                     dimension_numbers=("NHWC", "HWIO", "NHWC"))
        return jnp.maximum(y + b.reshape(1, 1, 1, -1), 0.0)

    def pool(x):
        return lax.reduce_window(x, -jnp.inf, lax.max,
                                 (1, 2, 2, 1), (1, 2, 2, 1), "VALID")

    x = pool(conv(x, p["c1w"], p["c1b"]))
    x = pool(conv(x, p["c2w"], p["c2b"]))
    x = pool(conv(x, p["c3w"], p["c3b"]))
    N = x.shape[0]
    xf = jnp.transpose(x, (0, 3, 1, 2)).reshape(N, -1)            # CHW flatten (PyTorch)
    h = jnp.maximum(xf @ p["fc1w"] + p["fc1b"], 0.0)
    return h @ p["fc2w"] + p["fc2b"]


if __name__ == "__main__":
    key = jax.random.PRNGKey(0)
    kx, kp = jax.random.split(key)
    params = init_params(kp)
    prepared = prepare_params(params)
    x = jax.random.normal(kx, (2, 3, 126, 126), jnp.float32)      # NCHW, like PyTorch

    fwd = jax.jit(cnn1_forward)
    out = fwd(x, prepared)
    jax.block_until_ready(out)
    assert out.shape == (2, 2), out.shape

    ref = reference_forward(x, params)
    np.testing.assert_allclose(np.asarray(out), np.asarray(ref), rtol=2e-3, atol=2e-3)
    print("KERNEL_OK")
</pallas_src>

<mosaic_0001>
module attributes {stable_mosaic.version = 11 : i64} {
  func.func @_conv3x3_relu_pool_kernel(%arg0: i32, %arg1: memref<1x62x62x16xf32, #tpu.memory_space<vmem>>, %arg2: memref<3x3x16x32xf32, #tpu.memory_space<vmem>>, %arg3: memref<1x32xf32, #tpu.memory_space<vmem>>, %arg4: memref<1x30x30x32xf32, #tpu.memory_space<vmem>>) attributes {dimension_semantics = [#tpu.dimension_semantics<parallel>], iteration_bounds = array<i64: 2>, scalar_prefetch = 0 : i64, scratch_operands = 0 : i64, tpu.core_type = #tpu.core_type<tc>, window_params = [{transform_indices = @transform_0, window_bounds = array<i64: 1, 62, 62, 16>}, {pipeline_mode = #tpu.pipeline_mode<synchronous>, transform_indices = @transform_1, window_bounds = array<i64: 3, 3, 16, 32>}, {pipeline_mode = #tpu.pipeline_mode<synchronous>, transform_indices = @transform_2, window_bounds = array<i64: 1, 32>}, {transform_indices = @transform_3, window_bounds = array<i64: 1, 30, 30, 32>}]} {
    %c0 = arith.constant 0 : index
    %c0_0 = arith.constant 0 : index
    %c0_1 = arith.constant 0 : index
    %c0_2 = arith.constant 0 : index
    %0 = vector.load %arg2[%c0, %c0_0, %c0_1, %c0_2] : memref<3x3x16x32xf32, #tpu.memory_space<vmem>>, vector<1x1x16x32xf32>
    %1 = vector.shape_cast %0 : vector<1x1x16x32xf32> to vector<16x32xf32>
    %c0_3 = arith.constant 0 : index
    %c1 = arith.constant 1 : index
    %c0_4 = arith.constant 0 : index
    %c0_5 = arith.constant 0 : index
    %2 = vector.load %arg2[%c0_3, %c1, %c0_4, %c0_5] : memref<3x3x16x32xf32, #tpu.memory_space<vmem>>, vector<1x1x16x32xf32>
    %3 = vector.shape_cast %2 : vector<1x1x16x32xf32> to vector<16x32xf32>
    %c0_6 = arith.constant 0 : index
    %c2 = arith.constant 2 : index
    %c0_7 = arith.constant 0 : index
    %c0_8 = arith.constant 0 : index
    %4 = vector.load %arg2[%c0_6, %c2, %c0_7, %c0_8] : memref<3x3x16x32xf32, #tpu.memory_space<vmem>>, vector<1x1x16x32xf32>
    %5 = vector.shape_cast %4 : vector<1x1x16x32xf32> to vector<16x32xf32>
    %c1_9 = arith.constant 1 : index
    %c0_10 = arith.constant 0 : index
    %c0_11 = arith.constant 0 : index
    %c0_12 = arith.constant 0 : index
    %6 = vector.load %arg2[%c1_9, %c0_10, %c0_11, %c0_12] : memref<3x3x16x32xf32, #tpu.memory_space<vmem>>, vector<1x1x16x32xf32>
    %7 = vector.shape_cast %6 : vector<1x1x16x32xf32> to vector<16x32xf32>
    %c1_13 = arith.constant 1 : index
    %c1_14 = arith.constant 1 : index
    %c0_15 = arith.constant 0 : index
    %c0_16 = arith.constant 0 : index
    %8 = vector.load %arg2[%c1_13, %c1_14, %c0_15, %c0_16] : memref<3x3x16x32xf32, #tpu.memory_space<vmem>>, vector<1x1x16x32xf32>
    %9 = vector.shape_cast %8 : vector<1x1x16x32xf32> to vector<16x32xf32>
    %c1_17 = arith.constant 1 : index
    %c2_18 = arith.constant 2 : index
    %c0_19 = arith.constant 0 : index
    %c0_20 = arith.constant 0 : index
    %10 = vector.load %arg2[%c1_17, %c2_18, %c0_19, %c0_20] : memref<3x3x16x32xf32, #tpu.memory_space<vmem>>, vector<1x1x16x32xf32>
    %11 = vector.shape_cast %10 : vector<1x1x16x32xf32> to vector<16x32xf32>
    %c2_21 = arith.constant 2 : index
    %c0_22 = arith.constant 0 : index
    %c0_23 = arith.constant 0 : index
    %c0_24 = arith.constant 0 : index
    %12 = vector.load %arg2[%c2_21, %c0_22, %c0_23, %c0_24] : memref<3x3x16x32xf32, #tpu.memory_space<vmem>>, vector<1x1x16x32xf32>
    %13 = vector.shape_cast %12 : vector<1x1x16x32xf32> to vector<16x32xf32>
    %c2_25 = arith.constant 2 : index
    %c1_26 = arith.constant 1 : index
    %c0_27 = arith.constant 0 : index
    %c0_28 = arith.constant 0 : index
    %14 = vector.load %arg2[%c2_25, %c1_26, %c0_27, %c0_28] : memref<3x3x16x32xf32, #tpu.memory_space<vmem>>, vector<1x1x16x32xf32>
    %15 = vector.shape_cast %14 : vector<1x1x16x32xf32> to vector<16x32xf32>
    %c2_29 = arith.constant 2 : index
    %c2_30 = arith.constant 2 : index
    %c0_31 = arith.constant 0 : index
    %c0_32 = arith.constant 0 : index
    %16 = vector.load %arg2[%c2_29, %c2_30, %c0_31, %c0_32] : memref<3x3x16x32xf32, #tpu.memory_space<vmem>>, vector<1x1x16x32xf32>
    %17 = vector.shape_cast %16 : vector<1x1x16x32xf32> to vector<16x32xf32>
    %c0_33 = arith.constant 0 : index
    %c0_34 = arith.constant 0 : index
    %18 = vector.load %arg3[%c0_33, %c0_34] : memref<1x32xf32, #tpu.memory_space<vmem>>, vector<1x32xf32>
    %19 = tpu.iota {dimensions = array<i32: 0>} : vector<30x60xi32>
    %20 = tpu.iota {dimensions = array<i32: 1>} : vector<30x60xi32>
    %c2_i32 = arith.constant 2 : i32
    %21 = vector.broadcast %c2_i32 : i32 to vector<30x60xi32>
    %22 = arith.muli %21, %19 : vector<30x60xi32>
    %23 = arith.cmpi eq, %20, %22 : vector<30x60xi32>
    %24 = arith.extui %23 : vector<30x60xi1> to vector<30x60xi32>
    %25 = arith.sitofp %24 : vector<30x60xi32> to vector<30x60xf32>
    %c2_i32_35 = arith.constant 2 : i32
    %26 = vector.broadcast %c2_i32_35 : i32 to vector<30x60xi32>
    %27 = arith.muli %26, %19 : vector<30x60xi32>
    %c1_i32 = arith.constant 1 : i32
    %28 = vector.broadcast %c1_i32 : i32 to vector<30x60xi32>
    %29 = arith.addi %27, %28 : vector<30x60xi32>
    %30 = arith.cmpi eq, %20, %29 : vector<30x60xi32>
    %31 = arith.extui %30 : vector<30x60xi1> to vector<30x60xi32>
    %32 = arith.sitofp %31 : vector<30x60xi32> to vector<30x60xf32>
    %c0_i32 = arith.constant 0 : i32
    %c30_i32 = arith.constant 30 : i32
    %33 = arith.addi %c0_i32, %c30_i32 : i32
    %c1_i32_36 = arith.constant 1 : i32
    scf.for %arg5 = %c0_i32 to %33 step %c1_i32_36  : i32 {
      %c2_i32_38 = arith.constant 2 : i32
      %34 = arith.muli %c2_i32_38, %arg5 : i32
      %35 = tpu.assume_multiple %34, 2 : i32
      %cst = arith.constant 0.000000e+00 : f32
      %36 = vector.broadcast %cst : f32 to vector<60x32xf32>
      %cst_39 = arith.constant 0.000000e+00 : f32
      %37 = vector.broadcast %cst_39 : f32 to vector<60x32xf32>
      %c0_i32_40 = arith.constant 0 : i32
      %38 = arith.addi %35, %c0_i32_40 : i32
      %c0_41 = arith.constant 0 : index
      %39 = arith.index_cast %38 : i32 to index
      %c0_42 = arith.constant 0 : index
      %c0_43 = arith.constant 0 : index
      %40 = vector.load %arg1[%c0_41, %39, %c0_42, %c0_43] : memref<1x62x62x16xf32, #tpu.memory_space<vmem>>, vector<1x1x60x16xf32>
      %41 = vector.shape_cast %40 : vector<1x1x60x16xf32> to vector<1x60x16xf32>
      %42 = vector.shape_cast %41 : vector<1x60x16xf32> to vector<60x16xf32>
      %cst_44 = arith.constant dense<0.000000e+00> : vector<60x32xf32>
      %43 = tpu.matmul %42, %1, %cst_44 {dimension_numbers = #tpu.dot_dimension_numbers<[1], [0], [0], [1], [0, 0, 1, 1], [], []>} : vector<60x16xf32>, vector<16x32xf32>, vector<60x32xf32> -> vector<60x32xf32>
      %44 = arith.addf %36, %43 : vector<60x32xf32>
      %c0_i32_45 = arith.constant 0 : i32
      %45 = arith.addi %35, %c0_i32_45 : i32
      %c0_46 = arith.constant 0 : index
      %46 = arith.index_cast %45 : i32 to index
      %c1_47 = arith.constant 1 : index
      %c0_48 = arith.constant 0 : index
      %47 = vector.load %arg1[%c0_46, %46, %c1_47, %c0_48] : memref<1x62x62x16xf32, #tpu.memory_space<vmem>>, vector<1x1x60x16xf32>
      %48 = vector.shape_cast %47 : vector<1x1x60x16xf32> to vector<1x60x16xf32>
      %49 = vector.shape_cast %48 : vector<1x60x16xf32> to vector<60x16xf32>
      %cst_49 = arith.constant dense<0.000000e+00> : vector<60x32xf32>
      %50 = tpu.matmul %49, %3, %cst_49 {dimension_numbers = #tpu.dot_dimension_numbers<[1], [0], [0], [1], [0, 0, 1, 1], [], []>} : vector<60x16xf32>, vector<16x32xf32>, vector<60x32xf32> -> vector<60x32xf32>
      %51 = arith.addf %44, %50 : vector<60x32xf32>
      %c0_i32_50 = arith.constant 0 : i32
      %52 = arith.addi %35, %c0_i32_50 : i32
      %c0_51 = arith.constant 0 : index
      %53 = arith.index_cast %52 : i32 to index
      %c2_52 = arith.constant 2 : index
      %c0_53 = arith.constant 0 : index
      %54 = vector.load %arg1[%c0_51, %53, %c2_52, %c0_53] : memref<1x62x62x16xf32, #tpu.memory_space<vmem>>, vector<1x1x60x16xf32>
      %55 = vector.shape_cast %54 : vector<1x1x60x16xf32> to vector<1x60x16xf32>
      %56 = vector.shape_cast %55 : vector<1x60x16xf32> to vector<60x16xf32>
      %cst_54 = arith.constant dense<0.000000e+00> : vector<60x32xf32>
      %57 = tpu.matmul %56, %5, %cst_54 {dimension_numbers = #tpu.dot_dimension_numbers<[1], [0], [0], [1], [0, 0, 1, 1], [], []>} : vector<60x16xf32>, vector<16x32xf32>, vector<60x32xf32> -> vector<60x32xf32>
      %58 = arith.addf %51, %57 : vector<60x32xf32>
      %c1_i32_55 = arith.constant 1 : i32
      %59 = arith.addi %35, %c1_i32_55 : i32
      %c0_56 = arith.constant 0 : index
      %60 = arith.index_cast %59 : i32 to index
      %c0_57 = arith.constant 0 : index
      %c0_58 = arith.constant 0 : index
      %61 = vector.load %arg1[%c0_56, %60, %c0_57, %c0_58] : memref<1x62x62x16xf32, #tpu.memory_space<vmem>>, vector<1x1x60x16xf32>
      %62 = vector.shape_cast %61 : vector<1x1x60x16xf32> to vector<1x60x16xf32>
      %63 = vector.shape_cast %62 : vector<1x60x16xf32> to vector<60x16xf32>
      %cst_59 = arith.constant dense<0.000000e+00> : vector<60x32xf32>
      %64 = tpu.matmul %63, %7, %cst_59 {dimension_numbers = #tpu.dot_dimension_numbers<[1], [0], [0], [1], [0, 0, 1, 1], [], []>} : vector<60x16xf32>, vector<16x32xf32>, vector<60x32xf32> -> vector<60x32xf32>
      %65 = arith.addf %58, %64 : vector<60x32xf32>
      %cst_60 = arith.constant dense<0.000000e+00> : vector<60x32xf32>
      %66 = tpu.matmul %63, %1, %cst_60 {dimension_numbers = #tpu.dot_dimension_numbers<[1], [0], [0], [1], [0, 0, 1, 1], [], []>} : vector<60x16xf32>, vector<16x32xf32>, vector<60x32xf32> -> vector<60x32xf32>
      %67 = arith.addf %37, %66 : vector<60x32xf32>
      %c1_i32_61 = arith.constant 1 : i32
      %68 = arith.addi %35, %c1_i32_61 : i32
      %c0_62 = arith.constant 0 : index
      %69 = arith.index_cast %68 : i32 to index
      %c1_63 = arith.constant 1 : index
      %c0_64 = arith.constant 0 : index
      %70 = vector.load %arg1[%c0_62, %69, %c1_63, %c0_64] : memref<1x62x62x16xf32, #tpu.memory_space<vmem>>, vector<1x1x60x16xf32>
      %71 = vector.shape_cast %70 : vector<1x1x60x16xf32> to vector<1x60x16xf32>
      %72 = vector.shape_cast %71 : vector<1x60x16xf32> to vector<60x16xf32>
      %cst_65 = arith.constant dense<0.000000e+00> : vector<60x32xf32>
      %73 = tpu.matmul %72, %9, %cst_65 {dimension_numbers = #tpu.dot_dimension_numbers<[1], [0], [0], [1], [0, 0, 1, 1], [], []>} : vector<60x16xf32>, vector<16x32xf32>, vector<60x32xf32> -> vector<60x32xf32>
      %74 = arith.addf %65, %73 : vector<60x32xf32>
      %cst_66 = arith.constant dense<0.000000e+00> : vector<60x32xf32>
      %75 = tpu.matmul %72, %3, %cst_66 {dimension_numbers = #tpu.dot_dimension_numbers<[1], [0], [0], [1], [0, 0, 1, 1], [], []>} : vector<60x16xf32>, vector<16x32xf32>, vector<60x32xf32> -> vector<60x32xf32>
      %76 = arith.addf %67, %75 : vector<60x32xf32>
      %c1_i32_67 = arith.constant 1 : i32
      %77 = arith.addi %35, %c1_i32_67 : i32
      %c0_68 = arith.constant 0 : index
      %78 = arith.index_cast %77 : i32 to index
      %c2_69 = arith.constant 2 : index
      %c0_70 = arith.constant 0 : index
      %79 = vector.load %arg1[%c0_68, %78, %c2_69, %c0_70] : memref<1x62x62x16xf32, #tpu.memory_space<vmem>>, vector<1x1x60x16xf32>
      %80 = vector.shape_cast %79 : vector<1x1x60x16xf32> to vector<1x60x16xf32>
      %81 = vector.shape_cast %80 : vector<1x60x16xf32> to vector<60x16xf32>
      %cst_71 = arith.constant dense<0.000000e+00> : vector<60x32xf32>
      %82 = tpu.matmul %81, %11, %cst_71 {dimension_numbers = #tpu.dot_dimension_numbers<[1], [0], [0], [1], [0, 0, 1, 1], [], []>} : vector<60x16xf32>, vector<16x32xf32>, vector<60x32xf32> -> vector<60x32xf32>
      %83 = arith.addf %74, %82 : vector<60x32xf32>
      %cst_72 = arith.constant dense<0.000000e+00> : vector<60x32xf32>
      %84 = tpu.matmul %81, %5, %cst_72 {dimension_numbers = #tpu.dot_dimension_numbers<[1], [0], [0], [1], [0, 0, 1, 1], [], []>} : vector<60x16xf32>, vector<16x32xf32>, vector<60x32xf32> -> vector<60x32xf32>
      %85 = arith.addf %76, %84 : vector<60x32xf32>
      %c2_i32_73 = arith.constant 2 : i32
      %86 = arith.addi %35, %c2_i32_73 : i32
      %c0_74 = arith.constant 0 : index
      %87 = arith.index_cast %86 : i32 to index
      %c0_75 = arith.constant 0 : index
      %c0_76 = arith.constant 0 : index
      %88 = vector.load %arg1[%c0_74, %87, %c0_75, %c0_76] : memref<1x62x62x16xf32, #tpu.memory_space<vmem>>, vector<1x1x60x16xf32>
      %89 = vector.shape_cast %88 : vector<1x1x60x16xf32> to vector<1x60x16xf32>
      %90 = vector.shape_cast %89 : vector<1x60x16xf32> to vector<60x16xf32>
      %cst_77 = arith.constant dense<0.000000e+00> : vector<60x32xf32>
      %91 = tpu.matmul %90, %13, %cst_77 {dimension_numbers = #tpu.dot_dimension_numbers<[1], [0], [0], [1], [0, 0, 1, 1], [], []>} : vector<60x16xf32>, vector<16x32xf32>, vector<60x32xf32> -> vector<60x32xf32>
      %92 = arith.addf %83, %91 : vector<60x32xf32>
      %cst_78 = arith.constant dense<0.000000e+00> : vector<60x32xf32>
      %93 = tpu.matmul %90, %7, %cst_78 {dimension_numbers = #tpu.dot_dimension_numbers<[1], [0], [0], [1], [0, 0, 1, 1], [], []>} : vector<60x16xf32>, vector<16x32xf32>, vector<60x32xf32> -> vector<60x32xf32>
      %94 = arith.addf %85, %93 : vector<60x32xf32>
      %c2_i32_79 = arith.constant 2 : i32
      %95 = arith.addi %35, %c2_i32_79 : i32
      %c0_80 = arith.constant 0 : index
      %96 = arith.index_cast %95 : i32 to index
      %c1_81 = arith.constant 1 : index
      %c0_82 = arith.constant 0 : index
      %97 = vector.load %arg1[%c0_80, %96, %c1_81, %c0_82] : memref<1x62x62x16xf32, #tpu.memory_space<vmem>>, vector<1x1x60x16xf32>
      %98 = vector.shape_cast %97 : vector<1x1x60x16xf32> to vector<1x60x16xf32>
      %99 = vector.shape_cast %98 : vector<1x60x16xf32> to vector<60x16xf32>
      %cst_83 = arith.constant dense<0.000000e+00> : vector<60x32xf32>
      %100 = tpu.matmul %99, %15, %cst_83 {dimension_numbers = #tpu.dot_dimension_numbers<[1], [0], [0], [1], [0, 0, 1, 1], [], []>} : vector<60x16xf32>, vector<16x32xf32>, vector<60x32xf32> -> vector<60x32xf32>
      %101 = arith.addf %92, %100 : vector<60x32xf32>
      %cst_84 = arith.constant dense<0.000000e+00> : vector<60x32xf32>
      %102 = tpu.matmul %99, %9, %cst_84 {dimension_numbers = #tpu.dot_dimension_numbers<[1], [0], [0], [1], [0, 0, 1, 1], [], []>} : vector<60x16xf32>, vector<16x32xf32>, vector<60x32xf32> -> vector<60x32xf32>
      %103 = arith.addf %94, %102 : vector<60x32xf32>
      %c2_i32_85 = arith.constant 2 : i32
      %104 = arith.addi %35, %c2_i32_85 : i32
      %c0_86 = arith.constant 0 : index
      %105 = arith.index_cast %104 : i32 to index
      %c2_87 = arith.constant 2 : index
      %c0_88 = arith.constant 0 : index
      %106 = vector.load %arg1[%c0_86, %105, %c2_87, %c0_88] : memref<1x62x62x16xf32, #tpu.memory_space<vmem>>, vector<1x1x60x16xf32>
      %107 = vector.shape_cast %106 : vector<1x1x60x16xf32> to vector<1x60x16xf32>
      %108 = vector.shape_cast %107 : vector<1x60x16xf32> to vector<60x16xf32>
      %cst_89 = arith.constant dense<0.000000e+00> : vector<60x32xf32>
      %109 = tpu.matmul %108, %17, %cst_89 {dimension_numbers = #tpu.dot_dimension_numbers<[1], [0], [0], [1], [0, 0, 1, 1], [], []>} : vector<60x16xf32>, vector<16x32xf32>, vector<60x32xf32> -> vector<60x32xf32>
      %110 = arith.addf %101, %109 : vector<60x32xf32>
      %cst_90 = arith.constant dense<0.000000e+00> : vector<60x32xf32>
      %111 = tpu.matmul %108, %11, %cst_90 {dimension_numbers = #tpu.dot_dimension_numbers<[1], [0], [0], [1], [0, 0, 1, 1], [], []>} : vector<60x16xf32>, vector<16x32xf32>, vector<60x32xf32> -> vector<60x32xf32>
      %112 = arith.addf %103, %111 : vector<60x32xf32>
      %c3_i32 = arith.constant 3 : i32
      %113 = arith.addi %35, %c3_i32 : i32
      %c0_91 = arith.constant 0 : index
      %114 = arith.index_cast %113 : i32 to index
      %c0_92 = arith.constant 0 : index
      %c0_93 = arith.constant 0 : index
      %115 = vector.load %arg1[%c0_91, %114, %c0_92, %c0_93] : memref<1x62x62x16xf32, #tpu.memory_space<vmem>>, vector<1x1x60x16xf32>
      %116 = vector.shape_cast %115 : vector<1x1x60x16xf32> to vector<1x60x16xf32>
      %117 = vector.shape_cast %116 : vector<1x60x16xf32> to vector<60x16xf32>
      %cst_94 = arith.constant dense<0.000000e+00> : vector<60x32xf32>
      %118 = tpu.matmul %117, %13, %cst_94 {dimension_numbers = #tpu.dot_dimension_numbers<[1], [0], [0], [1], [0, 0, 1, 1], [], []>} : vector<60x16xf32>, vector<16x32xf32>, vector<60x32xf32> -> vector<60x32xf32>
      %119 = arith.addf %112, %118 : vector<60x32xf32>
      %c3_i32_95 = arith.constant 3 : i32
      %120 = arith.addi %35, %c3_i32_95 : i32
      %c0_96 = arith.constant 0 : index
      %121 = arith.index_cast %120 : i32 to index
      %c1_97 = arith.constant 1 : index
      %c0_98 = arith.constant 0 : index
      %122 = vector.load %arg1[%c0_96, %121, %c1_97, %c0_98] : memref<1x62x62x16xf32, #tpu.memory_space<vmem>>, vector<1x1x60x16xf32>
      %123 = vector.shape_cast %122 : vector<1x1x60x16xf32> to vector<1x60x16xf32>
      %124 = vector.shape_cast %123 : vector<1x60x16xf32> to vector<60x16xf32>
      %cst_99 = arith.constant dense<0.000000e+00> : vector<60x32xf32>
      %125 = tpu.matmul %124, %15, %cst_99 {dimension_numbers = #tpu.dot_dimension_numbers<[1], [0], [0], [1], [0, 0, 1, 1], [], []>} : vector<60x16xf32>, vector<16x32xf32>, vector<60x32xf32> -> vector<60x32xf32>
      %126 = arith.addf %119, %125 : vector<60x32xf32>
      %c3_i32_100 = arith.constant 3 : i32
      %127 = arith.addi %35, %c3_i32_100 : i32
      %c0_101 = arith.constant 0 : index
      %128 = arith.index_cast %127 : i32 to index
      %c2_102 = arith.constant 2 : index
      %c0_103 = arith.constant 0 : index
      %129 = vector.load %arg1[%c0_101, %128, %c2_102, %c0_103] : memref<1x62x62x16xf32, #tpu.memory_space<vmem>>, vector<1x1x60x16xf32>
      %130 = vector.shape_cast %129 : vector<1x1x60x16xf32> to vector<1x60x16xf32>
      %131 = vector.shape_cast %130 : vector<1x60x16xf32> to vector<60x16xf32>
      %cst_104 = arith.constant dense<0.000000e+00> : vector<60x32xf32>
      %132 = tpu.matmul %131, %17, %cst_104 {dimension_numbers = #tpu.dot_dimension_numbers<[1], [0], [0], [1], [0, 0, 1, 1], [], []>} : vector<60x16xf32>, vector<16x32xf32>, vector<60x32xf32> -> vector<60x32xf32>
      %133 = arith.addf %126, %132 : vector<60x32xf32>
      %134 = arith.maximumf %110, %133 : vector<60x32xf32>
      %135 = vector.broadcast %18 : vector<1x32xf32> to vector<60x32xf32>
      %136 = arith.addf %134, %135 : vector<60x32xf32>
      %cst_105 = arith.constant 0.000000e+00 : f32
      %137 = vector.broadcast %cst_105 : f32 to vector<60x32xf32>
      %138 = arith.maximumf %136, %137 : vector<60x32xf32>
      %cst_106 = arith.constant dense<0.000000e+00> : vector<30x32xf32>
      %139 = tpu.matmul %25, %138, %cst_106 {dimension_numbers = #tpu.dot_dimension_numbers<[1], [0], [0], [1], [0, 0, 1, 1], [], []>} : vector<30x60xf32>, vector<60x32xf32>, vector<30x32xf32> -> vector<30x32xf32>
      %cst_107 = arith.constant dense<0.000000e+00> : vector<30x32xf32>
      %140 = tpu.matmul %32, %138, %cst_107 {dimension_numbers = #tpu.dot_dimension_numbers<[1], [0], [0], [1], [0, 0, 1, 1], [], []>} : vector<30x60xf32>, vector<60x32xf32>, vector<30x32xf32> -> vector<30x32xf32>
      %141 = arith.maximumf %139, %140 : vector<30x32xf32>
      %142 = vector.shape_cast %141 : vector<30x32xf32> to vector<1x30x32xf32>
      %c0_108 = arith.constant 0 : index
      %143 = arith.index_cast %arg5 : i32 to index
      %c0_109 = arith.constant 0 : index
      %c0_110 = arith.constant 0 : index
      %144 = vector.load %arg4[%c0_108, %143, %c0_109, %c0_110] : memref<1x30x30x32xf32, #tpu.memory_space<vmem>>, vector<1x1x30x32xf32>
      %145 = vector.shape_cast %144 : vector<1x1x30x32xf32> to vector<1x30x32xf32>
      %146 = vector.shape_cast %142 : vector<1x30x32xf32> to vector<1x1x30x32xf32>
      tpu.vector_store %arg4[%c0_108, %143, %c0_109, %c0_110], %146 {strides = array<i32>} : memref<1x30x30x32xf32, #tpu.memory_space<vmem>>, vector<1x1x30x32xf32>,
    }
    %c30_i32_37 = arith.constant 30 : i32
    return
  }
  func.func @transform_0(%arg0: i32) -> (i32, i32, i32, i32) {
    %c0_i32 = arith.constant 0 : i32
    %c0_i32_0 = arith.constant 0 : i32
    %c0_i32_1 = arith.constant 0 : i32
    %c0_i32_2 = arith.constant 0 : i32
    return %arg0, %c0_i32, %c0_i32_0, %c0_i32_1 : i32, i32, i32, i32
  }
  func.func @transform_1(%arg0: i32) -> (i32, i32, i32, i32) {
    %c0_i32 = arith.constant 0 : i32
    %c0_i32_0 = arith.constant 0 : i32
    %c0_i32_1 = arith.constant 0 : i32
    %c0_i32_2 = arith.constant 0 : i32
    %c0_i32_3 = arith.constant 0 : i32
    return %c0_i32, %c0_i32_0, %c0_i32_1, %c0_i32_2 : i32, i32, i32, i32
  }
  func.func @transform_2(%arg0: i32) -> (i32, i32) {
    %c0_i32 = arith.constant 0 : i32
    %c0_i32_0 = arith.constant 0 : i32
    %c0_i32_1 = arith.constant 0 : i32
    return %c0_i32, %c0_i32_0 : i32, i32
  }
  func.func @transform_3(%arg0: i32) -> (i32, i32, i32, i32) {
    %c0_i32 = arith.constant 0 : i32
    %c0_i32_0 = arith.constant 0 : i32
    %c0_i32_1 = arith.constant 0 : i32
    %c0_i32_2 = arith.constant 0 : i32
    return %arg0, %c0_i32, %c0_i32_0, %c0_i32_1 : i32, i32, i32, i32
  }
}

module attributes {stable_mosaic.version = 11 : i64} {
  func.func @_conv3x3_relu_pool_kernel(%arg0: i32, %arg1: memref<1x30x30x32xf32, #tpu.memory_space<vmem>>, %arg2: memref<3x3x32x64xf32, #tpu.memory_space<vmem>>, %arg3: memref<1x64xf32, #tpu.memory_space<vmem>>, %arg4: memref<1x14x14x64xf32, #tpu.memory_space<vmem>>) attributes {dimension_semantics = [#tpu.dimension_semantics<parallel>], iteration_bounds = array<i64: 2>, scalar_prefetch = 0 : i64, scratch_operands = 0 : i64, tpu.core_type = #tpu.core_type<tc>, window_params = [{transform_indices = @transform_0, window_bounds = array<i64: 1, 30, 30, 32>}, {pipeline_mode = #tpu.pipeline_mode<synchronous>, transform_indices = @transform_1, window_bounds = array<i64: 3, 3, 32, 64>}, {pipeline_mode = #tpu.pipeline_mode<synchronous>, transform_indices = @transform_2, window_bounds = array<i64: 1, 64>}, {transform_indices = @transform_3, window_bounds = array<i64: 1, 14, 14, 64>}]} {
    %c0 = arith.constant 0 : index
    %c0_0 = arith.constant 0 : index
    %c0_1 = arith.constant 0 : index
    %c0_2 = arith.constant 0 : index
    %0 = vector.load %arg2[%c0, %c0_0, %c0_1, %c0_2] : memref<3x3x32x64xf32, #tpu.memory_space<vmem>>, vector<1x1x32x64xf32>
    %1 = vector.shape_cast %0 : vector<1x1x32x64xf32> to vector<32x64xf32>
    %c0_3 = arith.constant 0 : index
    %c1 = arith.constant 1 : index
    %c0_4 = arith.constant 0 : index
    %c0_5 = arith.constant 0 : index
    %2 = vector.load %arg2[%c0_3, %c1, %c0_4, %c0_5] : memref<3x3x32x64xf32, #tpu.memory_space<vmem>>, vector<1x1x32x64xf32>
    %3 = vector.shape_cast %2 : vector<1x1x32x64xf32> to vector<32x64xf32>
    %c0_6 = arith.constant 0 : index
    %c2 = arith.constant 2 : index
    %c0_7 = arith.constant 0 : index
    %c0_8 = arith.constant 0 : index
    %4 = vector.load %arg2[%c0_6, %c2, %c0_7, %c0_8] : memref<3x3x32x64xf32, #tpu.memory_space<vmem>>, vector<1x1x32x64xf32>
    %5 = vector.shape_cast %4 : vector<1x1x32x64xf32> to vector<32x64xf32>
    %c1_9 = arith.constant 1 : index
    %c0_10 = arith.constant 0 : index
    %c0_11 = arith.constant 0 : index
    %c0_12 = arith.constant 0 : index
    %6 = vector.load %arg2[%c1_9, %c0_10, %c0_11, %c0_12] : memref<3x3x32x64xf32, #tpu.memory_space<vmem>>, vector<1x1x32x64xf32>
    %7 = vector.shape_cast %6 : vector<1x1x32x64xf32> to vector<32x64xf32>
    %c1_13 = arith.constant 1 : index
    %c1_14 = arith.constant 1 : index
    %c0_15 = arith.constant 0 : index
    %c0_16 = arith.constant 0 : index
    %8 = vector.load %arg2[%c1_13, %c1_14, %c0_15, %c0_16] : memref<3x3x32x64xf32, #tpu.memory_space<vmem>>, vector<1x1x32x64xf32>
    %9 = vector.shape_cast %8 : vector<1x1x32x64xf32> to vector<32x64xf32>
    %c1_17 = arith.constant 1 : index
    %c2_18 = arith.constant 2 : index
    %c0_19 = arith.constant 0 : index
    %c0_20 = arith.constant 0 : index
    %10 = vector.load %arg2[%c1_17, %c2_18, %c0_19, %c0_20] : memref<3x3x32x64xf32, #tpu.memory_space<vmem>>, vector<1x1x32x64xf32>
    %11 = vector.shape_cast %10 : vector<1x1x32x64xf32> to vector<32x64xf32>
    %c2_21 = arith.constant 2 : index
    %c0_22 = arith.constant 0 : index
    %c0_23 = arith.constant 0 : index
    %c0_24 = arith.constant 0 : index
    %12 = vector.load %arg2[%c2_21, %c0_22, %c0_23, %c0_24] : memref<3x3x32x64xf32, #tpu.memory_space<vmem>>, vector<1x1x32x64xf32>
    %13 = vector.shape_cast %12 : vector<1x1x32x64xf32> to vector<32x64xf32>
    %c2_25 = arith.constant 2 : index
    %c1_26 = arith.constant 1 : index
    %c0_27 = arith.constant 0 : index
    %c0_28 = arith.constant 0 : index
    %14 = vector.load %arg2[%c2_25, %c1_26, %c0_27, %c0_28] : memref<3x3x32x64xf32, #tpu.memory_space<vmem>>, vector<1x1x32x64xf32>
    %15 = vector.shape_cast %14 : vector<1x1x32x64xf32> to vector<32x64xf32>
    %c2_29 = arith.constant 2 : index
    %c2_30 = arith.constant 2 : index
    %c0_31 = arith.constant 0 : index
    %c0_32 = arith.constant 0 : index
    %16 = vector.load %arg2[%c2_29, %c2_30, %c0_31, %c0_32] : memref<3x3x32x64xf32, #tpu.memory_space<vmem>>, vector<1x1x32x64xf32>
    %17 = vector.shape_cast %16 : vector<1x1x32x64xf32> to vector<32x64xf32>
    %c0_33 = arith.constant 0 : index
    %c0_34 = arith.constant 0 : index
    %18 = vector.load %arg3[%c0_33, %c0_34] : memref<1x64xf32, #tpu.memory_space<vmem>>, vector<1x64xf32>
    %19 = tpu.iota {dimensions = array<i32: 0>} : vector<14x28xi32>
    %20 = tpu.iota {dimensions = array<i32: 1>} : vector<14x28xi32>
    %c2_i32 = arith.constant 2 : i32
    %21 = vector.broadcast %c2_i32 : i32 to vector<14x28xi32>
    %22 = arith.muli %21, %19 : vector<14x28xi32>
    %23 = arith.cmpi eq, %20, %22 : vector<14x28xi32>
    %24 = arith.extui %23 : vector<14x28xi1> to vector<14x28xi32>
    %25 = arith.sitofp %24 : vector<14x28xi32> to vector<14x28xf32>
    %c2_i32_35 = arith.constant 2 : i32
    %26 = vector.broadcast %c2_i32_35 : i32 to vector<14x28xi32>
    %27 = arith.muli %26, %19 : vector<14x28xi32>
    %c1_i32 = arith.constant 1 : i32
    %28 = vector.broadcast %c1_i32 : i32 to vector<14x28xi32>
    %29 = arith.addi %27, %28 : vector<14x28xi32>
    %30 = arith.cmpi eq, %20, %29 : vector<14x28xi32>
    %31 = arith.extui %30 : vector<14x28xi1> to vector<14x28xi32>
    %32 = arith.sitofp %31 : vector<14x28xi32> to vector<14x28xf32>
    %c0_i32 = arith.constant 0 : i32
    %c14_i32 = arith.constant 14 : i32
    %33 = arith.addi %c0_i32, %c14_i32 : i32
    %c1_i32_36 = arith.constant 1 : i32
    scf.for %arg5 = %c0_i32 to %33 step %c1_i32_36  : i32 {
      %c2_i32_38 = arith.constant 2 : i32
      %34 = arith.muli %c2_i32_38, %arg5 : i32
      %35 = tpu.assume_multiple %34, 2 : i32
      %cst = arith.constant 0.000000e+00 : f32
      %36 = vector.broadcast %cst : f32 to vector<28x64xf32>
      %cst_39 = arith.constant 0.000000e+00 : f32
      %37 = vector.broadcast %cst_39 : f32 to vector<28x64xf32>
      %c0_i32_40 = arith.constant 0 : i32
      %38 = arith.addi %35, %c0_i32_40 : i32
      %c0_41 = arith.constant 0 : index
      %39 = arith.index_cast %38 : i32 to index
      %c0_42 = arith.constant 0 : index
      %c0_43 = arith.constant 0 : index
      %40 = vector.load %arg1[%c0_41, %39, %c0_42, %c0_43] : memref<1x30x30x32xf32, #tpu.memory_space<vmem>>, vector<1x1x28x32xf32>
      %41 = vector.shape_cast %40 : vector<1x1x28x32xf32> to vector<1x28x32xf32>
      %42 = vector.shape_cast %41 : vector<1x28x32xf32> to vector<28x32xf32>
      %cst_44 = arith.constant dense<0.000000e+00> : vector<28x64xf32>
      %43 = tpu.matmul %42, %1, %cst_44 {dimension_numbers = #tpu.dot_dimension_numbers<[1], [0], [0], [1], [0, 0, 1, 1], [], []>} : vector<28x32xf32>, vector<32x64xf32>, vector<28x64xf32> -> vector<28x64xf32>
      %44 = arith.addf %36, %43 : vector<28x64xf32>
      %c0_i32_45 = arith.constant 0 : i32
      %45 = arith.addi %35, %c0_i32_45 : i32
      %c0_46 = arith.constant 0 : index
      %46 = arith.index_cast %45 : i32 to index
      %c1_47 = arith.constant 1 : index
      %c0_48 = arith.constant 0 : index
      %47 = vector.load %arg1[%c0_46, %46, %c1_47, %c0_48] : memref<1x30x30x32xf32, #tpu.memory_space<vmem>>, vector<1x1x28x32xf32>
      %48 = vector.shape_cast %47 : vector<1x1x28x32xf32> to vector<1x28x32xf32>
      %49 = vector.shape_cast %48 : vector<1x28x32xf32> to vector<28x32xf32>
      %cst_49 = arith.constant dense<0.000000e+00> : vector<28x64xf32>
      %50 = tpu.matmul %49, %3, %cst_49 {dimension_numbers = #tpu.dot_dimension_numbers<[1], [0], [0], [1], [0, 0, 1, 1], [], []>} : vector<28x32xf32>, vector<32x64xf32>, vector<28x64xf32> -> vector<28x64xf32>
      %51 = arith.addf %44, %50 : vector<28x64xf32>
      %c0_i32_50 = arith.constant 0 : i32
      %52 = arith.addi %35, %c0_i32_50 : i32
      %c0_51 = arith.constant 0 : index
      %53 = arith.index_cast %52 : i32 to index
      %c2_52 = arith.constant 2 : index
      %c0_53 = arith.constant 0 : index
      %54 = vector.load %arg1[%c0_51, %53, %c2_52, %c0_53] : memref<1x30x30x32xf32, #tpu.memory_space<vmem>>, vector<1x1x28x32xf32>
      %55 = vector.shape_cast %54 : vector<1x1x28x32xf32> to vector<1x28x32xf32>
      %56 = vector.shape_cast %55 : vector<1x28x32xf32> to vector<28x32xf32>
      %cst_54 = arith.constant dense<0.000000e+00> : vector<28x64xf32>
      %57 = tpu.matmul %56, %5, %cst_54 {dimension_numbers = #tpu.dot_dimension_numbers<[1], [0], [0], [1], [0, 0, 1, 1], [], []>} : vector<28x32xf32>, vector<32x64xf32>, vector<28x64xf32> -> vector<28x64xf32>
      %58 = arith.addf %51, %57 : vector<28x64xf32>
      %c1_i32_55 = arith.constant 1 : i32
      %59 = arith.addi %35, %c1_i32_55 : i32
      %c0_56 = arith.constant 0 : index
      %60 = arith.index_cast %59 : i32 to index
      %c0_57 = arith.constant 0 : index
      %c0_58 = arith.constant 0 : index
      %61 = vector.load %arg1[%c0_56, %60, %c0_57, %c0_58] : memref<1x30x30x32xf32, #tpu.memory_space<vmem>>, vector<1x1x28x32xf32>
      %62 = vector.shape_cast %61 : vector<1x1x28x32xf32> to vector<1x28x32xf32>
      %63 = vector.shape_cast %62 : vector<1x28x32xf32> to vector<28x32xf32>
      %cst_59 = arith.constant dense<0.000000e+00> : vector<28x64xf32>
      %64 = tpu.matmul %63, %7, %cst_59 {dimension_numbers = #tpu.dot_dimension_numbers<[1], [0], [0], [1], [0, 0, 1, 1], [], []>} : vector<28x32xf32>, vector<32x64xf32>, vector<28x64xf32> -> vector<28x64xf32>
      %65 = arith.addf %58, %64 : vector<28x64xf32>
      %cst_60 = arith.constant dense<0.000000e+00> : vector<28x64xf32>
      %66 = tpu.matmul %63, %1, %cst_60 {dimension_numbers = #tpu.dot_dimension_numbers<[1], [0], [0], [1], [0, 0, 1, 1], [], []>} : vector<28x32xf32>, vector<32x64xf32>, vector<28x64xf32> -> vector<28x64xf32>
      %67 = arith.addf %37, %66 : vector<28x64xf32>
      %c1_i32_61 = arith.constant 1 : i32
      %68 = arith.addi %35, %c1_i32_61 : i32
      %c0_62 = arith.constant 0 : index
      %69 = arith.index_cast %68 : i32 to index
      %c1_63 = arith.constant 1 : index
      %c0_64 = arith.constant 0 : index
      %70 = vector.load %arg1[%c0_62, %69, %c1_63, %c0_64] : memref<1x30x30x32xf32, #tpu.memory_space<vmem>>, vector<1x1x28x32xf32>
      %71 = vector.shape_cast %70 : vector<1x1x28x32xf32> to vector<1x28x32xf32>
      %72 = vector.shape_cast %71 : vector<1x28x32xf32> to vector<28x32xf32>
      %cst_65 = arith.constant dense<0.000000e+00> : vector<28x64xf32>
      %73 = tpu.matmul %72, %9, %cst_65 {dimension_numbers = #tpu.dot_dimension_numbers<[1], [0], [0], [1], [0, 0, 1, 1], [], []>} : vector<28x32xf32>, vector<32x64xf32>, vector<28x64xf32> -> vector<28x64xf32>
      %74 = arith.addf %65, %73 : vector<28x64xf32>
      %cst_66 = arith.constant dense<0.000000e+00> : vector<28x64xf32>
      %75 = tpu.matmul %72, %3, %cst_66 {dimension_numbers = #tpu.dot_dimension_numbers<[1], [0], [0], [1], [0, 0, 1, 1], [], []>} : vector<28x32xf32>, vector<32x64xf32>, vector<28x64xf32> -> vector<28x64xf32>
      %76 = arith.addf %67, %75 : vector<28x64xf32>
      %c1_i32_67 = arith.constant 1 : i32
      %77 = arith.addi %35, %c1_i32_67 : i32
      %c0_68 = arith.constant 0 : index
      %78 = arith.index_cast %77 : i32 to index
      %c2_69 = arith.constant 2 : index
      %c0_70 = arith.constant 0 : index
      %79 = vector.load %arg1[%c0_68, %78, %c2_69, %c0_70] : memref<1x30x30x32xf32, #tpu.memory_space<vmem>>, vector<1x1x28x32xf32>
      %80 = vector.shape_cast %79 : vector<1x1x28x32xf32> to vector<1x28x32xf32>
      %81 = vector.shape_cast %80 : vector<1x28x32xf32> to vector<28x32xf32>
      %cst_71 = arith.constant dense<0.000000e+00> : vector<28x64xf32>
      %82 = tpu.matmul %81, %11, %cst_71 {dimension_numbers = #tpu.dot_dimension_numbers<[1], [0], [0], [1], [0, 0, 1, 1], [], []>} : vector<28x32xf32>, vector<32x64xf32>, vector<28x64xf32> -> vector<28x64xf32>
      %83 = arith.addf %74, %82 : vector<28x64xf32>
      %cst_72 = arith.constant dense<0.000000e+00> : vector<28x64xf32>
      %84 = tpu.matmul %81, %5, %cst_72 {dimension_numbers = #tpu.dot_dimension_numbers<[1], [0], [0], [1], [0, 0, 1, 1], [], []>} : vector<28x32xf32>, vector<32x64xf32>, vector<28x64xf32> -> vector<28x64xf32>
      %85 = arith.addf %76, %84 : vector<28x64xf32>
      %c2_i32_73 = arith.constant 2 : i32
      %86 = arith.addi %35, %c2_i32_73 : i32
      %c0_74 = arith.constant 0 : index
      %87 = arith.index_cast %86 : i32 to index
      %c0_75 = arith.constant 0 : index
      %c0_76 = arith.constant 0 : index
      %88 = vector.load %arg1[%c0_74, %87, %c0_75, %c0_76] : memref<1x30x30x32xf32, #tpu.memory_space<vmem>>, vector<1x1x28x32xf32>
      %89 = vector.shape_cast %88 : vector<1x1x28x32xf32> to vector<1x28x32xf32>
      %90 = vector.shape_cast %89 : vector<1x28x32xf32> to vector<28x32xf32>
      %cst_77 = arith.constant dense<0.000000e+00> : vector<28x64xf32>
      %91 = tpu.matmul %90, %13, %cst_77 {dimension_numbers = #tpu.dot_dimension_numbers<[1], [0], [0], [1], [0, 0, 1, 1], [], []>} : vector<28x32xf32>, vector<32x64xf32>, vector<28x64xf32> -> vector<28x64xf32>
      %92 = arith.addf %83, %91 : vector<28x64xf32>
      %cst_78 = arith.constant dense<0.000000e+00> : vector<28x64xf32>
      %93 = tpu.matmul %90, %7, %cst_78 {dimension_numbers = #tpu.dot_dimension_numbers<[1], [0], [0], [1], [0, 0, 1, 1], [], []>} : vector<28x32xf32>, vector<32x64xf32>, vector<28x64xf32> -> vector<28x64xf32>
      %94 = arith.addf %85, %93 : vector<28x64xf32>
      %c2_i32_79 = arith.constant 2 : i32
      %95 = arith.addi %35, %c2_i32_79 : i32
      %c0_80 = arith.constant 0 : index
      %96 = arith.index_cast %95 : i32 to index
      %c1_81 = arith.constant 1 : index
      %c0_82 = arith.constant 0 : index
      %97 = vector.load %arg1[%c0_80, %96, %c1_81, %c0_82] : memref<1x30x30x32xf32, #tpu.memory_space<vmem>>, vector<1x1x28x32xf32>
      %98 = vector.shape_cast %97 : vector<1x1x28x32xf32> to vector<1x28x32xf32>
      %99 = vector.shape_cast %98 : vector<1x28x32xf32> to vector<28x32xf32>
      %cst_83 = arith.constant dense<0.000000e+00> : vector<28x64xf32>
      %100 = tpu.matmul %99, %15, %cst_83 {dimension_numbers = #tpu.dot_dimension_numbers<[1], [0], [0], [1], [0, 0, 1, 1], [], []>} : vector<28x32xf32>, vector<32x64xf32>, vector<28x64xf32> -> vector<28x64xf32>
      %101 = arith.addf %92, %100 : vector<28x64xf32>
      %cst_84 = arith.constant dense<0.000000e+00> : vector<28x64xf32>
      %102 = tpu.matmul %99, %9, %cst_84 {dimension_numbers = #tpu.dot_dimension_numbers<[1], [0], [0], [1], [0, 0, 1, 1], [], []>} : vector<28x32xf32>, vector<32x64xf32>, vector<28x64xf32> -> vector<28x64xf32>
      %103 = arith.addf %94, %102 : vector<28x64xf32>
      %c2_i32_85 = arith.constant 2 : i32
      %104 = arith.addi %35, %c2_i32_85 : i32
      %c0_86 = arith.constant 0 : index
      %105 = arith.index_cast %104 : i32 to index
      %c2_87 = arith.constant 2 : index
      %c0_88 = arith.constant 0 : index
      %106 = vector.load %arg1[%c0_86, %105, %c2_87, %c0_88] : memref<1x30x30x32xf32, #tpu.memory_space<vmem>>, vector<1x1x28x32xf32>
      %107 = vector.shape_cast %106 : vector<1x1x28x32xf32> to vector<1x28x32xf32>
      %108 = vector.shape_cast %107 : vector<1x28x32xf32> to vector<28x32xf32>
      %cst_89 = arith.constant dense<0.000000e+00> : vector<28x64xf32>
      %109 = tpu.matmul %108, %17, %cst_89 {dimension_numbers = #tpu.dot_dimension_numbers<[1], [0], [0], [1], [0, 0, 1, 1], [], []>} : vector<28x32xf32>, vector<32x64xf32>, vector<28x64xf32> -> vector<28x64xf32>
      %110 = arith.addf %101, %109 : vector<28x64xf32>
      %cst_90 = arith.constant dense<0.000000e+00> : vector<28x64xf32>
      %111 = tpu.matmul %108, %11, %cst_90 {dimension_numbers = #tpu.dot_dimension_numbers<[1], [0], [0], [1], [0, 0, 1, 1], [], []>} : vector<28x32xf32>, vector<32x64xf32>, vector<28x64xf32> -> vector<28x64xf32>
      %112 = arith.addf %103, %111 : vector<28x64xf32>
      %c3_i32 = arith.constant 3 : i32
      %113 = arith.addi %35, %c3_i32 : i32
      %c0_91 = arith.constant 0 : index
      %114 = arith.index_cast %113 : i32 to index
      %c0_92 = arith.constant 0 : index
      %c0_93 = arith.constant 0 : index
      %115 = vector.load %arg1[%c0_91, %114, %c0_92, %c0_93] : memref<1x30x30x32xf32, #tpu.memory_space<vmem>>, vector<1x1x28x32xf32>
      %116 = vector.shape_cast %115 : vector<1x1x28x32xf32> to vector<1x28x32xf32>
      %117 = vector.shape_cast %116 : vector<1x28x32xf32> to vector<28x32xf32>
      %cst_94 = arith.constant dense<0.000000e+00> : vector<28x64xf32>
      %118 = tpu.matmul %117, %13, %cst_94 {dimension_numbers = #tpu.dot_dimension_numbers<[1], [0], [0], [1], [0, 0, 1, 1], [], []>} : vector<28x32xf32>, vector<32x64xf32>, vector<28x64xf32> -> vector<28x64xf32>
      %119 = arith.addf %112, %118 : vector<28x64xf32>
      %c3_i32_95 = arith.constant 3 : i32
      %120 = arith.addi %35, %c3_i32_95 : i32
      %c0_96 = arith.constant 0 : index
      %121 = arith.index_cast %120 : i32 to index
      %c1_97 = arith.constant 1 : index
      %c0_98 = arith.constant 0 : index
      %122 = vector.load %arg1[%c0_96, %121, %c1_97, %c0_98] : memref<1x30x30x32xf32, #tpu.memory_space<vmem>>, vector<1x1x28x32xf32>
      %123 = vector.shape_cast %122 : vector<1x1x28x32xf32> to vector<1x28x32xf32>
      %124 = vector.shape_cast %123 : vector<1x28x32xf32> to vector<28x32xf32>
      %cst_99 = arith.constant dense<0.000000e+00> : vector<28x64xf32>
      %125 = tpu.matmul %124, %15, %cst_99 {dimension_numbers = #tpu.dot_dimension_numbers<[1], [0], [0], [1], [0, 0, 1, 1], [], []>} : vector<28x32xf32>, vector<32x64xf32>, vector<28x64xf32> -> vector<28x64xf32>
      %126 = arith.addf %119, %125 : vector<28x64xf32>
      %c3_i32_100 = arith.constant 3 : i32
      %127 = arith.addi %35, %c3_i32_100 : i32
      %c0_101 = arith.constant 0 : index
      %128 = arith.index_cast %127 : i32 to index
      %c2_102 = arith.constant 2 : index
      %c0_103 = arith.constant 0 : index
      %129 = vector.load %arg1[%c0_101, %128, %c2_102, %c0_103] : memref<1x30x30x32xf32, #tpu.memory_space<vmem>>, vector<1x1x28x32xf32>
      %130 = vector.shape_cast %129 : vector<1x1x28x32xf32> to vector<1x28x32xf32>
      %131 = vector.shape_cast %130 : vector<1x28x32xf32> to vector<28x32xf32>
      %cst_104 = arith.constant dense<0.000000e+00> : vector<28x64xf32>
      %132 = tpu.matmul %131, %17, %cst_104 {dimension_numbers = #tpu.dot_dimension_numbers<[1], [0], [0], [1], [0, 0, 1, 1], [], []>} : vector<28x32xf32>, vector<32x64xf32>, vector<28x64xf32> -> vector<28x64xf32>
      %133 = arith.addf %126, %132 : vector<28x64xf32>
      %134 = arith.maximumf %110, %133 : vector<28x64xf32>
      %135 = vector.broadcast %18 : vector<1x64xf32> to vector<28x64xf32>
      %136 = arith.addf %134, %135 : vector<28x64xf32>
      %cst_105 = arith.constant 0.000000e+00 : f32
      %137 = vector.broadcast %cst_105 : f32 to vector<28x64xf32>
      %138 = arith.maximumf %136, %137 : vector<28x64xf32>
      %cst_106 = arith.constant dense<0.000000e+00> : vector<14x64xf32>
      %139 = tpu.matmul %25, %138, %cst_106 {dimension_numbers = #tpu.dot_dimension_numbers<[1], [0], [0], [1], [0, 0, 1, 1], [], []>} : vector<14x28xf32>, vector<28x64xf32>, vector<14x64xf32> -> vector<14x64xf32>
      %cst_107 = arith.constant dense<0.000000e+00> : vector<14x64xf32>
      %140 = tpu.matmul %32, %138, %cst_107 {dimension_numbers = #tpu.dot_dimension_numbers<[1], [0], [0], [1], [0, 0, 1, 1], [], []>} : vector<14x28xf32>, vector<28x64xf32>, vector<14x64xf32> -> vector<14x64xf32>
      %141 = arith.maximumf %139, %140 : vector<14x64xf32>
      %142 = vector.shape_cast %141 : vector<14x64xf32> to vector<1x14x64xf32>
      %c0_108 = arith.constant 0 : index
      %143 = arith.index_cast %arg5 : i32 to index
      %c0_109 = arith.constant 0 : index
      %c0_110 = arith.constant 0 : index
      %144 = vector.load %arg4[%c0_108, %143, %c0_109, %c0_110] : memref<1x14x14x64xf32, #tpu.memory_space<vmem>>, vector<1x1x14x64xf32>
      %145 = vector.shape_cast %144 : vector<1x1x14x64xf32> to vector<1x14x64xf32>
      %146 = vector.shape_cast %142 : vector<1x14x64xf32> to vector<1x1x14x64xf32>
      tpu.vector_store %arg4[%c0_108, %143, %c0_109, %c0_110], %146 {strides = array<i32>} : memref<1x14x14x64xf32, #tpu.memory_space<vmem>>, vector<1x1x14x64xf32>,
    }
    %c14_i32_37 = arith.constant 14 : i32
    return
  }
  func.func @transform_0(%arg0: i32) -> (i32, i32, i32, i32) {
    %c0_i32 = arith.constant 0 : i32
    %c0_i32_0 = arith.constant 0 : i32
    %c0_i32_1 = arith.constant 0 : i32
    %c0_i32_2 = arith.constant 0 : i32
    return %arg0, %c0_i32, %c0_i32_0, %c0_i32_1 : i32, i32, i32, i32
  }
  func.func @transform_1(%arg0: i32) -> (i32, i32, i32, i32) {
    %c0_i32 = arith.constant 0 : i32
    %c0_i32_0 = arith.constant 0 : i32
    %c0_i32_1 = arith.constant 0 : i32
    %c0_i32_2 = arith.constant 0 : i32
    %c0_i32_3 = arith.constant 0 : i32
    return %c0_i32, %c0_i32_0, %c0_i32_1, %c0_i32_2 : i32, i32, i32, i32
  }
  func.func @transform_2(%arg0: i32) -> (i32, i32) {
    %c0_i32 = arith.constant 0 : i32
    %c0_i32_0 = arith.constant 0 : i32
    %c0_i32_1 = arith.constant 0 : i32
    return %c0_i32, %c0_i32_0 : i32, i32
  }
  func.func @transform_3(%arg0: i32) -> (i32, i32, i32, i32) {
    %c0_i32 = arith.constant 0 : i32
    %c0_i32_0 = arith.constant 0 : i32
    %c0_i32_1 = arith.constant 0 : i32
    %c0_i32_2 = arith.constant 0 : i32
    return %arg0, %c0_i32, %c0_i32_0, %c0_i32_1 : i32, i32, i32, i32
  }
}

module attributes {stable_mosaic.version = 11 : i64} {
  func.func @_conv3x3_relu_pool_kernel(%arg0: i32, %arg1: memref<1x126x126x3xf32, #tpu.memory_space<vmem>>, %arg2: memref<3x3x3x16xf32, #tpu.memory_space<vmem>>, %arg3: memref<1x16xf32, #tpu.memory_space<vmem>>, %arg4: memref<1x62x62x16xf32, #tpu.memory_space<vmem>>) attributes {dimension_semantics = [#tpu.dimension_semantics<parallel>], iteration_bounds = array<i64: 2>, scalar_prefetch = 0 : i64, scratch_operands = 0 : i64, tpu.core_type = #tpu.core_type<tc>, window_params = [{transform_indices = @transform_0, window_bounds = array<i64: 1, 126, 126, 3>}, {pipeline_mode = #tpu.pipeline_mode<synchronous>, transform_indices = @transform_1, window_bounds = array<i64: 3, 3, 3, 16>}, {pipeline_mode = #tpu.pipeline_mode<synchronous>, transform_indices = @transform_2, window_bounds = array<i64: 1, 16>}, {transform_indices = @transform_3, window_bounds = array<i64: 1, 62, 62, 16>}]} {
    %c0 = arith.constant 0 : index
    %c0_0 = arith.constant 0 : index
    %c0_1 = arith.constant 0 : index
    %c0_2 = arith.constant 0 : index
    %0 = vector.load %arg2[%c0, %c0_0, %c0_1, %c0_2] : memref<3x3x3x16xf32, #tpu.memory_space<vmem>>, vector<1x1x3x16xf32>
    %1 = vector.shape_cast %0 : vector<1x1x3x16xf32> to vector<3x16xf32>
    %c0_3 = arith.constant 0 : index
    %c1 = arith.constant 1 : index
    %c0_4 = arith.constant 0 : index
    %c0_5 = arith.constant 0 : index
    %2 = vector.load %arg2[%c0_3, %c1, %c0_4, %c0_5] : memref<3x3x3x16xf32, #tpu.memory_space<vmem>>, vector<1x1x3x16xf32>
    %3 = vector.shape_cast %2 : vector<1x1x3x16xf32> to vector<3x16xf32>
    %c0_6 = arith.constant 0 : index
    %c2 = arith.constant 2 : index
    %c0_7 = arith.constant 0 : index
    %c0_8 = arith.constant 0 : index
    %4 = vector.load %arg2[%c0_6, %c2, %c0_7, %c0_8] : memref<3x3x3x16xf32, #tpu.memory_space<vmem>>, vector<1x1x3x16xf32>
    %5 = vector.shape_cast %4 : vector<1x1x3x16xf32> to vector<3x16xf32>
    %c1_9 = arith.constant 1 : index
    %c0_10 = arith.constant 0 : index
    %c0_11 = arith.constant 0 : index
    %c0_12 = arith.constant 0 : index
    %6 = vector.load %arg2[%c1_9, %c0_10, %c0_11, %c0_12] : memref<3x3x3x16xf32, #tpu.memory_space<vmem>>, vector<1x1x3x16xf32>
    %7 = vector.shape_cast %6 : vector<1x1x3x16xf32> to vector<3x16xf32>
    %c1_13 = arith.constant 1 : index
    %c1_14 = arith.constant 1 : index
    %c0_15 = arith.constant 0 : index
    %c0_16 = arith.constant 0 : index
    %8 = vector.load %arg2[%c1_13, %c1_14, %c0_15, %c0_16] : memref<3x3x3x16xf32, #tpu.memory_space<vmem>>, vector<1x1x3x16xf32>
    %9 = vector.shape_cast %8 : vector<1x1x3x16xf32> to vector<3x16xf32>
    %c1_17 = arith.constant 1 : index
    %c2_18 = arith.constant 2 : index
    %c0_19 = arith.constant 0 : index
    %c0_20 = arith.constant 0 : index
    %10 = vector.load %arg2[%c1_17, %c2_18, %c0_19, %c0_20] : memref<3x3x3x16xf32, #tpu.memory_space<vmem>>, vector<1x1x3x16xf32>
    %11 = vector.shape_cast %10 : vector<1x1x3x16xf32> to vector<3x16xf32>
    %c2_21 = arith.constant 2 : index
    %c0_22 = arith.constant 0 : index
    %c0_23 = arith.constant 0 : index
    %c0_24 = arith.constant 0 : index
    %12 = vector.load %arg2[%c2_21, %c0_22, %c0_23, %c0_24] : memref<3x3x3x16xf32, #tpu.memory_space<vmem>>, vector<1x1x3x16xf32>
    %13 = vector.shape_cast %12 : vector<1x1x3x16xf32> to vector<3x16xf32>
    %c2_25 = arith.constant 2 : index
    %c1_26 = arith.constant 1 : index
    %c0_27 = arith.constant 0 : index
    %c0_28 = arith.constant 0 : index
    %14 = vector.load %arg2[%c2_25, %c1_26, %c0_27, %c0_28] : memref<3x3x3x16xf32, #tpu.memory_space<vmem>>, vector<1x1x3x16xf32>
    %15 = vector.shape_cast %14 : vector<1x1x3x16xf32> to vector<3x16xf32>
    %c2_29 = arith.constant 2 : index
    %c2_30 = arith.constant 2 : index
    %c0_31 = arith.constant 0 : index
    %c0_32 = arith.constant 0 : index
    %16 = vector.load %arg2[%c2_29, %c2_30, %c0_31, %c0_32] : memref<3x3x3x16xf32, #tpu.memory_space<vmem>>, vector<1x1x3x16xf32>
    %17 = vector.shape_cast %16 : vector<1x1x3x16xf32> to vector<3x16xf32>
    %c0_33 = arith.constant 0 : index
    %c0_34 = arith.constant 0 : index
    %18 = vector.load %arg3[%c0_33, %c0_34] : memref<1x16xf32, #tpu.memory_space<vmem>>, vector<1x16xf32>
    %19 = tpu.iota {dimensions = array<i32: 0>} : vector<62x124xi32>
    %20 = tpu.iota {dimensions = array<i32: 1>} : vector<62x124xi32>
    %c2_i32 = arith.constant 2 : i32
    %21 = vector.broadcast %c2_i32 : i32 to vector<62x124xi32>
    %22 = arith.muli %21, %19 : vector<62x124xi32>
    %23 = arith.cmpi eq, %20, %22 : vector<62x124xi32>
    %24 = arith.extui %23 : vector<62x124xi1> to vector<62x124xi32>
    %25 = arith.sitofp %24 : vector<62x124xi32> to vector<62x124xf32>
    %c2_i32_35 = arith.constant 2 : i32
    %26 = vector.broadcast %c2_i32_35 : i32 to vector<62x124xi32>
    %27 = arith.muli %26, %19 : vector<62x124xi32>
    %c1_i32 = arith.constant 1 : i32
    %28 = vector.broadcast %c1_i32 : i32 to vector<62x124xi32>
    %29 = arith.addi %27, %28 : vector<62x124xi32>
    %30 = arith.cmpi eq, %20, %29 : vector<62x124xi32>
    %31 = arith.extui %30 : vector<62x124xi1> to vector<62x124xi32>
    %32 = arith.sitofp %31 : vector<62x124xi32> to vector<62x124xf32>
    %c0_i32 = arith.constant 0 : i32
    %c62_i32 = arith.constant 62 : i32
    %33 = arith.addi %c0_i32, %c62_i32 : i32
    %c1_i32_36 = arith.constant 1 : i32
    scf.for %arg5 = %c0_i32 to %33 step %c1_i32_36  : i32 {
      %c2_i32_38 = arith.constant 2 : i32
      %34 = arith.muli %c2_i32_38, %arg5 : i32
      %35 = tpu.assume_multiple %34, 2 : i32
      %cst = arith.constant 0.000000e+00 : f32
      %36 = vector.broadcast %cst : f32 to vector<124x16xf32>
      %cst_39 = arith.constant 0.000000e+00 : f32
      %37 = vector.broadcast %cst_39 : f32 to vector<124x16xf32>
      %c0_i32_40 = arith.constant 0 : i32
      %38 = arith.addi %35, %c0_i32_40 : i32
      %c0_41 = arith.constant 0 : index
      %39 = arith.index_cast %38 : i32 to index
      %c0_42 = arith.constant 0 : index
      %c0_43 = arith.constant 0 : index
      %40 = vector.load %arg1[%c0_41, %39, %c0_42, %c0_43] : memref<1x126x126x3xf32, #tpu.memory_space<vmem>>, vector<1x1x124x3xf32>
      %41 = vector.shape_cast %40 : vector<1x1x124x3xf32> to vector<1x124x3xf32>
      %42 = vector.shape_cast %41 : vector<1x124x3xf32> to vector<124x3xf32>
      %cst_44 = arith.constant dense<0.000000e+00> : vector<124x16xf32>
      %43 = tpu.matmul %42, %1, %cst_44 {dimension_numbers = #tpu.dot_dimension_numbers<[1], [0], [0], [1], [0, 0, 1, 1], [], []>} : vector<124x3xf32>, vector<3x16xf32>, vector<124x16xf32> -> vector<124x16xf32>
      %44 = arith.addf %36, %43 : vector<124x16xf32>
      %c0_i32_45 = arith.constant 0 : i32
      %45 = arith.addi %35, %c0_i32_45 : i32
      %c0_46 = arith.constant 0 : index
      %46 = arith.index_cast %45 : i32 to index
      %c1_47 = arith.constant 1 : index
      %c0_48 = arith.constant 0 : index
      %47 = vector.load %arg1[%c0_46, %46, %c1_47, %c0_48] : memref<1x126x126x3xf32, #tpu.memory_space<vmem>>, vector<1x1x124x3xf32>
      %48 = vector.shape_cast %47 : vector<1x1x124x3xf32> to vector<1x124x3xf32>
      %49 = vector.shape_cast %48 : vector<1x124x3xf32> to vector<124x3xf32>
      %cst_49 = arith.constant dense<0.000000e+00> : vector<124x16xf32>
      %50 = tpu.matmul %49, %3, %cst_49 {dimension_numbers = #tpu.dot_dimension_numbers<[1], [0], [0], [1], [0, 0, 1, 1], [], []>} : vector<124x3xf32>, vector<3x16xf32>, vector<124x16xf32> -> vector<124x16xf32>
      %51 = arith.addf %44, %50 : vector<124x16xf32>
      %c0_i32_50 = arith.constant 0 : i32
      %52 = arith.addi %35, %c0_i32_50 : i32
      %c0_51 = arith.constant 0 : index
      %53 = arith.index_cast %52 : i32 to index
      %c2_52 = arith.constant 2 : index
      %c0_53 = arith.constant 0 : index
      %54 = vector.load %arg1[%c0_51, %53, %c2_52, %c0_53] : memref<1x126x126x3xf32, #tpu.memory_space<vmem>>, vector<1x1x124x3xf32>
      %55 = vector.shape_cast %54 : vector<1x1x124x3xf32> to vector<1x124x3xf32>
      %56 = vector.shape_cast %55 : vector<1x124x3xf32> to vector<124x3xf32>
      %cst_54 = arith.constant dense<0.000000e+00> : vector<124x16xf32>
      %57 = tpu.matmul %56, %5, %cst_54 {dimension_numbers = #tpu.dot_dimension_numbers<[1], [0], [0], [1], [0, 0, 1, 1], [], []>} : vector<124x3xf32>, vector<3x16xf32>, vector<124x16xf32> -> vector<124x16xf32>
      %58 = arith.addf %51, %57 : vector<124x16xf32>
      %c1_i32_55 = arith.constant 1 : i32
      %59 = arith.addi %35, %c1_i32_55 : i32
      %c0_56 = arith.constant 0 : index
      %60 = arith.index_cast %59 : i32 to index
      %c0_57 = arith.constant 0 : index
      %c0_58 = arith.constant 0 : index
      %61 = vector.load %arg1[%c0_56, %60, %c0_57, %c0_58] : memref<1x126x126x3xf32, #tpu.memory_space<vmem>>, vector<1x1x124x3xf32>
      %62 = vector.shape_cast %61 : vector<1x1x124x3xf32> to vector<1x124x3xf32>
      %63 = vector.shape_cast %62 : vector<1x124x3xf32> to vector<124x3xf32>
      %cst_59 = arith.constant dense<0.000000e+00> : vector<124x16xf32>
      %64 = tpu.matmul %63, %7, %cst_59 {dimension_numbers = #tpu.dot_dimension_numbers<[1], [0], [0], [1], [0, 0, 1, 1], [], []>} : vector<124x3xf32>, vector<3x16xf32>, vector<124x16xf32> -> vector<124x16xf32>
      %65 = arith.addf %58, %64 : vector<124x16xf32>
      %cst_60 = arith.constant dense<0.000000e+00> : vector<124x16xf32>
      %66 = tpu.matmul %63, %1, %cst_60 {dimension_numbers = #tpu.dot_dimension_numbers<[1], [0], [0], [1], [0, 0, 1, 1], [], []>} : vector<124x3xf32>, vector<3x16xf32>, vector<124x16xf32> -> vector<124x16xf32>
      %67 = arith.addf %37, %66 : vector<124x16xf32>
      %c1_i32_61 = arith.constant 1 : i32
      %68 = arith.addi %35, %c1_i32_61 : i32
      %c0_62 = arith.constant 0 : index
      %69 = arith.index_cast %68 : i32 to index
      %c1_63 = arith.constant 1 : index
      %c0_64 = arith.constant 0 : index
      %70 = vector.load %arg1[%c0_62, %69, %c1_63, %c0_64] : memref<1x126x126x3xf32, #tpu.memory_space<vmem>>, vector<1x1x124x3xf32>
      %71 = vector.shape_cast %70 : vector<1x1x124x3xf32> to vector<1x124x3xf32>
      %72 = vector.shape_cast %71 : vector<1x124x3xf32> to vector<124x3xf32>
      %cst_65 = arith.constant dense<0.000000e+00> : vector<124x16xf32>
      %73 = tpu.matmul %72, %9, %cst_65 {dimension_numbers = #tpu.dot_dimension_numbers<[1], [0], [0], [1], [0, 0, 1, 1], [], []>} : vector<124x3xf32>, vector<3x16xf32>, vector<124x16xf32> -> vector<124x16xf32>
      %74 = arith.addf %65, %73 : vector<124x16xf32>
      %cst_66 = arith.constant dense<0.000000e+00> : vector<124x16xf32>
      %75 = tpu.matmul %72, %3, %cst_66 {dimension_numbers = #tpu.dot_dimension_numbers<[1], [0], [0], [1], [0, 0, 1, 1], [], []>} : vector<124x3xf32>, vector<3x16xf32>, vector<124x16xf32> -> vector<124x16xf32>
      %76 = arith.addf %67, %75 : vector<124x16xf32>
      %c1_i32_67 = arith.constant 1 : i32
      %77 = arith.addi %35, %c1_i32_67 : i32
      %c0_68 = arith.constant 0 : index
      %78 = arith.index_cast %77 : i32 to index
      %c2_69 = arith.constant 2 : index
      %c0_70 = arith.constant 0 : index
      %79 = vector.load %arg1[%c0_68, %78, %c2_69, %c0_70] : memref<1x126x126x3xf32, #tpu.memory_space<vmem>>, vector<1x1x124x3xf32>
      %80 = vector.shape_cast %79 : vector<1x1x124x3xf32> to vector<1x124x3xf32>
      %81 = vector.shape_cast %80 : vector<1x124x3xf32> to vector<124x3xf32>
      %cst_71 = arith.constant dense<0.000000e+00> : vector<124x16xf32>
      %82 = tpu.matmul %81, %11, %cst_71 {dimension_numbers = #tpu.dot_dimension_numbers<[1], [0], [0], [1], [0, 0, 1, 1], [], []>} : vector<124x3xf32>, vector<3x16xf32>, vector<124x16xf32> -> vector<124x16xf32>
      %83 = arith.addf %74, %82 : vector<124x16xf32>
      %cst_72 = arith.constant dense<0.000000e+00> : vector<124x16xf32>
      %84 = tpu.matmul %81, %5, %cst_72 {dimension_numbers = #tpu.dot_dimension_numbers<[1], [0], [0], [1], [0, 0, 1, 1], [], []>} : vector<124x3xf32>, vector<3x16xf32>, vector<124x16xf32> -> vector<124x16xf32>
      %85 = arith.addf %76, %84 : vector<124x16xf32>
      %c2_i32_73 = arith.constant 2 : i32
      %86 = arith.addi %35, %c2_i32_73 : i32
      %c0_74 = arith.constant 0 : index
      %87 = arith.index_cast %86 : i32 to index
      %c0_75 = arith.constant 0 : index
      %c0_76 = arith.constant 0 : index
      %88 = vector.load %arg1[%c0_74, %87, %c0_75, %c0_76] : memref<1x126x126x3xf32, #tpu.memory_space<vmem>>, vector<1x1x124x3xf32>
      %89 = vector.shape_cast %88 : vector<1x1x124x3xf32> to vector<1x124x3xf32>
      %90 = vector.shape_cast %89 : vector<1x124x3xf32> to vector<124x3xf32>
      %cst_77 = arith.constant dense<0.000000e+00> : vector<124x16xf32>
      %91 = tpu.matmul %90, %13, %cst_77 {dimension_numbers = #tpu.dot_dimension_numbers<[1], [0], [0], [1], [0, 0, 1, 1], [], []>} : vector<124x3xf32>, vector<3x16xf32>, vector<124x16xf32> -> vector<124x16xf32>
      %92 = arith.addf %83, %91 : vector<124x16xf32>
      %cst_78 = arith.constant dense<0.000000e+00> : vector<124x16xf32>
      %93 = tpu.matmul %90, %7, %cst_78 {dimension_numbers = #tpu.dot_dimension_numbers<[1], [0], [0], [1], [0, 0, 1, 1], [], []>} : vector<124x3xf32>, vector<3x16xf32>, vector<124x16xf32> -> vector<124x16xf32>
      %94 = arith.addf %85, %93 : vector<124x16xf32>
      %c2_i32_79 = arith.constant 2 : i32
      %95 = arith.addi %35, %c2_i32_79 : i32
      %c0_80 = arith.constant 0 : index
      %96 = arith.index_cast %95 : i32 to index
      %c1_81 = arith.constant 1 : index
      %c0_82 = arith.constant 0 : index
      %97 = vector.load %arg1[%c0_80, %96, %c1_81, %c0_82] : memref<1x126x126x3xf32, #tpu.memory_space<vmem>>, vector<1x1x124x3xf32>
      %98 = vector.shape_cast %97 : vector<1x1x124x3xf32> to vector<1x124x3xf32>
      %99 = vector.shape_cast %98 : vector<1x124x3xf32> to vector<124x3xf32>
      %cst_83 = arith.constant dense<0.000000e+00> : vector<124x16xf32>
      %100 = tpu.matmul %99, %15, %cst_83 {dimension_numbers = #tpu.dot_dimension_numbers<[1], [0], [0], [1], [0, 0, 1, 1], [], []>} : vector<124x3xf32>, vector<3x16xf32>, vector<124x16xf32> -> vector<124x16xf32>
      %101 = arith.addf %92, %100 : vector<124x16xf32>
      %cst_84 = arith.constant dense<0.000000e+00> : vector<124x16xf32>
      %102 = tpu.matmul %99, %9, %cst_84 {dimension_numbers = #tpu.dot_dimension_numbers<[1], [0], [0], [1], [0, 0, 1, 1], [], []>} : vector<124x3xf32>, vector<3x16xf32>, vector<124x16xf32> -> vector<124x16xf32>
      %103 = arith.addf %94, %102 : vector<124x16xf32>
      %c2_i32_85 = arith.constant 2 : i32
      %104 = arith.addi %35, %c2_i32_85 : i32
      %c0_86 = arith.constant 0 : index
      %105 = arith.index_cast %104 : i32 to index
      %c2_87 = arith.constant 2 : index
      %c0_88 = arith.constant 0 : index
      %106 = vector.load %arg1[%c0_86, %105, %c2_87, %c0_88] : memref<1x126x126x3xf32, #tpu.memory_space<vmem>>, vector<1x1x124x3xf32>
      %107 = vector.shape_cast %106 : vector<1x1x124x3xf32> to vector<1x124x3xf32>
      %108 = vector.shape_cast %107 : vector<1x124x3xf32> to vector<124x3xf32>
      %cst_89 = arith.constant dense<0.000000e+00> : vector<124x16xf32>
      %109 = tpu.matmul %108, %17, %cst_89 {dimension_numbers = #tpu.dot_dimension_numbers<[1], [0], [0], [1], [0, 0, 1, 1], [], []>} : vector<124x3xf32>, vector<3x16xf32>, vector<124x16xf32> -> vector<124x16xf32>
      %110 = arith.addf %101, %109 : vector<124x16xf32>
      %cst_90 = arith.constant dense<0.000000e+00> : vector<124x16xf32>
      %111 = tpu.matmul %108, %11, %cst_90 {dimension_numbers = #tpu.dot_dimension_numbers<[1], [0], [0], [1], [0, 0, 1, 1], [], []>} : vector<124x3xf32>, vector<3x16xf32>, vector<124x16xf32> -> vector<124x16xf32>
      %112 = arith.addf %103, %111 : vector<124x16xf32>
      %c3_i32 = arith.constant 3 : i32
      %113 = arith.addi %35, %c3_i32 : i32
      %c0_91 = arith.constant 0 : index
      %114 = arith.index_cast %113 : i32 to index
      %c0_92 = arith.constant 0 : index
      %c0_93 = arith.constant 0 : index
      %115 = vector.load %arg1[%c0_91, %114, %c0_92, %c0_93] : memref<1x126x126x3xf32, #tpu.memory_space<vmem>>, vector<1x1x124x3xf32>
      %116 = vector.shape_cast %115 : vector<1x1x124x3xf32> to vector<1x124x3xf32>
      %117 = vector.shape_cast %116 : vector<1x124x3xf32> to vector<124x3xf32>
      %cst_94 = arith.constant dense<0.000000e+00> : vector<124x16xf32>
      %118 = tpu.matmul %117, %13, %cst_94 {dimension_numbers = #tpu.dot_dimension_numbers<[1], [0], [0], [1], [0, 0, 1, 1], [], []>} : vector<124x3xf32>, vector<3x16xf32>, vector<124x16xf32> -> vector<124x16xf32>
      %119 = arith.addf %112, %118 : vector<124x16xf32>
      %c3_i32_95 = arith.constant 3 : i32
      %120 = arith.addi %35, %c3_i32_95 : i32
      %c0_96 = arith.constant 0 : index
      %121 = arith.index_cast %120 : i32 to index
      %c1_97 = arith.constant 1 : index
      %c0_98 = arith.constant 0 : index
      %122 = vector.load %arg1[%c0_96, %121, %c1_97, %c0_98] : memref<1x126x126x3xf32, #tpu.memory_space<vmem>>, vector<1x1x124x3xf32>
      %123 = vector.shape_cast %122 : vector<1x1x124x3xf32> to vector<1x124x3xf32>
      %124 = vector.shape_cast %123 : vector<1x124x3xf32> to vector<124x3xf32>
      %cst_99 = arith.constant dense<0.000000e+00> : vector<124x16xf32>
      %125 = tpu.matmul %124, %15, %cst_99 {dimension_numbers = #tpu.dot_dimension_numbers<[1], [0], [0], [1], [0, 0, 1, 1], [], []>} : vector<124x3xf32>, vector<3x16xf32>, vector<124x16xf32> -> vector<124x16xf32>
      %126 = arith.addf %119, %125 : vector<124x16xf32>
      %c3_i32_100 = arith.constant 3 : i32
      %127 = arith.addi %35, %c3_i32_100 : i32
      %c0_101 = arith.constant 0 : index
      %128 = arith.index_cast %127 : i32 to index
      %c2_102 = arith.constant 2 : index
      %c0_103 = arith.constant 0 : index
      %129 = vector.load %arg1[%c0_101, %128, %c2_102, %c0_103] : memref<1x126x126x3xf32, #tpu.memory_space<vmem>>, vector<1x1x124x3xf32>
      %130 = vector.shape_cast %129 : vector<1x1x124x3xf32> to vector<1x124x3xf32>
      %131 = vector.shape_cast %130 : vector<1x124x3xf32> to vector<124x3xf32>
      %cst_104 = arith.constant dense<0.000000e+00> : vector<124x16xf32>
      %132 = tpu.matmul %131, %17, %cst_104 {dimension_numbers = #tpu.dot_dimension_numbers<[1], [0], [0], [1], [0, 0, 1, 1], [], []>} : vector<124x3xf32>, vector<3x16xf32>, vector<124x16xf32> -> vector<124x16xf32>
      %133 = arith.addf %126, %132 : vector<124x16xf32>
      %134 = arith.maximumf %110, %133 : vector<124x16xf32>
      %135 = vector.broadcast %18 : vector<1x16xf32> to vector<124x16xf32>
      %136 = arith.addf %134, %135 : vector<124x16xf32>
      %cst_105 = arith.constant 0.000000e+00 : f32
      %137 = vector.broadcast %cst_105 : f32 to vector<124x16xf32>
      %138 = arith.maximumf %136, %137 : vector<124x16xf32>
      %cst_106 = arith.constant dense<0.000000e+00> : vector<62x16xf32>
      %139 = tpu.matmul %25, %138, %cst_106 {dimension_numbers = #tpu.dot_dimension_numbers<[1], [0], [0], [1], [0, 0, 1, 1], [], []>} : vector<62x124xf32>, vector<124x16xf32>, vector<62x16xf32> -> vector<62x16xf32>
      %cst_107 = arith.constant dense<0.000000e+00> : vector<62x16xf32>
      %140 = tpu.matmul %32, %138, %cst_107 {dimension_numbers = #tpu.dot_dimension_numbers<[1], [0], [0], [1], [0, 0, 1, 1], [], []>} : vector<62x124xf32>, vector<124x16xf32>, vector<62x16xf32> -> vector<62x16xf32>
      %141 = arith.maximumf %139, %140 : vector<62x16xf32>
      %142 = vector.shape_cast %141 : vector<62x16xf32> to vector<1x62x16xf32>
      %c0_108 = arith.constant 0 : index
      %143 = arith.index_cast %arg5 : i32 to index
      %c0_109 = arith.constant 0 : index
      %c0_110 = arith.constant 0 : index
      %144 = vector.load %arg4[%c0_108, %143, %c0_109, %c0_110] : memref<1x62x62x16xf32, #tpu.memory_space<vmem>>, vector<1x1x62x16xf32>
      %145 = vector.shape_cast %144 : vector<1x1x62x16xf32> to vector<1x62x16xf32>
      %146 = vector.shape_cast %142 : vector<1x62x16xf32> to vector<1x1x62x16xf32>
      tpu.vector_store %arg4[%c0_108, %143, %c0_109, %c0_110], %146 {strides = array<i32>} : memref<1x62x62x16xf32, #tpu.memory_space<vmem>>, vector<1x1x62x16xf32>,
    }
    %c62_i32_37 = arith.constant 62 : i32
    return
  }
  func.func @transform_0(%arg0: i32) -> (i32, i32, i32, i32) {
    %c0_i32 = arith.constant 0 : i32
    %c0_i32_0 = arith.constant 0 : i32
    %c0_i32_1 = arith.constant 0 : i32
    %c0_i32_2 = arith.constant 0 : i32
    return %arg0, %c0_i32, %c0_i32_0, %c0_i32_1 : i32, i32, i32, i32
  }
  func.func @transform_1(%arg0: i32) -> (i32, i32, i32, i32) {
    %c0_i32 = arith.constant 0 : i32
    %c0_i32_0 = arith.constant 0 : i32
    %c0_i32_1 = arith.constant 0 : i32
    %c0_i32_2 = arith.constant 0 : i32
    %c0_i32_3 = arith.constant 0 : i32
    return %c0_i32, %c0_i32_0, %c0_i32_1, %c0_i32_2 : i32, i32, i32, i32
  }
  func.func @transform_2(%arg0: i32) -> (i32, i32) {
    %c0_i32 = arith.constant 0 : i32
    %c0_i32_0 = arith.constant 0 : i32
    %c0_i32_1 = arith.constant 0 : i32
    return %c0_i32, %c0_i32_0 : i32, i32
  }
  func.func @transform_3(%arg0: i32) -> (i32, i32, i32, i32) {
    %c0_i32 = arith.constant 0 : i32
    %c0_i32_0 = arith.constant 0 : i32
    %c0_i32_1 = arith.constant 0 : i32
    %c0_i32_2 = arith.constant 0 : i32
    return %arg0, %c0_i32, %c0_i32_0, %c0_i32_1 : i32, i32, i32, i32
  }
}

module attributes {stable_mosaic.version = 11 : i64} {
  func.func @_mlp_kernel(%arg0: i32, %arg1: memref<2x1792xf32, #tpu.memory_space<vmem>>, %arg2: memref<1792x128xf32, #tpu.memory_space<vmem>>, %arg3: memref<1x128xf32, #tpu.memory_space<vmem>>, %arg4: memref<128x2xf32, #tpu.memory_space<vmem>>, %arg5: memref<1x2xf32, #tpu.memory_space<vmem>>, %arg6: memref<2x2xf32, #tpu.memory_space<vmem>>, %arg7: memref<2x128xf32, #tpu.memory_space<vmem>>) attributes {dimension_semantics = [#tpu.dimension_semantics<arbitrary>], iteration_bounds = array<i64: 7>, scalar_prefetch = 0 : i64, scratch_operands = 1 : i64, tpu.core_type = #tpu.core_type<tc>, window_params = [{transform_indices = @transform_0, window_bounds = array<i64: 2, 1792>}, {transform_indices = @transform_1, window_bounds = array<i64: 1792, 128>}, {pipeline_mode = #tpu.pipeline_mode<synchronous>, transform_indices = @transform_2, window_bounds = array<i64: 1, 128>}, {pipeline_mode = #tpu.pipeline_mode<synchronous>, transform_indices = @transform_3, window_bounds = array<i64: 128, 2>}, {pipeline_mode = #tpu.pipeline_mode<synchronous>, transform_indices = @transform_4, window_bounds = array<i64: 1, 2>}, {pipeline_mode = #tpu.pipeline_mode<synchronous>, transform_indices = @transform_5, window_bounds = array<i64: 2, 2>}]} {
    %c0_i32 = arith.constant 0 : i32
    %0 = arith.cmpi eq, %arg0, %c0_i32 : i32
    %1 = arith.extui %0 : i1 to i32
    %c0_i32_0 = arith.constant 0 : i32
    %2 = arith.cmpi ne, %1, %c0_i32_0 : i32
    scf.if %2 {
      %cst_9 = arith.constant 0.000000e+00 : f32
      %12 = vector.broadcast %cst_9 : f32 to vector<2x128xf32>
      %c0_10 = arith.constant 0 : index
      %c0_11 = arith.constant 0 : index
      %13 = vector.load %arg7[%c0_10, %c0_11] : memref<2x128xf32, #tpu.memory_space<vmem>>, vector<2x128xf32>
      tpu.vector_store %arg7[%c0_10, %c0_11], %12 {strides = array<i32>} : memref<2x128xf32, #tpu.memory_space<vmem>>, vector<2x128xf32>,
    } else {
    }
    %c0 = arith.constant 0 : index
    %c0_1 = arith.constant 0 : index
    %3 = vector.load %arg7[%c0, %c0_1] : memref<2x128xf32, #tpu.memory_space<vmem>>, vector<2x128xf32>
    %c0_2 = arith.constant 0 : index
    %c0_3 = arith.constant 0 : index
    %4 = vector.load %arg1[%c0_2, %c0_3] : memref<2x1792xf32, #tpu.memory_space<vmem>>, vector<2x1792xf32>
    %c0_4 = arith.constant 0 : index
    %c0_5 = arith.constant 0 : index
    %5 = vector.load %arg2[%c0_4, %c0_5] : memref<1792x128xf32, #tpu.memory_space<vmem>>, vector<1792x128xf32>
    %cst = arith.constant dense<0.000000e+00> : vector<2x128xf32>
    %6 = tpu.matmul %4, %5, %cst {dimension_numbers = #tpu.dot_dimension_numbers<[1], [0], [0], [1], [0, 0, 1, 1], [], []>} : vector<2x1792xf32>, vector<1792x128xf32>, vector<2x128xf32> -> vector<2x128xf32>
    %7 = arith.addf %3, %6 : vector<2x128xf32>
    %c0_6 = arith.constant 0 : index
    %c0_7 = arith.constant 0 : index
    %8 = vector.load %arg7[%c0_6, %c0_7] : memref<2x128xf32, #tpu.memory_space<vmem>>, vector<2x128xf32>
    tpu.vector_store %arg7[%c0_6, %c0_7], %7 {strides = array<i32>} : memref<2x128xf32, #tpu.memory_space<vmem>>, vector<2x128xf32>,
    %c6_i32 = arith.constant 6 : i32
    %9 = arith.cmpi eq, %arg0, %c6_i32 : i32
    %10 = arith.extui %9 : i1 to i32
    %c0_i32_8 = arith.constant 0 : i32
    %11 = arith.cmpi ne, %10, %c0_i32_8 : i32
    scf.if %11 {
      %c0_9 = arith.constant 0 : index
      %c0_10 = arith.constant 0 : index
      %12 = vector.load %arg7[%c0_9, %c0_10] : memref<2x128xf32, #tpu.memory_space<vmem>>, vector<2x128xf32>
      %c0_11 = arith.constant 0 : index
      %c0_12 = arith.constant 0 : index
      %13 = vector.load %arg3[%c0_11, %c0_12] : memref<1x128xf32, #tpu.memory_space<vmem>>, vector<1x128xf32>
      %14 = vector.broadcast %13 : vector<1x128xf32> to vector<2x128xf32>
      %15 = arith.addf %12, %14 : vector<2x128xf32>
      %cst_13 = arith.constant 0.000000e+00 : f32
      %16 = vector.broadcast %cst_13 : f32 to vector<2x128xf32>
      %17 = arith.maximumf %15, %16 : vector<2x128xf32>
      %c0_14 = arith.constant 0 : index
      %c0_15 = arith.constant 0 : index
      %18 = vector.load %arg4[%c0_14, %c0_15] : memref<128x2xf32, #tpu.memory_space<vmem>>, vector<128x2xf32>
      %cst_16 = arith.constant dense<0.000000e+00> : vector<2x2xf32>
      %19 = tpu.matmul %17, %18, %cst_16 {dimension_numbers = #tpu.dot_dimension_numbers<[1], [0], [0], [1], [0, 0, 1, 1], [], []>} : vector<2x128xf32>, vector<128x2xf32>, vector<2x2xf32> -> vector<2x2xf32>
      %c0_17 = arith.constant 0 : index
      %c0_18 = arith.constant 0 : index
      %20 = vector.load %arg5[%c0_17, %c0_18] : memref<1x2xf32, #tpu.memory_space<vmem>>, vector<1x2xf32>
      %21 = vector.broadcast %20 : vector<1x2xf32> to vector<2x2xf32>
      %22 = arith.addf %19, %21 : vector<2x2xf32>
      %c0_19 = arith.constant 0 : index
      %c0_20 = arith.constant 0 : index
      %23 = vector.load %arg6[%c0_19, %c0_20] : memref<2x2xf32, #tpu.memory_space<vmem>>, vector<2x2xf32>
      tpu.vector_store %arg6[%c0_19, %c0_20], %22 {strides = array<i32>} : memref<2x2xf32, #tpu.memory_space<vmem>>, vector<2x2xf32>,
    } else {
    }
    return
  }
  func.func @transform_0(%arg0: i32) -> (i32, i32) {
    %c0_i32 = arith.constant 0 : i32
    %c0_i32_0 = arith.constant 0 : i32
    return %c0_i32, %arg0 : i32, i32
  }
  func.func @transform_1(%arg0: i32) -> (i32, i32) {
    %c0_i32 = arith.constant 0 : i32
    %c0_i32_0 = arith.constant 0 : i32
    return %arg0, %c0_i32 : i32, i32
  }
  func.func @transform_2(%arg0: i32) -> (i32, i32) {
    %c0_i32 = arith.constant 0 : i32
    %c0_i32_0 = arith.constant 0 : i32
    %c0_i32_1 = arith.constant 0 : i32
    return %c0_i32, %c0_i32_0 : i32, i32
  }
  func.func @transform_3(%arg0: i32) -> (i32, i32) {
    %c0_i32 = arith.constant 0 : i32
    %c0_i32_0 = arith.constant 0 : i32
    %c0_i32_1 = arith.constant 0 : i32
    return %c0_i32, %c0_i32_0 : i32, i32
  }
  func.func @transform_4(%arg0: i32) -> (i32, i32) {
    %c0_i32 = arith.constant 0 : i32
    %c0_i32_0 = arith.constant 0 : i32
    %c0_i32_1 = arith.constant 0 : i32
    return %c0_i32, %c0_i32_0 : i32, i32
  }
  func.func @transform_5(%arg0: i32) -> (i32, i32) {
    %c0_i32 = arith.constant 0 : i32
    %c0_i32_0 = arith.constant 0 : i32
    %c0_i32_1 = arith.constant 0 : i32
    return %c0_i32, %c0_i32_0 : i32, i32
  }
}

</mosaic_0001>

<llo_original>
// kernel: cnn1_forward.5
$region0: #{cnn1_forward.5}
  #allocation0 [shape = 'u32[]', space=smem, size = 0x4, offset = 0x4, fixed_abs, tag = 'smem constant byte address 0x4 - core index']
  #allocation1 [shape = 'u32[144,128]{1,0:T(1,128)}', space=vmem, size = 0x12000, scoped, tag = 'internal scratch']
  %s0 = inlined_call_operand.vmem [shape: f32[2,62,62,16], index: 0, kind: input, shape index: {}]
  %s1 = inlined_call_operand.vmem [shape: f32[3,3,16,32], index: 1, kind: input, shape index: {}]
  %s2 = inlined_call_operand.vmem [shape: f32[1,32], index: 2, kind: input, shape index: {}]
  %s3 = inlined_call_operand.vmem [shape: f32[2,30,30,32], index: 3, kind: output, shape index: {}]
  %s4 = sld [smem:[#allocation0]]
  $region52: #{cnn1_forward.5} parent=0
    _
  %s6 = ssub.s32 1, %s4
  %s7 = scalar_select 0, %s6, %s4
  loop: start=0, step=1, limit=4
  $region2: #{cnn1_forward.5} parent=0 // loop_pre_header
    _
  $region3: #{cnn1_forward.5} parent=0 // loop_header
    %s9 = sphi 0, %s13
    %p10 = scmp.ge.s32.totalorder %s9, 4
    %s19 = sphi 0, %s21
    %s22 = sphi 0, %s19
    %s23 = sphi 0, %s22
    %s39 = sphi 0, %s23
    %s43 = sphi 0, %s43
    %s45 = sphi 0, %s43
    %s46 = sphi 0, %s45
    %s60 = sphi 0, %s46
    %s64 = sphi 0, %s64
    %s66 = sphi 0, %s64
    %s67 = sphi 0, %s66
    %s81 = sphi 0, %s67
    %s87 = sphi 0, %s89
    %s90 = sphi 0, %s87
    %s91 = sphi 0, %s90
    %s107 = sphi 0, %s91
  $region4: #{cnn1_forward.5} parent=0 // loop_header_branch
    %12 = sbr.rel (%p10) target = $region8
  $region5: #{cnn1_forward.5} parent=0 // loop_body
    %s14 = ssub.s32 %s9, 1
    %s15 = ssub.s32 %s9, 2
    %s16 = sadd.s32 %s9, 1
    %s17 = ssub.s32 %s9, %s16
    %p18 = scmp.eq.s32.totalorder %s17, 0
    %s20 = sadd.s32 %s19, 1
    %s21 = scalar_select %p18, %s19, %s20
    %p24 = pneg %p18
    %p25 = scmp.eq.s32.totalorder %s9, 1
    %p26 = por %p24, %p25
    %p27 = scmp.ne.s32.totalorder %s19, %s22
    %p28 = scmp.eq.s32.totalorder %s9, 0
    %p29 = por %p27, %p28
    %p30 = scmp.ne.s32.totalorder %s19, %s22
    %p31 = scmp.eq.s32.totalorder %s14, 1
    %p32 = por %p30, %p31
    %p33 = scmp.ne.s32.totalorder %s22, %s23
    %p34 = scmp.eq.s32.totalorder %s14, 0
    %p35 = por %p33, %p34
    %p36 = scmp.ne.s32.totalorder %s22, %s23
    %p37 = scmp.eq.s32.totalorder %s15, 1
    %p38 = por %p36, %p37
    %p40 = scmp.ne.s32.totalorder %s23, %s39
    %p41 = scmp.eq.s32.totalorder %s15, 0
    %p42 = por %p40, %p41
    %s44 = sadd.s32 %s43, 1
    %p47 = scmp.eq.s32.totalorder %s9, 1
    %p48 = scmp.ne.s32.totalorder %s43, %s45
    %p49 = scmp.eq.s32.totalorder %s9, 0
    %p50 = por %p48, %p49
    %p51 = scmp.ne.s32.totalorder %s43, %s45
    %p52 = scmp.eq.s32.totalorder %s14, 1
    %p53 = por %p51, %p52
    %p54 = scmp.ne.s32.totalorder %s45, %s46
    %p55 = scmp.eq.s32.totalorder %s14, 0
    %p56 = por %p54, %p55
    %p57 = scmp.ne.s32.totalorder %s45, %s46
    %p58 = scmp.eq.s32.totalorder %s15, 1
    %p59 = por %p57, %p58
    %p61 = scmp.ne.s32.totalorder %s46, %s60
    %p62 = scmp.eq.s32.totalorder %s15, 0
    %p63 = por %p61, %p62
    %s65 = sadd.s32 %s64, 1
    %p68 = scmp.eq.s32.totalorder %s9, 1
    %p69 = scmp.ne.s32.totalorder %s64, %s66
    %p70 = scmp.eq.s32.totalorder %s9, 0
    %p71 = por %p69, %p70
    %p72 = scmp.ne.s32.totalorder %s64, %s66
    %p73 = scmp.eq.s32.totalorder %s14, 1
    %p74 = por %p72, %p73
    %p75 = scmp.ne.s32.totalorder %s66, %s67
    %p76 = scmp.eq.s32.totalorder %s14, 0
    %p77 = por %p75, %p76
    %p78 = scmp.ne.s32.totalorder %s66, %s67
    %p79 = scmp.eq.s32.totalorder %s15, 1
    %p80 = por %p78, %p79
    %p82 = scmp.ne.s32.totalorder %s67, %s81
    %p83 = scmp.eq.s32.totalorder %s15, 0
    %p84 = por %p82, %p83
    %s85 = ssub.s32 %s9, %s16
    %p86 = scmp.eq.s32.totalorder %s85, 0
    %s88 = sadd.s32 %s87, 1
    %s89 = scalar_select %p86, %s87, %s88
    %p92 = pneg %p86
    %p93 = scmp.eq.s32.totalorder %s9, 1
    %p94 = por %p92, %p93
    %p95 = scmp.ne.s32.totalorder %s87, %s90
    %p96 = scmp.eq.s32.totalorder %s9, 0
    %p97 = por %p95, %p96
    %p98 = scmp.ne.s32.totalorder %s87, %s90
    %p99 = scmp.eq.s32.totalorder %s14, 1
    %p100 = por %p98, %p99
    %p101 = scmp.ne.s32.totalorder %s90, %s91
    %p102 = scmp.eq.s32.totalorder %s14, 0
    %p103 = por %p101, %p102
    %p104 = scmp.ne.s32.totalorder %s90, %s91
    %p105 = scmp.eq.s32.totalorder %s15, 1
    %p106 = por %p104, %p105
    %p108 = scmp.ne.s32.totalorder %s91, %s107
    %p109 = scmp.eq.s32.totalorder %s15, 0
    %p110 = por %p108, %p109
    %p111 = scmp.le.s32.totalorder 1, %s9
    %p112 = scmp.lt.s32.totalorder %s9, 3
    %p113 = pnand %p111, %p112
    %p114 = pneg %p113
    // Predicated region
    $region9: #{cnn1_forward.5} parent=5 // pred_check
      _
    $region10: #{cnn1_forward.5} parent=5 // pred_check_branch
      %116 = sbr.rel (%p113) target = $region12
    $region11: #{cnn1_forward.5} parent=5 // pred_region
      %s117 = ssub.s32 %s9, 1
      // Predicated region
      $region13: #{cnn1_forward.5} parent=11 // pred_check
        %p118 = pneg %p56
      $region14: #{cnn1_forward.5} parent=11 // pred_check_branch
        %120 = sbr.rel (%p118) target = $region16
      $region15: #{cnn1_forward.5} parent=11 // pred_region
        _
      $region16: #{cnn1_forward.5} parent=11 // pred_fallthru
        _
      // Predicated region
      $region17: #{cnn1_forward.5} parent=11 // pred_check
        %p121 = pneg %p77
      $region18: #{cnn1_forward.5} parent=11 // pred_check_branch
        %123 = sbr.rel (%p121) target = $region20
      $region19: #{cnn1_forward.5} parent=11 // pred_region
        _
      $region20: #{cnn1_forward.5} parent=11 // pred_fallthru
        _
    $region12: #{cnn1_forward.5} parent=5 // pred_fallthru
      _
    %p124 = scmp.lt.s32.totalorder %s9, 2
    // Predicated region
    $region21: #{cnn1_forward.5} parent=5 // pred_check
      %p125 = pneg %p124
    $region22: #{cnn1_forward.5} parent=5 // pred_check_branch
      %127 = sbr.rel (%p125) target = $region24
    $region23: #{cnn1_forward.5} parent=5 // pred_region
      // Predicated region
      $region25: #{cnn1_forward.5} parent=23 // pred_check
        %p128 = pneg %p29
      $region26: #{cnn1_forward.5} parent=23 // pred_check_branch
        %130 = sbr.rel (%p128) target = $region28
      $region27: #{cnn1_forward.5} parent=23 // pred_region
        %p131 = scmp.lt.s32.totalorder %s9, 1
        %s132 = scalar_select %p131, %s9, 1
        %s133 = smul.addr %s132, 496
        %s134 = smul.addr %s133, 8
        %s135 = scalar_lea.vmem %s0, %s134
      $region28: #{cnn1_forward.5} parent=23 // pred_fallthru
        _
    $region24: #{cnn1_forward.5} parent=5 // pred_fallthru
      _
    %p136 = scmp.le.s32.totalorder 1, %s9
    %p137 = scmp.lt.s32.totalorder %s9, 3
    %p138 = pnand %p136, %p137
    %p139 = pneg %p138
    // Predicated region
    $region29: #{cnn1_forward.5} parent=5 // pred_check
      _
    $region30: #{cnn1_forward.5} parent=5 // pred_check_branch
      %141 = sbr.rel (%p138) target = $region32
    $region31: #{cnn1_forward.5} parent=5 // pred_region
      %s142 = ssub.s32 %s9, 1
      %p143 = scmp.lt.s32.totalorder %s14, 1
      %s144 = scalar_select %p143, %s14, 1
      %s145 = smul.addr %s144, 496
      %s146 = smul.addr %s145, 8
      %s147 = scalar_lea.vmem %s0, %s146
      %p148 = pneg %p35
      %p149 = pneg %p32
      %p150 = pneg %p56
      %p151 = pneg %p53
      %p152 = pneg %p77
      %p153 = pneg %p74
      %p154 = pneg %p103
      %p155 = pneg %p100
      %p156 = scmp.lt.s32.totalorder %s14, 1
      %s157 = scalar_select %p156, %s14, 1
      %s158 = smul.addr %s157, 120
      %s159 = smul.addr %s158, 8
      %s160 = scalar_lea.vmem %s3, %s159
      %p161 = scmp.lt.s32.totalorder %s14, 1
      %s162 = scalar_select %p161, %s14, 1
      %s163 = smul.addr %s162, 496
      %s164 = smul.addr %s163, 8
      %s165 = scalar_lea.vmem %s0, %s164
      %p166 = scmp.lt.s32.totalorder %s14, 1
      %s167 = scalar_select %p166, %s14, 1
      %s168 = smul.addr %s167, 120
      %s169 = smul.addr %s168, 8
      %s170 = scalar_lea.vmem %s3, %s169
      %v171 = vld [vmem:[%s1] sm:$0xff]
      %v172 = vld [vmem:[%s1 + $0x8] sm:$0xff]
      %s173 = scalar_lea.vmem %s1, 16
      %v174 = vld [vmem:[%s173] sm:$0xff]
      %v175 = vld [vmem:[%s173 + $0x8] sm:$0xff]
      %s176 = scalar_lea.vmem %s1, 32
      %v177 = vld [vmem:[%s176] sm:$0xff]
      %v178 = vld [vmem:[%s176 + $0x8] sm:$0xff]
      %s179 = scalar_lea.vmem %s1, 48
      %v180 = vld [vmem:[%s179] sm:$0xff]
      %v181 = vld [vmem:[%s179 + $0x8] sm:$0xff]
      %s182 = scalar_lea.vmem %s1, 64
      %v183 = vld [vmem:[%s182] sm:$0xff]
      %v184 = vld [vmem:[%s182 + $0x8] sm:$0xff]
      %s185 = scalar_lea.vmem %s1, 80
      %v186 = vld [vmem:[%s185] sm:$0xff]
      %v187 = vld [vmem:[%s185 + $0x8] sm:$0xff]
      %s188 = scalar_lea.vmem %s1, 96
      %v189 = vld [vmem:[%s188] sm:$0xff]
      %v190 = vld [vmem:[%s188 + $0x8] sm:$0xff]
      %s191 = scalar_lea.vmem %s1, 112
      %v192 = vld [vmem:[%s191] sm:$0xff]
      %v193 = vld [vmem:[%s191 + $0x8] sm:$0xff]
      %s194 = scalar_lea.vmem %s1, 128
      %v195 = vld [vmem:[%s194] sm:$0xff]
      %v196 = vld [vmem:[%s194 + $0x8] sm:$0xff]
      %v197 = vld [vmem:[%s2] sm:$0x1]
      %v198 = vlaneseq
      %v199 = vshrl.u32 %v198, 7
      %v200 = vadd.s32 %v199, 8
      %v201 = vadd.s32 %v199, 16
      %v202 = vadd.s32 %v199, 24
      %v203 = vlaneseq
      %v204 = vand.u32 %v203, 127
      %v205 = vmul.u32 %v199, 2
      %v206 = vmul.u32 %v200, 2
      %v207 = vmul.u32 %v201, 2
      %v208 = vmul.u32 %v202, 2
      %vm209 = vcmp.eq.s32.totalorder %v204, %v205
      %vm210 = vcmp.eq.s32.totalorder %v204, %v206
      %vm211 = vcmp.eq.s32.totalorder %v204, %v207
      %vm212 = vcmp.eq.s32.totalorder %v204, %v208
      %v213 = vsel %vm209, 1, 0
      %v214 = vsel %vm210, 1, 0
      %v215 = vsel %vm211, 1, 0
      %v216 = vsel %vm212, 1, 0
      %v217 = vcvt.s32.f32 %v213
      %v218 = vcvt.s32.f32 %v214
      %v219 = vcvt.s32.f32 %v215
      %v220 = vcvt.s32.f32 %v216
      %v221 = vadd.s32 %v205, 1
      %v222 = vadd.s32 %v206, 1
      %v223 = vadd.s32 %v207, 1
      %v224 = vadd.s32 %v208, 1
      %vm225 = vcmp.eq.s32.totalorder %v204, %v221
      %vm226 = vcmp.eq.s32.totalorder %v204, %v222
      %vm227 = vcmp.eq.s32.totalorder %v204, %v223
      %vm228 = vcmp.eq.s32.totalorder %v204, %v224
      %v229 = vsel %vm225, 1, 0
      %v230 = vsel %vm226, 1, 0
      %v231 = vsel %vm227, 1, 0
      %v232 = vsel %vm228, 1, 0
      %v233 = vcvt.s32.f32 %v229
      %v234 = vcvt.s32.f32 %v230
      %v235 = vcvt.s32.f32 %v231
      %v236 = vcvt.s32.f32 %v232
      loop: start=0, step=1, limit=30
      $region33: #{cnn1_forward.5} parent=31 // loop_pre_header
        _
      $region34: #{cnn1_forward.5} parent=31 // loop_header
        %s238 = sphi 0, %s242
        %p239 = scmp.ge.s32.totalorder %s238, 30
      $region35: #{cnn1_forward.5} parent=31 // loop_header_branch
        %241 = sbr.rel (%p239) target = $region39
      $region36: #{cnn1_forward.5} parent=31 // loop_body
        %s243 = smul.u32 %s238, 2
        %s244 = smul.u32 %s243, 64
        %s245 = scalar_lea.vmem %s165, %s244
        %v246 = vld [vmem:[%s245] sm:$0xff]
        %v247 = vld [vmem:[%s245 + $0x8] sm:$0xff]
        %v248 = vld [vmem:[%s245 + $0x10] sm:$0xff]
        %v249 = vld [vmem:[%s245 + $0x18] sm:$0xff]
        %v250 = vld [vmem:[%s245 + $0x20] sm:$0xff]
        %v251 = vld [vmem:[%s245 + $0x28] sm:$0xff]
        %v252 = vld [vmem:[%s245 + $0x30] sm:$0xff]
        %v253 = vld [vmem:[%s245 + $0x38] sm:$0xf]
        %v254 = vld [vmem:[%s245 + $0x1] sm:$0xff]
        %v255 = vld [vmem:[%s245 + $0x9] sm:$0xff]
        %v256 = vld [vmem:[%s245 + $0x11] sm:$0xff]
        %v257 = vld [vmem:[%s245 + $0x19] sm:$0xff]
        %v258 = vld [vmem:[%s245 + $0x21] sm:$0xff]
        %v259 = vld [vmem:[%s245 + $0x29] sm:$0xff]
        %v260 = vld [vmem:[%s245 + $0x31] sm:$0xff]
        %v261 = vld [vmem:[%s245 + $0x39] sm:$0xf]
        %vm262 = vcmask 130048
        %v264 = vsel %vm262, %v254, 0
        %v267 = vsel %vm262, %v255, 0
        %v270 = vsel %vm262, %v256, 0
        %v273 = vsel %vm262, %v257, 0
        %v276 = vsel %vm262, %v258, 0
        %v279 = vsel %vm262, %v259, 0
        %v282 = vsel %vm262, %v260, 0
        %v285 = vsel %vm262, %v261, 0
        %287 = vmatprep.subr.mxu0 0.0
        %288 = vmatpush1.msra.mxu0 0.0
        %289 = vmatprep.subr.mxu0 0.0
        %290 = vmatpush1.msra.mxu0 0.0
        %291 = vmatprep.subr.mxu0 0.0
        %292 = vmatpush1.msra.mxu0 0.0
        %293 = vmatprep.subr.mxu0 0.0
        %294 = vmatpush1.msra.mxu0 0.0
        %295 = vmatprep.subr.mxu0 0.0
        %296 = vmatpush1.msra.mxu0 0.0
        %297 = vmatprep.subr.mxu0 0.0
        %298 = vmatpush1.msra.mxu0 0.0
        %299 = vmatprep.subr.mxu0 0.0
        %300 = vmatpush1.msra.mxu0 0.0
        %301 = vmatprep.subr.mxu0 0.0
        %302 = vmatpush1.msra.mxu0 0.0
        %303 = vmatprep.subr.mxu0 0.0
        %304 = vmatpush1.msra.mxu0 0.0
        %305 = vmatprep.subr.mxu0 0.0
        %306 = vmatpush1.msra.mxu0 0.0
        %307 = vmatprep.subr.mxu0 0.0
        %308 = vmatpush1.msra.mxu0 0.0
        %309 = vmatprep.subr.mxu0 0.0
        %310 = vmatpush1.msra.mxu0 0.0
        %311 = vmatprep.subr.mxu0 0.0
        %312 = vmatpush1.msra.mxu0 0.0
        %313 = vmatprep.subr.mxu0 0.0
        %314 = vmatpush1.msra.mxu0 0.0
        %315 = vmatprep.subr.mxu0 0.0
        %316 = vmatpush1.msra.mxu0 %v175
        %317 = vmatprep.subr.mxu0 0.0
        %318 = vmatpush1.msra.mxu0 %v174
        %319 = vmatprep.subr.mxu0 0.0
        %320 = vmatpush2.msra.mxu0 0.0
        %321 = vmatprep.subr.mxu0 0.0
        %322 = vmatpush2.msra.mxu0 0.0
        %323 = vmatprep.subr.mxu0 0.0
        %324 = vmatpush2.msra.mxu0 0.0
        %325 = vmatprep.subr.mxu0 0.0
        %326 = vmatpush2.msra.mxu0 0.0
        %327 = vmatprep.subr.mxu0 0.0
        %328 = vmatpush2.msra.mxu0 0.0
        %329 = vmatprep.subr.mxu0 0.0
        %330 = vmatpush2.msra.mxu0 0.0
        %331 = vmatprep.subr.mxu0 0.0
        %332 = vmatpush2.msra.mxu0 0.0
        %333 = vmatprep.subr.mxu0 0.0
        %334 = vmatpush2.msra.mxu0 0.0
        %335 = vmatprep.subr.mxu0 0.0
        %336 = vmatpush2.msra.mxu0 0.0
        %337 = vmatprep.subr.mxu0 0.0
        %338 = vmatpush2.msra.mxu0 0.0
        %339 = vmatprep.subr.mxu0 0.0
        %340 = vmatpush2.msra.mxu0 0.0
        %341 = vmatprep.subr.mxu0 0.0
        %342 = vmatpush2.msra.mxu0 0.0
        %343 = vmatprep.subr.mxu0 0.0
        %344 = vmatpush2.msra.mxu0 0.0
        %345 = vmatprep.subr.mxu0 0.0
        %346 = vmatpush2.msra.mxu0 0.0
        %347 = vmatprep.subr.mxu0 0.0
        %348 = vmatpush2.msra.mxu0 0.0
        %349 = vmatprep.subr.mxu0 0.0
        %350 = vmatpush2.msra.mxu0 0.0
        %351 = vmatprep.mubr.f32.mxu0 0.0
        %352 = vmatmul.mubr.f32.gmra.mxu0 %v264
        %v353 = vpop.f32.mrf.mxu0
        %v354 = vadd.f32 0.0, %v353
        %v355 = vpop.f32.mrf.mxu0
        %356 = vmatprep.mubr.f32.mxu0 0.0
        %357 = vmatmul.mubr.f32.gmra.mxu0 %v267
        %v358 = vpop.f32.mrf.mxu0
        %v359 = vadd.f32 0.0, %v358
        %v360 = vpop.f32.mrf.mxu0
        %361 = vmatprep.mubr.f32.mxu0 0.0
        %362 = vmatmul.mubr.f32.gmra.mxu0 %v270
        %v363 = vpop.f32.mrf.mxu0
        %v364 = vadd.f32 0.0, %v363
        %v365 = vpop.f32.mrf.mxu0
        %366 = vmatprep.mubr.f32.mxu0 0.0
        %367 = vmatmul.mubr.f32.gmra.mxu0 %v273
        %v368 = vpop.f32.mrf.mxu0
        %v369 = vadd.f32 0.0, %v368
        %v370 = vpop.f32.mrf.mxu0
        %371 = vmatprep.mubr.f32.mxu0 0.0
        %372 = vmatmul.mubr.f32.gmra.mxu0 %v276
        %v373 = vpop.f32.mrf.mxu0
        %v374 = vadd.f32 0.0, %v373
        %v375 = vpop.f32.mrf.mxu0
        %376 = vmatprep.mubr.f32.mxu0 0.0
        %377 = vmatmul.mubr.f32.gmra.mxu0 %v279
        %v378 = vpop.f32.mrf.mxu0
        %v379 = vadd.f32 0.0, %v378
        %v380 = vpop.f32.mrf.mxu0
        %381 = vmatprep.mubr.f32.mxu0 0.0
        %382 = vmatmul.mubr.f32.gmra.mxu0 %v282
        %v383 = vpop.f32.mrf.mxu0
        %v384 = vadd.f32 0.0, %v383
        %v385 = vpop.f32.mrf.mxu0
        %386 = vmatprep.mubr.f32.mxu0 0.0
        %387 = vmatmul.mubr.f32.gmra.mxu0 %v285
        %v388 = vpop.f32.mrf.mxu0
        %v389 = vadd.f32 0.0, %v388
        %v390 = vpop.f32.mrf.mxu0
        %391 = vdwg.mxu0
        %v393 = vsel %vm262, %v246, 0
        %v396 = vsel %vm262, %v247, 0
        %v399 = vsel %vm262, %v248, 0
        %v402 = vsel %vm262, %v249, 0
        %v405 = vsel %vm262, %v250, 0
        %v408 = vsel %vm262, %v251, 0
        %v411 = vsel %vm262, %v252, 0
        %v414 = vsel %vm262, %v253, 0
        %416 = vmatprep.subr.mxu0 0.0
        %417 = vmatpush1.msra.mxu0 0.0
        %418 = vmatprep.subr.mxu0 0.0
        %419 = vmatpush1.msra.mxu0 0.0
        %420 = vmatprep.subr.mxu0 0.0
        %421 = vmatpush1.msra.mxu0 0.0
        %422 = vmatprep.subr.mxu0 0.0
        %423 = vmatpush1.msra.mxu0 0.0
        %424 = vmatprep.subr.mxu0 0.0
        %425 = vmatpush1.msra.mxu0 0.0
        %426 = vmatprep.subr.mxu0 0.0
        %427 = vmatpush1.msra.mxu0 0.0
        %428 = vmatprep.subr.mxu0 0.0
        %429 = vmatpush1.msra.mxu0 0.0
        %430 = vmatprep.subr.mxu0 0.0
        %431 = vmatpush1.msra.mxu0 0.0
        %432 = vmatprep.subr.mxu0 0.0
        %433 = vmatpush1.msra.mxu0 0.0
        %434 = vmatprep.subr.mxu0 0.0
        %435 = vmatpush1.msra.mxu0 0.0
        %436 = vmatprep.subr.mxu0 0.0
        %437 = vmatpush1.msra.mxu0 0.0
        %438 = vmatprep.subr.mxu0 0.0
        %439 = vmatpush1.msra.mxu0 0.0
        %440 = vmatprep.subr.mxu0 0.0
        %441 = vmatpush1.msra.mxu0 0.0
        %442 = vmatprep.subr.mxu0 0.0
        %443 = vmatpush1.msra.mxu0 0.0
        %444 = vmatprep.subr.mxu0 0.0
        %445 = vmatpush1.msra.mxu0 %v172
        %446 = vmatprep.subr.mxu0 0.0
        %447 = vmatpush1.msra.mxu0 %v171
        %448 = vmatprep.subr.mxu0 0.0
        %449 = vmatpush2.msra.mxu0 0.0
        %450 = vmatprep.subr.mxu0 0.0
        %451 = vmatpush2.msra.mxu0 0.0
        %452 = vmatprep.subr.mxu0 0.0
        %453 = vmatpush2.msra.mxu0 0.0
        %454 = vmatprep.subr.mxu0 0.0
        %455 = vmatpush2.msra.mxu0 0.0
        %456 = vmatprep.subr.mxu0 0.0
        %457 = vmatpush2.msra.mxu0 0.0
        %458 = vmatprep.subr.mxu0 0.0
        %459 = vmatpush2.msra.mxu0 0.0
        %460 = vmatprep.subr.mxu0 0.0
        %461 = vmatpush2.msra.mxu0 0.0
        %462 = vmatprep.subr.mxu0 0.0
        %463 = vmatpush2.msra.mxu0 0.0
        %464 = vmatprep.subr.mxu0 0.0
        %465 = vmatpush2.msra.mxu0 0.0
        %466 = vmatprep.subr.mxu0 0.0
        %467 = vmatpush2.msra.mxu0 0.0
        %468 = vmatprep.subr.mxu0 0.0
        %469 = vmatpush2.msra.mxu0 0.0
        %470 = vmatprep.subr.mxu0 0.0
        %471 = vmatpush2.msra.mxu0 0.0
        %472 = vmatprep.subr.mxu0 0.0
        %473 = vmatpush2.msra.mxu0 0.0
        %474 = vmatprep.subr.mxu0 0.0
        %475 = vmatpush2.msra.mxu0 0.0
        %476 = vmatprep.subr.mxu0 0.0
        %477 = vmatpush2.msra.mxu0 0.0
        %478 = vmatprep.subr.mxu0 0.0
        %479 = vmatpush2.msra.mxu0 0.0
        %480 = vmatprep.mubr.f32.mxu0 0.0
        %481 = vmatmul.mubr.f32.gmra.mxu0 %v393
        %v482 = vpop.f32.mrf.mxu0
        %v483 = vadd.f32 %v354, %v482
        %v484 = vpop.f32.mrf.mxu0
        %485 = vmatprep.mubr.f32.mxu0 0.0
        %486 = vmatmul.mubr.f32.gmra.mxu0 %v396
        %v487 = vpop.f32.mrf.mxu0
        %v488 = vadd.f32 %v359, %v487
        %v489 = vpop.f32.mrf.mxu0
        %490 = vmatprep.mubr.f32.mxu0 0.0
        %491 = vmatmul.mubr.f32.gmra.mxu0 %v399
        %v492 = vpop.f32.mrf.mxu0
        %v493 = vadd.f32 %v364, %v492
        %v494 = vpop.f32.mrf.mxu0
        %495 = vmatprep.mubr.f32.mxu0 0.0
        %496 = vmatmul.mubr.f32.gmra.mxu0 %v402
        %v497 = vpop.f32.mrf.mxu0
        %v498 = vadd.f32 %v369, %v497
        %v499 = vpop.f32.mrf.mxu0
        %500 = vmatprep.mubr.f32.mxu0 0.0
        %501 = vmatmul.mubr.f32.gmra.mxu0 %v405
        %v502 = vpop.f32.mrf.mxu0
        %v503 = vadd.f32 %v374, %v502
        %v504 = vpop.f32.mrf.mxu0
        %505 = vmatprep.mubr.f32.mxu0 0.0
        %506 = vmatmul.mubr.f32.gmra.mxu0 %v408
        %v507 = vpop.f32.mrf.mxu0
        %v508 = vadd.f32 %v379, %v507
        %v509 = vpop.f32.mrf.mxu0
        %510 = vmatprep.mubr.f32.mxu0 0.0
        %511 = vmatmul.mubr.f32.gmra.mxu0 %v411
        %v512 = vpop.f32.mrf.mxu0
        %v513 = vadd.f32 %v384, %v512
        %v514 = vpop.f32.mrf.mxu0
        %515 = vmatprep.mubr.f32.mxu0 0.0
        %516 = vmatmul.mubr.f32.gmra.mxu0 %v414
        %v517 = vpop.f32.mrf.mxu0
        %v518 = vadd.f32 %v389, %v517
        %v519 = vpop.f32.mrf.mxu0
        %520 = vdwg.mxu0
        %v521 = vld [vmem:[%s245 + $0x2] sm:$0xff]
        %v522 = vld [vmem:[%s245 + $0xa] sm:$0xff]
        %v523 = vld [vmem:[%s245 + $0x12] sm:$0xff]
        %v524 = vld [vmem:[%s245 + $0x1a] sm:$0xff]
        %v525 = vld [vmem:[%s245 + $0x22] sm:$0xff]
        %v526 = vld [vmem:[%s245 + $0x2a] sm:$0xff]
        %v527 = vld [vmem:[%s245 + $0x32] sm:$0xff]
        %v528 = vld [vmem:[%s245 + $0x3a] sm:$0xf]
        %v530 = vsel %vm262, %v521, 0
        %v533 = vsel %vm262, %v522, 0
        %v536 = vsel %vm262, %v523, 0
        %v539 = vsel %vm262, %v524, 0
        %v542 = vsel %vm262, %v525, 0
        %v545 = vsel %vm262, %v526, 0
        %v548 = vsel %vm262, %v527, 0
        %v551 = vsel %vm262, %v528, 0
        %553 = vmatprep.subr.mxu0 0.0
        %554 = vmatpush1.msra.mxu0 0.0
        %555 = vmatprep.subr.mxu0 0.0
        %556 = vmatpush1.msra.mxu0 0.0
        %557 = vmatprep.subr.mxu0 0.0
        %558 = vmatpush1.msra.mxu0 0.0
        %559 = vmatprep.subr.mxu0 0.0
        %560 = vmatpush1.msra.mxu0 0.0
        %561 = vmatprep.subr.mxu0 0.0
        %562 = vmatpush1.msra.mxu0 0.0
        %563 = vmatprep.subr.mxu0 0.0
        %564 = vmatpush1.msra.mxu0 0.0
        %565 = vmatprep.subr.mxu0 0.0
        %566 = vmatpush1.msra.mxu0 0.0
        %567 = vmatprep.subr.mxu0 0.0
        %568 = vmatpush1.msra.mxu0 0.0
        %569 = vmatprep.subr.mxu0 0.0
        %570 = vmatpush1.msra.mxu0 0.0
        %571 = vmatprep.subr.mxu0 0.0
        %572 = vmatpush1.msra.mxu0 0.0
        %573 = vmatprep.subr.mxu0 0.0
        %574 = vmatpush1.msra.mxu0 0.0
        %575 = vmatprep.subr.mxu0 0.0
        %576 = vmatpush1.msra.mxu0 0.0
        %577 = vmatprep.subr.mxu0 0.0
        %578 = vmatpush1.msra.mxu0 0.0
        %579 = vmatprep.subr.mxu0 0.0
        %580 = vmatpush1.msra.mxu0 0.0
        %581 = vmatprep.subr.mxu0 0.0
        %582 = vmatpush1.msra.mxu0 %v178
        %583 = vmatprep.subr.mxu0 0.0
        %584 = vmatpush1.msra.mxu0 %v177
        %585 = vmatprep.subr.mxu0 0.0
        %586 = vmatpush2.msra.mxu0 0.0
        %587 = vmatprep.subr.mxu0 0.0
        %588 = vmatpush2.msra.mxu0 0.0
        %589 = vmatprep.subr.mxu0 0.0
        %590 = vmatpush2.msra.mxu0 0.0
        %591 = vmatprep.subr.mxu0 0.0
        %592 = vmatpush2.msra.mxu0 0.0
        %593 = vmatprep.subr.mxu0 0.0
        %594 = vmatpush2.msra.mxu0 0.0
        %595 = vmatprep.subr.mxu0 0.0
        %596 = vmatpush2.msra.mxu0 0.0
        %597 = vmatprep.subr.mxu0 0.0
        %598 = vmatpush2.msra.mxu0 0.0
        %599 = vmatprep.subr.mxu0 0.0
        %600 = vmatpush2.msra.mxu0 0.0
        %601 = vmatprep.subr.mxu0 0.0
        %602 = vmatpush2.msra.mxu0 0.0
        %603 = vmatprep.subr.mxu0 0.0
        %604 = vmatpush2.msra.mxu0 0.0
        %605 = vmatprep.subr.mxu0 0.0
        %606 = vmatpush2.msra.mxu0 0.0
        %607 = vmatprep.subr.mxu0 0.0
        %608 = vmatpush2.msra.mxu0 0.0
        %609 = vmatprep.subr.mxu0 0.0
        %610 = vmatpush2.msra.mxu0 0.0
        %611 = vmatprep.subr.mxu0 0.0
        %612 = vmatpush2.msra.mxu0 0.0
        %613 = vmatprep.subr.mxu0 0.0
        %614 = vmatpush2.msra.mxu0 0.0
        %615 = vmatprep.subr.mxu0 0.0
        %616 = vmatpush2.msra.mxu0 0.0
        %617 = vmatprep.mubr.f32.mxu0 0.0
        %618 = vmatmul.mubr.f32.gmra.mxu0 %v530
        %v619 = vpop.f32.mrf.mxu0
        %v620 = vadd.f32 0.0, %v619
        %v621 = vpop.f32.mrf.mxu0
        %622 = vmatprep.mubr.f32.mxu0 0.0
        %623 = vmatmul.mubr.f32.gmra.mxu0 %v533
        %v624 = vpop.f32.mrf.mxu0
        %v625 = vadd.f32 0.0, %v624
        %v626 = vpop.f32.mrf.mxu0
        %627 = vmatprep.mubr.f32.mxu0 0.0
        %628 = vmatmul.mubr.f32.gmra.mxu0 %v536
        %v629 = vpop.f32.mrf.mxu0
        %v630 = vadd.f32 0.0, %v629
        %v631 = vpop.f32.mrf.mxu0
        %632 = vmatprep.mubr.f32.mxu0 0.0
        %633 = vmatmul.mubr.f32.gmra.mxu0 %v539
        %v634 = vpop.f32.mrf.mxu0
        %v635 = vadd.f32 0.0, %v634
        %v636 = vpop.f32.mrf.mxu0
        %637 = vmatprep.mubr.f32.mxu0 0.0
        %638 = vmatmul.mubr.f32.gmra.mxu0 %v542
        %v639 = vpop.f32.mrf.mxu0
        %v640 = vadd.f32 0.0, %v639
        %v641 = vpop.f32.mrf.mxu0
        %642 = vmatprep.mubr.f32.mxu0 0.0
        %643 = vmatmul.mubr.f32.gmra.mxu0 %v545
        %v644 = vpop.f32.mrf.mxu0
        %v645 = vadd.f32 0.0, %v644
        %v646 = vpop.f32.mrf.mxu0
        %647 = vmatprep.mubr.f32.mxu0 0.0
        %648 = vmatmul.mubr.f32.gmra.mxu0 %v548
        %v649 = vpop.f32.mrf.mxu0
        %v650 = vadd.f32 0.0, %v649
        %v651 = vpop.f32.mrf.mxu0
        %652 = vmatprep.mubr.f32.mxu0 0.0
        %653 = vmatmul.mubr.f32.gmra.mxu0 %v551
        %v654 = vpop.f32.mrf.mxu0
        %v655 = vadd.f32 0.0, %v654
        %v656 = vpop.f32.mrf.mxu0
        %657 = vdwg.mxu0
        %v658 = vadd.f32 %v483, %v620
        %v659 = vadd.f32 %v488, %v625
        %v660 = vadd.f32 %v493, %v630
        %v661 = vadd.f32 %v498, %v635
        %v662 = vadd.f32 %v503, %v640
        %v663 = vadd.f32 %v508, %v645
        %v664 = vadd.f32 %v513, %v650
        %v665 = vadd.f32 %v518, %v655
        %s666 = sadd.s32 %s243, 1
        %s667 = smul.u32 %s666, 64
        %s668 = scalar_lea.vmem %s165, %s667
        %v669 = vld [vmem:[%s668] sm:$0xff]
        %v670 = vld [vmem:[%s668 + $0x8] sm:$0xff]
        %v671 = vld [vmem:[%s668 + $0x10] sm:$0xff]
        %v672 = vld [vmem:[%s668 + $0x18] sm:$0xff]
        %v673 = vld [vmem:[%s668 + $0x20] sm:$0xff]
        %v674 = vld [vmem:[%s668 + $0x28] sm:$0xff]
        %v675 = vld [vmem:[%s668 + $0x30] sm:$0xff]
        %v676 = vld [vmem:[%s668 + $0x38] sm:$0xf]
        %v678 = vsel %vm262, %v669, 0
        %v681 = vsel %vm262, %v670, 0
        %v684 = vsel %vm262, %v671, 0
        %v687 = vsel %vm262, %v672, 0
        %v690 = vsel %vm262, %v673, 0
        %v693 = vsel %vm262, %v674, 0
        %v696 = vsel %vm262, %v675, 0
        %v699 = vsel %vm262, %v676, 0
        %701 = vmatprep.subr.mxu0 0.0
        %702 = vmatpush1.msra.mxu0 0.0
        %703 = vmatprep.subr.mxu0 0.0
        %704 = vmatpush1.msra.mxu0 0.0
        %705 = vmatprep.subr.mxu0 0.0
        %706 = vmatpush1.msra.mxu0 0.0
        %707 = vmatprep.subr.mxu0 0.0
        %708 = vmatpush1.msra.mxu0 0.0
        %709 = vmatprep.subr.mxu0 0.0
        %710 = vmatpush1.msra.mxu0 0.0
        %711 = vmatprep.subr.mxu0 0.0
        %712 = vmatpush1.msra.mxu0 0.0
        %713 = vmatprep.subr.mxu0 0.0
        %714 = vmatpush1.msra.mxu0 0.0
        %715 = vmatprep.subr.mxu0 0.0
        %716 = vmatpush1.msra.mxu0 0.0
        %717 = vmatprep.subr.mxu0 0.0
        %718 = vmatpush1.msra.mxu0 0.0
        %719 = vmatprep.subr.mxu0 0.0
        %720 = vmatpush1.msra.mxu0 0.0
        %721 = vmatprep.subr.mxu0 0.0
        %722 = vmatpush1.msra.mxu0 0.0
        %723 = vmatprep.subr.mxu0 0.0
        %724 = vmatpush1.msra.mxu0 0.0
        %725 = vmatprep.subr.mxu0 0.0
        %726 = vmatpush1.msra.mxu0 0.0
        %727 = vmatprep.subr.mxu0 0.0
        %728 = vmatpush1.msra.mxu0 0.0
        %729 = vmatprep.subr.mxu0 0.0
        %730 = vmatpush1.msra.mxu0 %v181
        %731 = vmatprep.subr.mxu0 0.0
        %732 = vmatpush1.msra.mxu0 %v180
        %733 = vmatprep.subr.mxu0 0.0
        %734 = vmatpush2.msra.mxu0 0.0
        %735 = vmatprep.subr.mxu0 0.0
        %736 = vmatpush2.msra.mxu0 0.0
        %737 = vmatprep.subr.mxu0 0.0
        %738 = vmatpush2.msra.mxu0 0.0
        %739 = vmatprep.subr.mxu0 0.0
        %740 = vmatpush2.msra.mxu0 0.0
        %741 = vmatprep.subr.mxu0 0.0
        %742 = vmatpush2.msra.mxu0 0.0
        %743 = vmatprep.subr.mxu0 0.0
        %744 = vmatpush2.msra.mxu0 0.0
        %745 = vmatprep.subr.mxu0 0.0
        %746 = vmatpush2.msra.mxu0 0.0
        %747 = vmatprep.subr.mxu0 0.0
        %748 = vmatpush2.msra.mxu0 0.0
        %749 = vmatprep.subr.mxu0 0.0
        %750 = vmatpush2.msra.mxu0 0.0
        %751 = vmatprep.subr.mxu0 0.0
        %752 = vmatpush2.msra.mxu0 0.0
        %753 = vmatprep.subr.mxu0 0.0
        %754 = vmatpush2.msra.mxu0 0.0
        %755 = vmatprep.subr.mxu0 0.0
        %756 = vmatpush2.msra.mxu0 0.0
        %757 = vmatprep.subr.mxu0 0.0
        %758 = vmatpush2.msra.mxu0 0.0
        %759 = vmatprep.subr.mxu0 0.0
        %760 = vmatpush2.msra.mxu0 0.0
        %761 = vmatprep.subr.mxu0 0.0
        %762 = vmatpush2.msra.mxu0 0.0
        %763 = vmatprep.subr.mxu0 0.0
        %764 = vmatpush2.msra.mxu0 0.0
        %765 = vmatprep.mubr.f32.mxu0 0.0
        %766 = vmatmul.mubr.f32.gmra.mxu0 %v678
        %v767 = vpop.f32.mrf.mxu0
        %v768 = vadd.f32 0.0, %v767
        %v769 = vpop.f32.mrf.mxu0
        %770 = vmatprep.mubr.f32.mxu0 0.0
        %771 = vmatmul.mubr.f32.gmra.mxu0 %v681
        %v772 = vpop.f32.mrf.mxu0
        %v773 = vadd.f32 0.0, %v772
        %v774 = vpop.f32.mrf.mxu0
        %775 = vmatprep.mubr.f32.mxu0 0.0
        %776 = vmatmul.mubr.f32.gmra.mxu0 %v684
        %v777 = vpop.f32.mrf.mxu0
        %v778 = vadd.f32 0.0, %v777
        %v779 = vpop.f32.mrf.mxu0
        %780 = vmatprep.mubr.f32.mxu0 0.0
        %781 = vmatmul.mubr.f32.gmra.mxu0 %v687
        %v782 = vpop.f32.mrf.mxu0
        %v783 = vadd.f32 0.0, %v782
        %v784 = vpop.f32.mrf.mxu0
        %785 = vmatprep.mubr.f32.mxu0 0.0
        %786 = vmatmul.mubr.f32.gmra.mxu0 %v690
        %v787 = vpop.f32.mrf.mxu0
        %v788 = vadd.f32 0.0, %v787
        %v789 = vpop.f32.mrf.mxu0
        %790 = vmatprep.mubr.f32.mxu0 0.0
        %791 = vmatmul.mubr.f32.gmra.mxu0 %v693
        %v792 = vpop.f32.mrf.mxu0
        %v793 = vadd.f32 0.0, %v792
        %v794 = vpop.f32.mrf.mxu0
        %795 = vmatprep.mubr.f32.mxu0 0.0
        %796 = vmatmul.mubr.f32.gmra.mxu0 %v696
        %v797 = vpop.f32.mrf.mxu0
        %v798 = vadd.f32 0.0, %v797
        %v799 = vpop.f32.mrf.mxu0
        %800 = vmatprep.mubr.f32.mxu0 0.0
        %801 = vmatmul.mubr.f32.gmra.mxu0 %v699
        %v802 = vpop.f32.mrf.mxu0
        %v803 = vadd.f32 0.0, %v802
        %v804 = vpop.f32.mrf.mxu0
        %805 = vdwg.mxu0
        %v806 = vadd.f32 %v658, %v768
        %v807 = vadd.f32 %v659, %v773
        %v808 = vadd.f32 %v660, %v778
        %v809 = vadd.f32 %v661, %v783
        %v810 = vadd.f32 %v662, %v788
        %v811 = vadd.f32 %v663, %v793
        %v812 = vadd.f32 %v664, %v798
        %v813 = vadd.f32 %v665, %v803
        %v814 = vld [vmem:[%s668 + $0x1] sm:$0xff]
        %v815 = vld [vmem:[%s668 + $0x9] sm:$0xff]
        %v816 = vld [vmem:[%s668 + $0x11] sm:$0xff]
        %v817 = vld [vmem:[%s668 + $0x19] sm:$0xff]
        %v818 = vld [vmem:[%s668 + $0x21] sm:$0xff]
        %v819 = vld [vmem:[%s668 + $0x29] sm:$0xff]
        %v820 = vld [vmem:[%s668 + $0x31] sm:$0xff]
        %v821 = vld [vmem:[%s668 + $0x39] sm:$0xf]
        %v823 = vsel %vm262, %v814, 0
        %v826 = vsel %vm262, %v815, 0
        %v829 = vsel %vm262, %v816, 0
        %v832 = vsel %vm262, %v817, 0
        %v835 = vsel %vm262, %v818, 0
        %v838 = vsel %vm262, %v819, 0
        %v841 = vsel %vm262, %v820, 0
        %v844 = vsel %vm262, %v821, 0
        %846 = vmatprep.subr.mxu0 0.0
        %847 = vmatpush1.msra.mxu0 0.0
        %848 = vmatprep.subr.mxu0 0.0
        %849 = vmatpush1.msra.mxu0 0.0
        %850 = vmatprep.subr.mxu0 0.0
        %851 = vmatpush1.msra.mxu0 0.0
        %852 = vmatprep.subr.mxu0 0.0
        %853 = vmatpush1.msra.mxu0 0.0
        %854 = vmatprep.subr.mxu0 0.0
        %855 = vmatpush1.msra.mxu0 0.0
        %856 = vmatprep.subr.mxu0 0.0
        %857 = vmatpush1.msra.mxu0 0.0
        %858 = vmatprep.subr.mxu0 0.0
        %859 = vmatpush1.msra.mxu0 0.0
        %860 = vmatprep.subr.mxu0 0.0
        %861 = vmatpush1.msra.mxu0 0.0
        %862 = vmatprep.subr.mxu0 0.0
        %863 = vmatpush1.msra.mxu0 0.0
        %864 = vmatprep.subr.mxu0 0.0
        %865 = vmatpush1.msra.mxu0 0.0
        %866 = vmatprep.subr.mxu0 0.0
        %867 = vmatpush1.msra.mxu0 0.0
        %868 = vmatprep.subr.mxu0 0.0
        %869 = vmatpush1.msra.mxu0 0.0
        %870 = vmatprep.subr.mxu0 0.0
        %871 = vmatpush1.msra.mxu0 0.0
        %872 = vmatprep.subr.mxu0 0.0
        %873 = vmatpush1.msra.mxu0 0.0
        %874 = vmatprep.subr.mxu0 0.0
        %875 = vmatpush1.msra.mxu0 %v184
        %876 = vmatprep.subr.mxu0 0.0
        %877 = vmatpush1.msra.mxu0 %v183
        %878 = vmatprep.subr.mxu0 0.0
        %879 = vmatpush2.msra.mxu0 0.0
        %880 = vmatprep.subr.mxu0 0.0
        %881 = vmatpush2.msra.mxu0 0.0
        %882 = vmatprep.subr.mxu0 0.0
        %883 = vmatpush2.msra.mxu0 0.0
        %884 = vmatprep.subr.mxu0 0.0
        %885 = vmatpush2.msra.mxu0 0.0
        %886 = vmatprep.subr.mxu0 0.0
        %887 = vmatpush2.msra.mxu0 0.0
        %888 = vmatprep.subr.mxu0 0.0
        %889 = vmatpush2.msra.mxu0 0.0
        %890 = vmatprep.subr.mxu0 0.0
        %891 = vmatpush2.msra.mxu0 0.0
        %892 = vmatprep.subr.mxu0 0.0
        %893 = vmatpush2.msra.mxu0 0.0
        %894 = vmatprep.subr.mxu0 0.0
        %895 = vmatpush2.msra.mxu0 0.0
        %896 = vmatprep.subr.mxu0 0.0
        %897 = vmatpush2.msra.mxu0 0.0
        %898 = vmatprep.subr.mxu0 0.0
        %899 = vmatpush2.msra.mxu0 0.0
        %900 = vmatprep.subr.mxu0 0.0
        %901 = vmatpush2.msra.mxu0 0.0
        %902 = vmatprep.subr.mxu0 0.0
        %903 = vmatpush2.msra.mxu0 0.0
        %904 = vmatprep.subr.mxu0 0.0
        %905 = vmatpush2.msra.mxu0 0.0
        %906 = vmatprep.subr.mxu0 0.0
        %907 = vmatpush2.msra.mxu0 0.0
        %908 = vmatprep.subr.mxu0 0.0
        %909 = vmatpush2.msra.mxu0 0.0
        %910 = vmatprep.mubr.f32.mxu0 0.0
        %911 = vmatmul.mubr.f32.gmra.mxu0 %v823
        %v912 = vpop.f32.mrf.mxu0
        %v913 = vadd.f32 0.0, %v912
        %v914 = vpop.f32.mrf.mxu0
        %915 = vmatprep.mubr.f32.mxu0 0.0
        %916 = vmatmul.mubr.f32.gmra.mxu0 %v826
        %v917 = vpop.f32.mrf.mxu0
        %v918 = vadd.f32 0.0, %v917
        %v919 = vpop.f32.mrf.mxu0
        %920 = vmatprep.mubr.f32.mxu0 0.0
        %921 = vmatmul.mubr.f32.gmra.mxu0 %v829
        %v922 = vpop.f32.mrf.mxu0
        %v923 = vadd.f32 0.0, %v922
        %v924 = vpop.f32.mrf.mxu0
        %925 = vmatprep.mubr.f32.mxu0 0.0
        %926 = vmatmul.mubr.f32.gmra.mxu0 %v832
        %v927 = vpop.f32.mrf.mxu0
        %v928 = vadd.f32 0.0, %v927
        %v929 = vpop.f32.mrf.mxu0
        %930 = vmatprep.mubr.f32.mxu0 0.0
        %931 = vmatmul.mubr.f32.gmra.mxu0 %v835
        %v932 = vpop.f32.mrf.mxu0
        %v933 = vadd.f32 0.0, %v932
        %v934 = vpop.f32.mrf.mxu0
        %935 = vmatprep.mubr.f32.mxu0 0.0
        %936 = vmatmul.mubr.f32.gmra.mxu0 %v838
        %v937 = vpop.f32.mrf.mxu0
        %v938 = vadd.f32 0.0, %v937
        %v939 = vpop.f32.mrf.mxu0
        %940 = vmatprep.mubr.f32.mxu0 0.0
        %941 = vmatmul.mubr.f32.gmra.mxu0 %v841
        %v942 = vpop.f32.mrf.mxu0
        %v943 = vadd.f32 0.0, %v942
        %v944 = vpop.f32.mrf.mxu0
        %945 = vmatprep.mubr.f32.mxu0 0.0
        %946 = vmatmul.mubr.f32.gmra.mxu0 %v844
        %v947 = vpop.f32.mrf.mxu0
        %v948 = vadd.f32 0.0, %v947
        %v949 = vpop.f32.mrf.mxu0
        %950 = vdwg.mxu0
        %v951 = vadd.f32 %v806, %v913
        %v952 = vadd.f32 %v807, %v918
        %v953 = vadd.f32 %v808, %v923
        %v954 = vadd.f32 %v809, %v928
        %v955 = vadd.f32 %v810, %v933
        %v956 = vadd.f32 %v811, %v938
        %v957 = vadd.f32 %v812, %v943
        %v958 = vadd.f32 %v813, %v948
        %959 = vmatprep.subr.mxu0 0.0
        %960 = vmatpush1.msra.mxu0 0.0
        %961 = vmatprep.subr.mxu0 0.0
        %962 = vmatpush1.msra.mxu0 0.0
        %963 = vmatprep.subr.mxu0 0.0
        %964 = vmatpush1.msra.mxu0 0.0
        %965 = vmatprep.subr.mxu0 0.0
        %966 = vmatpush1.msra.mxu0 0.0
        %967 = vmatprep.subr.mxu0 0.0
        %968 = vmatpush1.msra.mxu0 0.0
        %969 = vmatprep.subr.mxu0 0.0
        %970 = vmatpush1.msra.mxu0 0.0
        %971 = vmatprep.subr.mxu0 0.0
        %972 = vmatpush1.msra.mxu0 0.0
        %973 = vmatprep.subr.mxu0 0.0
        %974 = vmatpush1.msra.mxu0 0.0
        %975 = vmatprep.subr.mxu0 0.0
        %976 = vmatpush1.msra.mxu0 0.0
        %977 = vmatprep.subr.mxu0 0.0
        %978 = vmatpush1.msra.mxu0 0.0
        %979 = vmatprep.subr.mxu0 0.0
        %980 = vmatpush1.msra.mxu0 0.0
        %981 = vmatprep.subr.mxu0 0.0
        %982 = vmatpush1.msra.mxu0 0.0
        %983 = vmatprep.subr.mxu0 0.0
        %984 = vmatpush1.msra.mxu0 0.0
        %985 = vmatprep.subr.mxu0 0.0
        %986 = vmatpush1.msra.mxu0 0.0
        %987 = vmatprep.subr.mxu0 0.0
        %988 = vmatpush1.msra.mxu0 %v175
        %989 = vmatprep.subr.mxu0 0.0
        %990 = vmatpush1.msra.mxu0 %v174
        %991 = vmatprep.subr.mxu0 0.0
        %992 = vmatpush2.msra.mxu0 0.0
        %993 = vmatprep.subr.mxu0 0.0
        %994 = vmatpush2.msra.mxu0 0.0
        %995 = vmatprep.subr.mxu0 0.0
        %996 = vmatpush2.msra.mxu0 0.0
        %997 = vmatprep.subr.mxu0 0.0
        %998 = vmatpush2.msra.mxu0 0.0
        %999 = vmatprep.subr.mxu0 0.0
        %1000 = vmatpush2.msra.mxu0 0.0
        %1001 = vmatprep.subr.mxu0 0.0
        %1002 = vmatpush2.msra.mxu0 0.0
        %1003 = vmatprep.subr.mxu0 0.0
        %1004 = vmatpush2.msra.mxu0 0.0
        %1005 = vmatprep.subr.mxu0 0.0
        %1006 = vmatpush2.msra.mxu0 0.0
        %1007 = vmatprep.subr.mxu0 0.0
        %1008 = vmatpush2.msra.mxu0 0.0
        %1009 = vmatprep.subr.mxu0 0.0
        %1010 = vmatpush2.msra.mxu0 0.0
        %1011 = vmatprep.subr.mxu0 0.0
        %1012 = vmatpush2.msra.mxu0 0.0
        %1013 = vmatprep.subr.mxu0 0.0
        %1014 = vmatpush2.msra.mxu0 0.0
        %1015 = vmatprep.subr.mxu0 0.0
        %1016 = vmatpush2.msra.mxu0 0.0
        %1017 = vmatprep.subr.mxu0 0.0
        %1018 = vmatpush2.msra.mxu0 0.0
        %1019 = vmatprep.subr.mxu0 0.0
        %1020 = vmatpush2.msra.mxu0 0.0
        %1021 = vmatprep.subr.mxu0 0.0
        %1022 = vmatpush2.msra.mxu0 0.0
        %1023 = vmatprep.mubr.f32.mxu0 0.0
        %1024 = vmatmul.mubr.f32.gmra.mxu0 %v823
        %v1025 = vpop.f32.mrf.mxu0
        %v1026 = vadd.f32 0.0, %v1025
        %v1027 = vpop.f32.mrf.mxu0
        %1028 = vmatprep.mubr.f32.mxu0 0.0
        %1029 = vmatmul.mubr.f32.gmra.mxu0 %v826
        %v1030 = vpop.f32.mrf.mxu0
        %v1031 = vadd.f32 0.0, %v1030
        %v1032 = vpop.f32.mrf.mxu0
        %1033 = vmatprep.mubr.f32.mxu0 0.0
        %1034 = vmatmul.mubr.f32.gmra.mxu0 %v829
        %v1035 = vpop.f32.mrf.mxu0
        %v1036 = vadd.f32 0.0, %v1035
        %v1037 = vpop.f32.mrf.mxu0
        %1038 = vmatprep.mubr.f32.mxu0 0.0
        %1039 = vmatmul.mubr.f32.gmra.mxu0 %v832
        %v1040 = vpop.f32.mrf.mxu0
        %v1041 = vadd.f32 0.0, %v1040
        %v1042 = vpop.f32.mrf.mxu0
        %1043 = vmatprep.mubr.f32.mxu0 0.0
        %1044 = vmatmul.mubr.f32.gmra.mxu0 %v835
        %v1045 = vpop.f32.mrf.mxu0
        %v1046 = vadd.f32 0.0, %v1045
        %v1047 = vpop.f32.mrf.mxu0
        %1048 = vmatprep.mubr.f32.mxu0 0.0
        %1049 = vmatmul.mubr.f32.gmra.mxu0 %v838
        %v1050 = vpop.f32.mrf.mxu0
        %v1051 = vadd.f32 0.0, %v1050
        %v1052 = vpop.f32.mrf.mxu0
        %1053 = vmatprep.mubr.f32.mxu0 0.0
        %1054 = vmatmul.mubr.f32.gmra.mxu0 %v841
        %v1055 = vpop.f32.mrf.mxu0
        %v1056 = vadd.f32 0.0, %v1055
        %v1057 = vpop.f32.mrf.mxu0
        %1058 = vmatprep.mubr.f32.mxu0 0.0
        %1059 = vmatmul.mubr.f32.gmra.mxu0 %v844
        %v1060 = vpop.f32.mrf.mxu0
        %v1061 = vadd.f32 0.0, %v1060
        %v1062 = vpop.f32.mrf.mxu0
        %1063 = vdwg.mxu0
        %1064 = vmatprep.subr.mxu0 0.0
        %1065 = vmatpush1.msra.mxu0 0.0
        %1066 = vmatprep.subr.mxu0 0.0
        %1067 = vmatpush1.msra.mxu0 0.0
        %1068 = vmatprep.subr.mxu0 0.0
        %1069 = vmatpush1.msra.mxu0 0.0
        %1070 = vmatprep.subr.mxu0 0.0
        %1071 = vmatpush1.msra.mxu0 0.0
        %1072 = vmatprep.subr.mxu0 0.0
        %1073 = vmatpush1.msra.mxu0 0.0
        %1074 = vmatprep.subr.mxu0 0.0
        %1075 = vmatpush1.msra.mxu0 0.0
        %1076 = vmatprep.subr.mxu0 0.0
        %1077 = vmatpush1.msra.mxu0 0.0
        %1078 = vmatprep.subr.mxu0 0.0
        %1079 = vmatpush1.msra.mxu0 0.0
        %1080 = vmatprep.subr.mxu0 0.0
        %1081 = vmatpush1.msra.mxu0 0.0
        %1082 = vmatprep.subr.mxu0 0.0
        %1083 = vmatpush1.msra.mxu0 0.0
        %1084 = vmatprep.subr.mxu0 0.0
        %1085 = vmatpush1.msra.mxu0 0.0
        %1086 = vmatprep.subr.mxu0 0.0
        %1087 = vmatpush1.msra.mxu0 0.0
        %1088 = vmatprep.subr.mxu0 0.0
        %1089 = vmatpush1.msra.mxu0 0.0
        %1090 = vmatprep.subr.mxu0 0.0
        %1091 = vmatpush1.msra.mxu0 0.0
        %1092 = vmatprep.subr.mxu0 0.0
        %1093 = vmatpush1.msra.mxu0 %v172
        %1094 = vmatprep.subr.mxu0 0.0
        %1095 = vmatpush1.msra.mxu0 %v171
        %1096 = vmatprep.subr.mxu0 0.0
        %1097 = vmatpush2.msra.mxu0 0.0
        %1098 = vmatprep.subr.mxu0 0.0
        %1099 = vmatpush2.msra.mxu0 0.0
        %1100 = vmatprep.subr.mxu0 0.0
        %1101 = vmatpush2.msra.mxu0 0.0
        %1102 = vmatprep.subr.mxu0 0.0
        %1103 = vmatpush2.msra.mxu0 0.0
        %1104 = vmatprep.subr.mxu0 0.0
        %1105 = vmatpush2.msra.mxu0 0.0
        %1106 = vmatprep.subr.mxu0 0.0
        %1107 = vmatpush2.msra.mxu0 0.0
        %1108 = vmatprep.subr.mxu0 0.0
        %1109 = vmatpush2.msra.mxu0 0.0
        %1110 = vmatprep.subr.mxu0 0.0
        %1111 = vmatpush2.msra.mxu0 0.0
        %1112 = vmatprep.subr.mxu0 0.0
        %1113 = vmatpush2.msra.mxu0 0.0
        %1114 = vmatprep.subr.mxu0 0.0
        %1115 = vmatpush2.msra.mxu0 0.0
        %1116 = vmatprep.subr.mxu0 0.0
        %1117 = vmatpush2.msra.mxu0 0.0
        %1118 = vmatprep.subr.mxu0 0.0
        %1119 = vmatpush2.msra.mxu0 0.0
        %1120 = vmatprep.subr.mxu0 0.0
        %1121 = vmatpush2.msra.mxu0 0.0
        %1122 = vmatprep.subr.mxu0 0.0
        %1123 = vmatpush2.msra.mxu0 0.0
        %1124 = vmatprep.subr.mxu0 0.0
        %1125 = vmatpush2.msra.mxu0 0.0
        %1126 = vmatprep.subr.mxu0 0.0
        %1127 = vmatpush2.msra.mxu0 0.0
        %1128 = vmatprep.mubr.f32.mxu0 0.0
        %1129 = vmatmul.mubr.f32.gmra.mxu0 %v678
        %v1130 = vpop.f32.mrf.mxu0
        %v1131 = vadd.f32 %v1026, %v1130
        %v1132 = vpop.f32.mrf.mxu0
        %1133 = vmatprep.mubr.f32.mxu0 0.0
        %1134 = vmatmul.mubr.f32.gmra.mxu0 %v681
        %v1135 = vpop.f32.mrf.mxu0
        %v1136 = vadd.f32 %v1031, %v1135
        %v1137 = vpop.f32.mrf.mxu0
        %1138 = vmatprep.mubr.f32.mxu0 0.0
        %1139 = vmatmul.mubr.f32.gmra.mxu0 %v684
        %v1140 = vpop.f32.mrf.mxu0
        %v1141 = vadd.f32 %v1036, %v1140
        %v1142 = vpop.f32.mrf.mxu0
        %1143 = vmatprep.mubr.f32.mxu0 0.0
        %1144 = vmatmul.mubr.f32.gmra.mxu0 %v687
        %v1145 = vpop.f32.mrf.mxu0
        %v1146 = vadd.f32 %v1041, %v1145
        %v1147 = vpop.f32.mrf.mxu0
        %1148 = vmatprep.mubr.f32.mxu0 0.0
        %1149 = vmatmul.mubr.f32.gmra.mxu0 %v690
        %v1150 = vpop.f32.mrf.mxu0
        %v1151 = vadd.f32 %v1046, %v1150
        %v1152 = vpop.f32.mrf.mxu0
        %1153 = vmatprep.mubr.f32.mxu0 0.0
        %1154 = vmatmul.mubr.f32.gmra.mxu0 %v693
        %v1155 = vpop.f32.mrf.mxu0
        %v1156 = vadd.f32 %v1051, %v1155
        %v1157 = vpop.f32.mrf.mxu0
        %1158 = vmatprep.mubr.f32.mxu0 0.0
        %1159 = vmatmul.mubr.f32.gmra.mxu0 %v696
        %v1160 = vpop.f32.mrf.mxu0
        %v1161 = vadd.f32 %v1056, %v1160
        %v1162 = vpop.f32.mrf.mxu0
        %1163 = vmatprep.mubr.f32.mxu0 0.0
        %1164 = vmatmul.mubr.f32.gmra.mxu0 %v699
        %v1165 = vpop.f32.mrf.mxu0
        %v1166 = vadd.f32 %v1061, %v1165
        %v1167 = vpop.f32.mrf.mxu0
        %1168 = vdwg.mxu0
        %v1169 = vld [vmem:[%s668 + $0x2] sm:$0xff]
        %v1170 = vld [vmem:[%s668 + $0xa] sm:$0xff]
        %v1171 = vld [vmem:[%s668 + $0x12] sm:$0xff]
        %v1172 = vld [vmem:[%s668 + $0x1a] sm:$0xff]
        %v1173 = vld [vmem:[%s668 + $0x22] sm:$0xff]
        %v1174 = vld [vmem:[%s668 + $0x2a] sm:$0xff]
        %v1175 = vld [vmem:[%s668 + $0x32] sm:$0xff]
        %v1176 = vld [vmem:[%s668 + $0x3a] sm:$0xf]
        %v1178 = vsel %vm262, %v1169, 0
        %v1181 = vsel %vm262, %v1170, 0
        %v1184 = vsel %vm262, %v1171, 0
        %v1187 = vsel %vm262, %v1172, 0
        %v1190 = vsel %vm262, %v1173, 0
        %v1193 = vsel %vm262, %v1174, 0
        %v1196 = vsel %vm262, %v1175, 0
        %v1199 = vsel %vm262, %v1176, 0
        %1201 = vmatprep.subr.mxu0 0.0
        %1202 = vmatpush1.msra.mxu0 0.0
        %1203 = vmatprep.subr.mxu0 0.0
        %1204 = vmatpush1.msra.mxu0 0.0
        %1205 = vmatprep.subr.mxu0 0.0
        %1206 = vmatpush1.msra.mxu0 0.0
        %1207 = vmatprep.subr.mxu0 0.0
        %1208 = vmatpush1.msra.mxu0 0.0
        %1209 = vmatprep.subr.mxu0 0.0
        %1210 = vmatpush1.msra.mxu0 0.0
        %1211 = vmatprep.subr.mxu0 0.0
        %1212 = vmatpush1.msra.mxu0 0.0
        %1213 = vmatprep.subr.mxu0 0.0
        %1214 = vmatpush1.msra.mxu0 0.0
        %1215 = vmatprep.subr.mxu0 0.0
        %1216 = vmatpush1.msra.mxu0 0.0
        %1217 = vmatprep.subr.mxu0 0.0
        %1218 = vmatpush1.msra.mxu0 0.0
        %1219 = vmatprep.subr.mxu0 0.0
        %1220 = vmatpush1.msra.mxu0 0.0
        %1221 = vmatprep.subr.mxu0 0.0
        %1222 = vmatpush1.msra.mxu0 0.0
        %1223 = vmatprep.subr.mxu0 0.0
        %1224 = vmatpush1.msra.mxu0 0.0
        %1225 = vmatprep.subr.mxu0 0.0
        %1226 = vmatpush1.msra.mxu0 0.0
        %1227 = vmatprep.subr.mxu0 0.0
        %1228 = vmatpush1.msra.mxu0 0.0
        %1229 = vmatprep.subr.mxu0 0.0
        %1230 = vmatpush1.msra.mxu0 %v187
        %1231 = vmatprep.subr.mxu0 0.0
        %1232 = vmatpush1.msra.mxu0 %v186
        %1233 = vmatprep.subr.mxu0 0.0
        %1234 = vmatpush2.msra.mxu0 0.0
        %1235 = vmatprep.subr.mxu0 0.0
        %1236 = vmatpush2.msra.mxu0 0.0
        %1237 = vmatprep.subr.mxu0 0.0
        %1238 = vmatpush2.msra.mxu0 0.0
        %1239 = vmatprep.subr.mxu0 0.0
        %1240 = vmatpush2.msra.mxu0 0.0
        %1241 = vmatprep.subr.mxu0 0.0
        %1242 = vmatpush2.msra.mxu0 0.0
        %1243 = vmatprep.subr.mxu0 0.0
        %1244 = vmatpush2.msra.mxu0 0.0
        %1245 = vmatprep.subr.mxu0 0.0
        %1246 = vmatpush2.msra.mxu0 0.0
        %1247 = vmatprep.subr.mxu0 0.0
        %1248 = vmatpush2.msra.mxu0 0.0
        %1249 = vmatprep.subr.mxu0 0.0
        %1250 = vmatpush2.msra.mxu0 0.0
        %1251 = vmatprep.subr.mxu0 0.0
        %1252 = vmatpush2.msra.mxu0 0.0
        %1253 = vmatprep.subr.mxu0 0.0
        %1254 = vmatpush2.msra.mxu0 0.0
        %1255 = vmatprep.subr.mxu0 0.0
        %1256 = vmatpush2.msra.mxu0 0.0
        %1257 = vmatprep.subr.mxu0 0.0
        %1258 = vmatpush2.msra.mxu0 0.0
        %1259 = vmatprep.subr.mxu0 0.0
        %1260 = vmatpush2.msra.mxu0 0.0
        %1261 = vmatprep.subr.mxu0 0.0
        %1262 = vmatpush2.msra.mxu0 0.0
        %1263 = vmatprep.subr.mxu0 0.0
        %1264 = vmatpush2.msra.mxu0 0.0
        %1265 = vmatprep.mubr.f32.mxu0 0.0
        %1266 = vmatmul.mubr.f32.gmra.mxu0 %v1178
        %v1267 = vpop.f32.mrf.mxu0
        %v1268 = vadd.f32 0.0, %v1267
        %v1269 = vpop.f32.mrf.mxu0
        %1270 = vmatprep.mubr.f32.mxu0 0.0
        %1271 = vmatmul.mubr.f32.gmra.mxu0 %v1181
        %v1272 = vpop.f32.mrf.mxu0
        %v1273 = vadd.f32 0.0, %v1272
        %v1274 = vpop.f32.mrf.mxu0
        %1275 = vmatprep.mubr.f32.mxu0 0.0
        %1276 = vmatmul.mubr.f32.gmra.mxu0 %v1184
        %v1277 = vpop.f32.mrf.mxu0
        %v1278 = vadd.f32 0.0, %v1277
        %v1279 = vpop.f32.mrf.mxu0
        %1280 = vmatprep.mubr.f32.mxu0 0.0
        %1281 = vmatmul.mubr.f32.gmra.mxu0 %v1187
        %v1282 = vpop.f32.mrf.mxu0
        %v1283 = vadd.f32 0.0, %v1282
        %v1284 = vpop.f32.mrf.mxu0
        %1285 = vmatprep.mubr.f32.mxu0 0.0
        %1286 = vmatmul.mubr.f32.gmra.mxu0 %v1190
        %v1287 = vpop.f32.mrf.mxu0
        %v1288 = vadd.f32 0.0, %v1287
        %v1289 = vpop.f32.mrf.mxu0
        %1290 = vmatprep.mubr.f32.mxu0 0.0
        %1291 = vmatmul.mubr.f32.gmra.mxu0 %v1193
        %v1292 = vpop.f32.mrf.mxu0
        %v1293 = vadd.f32 0.0, %v1292
        %v1294 = vpop.f32.mrf.mxu0
        %1295 = vmatprep.mubr.f32.mxu0 0.0
        %1296 = vmatmul.mubr.f32.gmra.mxu0 %v1196
        %v1297 = vpop.f32.mrf.mxu0
        %v1298 = vadd.f32 0.0, %v1297
        %v1299 = vpop.f32.mrf.mxu0
        %1300 = vmatprep.mubr.f32.mxu0 0.0
        %1301 = vmatmul.mubr.f32.gmra.mxu0 %v1199
        %v1302 = vpop.f32.mrf.mxu0
        %v1303 = vadd.f32 0.0, %v1302
        %v1304 = vpop.f32.mrf.mxu0
        %1305 = vdwg.mxu0
        %v1306 = vadd.f32 %v951, %v1268
        %v1307 = vadd.f32 %v952, %v1273
        %v1308 = vadd.f32 %v953, %v1278
        %v1309 = vadd.f32 %v954, %v1283
        %v1310 = vadd.f32 %v955, %v1288
        %v1311 = vadd.f32 %v956, %v1293
        %v1312 = vadd.f32 %v957, %v1298
        %v1313 = vadd.f32 %v958, %v1303
        %1314 = vmatprep.subr.mxu0 0.0
        %1315 = vmatpush1.msra.mxu0 0.0
        %1316 = vmatprep.subr.mxu0 0.0
        %1317 = vmatpush1.msra.mxu0 0.0
        %1318 = vmatprep.subr.mxu0 0.0
        %1319 = vmatpush1.msra.mxu0 0.0
        %1320 = vmatprep.subr.mxu0 0.0
        %1321 = vmatpush1.msra.mxu0 0.0
        %1322 = vmatprep.subr.mxu0 0.0
        %1323 = vmatpush1.msra.mxu0 0.0
        %1324 = vmatprep.subr.mxu0 0.0
        %1325 = vmatpush1.msra.mxu0 0.0
        %1326 = vmatprep.subr.mxu0 0.0
        %1327 = vmatpush1.msra.mxu0 0.0
        %1328 = vmatprep.subr.mxu0 0.0
        %1329 = vmatpush1.msra.mxu0 0.0
        %1330 = vmatprep.subr.mxu0 0.0
        %1331 = vmatpush1.msra.mxu0 0.0
        %1332 = vmatprep.subr.mxu0 0.0
        %1333 = vmatpush1.msra.mxu0 0.0
        %1334 = vmatprep.subr.mxu0 0.0
        %1335 = vmatpush1.msra.mxu0 0.0
        %1336 = vmatprep.subr.mxu0 0.0
        %1337 = vmatpush1.msra.mxu0 0.0
        %1338 = vmatprep.subr.mxu0 0.0
        %1339 = vmatpush1.msra.mxu0 0.0
        %1340 = vmatprep.subr.mxu0 0.0
        %1341 = vmatpush1.msra.mxu0 0.0
        %1342 = vmatprep.subr.mxu0 0.0
        %1343 = vmatpush1.msra.mxu0 %v178
        %1344 = vmatprep.subr.mxu0 0.0
        %1345 = vmatpush1.msra.mxu0 %v177
        %1346 = vmatprep.subr.mxu0 0.0
        %1347 = vmatpush2.msra.mxu0 0.0
        %1348 = vmatprep.subr.mxu0 0.0
        %1349 = vmatpush2.msra.mxu0 0.0
        %1350 = vmatprep.subr.mxu0 0.0
        %1351 = vmatpush2.msra.mxu0 0.0
        %1352 = vmatprep.subr.mxu0 0.0
        %1353 = vmatpush2.msra.mxu0 0.0
        %1354 = vmatprep.subr.mxu0 0.0
        %1355 = vmatpush2.msra.mxu0 0.0
        %1356 = vmatprep.subr.mxu0 0.0
        %1357 = vmatpush2.msra.mxu0 0.0
        %1358 = vmatprep.subr.mxu0 0.0
        %1359 = vmatpush2.msra.mxu0 0.0
        %1360 = vmatprep.subr.mxu0 0.0
        %1361 = vmatpush2.msra.mxu0 0.0
        %1362 = vmatprep.subr.mxu0 0.0
        %1363 = vmatpush2.msra.mxu0 0.0
        %1364 = vmatprep.subr.mxu0 0.0
        %1365 = vmatpush2.msra.mxu0 0.0
        %1366 = vmatprep.subr.mxu0 0.0
        %1367 = vmatpush2.msra.mxu0 0.0
        %1368 = vmatprep.subr.mxu0 0.0
        %1369 = vmatpush2.msra.mxu0 0.0
        %1370 = vmatprep.subr.mxu0 0.0
        %1371 = vmatpush2.msra.mxu0 0.0
        %1372 = vmatprep.subr.mxu0 0.0
        %1373 = vmatpush2.msra.mxu0 0.0
        %1374 = vmatprep.subr.mxu0 0.0
        %1375 = vmatpush2.msra.mxu0 0.0
        %1376 = vmatprep.subr.mxu0 0.0
        %1377 = vmatpush2.msra.mxu0 0.0
        %1378 = vmatprep.mubr.f32.mxu0 0.0
        %1379 = vmatmul.mubr.f32.gmra.mxu0 %v1178
        %v1380 = vpop.f32.mrf.mxu0
        %v1381 = vadd.f32 0.0, %v1380
        %v1382 = vpop.f32.mrf.mxu0
        %1383 = vmatprep.mubr.f32.mxu0 0.0
        %1384 = vmatmul.mubr.f32.gmra.mxu0 %v1181
        %v1385 = vpop.f32.mrf.mxu0
        %v1386 = vadd.f32 0.0, %v1385
        %v1387 = vpop.f32.mrf.mxu0
        %1388 = vmatprep.mubr.f32.mxu0 0.0
        %1389 = vmatmul.mubr.f32.gmra.mxu0 %v1184
        %v1390 = vpop.f32.mrf.mxu0
        %v1391 = vadd.f32 0.0, %v1390
        %v1392 = vpop.f32.mrf.mxu0
        %1393 = vmatprep.mubr.f32.mxu0 0.0
        %1394 = vmatmul.mubr.f32.gmra.mxu0 %v1187
        %v1395 = vpop.f32.mrf.mxu0
        %v1396 = vadd.f32 0.0, %v1395
        %v1397 = vpop.f32.mrf.mxu0
        %1398 = vmatprep.mubr.f32.mxu0 0.0
        %1399 = vmatmul.mubr.f32.gmra.mxu0 %v1190
        %v1400 = vpop.f32.mrf.mxu0
        %v1401 = vadd.f32 0.0, %v1400
        %v1402 = vpop.f32.mrf.mxu0
        %1403 = vmatprep.mubr.f32.mxu0 0.0
        %1404 = vmatmul.mubr.f32.gmra.mxu0 %v1193
        %v1405 = vpop.f32.mrf.mxu0
        %v1406 = vadd.f32 0.0, %v1405
        %v1407 = vpop.f32.mrf.mxu0
        %1408 = vmatprep.mubr.f32.mxu0 0.0
        %1409 = vmatmul.mubr.f32.gmra.mxu0 %v1196
        %v1410 = vpop.f32.mrf.mxu0
        %v1411 = vadd.f32 0.0, %v1410
        %v1412 = vpop.f32.mrf.mxu0
        %1413 = vmatprep.mubr.f32.mxu0 0.0
        %1414 = vmatmul.mubr.f32.gmra.mxu0 %v1199
        %v1415 = vpop.f32.mrf.mxu0
        %v1416 = vadd.f32 0.0, %v1415
        %v1417 = vpop.f32.mrf.mxu0
        %1418 = vdwg.mxu0
        %v1419 = vadd.f32 %v1131, %v1381
        %v1420 = vadd.f32 %v1136, %v1386
        %v1421 = vadd.f32 %v1141, %v1391
        %v1422 = vadd.f32 %v1146, %v1396
        %v1423 = vadd.f32 %v1151, %v1401
        %v1424 = vadd.f32 %v1156, %v1406
        %v1425 = vadd.f32 %v1161, %v1411
        %v1426 = vadd.f32 %v1166, %v1416
        %s1427 = sadd.s32 %s243, 2
        %s1428 = smul.u32 %s1427, 64
        %s1429 = scalar_lea.vmem %s165, %s1428
        %v1430 = vld [vmem:[%s1429] sm:$0xff]
        %v1431 = vld [vmem:[%s1429 + $0x8] sm:$0xff]
        %v1432 = vld [vmem:[%s1429 + $0x10] sm:$0xff]
        %v1433 = vld [vmem:[%s1429 + $0x18] sm:$0xff]
        %v1434 = vld [vmem:[%s1429 + $0x20] sm:$0xff]
        %v1435 = vld [vmem:[%s1429 + $0x28] sm:$0xff]
        %v1436 = vld [vmem:[%s1429 + $0x30] sm:$0xff]
        %v1437 = vld [vmem:[%s1429 + $0x38] sm:$0xf]
        %v1439 = vsel %vm262, %v1430, 0
        %v1442 = vsel %vm262, %v1431, 0
        %v1445 = vsel %vm262, %v1432, 0
        %v1448 = vsel %vm262, %v1433, 0
        %v1451 = vsel %vm262, %v1434, 0
        %v1454 = vsel %vm262, %v1435, 0
        %v1457 = vsel %vm262, %v1436, 0
        %v1460 = vsel %vm262, %v1437, 0
        %1462 = vmatprep.subr.mxu0 0.0
        %1463 = vmatpush1.msra.mxu0 0.0
        %1464 = vmatprep.subr.mxu0 0.0
        %1465 = vmatpush1.msra.mxu0 0.0
        %1466 = vmatprep.subr.mxu0 0.0
        %1467 = vmatpush1.msra.mxu0 0.0
        %1468 = vmatprep.subr.mxu0 0.0
        %1469 = vmatpush1.msra.mxu0 0.0
        %1470 = vmatprep.subr.mxu0 0.0
        %1471 = vmatpush1.msra.mxu0 0.0
        %1472 = vmatprep.subr.mxu0 0.0
        %1473 = vmatpush1.msra.mxu0 0.0
        %1474 = vmatprep.subr.mxu0 0.0
        %1475 = vmatpush1.msra.mxu0 0.0
        %1476 = vmatprep.subr.mxu0 0.0
        %1477 = vmatpush1.msra.mxu0 0.0
        %1478 = vmatprep.subr.mxu0 0.0
        %1479 = vmatpush1.msra.mxu0 0.0
        %1480 = vmatprep.subr.mxu0 0.0
        %1481 = vmatpush1.msra.mxu0 0.0
        %1482 = vmatprep.subr.mxu0 0.0
        %1483 = vmatpush1.msra.mxu0 0.0
        %1484 = vmatprep.subr.mxu0 0.0
        %1485 = vmatpush1.msra.mxu0 0.0
        %1486 = vmatprep.subr.mxu0 0.0
        %1487 = vmatpush1.msra.mxu0 0.0
        %1488 = vmatprep.subr.mxu0 0.0
        %1489 = vmatpush1.msra.mxu0 0.0
        %1490 = vmatprep.subr.mxu0 0.0
        %1491 = vmatpush1.msra.mxu0 %v190
        %1492 = vmatprep.subr.mxu0 0.0
        %1493 = vmatpush1.msra.mxu0 %v189
        %1494 = vmatprep.subr.mxu0 0.0
        %1495 = vmatpush2.msra.mxu0 0.0
        %1496 = vmatprep.subr.mxu0 0.0
        %1497 = vmatpush2.msra.mxu0 0.0
        %1498 = vmatprep.subr.mxu0 0.0
        %1499 = vmatpush2.msra.mxu0 0.0
        %1500 = vmatprep.subr.mxu0 0.0
        %1501 = vmatpush2.msra.mxu0 0.0
        %1502 = vmatprep.subr.mxu0 0.0
        %1503 = vmatpush2.msra.mxu0 0.0
        %1504 = vmatprep.subr.mxu0 0.0
        %1505 = vmatpush2.msra.mxu0 0.0
        %1506 = vmatprep.subr.mxu0 0.0
        %1507 = vmatpush2.msra.mxu0 0.0
        %1508 = vmatprep.subr.mxu0 0.0
        %1509 = vmatpush2.msra.mxu0 0.0
        %1510 = vmatprep.subr.mxu0 0.0
        %1511 = vmatpush2.msra.mxu0 0.0
        %1512 = vmatprep.subr.mxu0 0.0
        %1513 = vmatpush2.msra.mxu0 0.0
        %1514 = vmatprep.subr.mxu0 0.0
        %1515 = vmatpush2.msra.mxu0 0.0
        %1516 = vmatprep.subr.mxu0 0.0
        %1517 = vmatpush2.msra.mxu0 0.0
        %1518 = vmatprep.subr.mxu0 0.0
        %1519 = vmatpush2.msra.mxu0 0.0
        %1520 = vmatprep.subr.mxu0 0.0
        %1521 = vmatpush2.msra.mxu0 0.0
        %1522 = vmatprep.subr.mxu0 0.0
        %1523 = vmatpush2.msra.mxu0 0.0
        %1524 = vmatprep.subr.mxu0 0.0
        %1525 = vmatpush2.msra.mxu0 0.0
        %1526 = vmatprep.mubr.f32.mxu0 0.0
        %1527 = vmatmul.mubr.f32.gmra.mxu0 %v1439
        %v1528 = vpop.f32.mrf.mxu0
        %v1529 = vadd.f32 0.0, %v1528
        %v1530 = vpop.f32.mrf.mxu0
        %1531 = vmatprep.mubr.f32.mxu0 0.0
        %1532 = vmatmul.mubr.f32.gmra.mxu0 %v1442
        %v1533 = vpop.f32.mrf.mxu0
        %v1534 = vadd.f32 0.0, %v1533
        %v1535 = vpop.f32.mrf.mxu0
        %1536 = vmatprep.mubr.f32.mxu0 0.0
        %1537 = vmatmul.mubr.f32.gmra.mxu0 %v1445
        %v1538 = vpop.f32.mrf.mxu0
        %v1539 = vadd.f32 0.0, %v1538
        %v1540 = vpop.f32.mrf.mxu0
        %1541 = vmatprep.mubr.f32.mxu0 0.0
        %1542 = vmatmul.mubr.f32.gmra.mxu0 %v1448
        %v1543 = vpop.f32.mrf.mxu0
        %v1544 = vadd.f32 0.0, %v1543
        %v1545 = vpop.f32.mrf.mxu0
        %1546 = vmatprep.mubr.f32.mxu0 0.0
        %1547 = vmatmul.mubr.f32.gmra.mxu0 %v1451
        %v1548 = vpop.f32.mrf.mxu0
        %v1549 = vadd.f32 0.0, %v1548
        %v1550 = vpop.f32.mrf.mxu0
        %1551 = vmatprep.mubr.f32.mxu0 0.0
        %1552 = vmatmul.mubr.f32.gmra.mxu0 %v1454
        %v1553 = vpop.f32.mrf.mxu0
        %v1554 = vadd.f32 0.0, %v1553
        %v1555 = vpop.f32.mrf.mxu0
        %1556 = vmatprep.mubr.f32.mxu0 0.0
        %1557 = vmatmul.mubr.f32.gmra.mxu0 %v1457
        %v1558 = vpop.f32.mrf.mxu0
        %v1559 = vadd.f32 0.0, %v1558
        %v1560 = vpop.f32.mrf.mxu0
        %1561 = vmatprep.mubr.f32.mxu0 0.0
        %1562 = vmatmul.mubr.f32.gmra.mxu0 %v1460
        %v1563 = vpop.f32.mrf.mxu0
        %v1564 = vadd.f32 0.0, %v1563
        %v1565 = vpop.f32.mrf.mxu0
        %1566 = vdwg.mxu0
        %v1567 = vadd.f32 %v1306, %v1529
        %v1568 = vadd.f32 %v1307, %v1534
        %v1569 = vadd.f32 %v1308, %v1539
        %v1570 = vadd.f32 %v1309, %v1544
        %v1571 = vadd.f32 %v1310, %v1549
        %v1572 = vadd.f32 %v1311, %v1554
        %v1573 = vadd.f32 %v1312, %v1559
        %v1574 = vadd.f32 %v1313, %v1564
        %1575 = vmatprep.subr.mxu0 0.0
        %1576 = vmatpush1.msra.mxu0 0.0
        %1577 = vmatprep.subr.mxu0 0.0
        %1578 = vmatpush1.msra.mxu0 0.0
        %1579 = vmatprep.subr.mxu0 0.0
        %1580 = vmatpush1.msra.mxu0 0.0
        %1581 = vmatprep.subr.mxu0 0.0
        %1582 = vmatpush1.msra.mxu0 0.0
        %1583 = vmatprep.subr.mxu0 0.0
        %1584 = vmatpush1.msra.mxu0 0.0
        %1585 = vmatprep.subr.mxu0 0.0
        %1586 = vmatpush1.msra.mxu0 0.0
        %1587 = vmatprep.subr.mxu0 0.0
        %1588 = vmatpush1.msra.mxu0 0.0
        %1589 = vmatprep.subr.mxu0 0.0
        %1590 = vmatpush1.msra.mxu0 0.0
        %1591 = vmatprep.subr.mxu0 0.0
        %1592 = vmatpush1.msra.mxu0 0.0
        %1593 = vmatprep.subr.mxu0 0.0
        %1594 = vmatpush1.msra.mxu0 0.0
        %1595 = vmatprep.subr.mxu0 0.0
        %1596 = vmatpush1.msra.mxu0 0.0
        %1597 = vmatprep.subr.mxu0 0.0
        %1598 = vmatpush1.msra.mxu0 0.0
        %1599 = vmatprep.subr.mxu0 0.0
        %1600 = vmatpush1.msra.mxu0 0.0
        %1601 = vmatprep.subr.mxu0 0.0
        %1602 = vmatpush1.msra.mxu0 0.0
        %1603 = vmatprep.subr.mxu0 0.0
        %1604 = vmatpush1.msra.mxu0 %v181
        %1605 = vmatprep.subr.mxu0 0.0
        %1606 = vmatpush1.msra.mxu0 %v180
        %1607 = vmatprep.subr.mxu0 0.0
        %1608 = vmatpush2.msra.mxu0 0.0
        %1609 = vmatprep.subr.mxu0 0.0
        %1610 = vmatpush2.msra.mxu0 0.0
        %1611 = vmatprep.subr.mxu0 0.0
        %1612 = vmatpush2.msra.mxu0 0.0
        %1613 = vmatprep.subr.mxu0 0.0
        %1614 = vmatpush2.msra.mxu0 0.0
        %1615 = vmatprep.subr.mxu0 0.0
        %1616 = vmatpush2.msra.mxu0 0.0
        %1617 = vmatprep.subr.mxu0 0.0
        %1618 = vmatpush2.msra.mxu0 0.0
        %1619 = vmatprep.subr.mxu0 0.0
        %1620 = vmatpush2.msra.mxu0 0.0
        %1621 = vmatprep.subr.mxu0 0.0
        %1622 = vmatpush2.msra.mxu0 0.0
        %1623 = vmatprep.subr.mxu0 0.0
        %1624 = vmatpush2.msra.mxu0 0.0
        %1625 = vmatprep.subr.mxu0 0.0
        %1626 = vmatpush2.msra.mxu0 0.0
        %1627 = vmatprep.subr.mxu0 0.0
        %1628 = vmatpush2.msra.mxu0 0.0
        %1629 = vmatprep.subr.mxu0 0.0
        %1630 = vmatpush2.msra.mxu0 0.0
        %1631 = vmatprep.subr.mxu0 0.0
        %1632 = vmatpush2.msra.mxu0 0.0
        %1633 = vmatprep.subr.mxu0 0.0
        %1634 = vmatpush2.msra.mxu0 0.0
        %1635 = vmatprep.subr.mxu0 0.0
        %1636 = vmatpush2.msra.mxu0 0.0
        %1637 = vmatprep.subr.mxu0 0.0
        %1638 = vmatpush2.msra.mxu0 0.0
        %1639 = vmatprep.mubr.f32.mxu0 0.0
        %1640 = vmatmul.mubr.f32.gmra.mxu0 %v1439
        %v1641 = vpop.f32.mrf.mxu0
        %v1642 = vadd.f32 0.0, %v1641
        %v1643 = vpop.f32.mrf.mxu0
        %1644 = vmatprep.mubr.f32.mxu0 0.0
        %1645 = vmatmul.mubr.f32.gmra.mxu0 %v1442
        %v1646 = vpop.f32.mrf.mxu0
        %v1647 = vadd.f32 0.0, %v1646
        %v1648 = vpop.f32.mrf.mxu0
        %1649 = vmatprep.mubr.f32.mxu0 0.0
        %1650 = vmatmul.mubr.f32.gmra.mxu0 %v1445
        %v1651 = vpop.f32.mrf.mxu0
        %v1652 = vadd.f32 0.0, %v1651
        %v1653 = vpop.f32.mrf.mxu0
        %1654 = vmatprep.mubr.f32.mxu0 0.0
        %1655 = vmatmul.mubr.f32.gmra.mxu0 %v1448
        %v1656 = vpop.f32.mrf.mxu0
        %v1657 = vadd.f32 0.0, %v1656
        %v1658 = vpop.f32.mrf.mxu0
        %1659 = vmatprep.mubr.f32.mxu0 0.0
        %1660 = vmatmul.mubr.f32.gmra.mxu0 %v1451
        %v1661 = vpop.f32.mrf.mxu0
        %v1662 = vadd.f32 0.0, %v1661
        %v1663 = vpop.f32.mrf.mxu0
        %1664 = vmatprep.mubr.f32.mxu0 0.0
        %1665 = vmatmul.mubr.f32.gmra.mxu0 %v1454
        %v1666 = vpop.f32.mrf.mxu0
        %v1667 = vadd.f32 0.0, %v1666
        %v1668 = vpop.f32.mrf.mxu0
        %1669 = vmatprep.mubr.f32.mxu0 0.0
        %1670 = vmatmul.mubr.f32.gmra.mxu0 %v1457
        %v1671 = vpop.f32.mrf.mxu0
        %v1672 = vadd.f32 0.0, %v1671
        %v1673 = vpop.f32.mrf.mxu0
        %1674 = vmatprep.mubr.f32.mxu0 0.0
        %1675 = vmatmul.mubr.f32.gmra.mxu0 %v1460
        %v1676 = vpop.f32.mrf.mxu0
        %v1677 = vadd.f32 0.0, %v1676
        %v1678 = vpop.f32.mrf.mxu0
        %1679 = vdwg.mxu0
        %v1680 = vadd.f32 %v1419, %v1642
        %v1681 = vadd.f32 %v1420, %v1647
        %v1682 = vadd.f32 %v1421, %v1652
        %v1683 = vadd.f32 %v1422, %v1657
        %v1684 = vadd.f32 %v1423, %v1662
        %v1685 = vadd.f32 %v1424, %v1667
        %v1686 = vadd.f32 %v1425, %v1672
        %v1687 = vadd.f32 %v1426, %v1677
        %v1688 = vld [vmem:[%s1429 + $0x1] sm:$0xff]
        %v1689 = vld [vmem:[%s1429 + $0x9] sm:$0xff]
        %v1690 = vld [vmem:[%s1429 + $0x11] sm:$0xff]
        %v1691 = vld [vmem:[%s1429 + $0x19] sm:$0xff]
        %v1692 = vld [vmem:[%s1429 + $0x21] sm:$0xff]
        %v1693 = vld [vmem:[%s1429 + $0x29] sm:$0xff]
        %v1694 = vld [vmem:[%s1429 + $0x31] sm:$0xff]
        %v1695 = vld [vmem:[%s1429 + $0x39] sm:$0xf]
        %v1697 = vsel %vm262, %v1688, 0
        %v1700 = vsel %vm262, %v1689, 0
        %v1703 = vsel %vm262, %v1690, 0
        %v1706 = vsel %vm262, %v1691, 0
        %v1709 = vsel %vm262, %v1692, 0
        %v1712 = vsel %vm262, %v1693, 0
        %v1715 = vsel %vm262, %v1694, 0
        %v1718 = vsel %vm262, %v1695, 0
        %1720 = vmatprep.subr.mxu0 0.0
        %1721 = vmatpush1.msra.mxu0 0.0
        %1722 = vmatprep.subr.mxu0 0.0
        %1723 = vmatpush1.msra.mxu0 0.0
        %1724 = vmatprep.subr.mxu0 0.0
        %1725 = vmatpush1.msra.mxu0 0.0
        %1726 = vmatprep.subr.mxu0 0.0
        %1727 = vmatpush1.msra.mxu0 0.0
        %1728 = vmatprep.subr.mxu0 0.0
        %1729 = vmatpush1.msra.mxu0 0.0
        %1730 = vmatprep.subr.mxu0 0.0
        %1731 = vmatpush1.msra.mxu0 0.0
        %1732 = vmatprep.subr.mxu0 0.0
        %1733 = vmatpush1.msra.mxu0 0.0
        %1734 = vmatprep.subr.mxu0 0.0
        %1735 = vmatpush1.msra.mxu0 0.0
        %1736 = vmatprep.subr.mxu0 0.0
        %1737 = vmatpush1.msra.mxu0 0.0
        %1738 = vmatprep.subr.mxu0 0.0
        %1739 = vmatpush1.msra.mxu0 0.0
        %1740 = vmatprep.subr.mxu0 0.0
        %1741 = vmatpush1.msra.mxu0 0.0
        %1742 = vmatprep.subr.mxu0 0.0
        %1743 = vmatpush1.msra.mxu0 0.0
        %1744 = vmatprep.subr.mxu0 0.0
        %1745 = vmatpush1.msra.mxu0 0.0
        %1746 = vmatprep.subr.mxu0 0.0
        %1747 = vmatpush1.msra.mxu0 0.0
        %1748 = vmatprep.subr.mxu0 0.0
        %1749 = vmatpush1.msra.mxu0 %v193
        %1750 = vmatprep.subr.mxu0 0.0
        %1751 = vmatpush1.msra.mxu0 %v192
        %1752 = vmatprep.subr.mxu0 0.0
        %1753 = vmatpush2.msra.mxu0 0.0
        %1754 = vmatprep.subr.mxu0 0.0
        %1755 = vmatpush2.msra.mxu0 0.0
        %1756 = vmatprep.subr.mxu0 0.0
        %1757 = vmatpush2.msra.mxu0 0.0
        %1758 = vmatprep.subr.mxu0 0.0
        %1759 = vmatpush2.msra.mxu0 0.0
        %1760 = vmatprep.subr.mxu0 0.0
        %1761 = vmatpush2.msra.mxu0 0.0
        %1762 = vmatprep.subr.mxu0 0.0
        %1763 = vmatpush2.msra.mxu0 0.0
        %1764 = vmatprep.subr.mxu0 0.0
        %1765 = vmatpush2.msra.mxu0 0.0
        %1766 = vmatprep.subr.mxu0 0.0
        %1767 = vmatpush2.msra.mxu0 0.0
        %1768 = vmatprep.subr.mxu0 0.0
        %1769 = vmatpush2.msra.mxu0 0.0
        %1770 = vmatprep.subr.mxu0 0.0
        %1771 = vmatpush2.msra.mxu0 0.0
        %1772 = vmatprep.subr.mxu0 0.0
        %1773 = vmatpush2.msra.mxu0 0.0
        %1774 = vmatprep.subr.mxu0 0.0
        %1775 = vmatpush2.msra.mxu0 0.0
        %1776 = vmatprep.subr.mxu0 0.0
        %1777 = vmatpush2.msra.mxu0 0.0
        %1778 = vmatprep.subr.mxu0 0.0
        %1779 = vmatpush2.msra.mxu0 0.0
        %1780 = vmatprep.subr.mxu0 0.0
        %1781 = vmatpush2.msra.mxu0 0.0
        %1782 = vmatprep.subr.mxu0 0.0
        %1783 = vmatpush2.msra.mxu0 0.0
        %1784 = vmatprep.mubr.f32.mxu0 0.0
        %1785 = vmatmul.mubr.f32.gmra.mxu0 %v1697
        %v1786 = vpop.f32.mrf.mxu0
        %v1787 = vadd.f32 0.0, %v1786
        %v1788 = vpop.f32.mrf.mxu0
        %1789 = vmatprep.mubr.f32.mxu0 0.0
        %1790 = vmatmul.mubr.f32.gmra.mxu0 %v1700
        %v1791 = vpop.f32.mrf.mxu0
        %v1792 = vadd.f32 0.0, %v1791
        %v1793 = vpop.f32.mrf.mxu0
        %1794 = vmatprep.mubr.f32.mxu0 0.0
        %1795 = vmatmul.mubr.f32.gmra.mxu0 %v1703
        %v1796 = vpop.f32.mrf.mxu0
        %v1797 = vadd.f32 0.0, %v1796
        %v1798 = vpop.f32.mrf.mxu0
        %1799 = vmatprep.mubr.f32.mxu0 0.0
        %1800 = vmatmul.mubr.f32.gmra.mxu0 %v1706
        %v1801 = vpop.f32.mrf.mxu0
        %v1802 = vadd.f32 0.0, %v1801
        %v1803 = vpop.f32.mrf.mxu0
        %1804 = vmatprep.mubr.f32.mxu0 0.0
        %1805 = vmatmul.mubr.f32.gmra.mxu0 %v1709
        %v1806 = vpop.f32.mrf.mxu0
        %v1807 = vadd.f32 0.0, %v1806
        %v1808 = vpop.f32.mrf.mxu0
        %1809 = vmatprep.mubr.f32.mxu0 0.0
        %1810 = vmatmul.mubr.f32.gmra.mxu0 %v1712
        %v1811 = vpop.f32.mrf.mxu0
        %v1812 = vadd.f32 0.0, %v1811
        %v1813 = vpop.f32.mrf.mxu0
        %1814 = vmatprep.mubr.f32.mxu0 0.0
        %1815 = vmatmul.mubr.f32.gmra.mxu0 %v1715
        %v1816 = vpop.f32.mrf.mxu0
        %v1817 = vadd.f32 0.0, %v1816
        %v1818 = vpop.f32.mrf.mxu0
        %1819 = vmatprep.mubr.f32.mxu0 0.0
        %1820 = vmatmul.mubr.f32.gmra.mxu0 %v1718
        %v1821 = vpop.f32.mrf.mxu0
        %v1822 = vadd.f32 0.0, %v1821
        %v1823 = vpop.f32.mrf.mxu0
        %1824 = vdwg.mxu0
        %v1825 = vadd.f32 %v1567, %v1787
        %v1826 = vadd.f32 %v1568, %v1792
        %v1827 = vadd.f32 %v1569, %v1797
        %v1828 = vadd.f32 %v1570, %v1802
        %v1829 = vadd.f32 %v1571, %v1807
        %v1830 = vadd.f32 %v1572, %v1812
        %v1831 = vadd.f32 %v1573, %v1817
        %v1832 = vadd.f32 %v1574, %v1822
        %1833 = vmatprep.subr.mxu0 0.0
        %1834 = vmatpush1.msra.mxu0 0.0
        %1835 = vmatprep.subr.mxu0 0.0
        %1836 = vmatpush1.msra.mxu0 0.0
        %1837 = vmatprep.subr.mxu0 0.0
        %1838 = vmatpush1.msra.mxu0 0.0
        %1839 = vmatprep.subr.mxu0 0.0
        %1840 = vmatpush1.msra.mxu0 0.0
        %1841 = vmatprep.subr.mxu0 0.0
        %1842 = vmatpush1.msra.mxu0 0.0
        %1843 = vmatprep.subr.mxu0 0.0
        %1844 = vmatpush1.msra.mxu0 0.0
        %1845 = vmatprep.subr.mxu0 0.0
        %1846 = vmatpush1.msra.mxu0 0.0
        %1847 = vmatprep.subr.mxu0 0.0
        %1848 = vmatpush1.msra.mxu0 0.0
        %1849 = vmatprep.subr.mxu0 0.0
        %1850 = vmatpush1.msra.mxu0 0.0
        %1851 = vmatprep.subr.mxu0 0.0
        %1852 = vmatpush1.msra.mxu0 0.0
        %1853 = vmatprep.subr.mxu0 0.0
        %1854 = vmatpush1.msra.mxu0 0.0
        %1855 = vmatprep.subr.mxu0 0.0
        %1856 = vmatpush1.msra.mxu0 0.0
        %1857 = vmatprep.subr.mxu0 0.0
        %1858 = vmatpush1.msra.mxu0 0.0
        %1859 = vmatprep.subr.mxu0 0.0
        %1860 = vmatpush1.msra.mxu0 0.0
        %1861 = vmatprep.subr.mxu0 0.0
        %1862 = vmatpush1.msra.mxu0 %v184
        %1863 = vmatprep.subr.mxu0 0.0
        %1864 = vmatpush1.msra.mxu0 %v183
        %1865 = vmatprep.subr.mxu0 0.0
        %1866 = vmatpush2.msra.mxu0 0.0
        %1867 = vmatprep.subr.mxu0 0.0
        %1868 = vmatpush2.msra.mxu0 0.0
        %1869 = vmatprep.subr.mxu0 0.0
        %1870 = vmatpush2.msra.mxu0 0.0
        %1871 = vmatprep.subr.mxu0 0.0
        %1872 = vmatpush2.msra.mxu0 0.0
        %1873 = vmatprep.subr.mxu0 0.0
        %1874 = vmatpush2.msra.mxu0 0.0
        %1875 = vmatprep.subr.mxu0 0.0
        %1876 = vmatpush2.msra.mxu0 0.0
        %1877 = vmatprep.subr.mxu0 0.0
        %1878 = vmatpush2.msra.mxu0 0.0
        %1879 = vmatprep.subr.mxu0 0.0
        %1880 = vmatpush2.msra.mxu0 0.0
        %1881 = vmatprep.subr.mxu0 0.0
        %1882 = vmatpush2.msra.mxu0 0.0
        %1883 = vmatprep.subr.mxu0 0.0
        %1884 = vmatpush2.msra.mxu0 0.0
        %1885 = vmatprep.subr.mxu0 0.0
        %1886 = vmatpush2.msra.mxu0 0.0
        %1887 = vmatprep.subr.mxu0 0.0
        %1888 = vmatpush2.msra.mxu0 0.0
        %1889 = vmatprep.subr.mxu0 0.0
        %1890 = vmatpush2.msra.mxu0 0.0
        %1891 = vmatprep.subr.mxu0 0.0
        %1892 = vmatpush2.msra.mxu0 0.0
        %1893 = vmatprep.subr.mxu0 0.0
        %1894 = vmatpush2.msra.mxu0 0.0
        %1895 = vmatprep.subr.mxu0 0.0
        %1896 = vmatpush2.msra.mxu0 0.0
        %1897 = vmatprep.mubr.f32.mxu0 0.0
        %1898 = vmatmul.mubr.f32.gmra.mxu0 %v1697
        %v1899 = vpop.f32.mrf.mxu0
        %v1900 = vadd.f32 0.0, %v1899
        %v1901 = vpop.f32.mrf.mxu0
        %1902 = vmatprep.mubr.f32.mxu0 0.0
        %1903 = vmatmul.mubr.f32.gmra.mxu0 %v1700
        %v1904 = vpop.f32.mrf.mxu0
        %v1905 = vadd.f32 0.0, %v1904
        %v1906 = vpop.f32.mrf.mxu0
        %1907 = vmatprep.mubr.f32.mxu0 0.0
        %1908 = vmatmul.mubr.f32.gmra.mxu0 %v1703
        %v1909 = vpop.f32.mrf.mxu0
        %v1910 = vadd.f32 0.0, %v1909
        %v1911 = vpop.f32.mrf.mxu0
        %1912 = vmatprep.mubr.f32.mxu0 0.0
        %1913 = vmatmul.mubr.f32.gmra.mxu0 %v1706
        %v1914 = vpop.f32.mrf.mxu0
        %v1915 = vadd.f32 0.0, %v1914
        %v1916 = vpop.f32.mrf.mxu0
        %1917 = vmatprep.mubr.f32.mxu0 0.0
        %1918 = vmatmul.mubr.f32.gmra.mxu0 %v1709
        %v1919 = vpop.f32.mrf.mxu0
        %v1920 = vadd.f32 0.0, %v1919
        %v1921 = vpop.f32.mrf.mxu0
        %1922 = vmatprep.mubr.f32.mxu0 0.0
        %1923 = vmatmul.mubr.f32.gmra.mxu0 %v1712
        %v1924 = vpop.f32.mrf.mxu0
        %v1925 = vadd.f32 0.0, %v1924
        %v1926 = vpop.f32.mrf.mxu0
        %1927 = vmatprep.mubr.f32.mxu0 0.0
        %1928 = vmatmul.mubr.f32.gmra.mxu0 %v1715
        %v1929 = vpop.f32.mrf.mxu0
        %v1930 = vadd.f32 0.0, %v1929
        %v1931 = vpop.f32.mrf.mxu0
        %1932 = vmatprep.mubr.f32.mxu0 0.0
        %1933 = vmatmul.mubr.f32.gmra.mxu0 %v1718
        %v1934 = vpop.f32.mrf.mxu0
        %v1935 = vadd.f32 0.0, %v1934
        %v1936 = vpop.f32.mrf.mxu0
        %1937 = vdwg.mxu0
        %v1938 = vadd.f32 %v1680, %v1900
        %v1939 = vadd.f32 %v1681, %v1905
        %v1940 = vadd.f32 %v1682, %v1910
        %v1941 = vadd.f32 %v1683, %v1915
        %v1942 = vadd.f32 %v1684, %v1920
        %v1943 = vadd.f32 %v1685, %v1925
        %v1944 = vadd.f32 %v1686, %v1930
        %v1945 = vadd.f32 %v1687, %v1935
        %v1946 = vld [vmem:[%s1429 + $0x2] sm:$0xff]
        %v1947 = vld [vmem:[%s1429 + $0xa] sm:$0xff]
        %v1948 = vld [vmem:[%s1429 + $0x12] sm:$0xff]
        %v1949 = vld [vmem:[%s1429 + $0x1a] sm:$0xff]
        %v1950 = vld [vmem:[%s1429 + $0x22] sm:$0xff]
        %v1951 = vld [vmem:[%s1429 + $0x2a] sm:$0xff]
        %v1952 = vld [vmem:[%s1429 + $0x32] sm:$0xff]
        %v1953 = vld [vmem:[%s1429 + $0x3a] sm:$0xf]
        %v1955 = vsel %vm262, %v1946, 0
        %v1958 = vsel %vm262, %v1947, 0
        %v1961 = vsel %vm262, %v1948, 0
        %v1964 = vsel %vm262, %v1949, 0
        %v1967 = vsel %vm262, %v1950, 0
        %v1970 = vsel %vm262, %v1951, 0
        %v1973 = vsel %vm262, %v1952, 0
        %v1976 = vsel %vm262, %v1953, 0
        %1978 = vmatprep.subr.mxu0 0.0
        %1979 = vmatpush1.msra.mxu0 0.0
        %1980 = vmatprep.subr.mxu0 0.0
        %1981 = vmatpush1.msra.mxu0 0.0
        %1982 = vmatprep.subr.mxu0 0.0
        %1983 = vmatpush1.msra.mxu0 0.0
        %1984 = vmatprep.subr.mxu0 0.0
        %1985 = vmatpush1.msra.mxu0 0.0
        %1986 = vmatprep.subr.mxu0 0.0
        %1987 = vmatpush1.msra.mxu0 0.0
        %1988 = vmatprep.subr.mxu0 0.0
        %1989 = vmatpush1.msra.mxu0 0.0
        %1990 = vmatprep.subr.mxu0 0.0
        %1991 = vmatpush1.msra.mxu0 0.0
        %1992 = vmatprep.subr.mxu0 0.0
        %1993 = vmatpush1.msra.mxu0 0.0
        %1994 = vmatprep.subr.mxu0 0.0
        %1995 = vmatpush1.msra.mxu0 0.0
        %1996 = vmatprep.subr.mxu0 0.0
        %1997 = vmatpush1.msra.mxu0 0.0
        %1998 = vmatprep.subr.mxu0 0.0
        %1999 = vmatpush1.msra.mxu0 0.0
        %2000 = vmatprep.subr.mxu0 0.0
        %2001 = vmatpush1.msra.mxu0 0.0
        %2002 = vmatprep.subr.mxu0 0.0
        %2003 = vmatpush1.msra.mxu0 0.0
        %2004 = vmatprep.subr.mxu0 0.0
        %2005 = vmatpush1.msra.mxu0 0.0
        %2006 = vmatprep.subr.mxu0 0.0
        %2007 = vmatpush1.msra.mxu0 %v196
        %2008 = vmatprep.subr.mxu0 0.0
        %2009 = vmatpush1.msra.mxu0 %v195
        %2010 = vmatprep.subr.mxu0 0.0
        %2011 = vmatpush2.msra.mxu0 0.0
        %2012 = vmatprep.subr.mxu0 0.0
        %2013 = vmatpush2.msra.mxu0 0.0
        %2014 = vmatprep.subr.mxu0 0.0
        %2015 = vmatpush2.msra.mxu0 0.0
        %2016 = vmatprep.subr.mxu0 0.0
        %2017 = vmatpush2.msra.mxu0 0.0
        %2018 = vmatprep.subr.mxu0 0.0
        %2019 = vmatpush2.msra.mxu0 0.0
        %2020 = vmatprep.subr.mxu0 0.0
        %2021 = vmatpush2.msra.mxu0 0.0
        %2022 = vmatprep.subr.mxu0 0.0
        %2023 = vmatpush2.msra.mxu0 0.0
        %2024 = vmatprep.subr.mxu0 0.0
        %2025 = vmatpush2.msra.mxu0 0.0
        %2026 = vmatprep.subr.mxu0 0.0
        %2027 = vmatpush2.msra.mxu0 0.0
        %2028 = vmatprep.subr.mxu0 0.0
        %2029 = vmatpush2.msra.mxu0 0.0
        %2030 = vmatprep.subr.mxu0 0.0
        %2031 = vmatpush2.msra.mxu0 0.0
        %2032 = vmatprep.subr.mxu0 0.0
        %2033 = vmatpush2.msra.mxu0 0.0
        %2034 = vmatprep.subr.mxu0 0.0
        %2035 = vmatpush2.msra.mxu0 0.0
        %2036 = vmatprep.subr.mxu0 0.0
        %2037 = vmatpush2.msra.mxu0 0.0
        %2038 = vmatprep.subr.mxu0 0.0
        %2039 = vmatpush2.msra.mxu0 0.0
        %2040 = vmatprep.subr.mxu0 0.0
        %2041 = vmatpush2.msra.mxu0 0.0
        %2042 = vmatprep.mubr.f32.mxu0 0.0
        %2043 = vmatmul.mubr.f32.gmra.mxu0 %v1955
        %v2044 = vpop.f32.mrf.mxu0
        %v2045 = vadd.f32 0.0, %v2044
        %v2046 = vpop.f32.mrf.mxu0
        %2047 = vmatprep.mubr.f32.mxu0 0.0
        %2048 = vmatmul.mubr.f32.gmra.mxu0 %v1958
        %v2049 = vpop.f32.mrf.mxu0
        %v2050 = vadd.f32 0.0, %v2049
        %v2051 = vpop.f32.mrf.mxu0
        %2052 = vmatprep.mubr.f32.mxu0 0.0
        %2053 = vmatmul.mubr.f32.gmra.mxu0 %v1961
        %v2054 = vpop.f32.mrf.mxu0
        %v2055 = vadd.f32 0.0, %v2054
        %v2056 = vpop.f32.mrf.mxu0
        %2057 = vmatprep.mubr.f32.mxu0 0.0
        %2058 = vmatmul.mubr.f32.gmra.mxu0 %v1964
        %v2059 = vpop.f32.mrf.mxu0
        %v2060 = vadd.f32 0.0, %v2059
        %v2061 = vpop.f32.mrf.mxu0
        %2062 = vmatprep.mubr.f32.mxu0 0.0
        %2063 = vmatmul.mubr.f32.gmra.mxu0 %v1967
        %v2064 = vpop.f32.mrf.mxu0
        %v2065 = vadd.f32 0.0, %v2064
        %v2066 = vpop.f32.mrf.mxu0
        %2067 = vmatprep.mubr.f32.mxu0 0.0
        %2068 = vmatmul.mubr.f32.gmra.mxu0 %v1970
        %v2069 = vpop.f32.mrf.mxu0
        %v2070 = vadd.f32 0.0, %v2069
        %v2071 = vpop.f32.mrf.mxu0
        %2072 = vmatprep.mubr.f32.mxu0 0.0
        %2073 = vmatmul.mubr.f32.gmra.mxu0 %v1973
        %v2074 = vpop.f32.mrf.mxu0
        %v2075 = vadd.f32 0.0, %v2074
        %v2076 = vpop.f32.mrf.mxu0
        %2077 = vmatprep.mubr.f32.mxu0 0.0
        %2078 = vmatmul.mubr.f32.gmra.mxu0 %v1976
        %v2079 = vpop.f32.mrf.mxu0
        %v2080 = vadd.f32 0.0, %v2079
        %v2081 = vpop.f32.mrf.mxu0
        %2082 = vdwg.mxu0
        %v2083 = vadd.f32 %v1825, %v2045
        %v2084 = vadd.f32 %v1826, %v2050
        %v2085 = vadd.f32 %v1827, %v2055
        %v2086 = vadd.f32 %v1828, %v2060
        %v2087 = vadd.f32 %v1829, %v2065
        %v2088 = vadd.f32 %v1830, %v2070
        %v2089 = vadd.f32 %v1831, %v2075
        %v2090 = vadd.f32 %v1832, %v2080
        %2091 = vmatprep.subr.mxu0 0.0
        %2092 = vmatpush1.msra.mxu0 0.0
        %2093 = vmatprep.subr.mxu0 0.0
        %2094 = vmatpush1.msra.mxu0 0.0
        %2095 = vmatprep.subr.mxu0 0.0
        %2096 = vmatpush1.msra.mxu0 0.0
        %2097 = vmatprep.subr.mxu0 0.0
        %2098 = vmatpush1.msra.mxu0 0.0
        %2099 = vmatprep.subr.mxu0 0.0
        %2100 = vmatpush1.msra.mxu0 0.0
        %2101 = vmatprep.subr.mxu0 0.0
        %2102 = vmatpush1.msra.mxu0 0.0
        %2103 = vmatprep.subr.mxu0 0.0
        %2104 = vmatpush1.msra.mxu0 0.0
        %2105 = vmatprep.subr.mxu0 0.0
        %2106 = vmatpush1.msra.mxu0 0.0
        %2107 = vmatprep.subr.mxu0 0.0
        %2108 = vmatpush1.msra.mxu0 0.0
        %2109 = vmatprep.subr.mxu0 0.0
        %2110 = vmatpush1.msra.mxu0 0.0
        %2111 = vmatprep.subr.mxu0 0.0
        %2112 = vmatpush1.msra.mxu0 0.0
        %2113 = vmatprep.subr.mxu0 0.0
        %2114 = vmatpush1.msra.mxu0 0.0
        %2115 = vmatprep.subr.mxu0 0.0
        %2116 = vmatpush1.msra.mxu0 0.0
        %2117 = vmatprep.subr.mxu0 0.0
        %2118 = vmatpush1.msra.mxu0 0.0
        %2119 = vmatprep.subr.mxu0 0.0
        %2120 = vmatpush1.msra.mxu0 %v187
        %2121 = vmatprep.subr.mxu0 0.0
        %2122 = vmatpush1.msra.mxu0 %v186
        %2123 = vmatprep.subr.mxu0 0.0
        %2124 = vmatpush2.msra.mxu0 0.0
        %2125 = vmatprep.subr.mxu0 0.0
        %2126 = vmatpush2.msra.mxu0 0.0
        %2127 = vmatprep.subr.mxu0 0.0
        %2128 = vmatpush2.msra.mxu0 0.0
        %2129 = vmatprep.subr.mxu0 0.0
        %2130 = vmatpush2.msra.mxu0 0.0
        %2131 = vmatprep.subr.mxu0 0.0
        %2132 = vmatpush2.msra.mxu0 0.0
        %2133 = vmatprep.subr.mxu0 0.0
        %2134 = vmatpush2.msra.mxu0 0.0
        %2135 = vmatprep.subr.mxu0 0.0
        %2136 = vmatpush2.msra.mxu0 0.0
        %2137 = vmatprep.subr.mxu0 0.0
        %2138 = vmatpush2.msra.mxu0 0.0
        %2139 = vmatprep.subr.mxu0 0.0
        %2140 = vmatpush2.msra.mxu0 0.0
        %2141 = vmatprep.subr.mxu0 0.0
        %2142 = vmatpush2.msra.mxu0 0.0
        %2143 = vmatprep.subr.mxu0 0.0
        %2144 = vmatpush2.msra.mxu0 0.0
        %2145 = vmatprep.subr.mxu0 0.0
        %2146 = vmatpush2.msra.mxu0 0.0
        %2147 = vmatprep.subr.mxu0 0.0
        %2148 = vmatpush2.msra.mxu0 0.0
        %2149 = vmatprep.subr.mxu0 0.0
        %2150 = vmatpush2.msra.mxu0 0.0
        %2151 = vmatprep.subr.mxu0 0.0
        %2152 = vmatpush2.msra.mxu0 0.0
        %2153 = vmatprep.subr.mxu0 0.0
        %2154 = vmatpush2.msra.mxu0 0.0
        %2155 = vmatprep.mubr.f32.mxu0 0.0
        %2156 = vmatmul.mubr.f32.gmra.mxu0 %v1955
        %v2157 = vpop.f32.mrf.mxu0
        %v2158 = vadd.f32 0.0, %v2157
        %v2159 = vpop.f32.mrf.mxu0
        %2160 = vmatprep.mubr.f32.mxu0 0.0
        %2161 = vmatmul.mubr.f32.gmra.mxu0 %v1958
        %v2162 = vpop.f32.mrf.mxu0
        %v2163 = vadd.f32 0.0, %v2162
        %v2164 = vpop.f32.mrf.mxu0
        %2165 = vmatprep.mubr.f32.mxu0 0.0
        %2166 = vmatmul.mubr.f32.gmra.mxu0 %v1961
        %v2167 = vpop.f32.mrf.mxu0
        %v2168 = vadd.f32 0.0, %v2167
        %v2169 = vpop.f32.mrf.mxu0
        %2170 = vmatprep.mubr.f32.mxu0 0.0
        %2171 = vmatmul.mubr.f32.gmra.mxu0 %v1964
        %v2172 = vpop.f32.mrf.mxu0
        %v2173 = vadd.f32 0.0, %v2172
        %v2174 = vpop.f32.mrf.mxu0
        %2175 = vmatprep.mubr.f32.mxu0 0.0
        %2176 = vmatmul.mubr.f32.gmra.mxu0 %v1967
        %v2177 = vpop.f32.mrf.mxu0
        %v2178 = vadd.f32 0.0, %v2177
        %v2179 = vpop.f32.mrf.mxu0
        %2180 = vmatprep.mubr.f32.mxu0 0.0
        %2181 = vmatmul.mubr.f32.gmra.mxu0 %v1970
        %v2182 = vpop.f32.mrf.mxu0
        %v2183 = vadd.f32 0.0, %v2182
        %v2184 = vpop.f32.mrf.mxu0
        %2185 = vmatprep.mubr.f32.mxu0 0.0
        %2186 = vmatmul.mubr.f32.gmra.mxu0 %v1973
        %v2187 = vpop.f32.mrf.mxu0
        %v2188 = vadd.f32 0.0, %v2187
        %v2189 = vpop.f32.mrf.mxu0
        %2190 = vmatprep.mubr.f32.mxu0 0.0
        %2191 = vmatmul.mubr.f32.gmra.mxu0 %v1976
        %v2192 = vpop.f32.mrf.mxu0
        %v2193 = vadd.f32 0.0, %v2192
        %v2194 = vpop.f32.mrf.mxu0
        %2195 = vdwg.mxu0
        %v2196 = vadd.f32 %v1938, %v2158
        %v2197 = vadd.f32 %v1939, %v2163
        %v2198 = vadd.f32 %v1940, %v2168
        %v2199 = vadd.f32 %v1941, %v2173
        %v2200 = vadd.f32 %v1942, %v2178
        %v2201 = vadd.f32 %v1943, %v2183
        %v2202 = vadd.f32 %v1944, %v2188
        %v2203 = vadd.f32 %v1945, %v2193
        %s2204 = sadd.s32 %s243, 3
        %s2205 = smul.u32 %s2204, 64
        %s2206 = scalar_lea.vmem %s165, %s2205
        %v2207 = vld [vmem:[%s2206] sm:$0xff]
        %v2208 = vld [vmem:[%s2206 + $0x8] sm:$0xff]
        %v2209 = vld [vmem:[%s2206 + $0x10] sm:$0xff]
        %v2210 = vld [vmem:[%s2206 + $0x18] sm:$0xff]
        %v2211 = vld [vmem:[%s2206 + $0x20] sm:$0xff]
        %v2212 = vld [vmem:[%s2206 + $0x28] sm:$0xff]
        %v2213 = vld [vmem:[%s2206 + $0x30] sm:$0xff]
        %v2214 = vld [vmem:[%s2206 + $0x38] sm:$0xf]
        %v2216 = vsel %vm262, %v2207, 0
        %v2219 = vsel %vm262, %v2208, 0
        %v2222 = vsel %vm262, %v2209, 0
        %v2225 = vsel %vm262, %v2210, 0
        %v2228 = vsel %vm262, %v2211, 0
        %v2231 = vsel %vm262, %v2212, 0
        %v2234 = vsel %vm262, %v2213, 0
        %v2237 = vsel %vm262, %v2214, 0
        %2239 = vmatprep.subr.mxu0 0.0
        %2240 = vmatpush1.msra.mxu0 0.0
        %2241 = vmatprep.subr.mxu0 0.0
        %2242 = vmatpush1.msra.mxu0 0.0
        %2243 = vmatprep.subr.mxu0 0.0
        %2244 = vmatpush1.msra.mxu0 0.0
        %2245 = vmatprep.subr.mxu0 0.0
        %2246 = vmatpush1.msra.mxu0 0.0
        %2247 = vmatprep.subr.mxu0 0.0
        %2248 = vmatpush1.msra.mxu0 0.0
        %2249 = vmatprep.subr.mxu0 0.0
        %2250 = vmatpush1.msra.mxu0 0.0
        %2251 = vmatprep.subr.mxu0 0.0
        %2252 = vmatpush1.msra.mxu0 0.0
        %2253 = vmatprep.subr.mxu0 0.0
        %2254 = vmatpush1.msra.mxu0 0.0
        %2255 = vmatprep.subr.mxu0 0.0
        %2256 = vmatpush1.msra.mxu0 0.0
        %2257 = vmatprep.subr.mxu0 0.0
        %2258 = vmatpush1.msra.mxu0 0.0
        %2259 = vmatprep.subr.mxu0 0.0
        %2260 = vmatpush1.msra.mxu0 0.0
        %2261 = vmatprep.subr.mxu0 0.0
        %2262 = vmatpush1.msra.mxu0 0.0
        %2263 = vmatprep.subr.mxu0 0.0
        %2264 = vmatpush1.msra.mxu0 0.0
        %2265 = vmatprep.subr.mxu0 0.0
        %2266 = vmatpush1.msra.mxu0 0.0
        %2267 = vmatprep.subr.mxu0 0.0
        %2268 = vmatpush1.msra.mxu0 %v190
        %2269 = vmatprep.subr.mxu0 0.0
        %2270 = vmatpush1.msra.mxu0 %v189
        %2271 = vmatprep.subr.mxu0 0.0
        %2272 = vmatpush2.msra.mxu0 0.0
        %2273 = vmatprep.subr.mxu0 0.0
        %2274 = vmatpush2.msra.mxu0 0.0
        %2275 = vmatprep.subr.mxu0 0.0
        %2276 = vmatpush2.msra.mxu0 0.0
        %2277 = vmatprep.subr.mxu0 0.0
        %2278 = vmatpush2.msra.mxu0 0.0
        %2279 = vmatprep.subr.mxu0 0.0
        %2280 = vmatpush2.msra.mxu0 0.0
        %2281 = vmatprep.subr.mxu0 0.0
        %2282 = vmatpush2.msra.mxu0 0.0
        %2283 = vmatprep.subr.mxu0 0.0
        %2284 = vmatpush2.msra.mxu0 0.0
        %2285 = vmatprep.subr.mxu0 0.0
        %2286 = vmatpush2.msra.mxu0 0.0
        %2287 = vmatprep.subr.mxu0 0.0
        %2288 = vmatpush2.msra.mxu0 0.0
        %2289 = vmatprep.subr.mxu0 0.0
        %2290 = vmatpush2.msra.mxu0 0.0
        %2291 = vmatprep.subr.mxu0 0.0
        %2292 = vmatpush2.msra.mxu0 0.0
        %2293 = vmatprep.subr.mxu0 0.0
        %2294 = vmatpush2.msra.mxu0 0.0
        %2295 = vmatprep.subr.mxu0 0.0
        %2296 = vmatpush2.msra.mxu0 0.0
        %2297 = vmatprep.subr.mxu0 0.0
        %2298 = vmatpush2.msra.mxu0 0.0
        %2299 = vmatprep.subr.mxu0 0.0
        %2300 = vmatpush2.msra.mxu0 0.0
        %2301 = vmatprep.subr.mxu0 0.0
        %2302 = vmatpush2.msra.mxu0 0.0
        %2303 = vmatprep.mubr.f32.mxu0 0.0
        %2304 = vmatmul.mubr.f32.gmra.mxu0 %v2216
        %v2305 = vpop.f32.mrf.mxu0
        %v2306 = vadd.f32 0.0, %v2305
        %v2307 = vpop.f32.mrf.mxu0
        %2308 = vmatprep.mubr.f32.mxu0 0.0
        %2309 = vmatmul.mubr.f32.gmra.mxu0 %v2219
        %v2310 = vpop.f32.mrf.mxu0
        %v2311 = vadd.f32 0.0, %v2310
        %v2312 = vpop.f32.mrf.mxu0
        %2313 = vmatprep.mubr.f32.mxu0 0.0
        %2314 = vmatmul.mubr.f32.gmra.mxu0 %v2222
        %v2315 = vpop.f32.mrf.mxu0
        %v2316 = vadd.f32 0.0, %v2315
        %v2317 = vpop.f32.mrf.mxu0
        %2318 = vmatprep.mubr.f32.mxu0 0.0
        %2319 = vmatmul.mubr.f32.gmra.mxu0 %v2225
        %v2320 = vpop.f32.mrf.mxu0
        %v2321 = vadd.f32 0.0, %v2320
        %v2322 = vpop.f32.mrf.mxu0
        %2323 = vmatprep.mubr.f32.mxu0 0.0
        %2324 = vmatmul.mubr.f32.gmra.mxu0 %v2228
        %v2325 = vpop.f32.mrf.mxu0
        %v2326 = vadd.f32 0.0, %v2325
        %v2327 = vpop.f32.mrf.mxu0
        %2328 = vmatprep.mubr.f32.mxu0 0.0
        %2329 = vmatmul.mubr.f32.gmra.mxu0 %v2231
        %v2330 = vpop.f32.mrf.mxu0
        %v2331 = vadd.f32 0.0, %v2330
        %v2332 = vpop.f32.mrf.mxu0
        %2333 = vmatprep.mubr.f32.mxu0 0.0
        %2334 = vmatmul.mubr.f32.gmra.mxu0 %v2234
        %v2335 = vpop.f32.mrf.mxu0
        %v2336 = vadd.f32 0.0, %v2335
        %v2337 = vpop.f32.mrf.mxu0
        %2338 = vmatprep.mubr.f32.mxu0 0.0
        %2339 = vmatmul.mubr.f32.gmra.mxu0 %v2237
        %v2340 = vpop.f32.mrf.mxu0
        %v2341 = vadd.f32 0.0, %v2340
        %v2342 = vpop.f32.mrf.mxu0
        %2343 = vdwg.mxu0
        %v2344 = vadd.f32 %v2196, %v2306
        %v2345 = vadd.f32 %v2197, %v2311
        %v2346 = vadd.f32 %v2198, %v2316
        %v2347 = vadd.f32 %v2199, %v2321
        %v2348 = vadd.f32 %v2200, %v2326
        %v2349 = vadd.f32 %v2201, %v2331
        %v2350 = vadd.f32 %v2202, %v2336
        %v2351 = vadd.f32 %v2203, %v2341
        %v2352 = vld [vmem:[%s2206 + $0x1] sm:$0xff]
        %v2353 = vld [vmem:[%s2206 + $0x9] sm:$0xff]
        %v2354 = vld [vmem:[%s2206 + $0x11] sm:$0xff]
        %v2355 = vld [vmem:[%s2206 + $0x19] sm:$0xff]
        %v2356 = vld [vmem:[%s2206 + $0x21] sm:$0xff]
        %v2357 = vld [vmem:[%s2206 + $0x29] sm:$0xff]
        %v2358 = vld [vmem:[%s2206 + $0x31] sm:$0xff]
        %v2359 = vld [vmem:[%s2206 + $0x39] sm:$0xf]
        %v2361 = vsel %vm262, %v2352, 0
        %v2364 = vsel %vm262, %v2353, 0
        %v2367 = vsel %vm262, %v2354, 0
        %v2370 = vsel %vm262, %v2355, 0
        %v2373 = vsel %vm262, %v2356, 0
        %v2376 = vsel %vm262, %v2357, 0
        %v2379 = vsel %vm262, %v2358, 0
        %v2382 = vsel %vm262, %v2359, 0
        %2384 = vmatprep.subr.mxu0 0.0
        %2385 = vmatpush1.msra.mxu0 0.0
        %2386 = vmatprep.subr.mxu0 0.0
        %2387 = vmatpush1.msra.mxu0 0.0
        %2388 = vmatprep.subr.mxu0 0.0
        %2389 = vmatpush1.msra.mxu0 0.0
        %2390 = vmatprep.subr.mxu0 0.0
        %2391 = vmatpush1.msra.mxu0 0.0
        %2392 = vmatprep.subr.mxu0 0.0
        %2393 = vmatpush1.msra.mxu0 0.0
        %2394 = vmatprep.subr.mxu0 0.0
        %2395 = vmatpush1.msra.mxu0 0.0
        %2396 = vmatprep.subr.mxu0 0.0
        %2397 = vmatpush1.msra.mxu0 0.0
        %2398 = vmatprep.subr.mxu0 0.0
        %2399 = vmatpush1.msra.mxu0 0.0
        %2400 = vmatprep.subr.mxu0 0.0
        %2401 = vmatpush1.msra.mxu0 0.0
        %2402 = vmatprep.subr.mxu0 0.0
        %2403 = vmatpush1.msra.mxu0 0.0
        %2404 = vmatprep.subr.mxu0 0.0
        %2405 = vmatpush1.msra.mxu0 0.0
        %2406 = vmatprep.subr.mxu0 0.0
        %2407 = vmatpush1.msra.mxu0 0.0
        %2408 = vmatprep.subr.mxu0 0.0
        %2409 = vmatpush1.msra.mxu0 0.0
        %2410 = vmatprep.subr.mxu0 0.0
        %2411 = vmatpush1.msra.mxu0 0.0
        %2412 = vmatprep.subr.mxu0 0.0
        %2413 = vmatpush1.msra.mxu0 %v193
        %2414 = vmatprep.subr.mxu0 0.0
        %2415 = vmatpush1.msra.mxu0 %v192
        %2416 = vmatprep.subr.mxu0 0.0
        %2417 = vmatpush2.msra.mxu0 0.0
        %2418 = vmatprep.subr.mxu0 0.0
        %2419 = vmatpush2.msra.mxu0 0.0
        %2420 = vmatprep.subr.mxu0 0.0
        %2421 = vmatpush2.msra.mxu0 0.0
        %2422 = vmatprep.subr.mxu0 0.0
        %2423 = vmatpush2.msra.mxu0 0.0
        %2424 = vmatprep.subr.mxu0 0.0
        %2425 = vmatpush2.msra.mxu0 0.0
        %2426 = vmatprep.subr.mxu0 0.0
        %2427 = vmatpush2.msra.mxu0 0.0
        %2428 = vmatprep.subr.mxu0 0.0
        %2429 = vmatpush2.msra.mxu0 0.0
        %2430 = vmatprep.subr.mxu0 0.0
        %2431 = vmatpush2.msra.mxu0 0.0
        %2432 = vmatprep.subr.mxu0 0.0
        %2433 = vmatpush2.msra.mxu0 0.0
        %2434 = vmatprep.subr.mxu0 0.0
        %2435 = vmatpush2.msra.mxu0 0.0
        %2436 = vmatprep.subr.mxu0 0.0
        %2437 = vmatpush2.msra.mxu0 0.0
        %2438 = vmatprep.subr.mxu0 0.0
        %2439 = vmatpush2.msra.mxu0 0.0
        %2440 = vmatprep.subr.mxu0 0.0
        %2441 = vmatpush2.msra.mxu0 0.0
        %2442 = vmatprep.subr.mxu0 0.0
        %2443 = vmatpush2.msra.mxu0 0.0
        %2444 = vmatprep.subr.mxu0 0.0
        %2445 = vmatpush2.msra.mxu0 0.0
        %2446 = vmatprep.subr.mxu0 0.0
        %2447 = vmatpush2.msra.mxu0 0.0
        %2448 = vmatprep.mubr.f32.mxu0 0.0
        %2449 = vmatmul.mubr.f32.gmra.mxu0 %v2361
        %v2450 = vpop.f32.mrf.mxu0
        %v2451 = vadd.f32 0.0, %v2450
        %v2452 = vpop.f32.mrf.mxu0
        %2453 = vmatprep.mubr.f32.mxu0 0.0
        %2454 = vmatmul.mubr.f32.gmra.mxu0 %v2364
        %v2455 = vpop.f32.mrf.mxu0
        %v2456 = vadd.f32 0.0, %v2455
        %v2457 = vpop.f32.mrf.mxu0
        %2458 = vmatprep.mubr.f32.mxu0 0.0
        %2459 = vmatmul.mubr.f32.gmra.mxu0 %v2367
        %v2460 = vpop.f32.mrf.mxu0
        %v2461 = vadd.f32 0.0, %v2460
        %v2462 = vpop.f32.mrf.mxu0
        %2463 = vmatprep.mubr.f32.mxu0 0.0
        %2464 = vmatmul.mubr.f32.gmra.mxu0 %v2370
        %v2465 = vpop.f32.mrf.mxu0
        %v2466 = vadd.f32 0.0, %v2465
        %v2467 = vpop.f32.mrf.mxu0
        %2468 = vmatprep.mubr.f32.mxu0 0.0
        %2469 = vmatmul.mubr.f32.gmra.mxu0 %v2373
        %v2470 = vpop.f32.mrf.mxu0
        %v2471 = vadd.f32 0.0, %v2470
        %v2472 = vpop.f32.mrf.mxu0
        %2473 = vmatprep.mubr.f32.mxu0 0.0
        %2474 = vmatmul.mubr.f32.gmra.mxu0 %v2376
        %v2475 = vpop.f32.mrf.mxu0
        %v2476 = vadd.f32 0.0, %v2475
        %v2477 = vpop.f32.mrf.mxu0
        %2478 = vmatprep.mubr.f32.mxu0 0.0
        %2479 = vmatmul.mubr.f32.gmra.mxu0 %v2379
        %v2480 = vpop.f32.mrf.mxu0
        %v2481 = vadd.f32 0.0, %v2480
        %v2482 = vpop.f32.mrf.mxu0
        %2483 = vmatprep.mubr.f32.mxu0 0.0
        %2484 = vmatmul.mubr.f32.gmra.mxu0 %v2382
        %v2485 = vpop.f32.mrf.mxu0
        %v2486 = vadd.f32 0.0, %v2485
        %v2487 = vpop.f32.mrf.mxu0
        %2488 = vdwg.mxu0
        %v2489 = vadd.f32 %v2344, %v2451
        %v2490 = vadd.f32 %v2345, %v2456
        %v2491 = vadd.f32 %v2346, %v2461
        %v2492 = vadd.f32 %v2347, %v2466
        %v2493 = vadd.f32 %v2348, %v2471
        %v2494 = vadd.f32 %v2349, %v2476
        %v2495 = vadd.f32 %v2350, %v2481
        %v2496 = vadd.f32 %v2351, %v2486
        %v2497 = vld [vmem:[%s2206 + $0x2] sm:$0xff]
        %v2498 = vld [vmem:[%s2206 + $0xa] sm:$0xff]
        %v2499 = vld [vmem:[%s2206 + $0x12] sm:$0xff]
        %v2500 = vld [vmem:[%s2206 + $0x1a] sm:$0xff]
        %v2501 = vld [vmem:[%s2206 + $0x22] sm:$0xff]
        %v2502 = vld [vmem:[%s2206 + $0x2a] sm:$0xff]
        %v2503 = vld [vmem:[%s2206 + $0x32] sm:$0xff]
        %v2504 = vld [vmem:[%s2206 + $0x3a] sm:$0xf]
        %v2506 = vsel %vm262, %v2497, 0
        %v2509 = vsel %vm262, %v2498, 0
        %v2512 = vsel %vm262, %v2499, 0
        %v2515 = vsel %vm262, %v2500, 0
        %v2518 = vsel %vm262, %v2501, 0
        %v2521 = vsel %vm262, %v2502, 0
        %v2524 = vsel %vm262, %v2503, 0
        %v2527 = vsel %vm262, %v2504, 0
        %2529 = vmatprep.subr.mxu0 0.0
        %2530 = vmatpush1.msra.mxu0 0.0
        %2531 = vmatprep.subr.mxu0 0.0
        %2532 = vmatpush1.msra.mxu0 0.0
        %2533 = vmatprep.subr.mxu0 0.0
        %2534 = vmatpush1.msra.mxu0 0.0
        %2535 = vmatprep.subr.mxu0 0.0
        %2536 = vmatpush1.msra.mxu0 0.0
        %2537 = vmatprep.subr.mxu0 0.0
        %2538 = vmatpush1.msra.mxu0 0.0
        %2539 = vmatprep.subr.mxu0 0.0
        %2540 = vmatpush1.msra.mxu0 0.0
        %2541 = vmatprep.subr.mxu0 0.0
        %2542 = vmatpush1.msra.mxu0 0.0
        %2543 = vmatprep.subr.mxu0 0.0
        %2544 = vmatpush1.msra.mxu0 0.0
        %2545 = vmatprep.subr.mxu0 0.0
        %2546 = vmatpush1.msra.mxu0 0.0
        %2547 = vmatprep.subr.mxu0 0.0
        %2548 = vmatpush1.msra.mxu0 0.0
        %2549 = vmatprep.subr.mxu0 0.0
        %2550 = vmatpush1.msra.mxu0 0.0
        %2551 = vmatprep.subr.mxu0 0.0
        %2552 = vmatpush1.msra.mxu0 0.0
        %2553 = vmatprep.subr.mxu0 0.0
        %2554 = vmatpush1.msra.mxu0 0.0
        %2555 = vmatprep.subr.mxu0 0.0
        %2556 = vmatpush1.msra.mxu0 0.0
        %2557 = vmatprep.subr.mxu0 0.0
        %2558 = vmatpush1.msra.mxu0 %v196
        %2559 = vmatprep.subr.mxu0 0.0
        %2560 = vmatpush1.msra.mxu0 %v195
        %2561 = vmatprep.subr.mxu0 0.0
        %2562 = vmatpush2.msra.mxu0 0.0
        %2563 = vmatprep.subr.mxu0 0.0
        %2564 = vmatpush2.msra.mxu0 0.0
        %2565 = vmatprep.subr.mxu0 0.0
        %2566 = vmatpush2.msra.mxu0 0.0
        %2567 = vmatprep.subr.mxu0 0.0
        %2568 = vmatpush2.msra.mxu0 0.0
        %2569 = vmatprep.subr.mxu0 0.0
        %2570 = vmatpush2.msra.mxu0 0.0
        %2571 = vmatprep.subr.mxu0 0.0
        %2572 = vmatpush2.msra.mxu0 0.0
        %2573 = vmatprep.subr.mxu0 0.0
        %2574 = vmatpush2.msra.mxu0 0.0
        %2575 = vmatprep.subr.mxu0 0.0
        %2576 = vmatpush2.msra.mxu0 0.0
        %2577 = vmatprep.subr.mxu0 0.0
        %2578 = vmatpush2.msra.mxu0 0.0
        %2579 = vmatprep.subr.mxu0 0.0
        %2580 = vmatpush2.msra.mxu0 0.0
        %2581 = vmatprep.subr.mxu0 0.0
        %2582 = vmatpush2.msra.mxu0 0.0
        %2583 = vmatprep.subr.mxu0 0.0
        %2584 = vmatpush2.msra.mxu0 0.0
        %2585 = vmatprep.subr.mxu0 0.0
        %2586 = vmatpush2.msra.mxu0 0.0
        %2587 = vmatprep.subr.mxu0 0.0
        %2588 = vmatpush2.msra.mxu0 0.0
        %2589 = vmatprep.subr.mxu0 0.0
        %2590 = vmatpush2.msra.mxu0 0.0
        %2591 = vmatprep.subr.mxu0 0.0
        %2592 = vmatpush2.msra.mxu0 0.0
        %2593 = vmatprep.mubr.f32.mxu0 0.0
        %2594 = vmatmul.mubr.f32.gmra.mxu0 %v2506
        %v2595 = vpop.f32.mrf.mxu0
        %v2596 = vadd.f32 0.0, %v2595
        %v2597 = vpop.f32.mrf.mxu0
        %2598 = vmatprep.mubr.f32.mxu0 0.0
        %2599 = vmatmul.mubr.f32.gmra.mxu0 %v2509
        %v2600 = vpop.f32.mrf.mxu0
        %v2601 = vadd.f32 0.0, %v2600
        %v2602 = vpop.f32.mrf.mxu0
        %2603 = vmatprep.mubr.f32.mxu0 0.0
        %2604 = vmatmul.mubr.f32.gmra.mxu0 %v2512
        %v2605 = vpop.f32.mrf.mxu0
        %v2606 = vadd.f32 0.0, %v2605
        %v2607 = vpop.f32.mrf.mxu0
        %2608 = vmatprep.mubr.f32.mxu0 0.0
        %2609 = vmatmul.mubr.f32.gmra.mxu0 %v2515
        %v2610 = vpop.f32.mrf.mxu0
        %v2611 = vadd.f32 0.0, %v2610
        %v2612 = vpop.f32.mrf.mxu0
        %2613 = vmatprep.mubr.f32.mxu0 0.0
        %2614 = vmatmul.mubr.f32.gmra.mxu0 %v2518
        %v2615 = vpop.f32.mrf.mxu0
        %v2616 = vadd.f32 0.0, %v2615
        %v2617 = vpop.f32.mrf.mxu0
        %2618 = vmatprep.mubr.f32.mxu0 0.0
        %2619 = vmatmul.mubr.f32.gmra.mxu0 %v2521
        %v2620 = vpop.f32.mrf.mxu0
        %v2621 = vadd.f32 0.0, %v2620
        %v2622 = vpop.f32.mrf.mxu0
        %2623 = vmatprep.mubr.f32.mxu0 0.0
        %2624 = vmatmul.mubr.f32.gmra.mxu0 %v2524
        %v2625 = vpop.f32.mrf.mxu0
        %v2626 = vadd.f32 0.0, %v2625
        %v2627 = vpop.f32.mrf.mxu0
        %2628 = vmatprep.mubr.f32.mxu0 0.0
        %2629 = vmatmul.mubr.f32.gmra.mxu0 %v2527
        %v2630 = vpop.f32.mrf.mxu0
        %v2631 = vadd.f32 0.0, %v2630
        %v2632 = vpop.f32.mrf.mxu0
        %2633 = vdwg.mxu0
        %v2634 = vadd.f32 %v2489, %v2596
        %v2635 = vadd.f32 %v2490, %v2601
        %v2636 = vadd.f32 %v2491, %v2606
        %v2637 = vadd.f32 %v2492, %v2611
        %v2638 = vadd.f32 %v2493, %v2616
        %v2639 = vadd.f32 %v2494, %v2621
        %v2640 = vadd.f32 %v2495, %v2626
        %v2641 = vadd.f32 %v2496, %v2631
        %v2642 = vmax.f32 %v2083, %v2634
        %v2643 = vmax.f32 %v2084, %v2635
        %v2644 = vmax.f32 %v2085, %v2636
        %v2645 = vmax.f32 %v2086, %v2637
        %v2646 = vmax.f32 %v2087, %v2638
        %v2647 = vmax.f32 %v2088, %v2639
        %v2648 = vmax.f32 %v2089, %v2640
        %v2649 = vmax.f32 %v2090, %v2641
        %v2651 = vlaneseq
        %v2652 = vshrl.u32 %v2651, 7
        %v2653 = vsub.s32 0, %v2652
        %v2654 = vrot.slane %v197, %v2653
        %v2656 = vadd.f32 %v2642, %v2654
        %v2657 = vadd.f32 %v2643, %v2654
        %v2658 = vadd.f32 %v2644, %v2654
        %v2659 = vadd.f32 %v2645, %v2654
        %v2660 = vadd.f32 %v2646, %v2654
        %v2661 = vadd.f32 %v2647, %v2654
        %v2662 = vadd.f32 %v2648, %v2654
        %v2663 = vadd.f32 %v2649, %v2654
        %v2664 = vmax.f32 %v2656, 0.0
        %v2665 = vmax.f32 %v2657, 0.0
        %v2666 = vmax.f32 %v2658, 0.0
        %v2667 = vmax.f32 %v2659, 0.0
        %v2668 = vmax.f32 %v2660, 0.0
        %v2669 = vmax.f32 %v2661, 0.0
        %v2670 = vmax.f32 %v2662, 0.0
        %v2671 = vmax.f32 %v2663, 0.0
        %vm2672 = vcmask 490496
        %v2674 = vsel %vm2672, %v217, 0
        %v2677 = vsel %vm2672, %v218, 0
        %v2680 = vsel %vm2672, %v219, 0
        %v2683 = vsel %vm2672, %v220, 0
        %vm2685 = vcmask 1043456
        %v2687 = vsel %vm2685, %v2671, 0
        %2689 = vmatprep.subr.mxu0 0.0
        %2690 = vmatpush1.msra.mxu0 0.0
        %2691 = vmatprep.subr.mxu0 0.0
        %2692 = vmatpush1.msra.mxu0 0.0
        %2693 = vmatprep.subr.mxu0 0.0
        %2694 = vmatpush1.msra.mxu0 0.0
        %2695 = vmatprep.subr.mxu0 0.0
        %2696 = vmatpush1.msra.mxu0 0.0
        %2697 = vmatprep.subr.mxu0 0.0
        %2698 = vmatpush1.msra.mxu0 0.0
        %2699 = vmatprep.subr.mxu0 0.0
        %2700 = vmatpush1.msra.mxu0 0.0
        %2701 = vmatprep.subr.mxu0 0.0
        %2702 = vmatpush1.msra.mxu0 0.0
        %2703 = vmatprep.subr.mxu0 0.0
        %2704 = vmatpush1.msra.mxu0 0.0
        %2705 = vmatprep.subr.mxu0 0.0
        %2706 = vmatpush1.msra.mxu0 %v2687
        %2707 = vmatprep.subr.mxu0 0.0
        %2708 = vmatpush1.msra.mxu0 %v2670
        %2709 = vmatprep.subr.mxu0 0.0
        %2710 = vmatpush1.msra.mxu0 %v2669
        %2711 = vmatprep.subr.mxu0 0.0
        %2712 = vmatpush1.msra.mxu0 %v2668
        %2713 = vmatprep.subr.mxu0 0.0
        %2714 = vmatpush1.msra.mxu0 %v2667
        %2715 = vmatprep.subr.mxu0 0.0
        %2716 = vmatpush1.msra.mxu0 %v2666
        %2717 = vmatprep.subr.mxu0 0.0
        %2718 = vmatpush1.msra.mxu0 %v2665
        %2719 = vmatprep.subr.mxu0 0.0
        %2720 = vmatpush1.msra.mxu0 %v2664
        %2721 = vmatprep.subr.mxu0 0.0
        %2722 = vmatpush2.msra.mxu0 0.0
        %2723 = vmatprep.subr.mxu0 0.0
        %2724 = vmatpush2.msra.mxu0 0.0
        %2725 = vmatprep.subr.mxu0 0.0
        %2726 = vmatpush2.msra.mxu0 0.0
        %2727 = vmatprep.subr.mxu0 0.0
        %2728 = vmatpush2.msra.mxu0 0.0
        %2729 = vmatprep.subr.mxu0 0.0
        %2730 = vmatpush2.msra.mxu0 0.0
        %2731 = vmatprep.subr.mxu0 0.0
        %2732 = vmatpush2.msra.mxu0 0.0
        %2733 = vmatprep.subr.mxu0 0.0
        %2734 = vmatpush2.msra.mxu0 0.0
        %2735 = vmatprep.subr.mxu0 0.0
        %2736 = vmatpush2.msra.mxu0 0.0
        %2737 = vmatprep.subr.mxu0 0.0
        %2738 = vmatpush2.msra.mxu0 0.0
        %2739 = vmatprep.subr.mxu0 0.0
        %2740 = vmatpush2.msra.mxu0 0.0
        %2741 = vmatprep.subr.mxu0 0.0
        %2742 = vmatpush2.msra.mxu0 0.0
        %2743 = vmatprep.subr.mxu0 0.0
        %2744 = vmatpush2.msra.mxu0 0.0
        %2745 = vmatprep.subr.mxu0 0.0
        %2746 = vmatpush2.msra.mxu0 0.0
        %2747 = vmatprep.subr.mxu0 0.0
        %2748 = vmatpush2.msra.mxu0 0.0
        %2749 = vmatprep.subr.mxu0 0.0
        %2750 = vmatpush2.msra.mxu0 0.0
        %2751 = vmatprep.subr.mxu0 0.0
        %2752 = vmatpush2.msra.mxu0 0.0
        %2753 = vmatprep.mubr.f32.mxu0 0.0
        %2754 = vmatmul.mubr.f32.gmra.mxu0 %v2674
        %v2755 = vpop.f32.mrf.mxu0
        %v2756 = vadd.f32 0.0, %v2755
        %v2757 = vpop.f32.mrf.mxu0
        %2758 = vmatprep.mubr.f32.mxu0 0.0
        %2759 = vmatmul.mubr.f32.gmra.mxu0 %v2677
        %v2760 = vpop.f32.mrf.mxu0
        %v2761 = vadd.f32 0.0, %v2760
        %v2762 = vpop.f32.mrf.mxu0
        %2763 = vmatprep.mubr.f32.mxu0 0.0
        %2764 = vmatmul.mubr.f32.gmra.mxu0 %v2680
        %v2765 = vpop.f32.mrf.mxu0
        %v2766 = vadd.f32 0.0, %v2765
        %v2767 = vpop.f32.mrf.mxu0
        %2768 = vmatprep.mubr.f32.mxu0 0.0
        %2769 = vmatmul.mubr.f32.gmra.mxu0 %v2683
        %v2770 = vpop.f32.mrf.mxu0
        %v2771 = vadd.f32 0.0, %v2770
        %v2772 = vpop.f32.mrf.mxu0
        %2773 = vdwg.mxu0
        %v2775 = vsel %vm2672, %v233, 0
        %v2778 = vsel %vm2672, %v234, 0
        %v2781 = vsel %vm2672, %v235, 0
        %v2784 = vsel %vm2672, %v236, 0
        %2786 = vmatprep.subr.mxu0 0.0
        %2787 = vmatpush1.msra.mxu0 0.0
        %2788 = vmatprep.subr.mxu0 0.0
        %2789 = vmatpush1.msra.mxu0 0.0
        %2790 = vmatprep.subr.mxu0 0.0
        %2791 = vmatpush1.msra.mxu0 0.0
        %2792 = vmatprep.subr.mxu0 0.0
        %2793 = vmatpush1.msra.mxu0 0.0
        %2794 = vmatprep.subr.mxu0 0.0
        %2795 = vmatpush1.msra.mxu0 0.0
        %2796 = vmatprep.subr.mxu0 0.0
        %2797 = vmatpush1.msra.mxu0 0.0
        %2798 = vmatprep.subr.mxu0 0.0
        %2799 = vmatpush1.msra.mxu0 0.0
        %2800 = vmatprep.subr.mxu0 0.0
        %2801 = vmatpush1.msra.mxu0 0.0
        %2802 = vmatprep.subr.mxu0 0.0
        %2803 = vmatpush1.msra.mxu0 %v2687
        %2804 = vmatprep.subr.mxu0 0.0
        %2805 = vmatpush1.msra.mxu0 %v2670
        %2806 = vmatprep.subr.mxu0 0.0
        %2807 = vmatpush1.msra.mxu0 %v2669
        %2808 = vmatprep.subr.mxu0 0.0
        %2809 = vmatpush1.msra.mxu0 %v2668
        %2810 = vmatprep.subr.mxu0 0.0
        %2811 = vmatpush1.msra.mxu0 %v2667
        %2812 = vmatprep.subr.mxu0 0.0
        %2813 = vmatpush1.msra.mxu0 %v2666
        %2814 = vmatprep.subr.mxu0 0.0
        %2815 = vmatpush1.msra.mxu0 %v2665
        %2816 = vmatprep.subr.mxu0 0.0
        %2817 = vmatpush1.msra.mxu0 %v2664
        %2818 = vmatprep.subr.mxu0 0.0
        %2819 = vmatpush2.msra.mxu0 0.0
        %2820 = vmatprep.subr.mxu0 0.0
        %2821 = vmatpush2.msra.mxu0 0.0
        %2822 = vmatprep.subr.mxu0 0.0
        %2823 = vmatpush2.msra.mxu0 0.0
        %2824 = vmatprep.subr.mxu0 0.0
        %2825 = vmatpush2.msra.mxu0 0.0
        %2826 = vmatprep.subr.mxu0 0.0
        %2827 = vmatpush2.msra.mxu0 0.0
        %2828 = vmatprep.subr.mxu0 0.0
        %2829 = vmatpush2.msra.mxu0 0.0
        %2830 = vmatprep.subr.mxu0 0.0
        %2831 = vmatpush2.msra.mxu0 0.0
        %2832 = vmatprep.subr.mxu0 0.0
        %2833 = vmatpush2.msra.mxu0 0.0
        %2834 = vmatprep.subr.mxu0 0.0
        %2835 = vmatpush2.msra.mxu0 0.0
        %2836 = vmatprep.subr.mxu0 0.0
        %2837 = vmatpush2.msra.mxu0 0.0
        %2838 = vmatprep.subr.mxu0 0.0
        %2839 = vmatpush2.msra.mxu0 0.0
        %2840 = vmatprep.subr.mxu0 0.0
        %2841 = vmatpush2.msra.mxu0 0.0
        %2842 = vmatprep.subr.mxu0 0.0
        %2843 = vmatpush2.msra.mxu0 0.0
        %2844 = vmatprep.subr.mxu0 0.0
        %2845 = vmatpush2.msra.mxu0 0.0
        %2846 = vmatprep.subr.mxu0 0.0
        %2847 = vmatpush2.msra.mxu0 0.0
        %2848 = vmatprep.subr.mxu0 0.0
        %2849 = vmatpush2.msra.mxu0 0.0
        %2850 = vmatprep.mubr.f32.mxu0 0.0
        %2851 = vmatmul.mubr.f32.gmra.mxu0 %v2775
        %v2852 = vpop.f32.mrf.mxu0
        %v2853 = vadd.f32 0.0, %v2852
        %v2854 = vpop.f32.mrf.mxu0
        %2855 = vmatprep.mubr.f32.mxu0 0.0
        %2856 = vmatmul.mubr.f32.gmra.mxu0 %v2778
        %v2857 = vpop.f32.mrf.mxu0
        %v2858 = vadd.f32 0.0, %v2857
        %v2859 = vpop.f32.mrf.mxu0
        %2860 = vmatprep.mubr.f32.mxu0 0.0
        %2861 = vmatmul.mubr.f32.gmra.mxu0 %v2781
        %v2862 = vpop.f32.mrf.mxu0
        %v2863 = vadd.f32 0.0, %v2862
        %v2864 = vpop.f32.mrf.mxu0
        %2865 = vmatprep.mubr.f32.mxu0 0.0
        %2866 = vmatmul.mubr.f32.gmra.mxu0 %v2784
        %v2867 = vpop.f32.mrf.mxu0
        %v2868 = vadd.f32 0.0, %v2867
        %v2869 = vpop.f32.mrf.mxu0
        %2870 = vdwg.mxu0
        %v2871 = vmax.f32 %v2756, %v2853
        %v2872 = vmax.f32 %v2761, %v2858
        %v2873 = vmax.f32 %v2766, %v2863
        %v2874 = vmax.f32 %v2771, %v2868
        %s2875 = smul.u32 %s238, 32
        %s2876 = scalar_lea.vmem %s170, %s2875
        %vm2877 = vcmask 261120
        %2878 = vst.msk [vmem:[%s2876] sm:$0xff] %vm2877, %v2871
        %2879 = vst.msk [vmem:[%s2876 + $0x8] sm:$0xff] %vm2877, %v2872
        %2880 = vst.msk [vmem:[%s2876 + $0x10] sm:$0xff] %vm2877, %v2873
        %vm2881 = vcmask 259072
        %2882 = vst.msk [vmem:[%s2876 + $0x18] sm:$0x3f] %vm2881, %v2874
      $region37: #{cnn1_forward.5} parent=31 // loop_footer
        %s242 = sadd.s32 1, %s238
      $region38: #{cnn1_forward.5} parent=31 // loop_footer_branch
        %237 = sbr.rel target = $region34
      $region39: #{cnn1_forward.5} parent=31 // loop_exit
        _
      %p2883 = scmp.lt.s32.totalorder %s14, 1
      %s2884 = scalar_select %p2883, %s14, 1
      %s2885 = smul.addr %s2884, 120
      %s2886 = smul.addr %s2885, 8
      %s2887 = scalar_lea.vmem %s3, %s2886
      // Predicated region
      $region40: #{cnn1_forward.5} parent=31 // pred_check
        %p2888 = pneg %p100
      $region41: #{cnn1_forward.5} parent=31 // pred_check_branch
        %2890 = sbr.rel (%p2888) target = $region43
      $region42: #{cnn1_forward.5} parent=31 // pred_region
        _
      $region43: #{cnn1_forward.5} parent=31 // pred_fallthru
        _
    $region32: #{cnn1_forward.5} parent=5 // pred_fallthru
      _
    %p2891 = scmp.le.s32.totalorder 2, %s9
    // Predicated region
    $region44: #{cnn1_forward.5} parent=5 // pred_check
      %p2892 = pneg %p2891
    $region45: #{cnn1_forward.5} parent=5 // pred_check_branch
      %2894 = sbr.rel (%p2892) target = $region47
    $region46: #{cnn1_forward.5} parent=5 // pred_region
      %s2895 = ssub.s32 %s9, 2
      // Predicated region
      $region48: #{cnn1_forward.5} parent=46 // pred_check
        %p2896 = pneg %p106
      $region49: #{cnn1_forward.5} parent=46 // pred_check_branch
        %2898 = sbr.rel (%p2896) target = $region51
      $region50: #{cnn1_forward.5} parent=46 // pred_region
        %p2899 = scmp.lt.s32.totalorder %s15, 1
        %s2900 = scalar_select %p2899, %s15, 1
        %s2901 = smul.addr %s2900, 120
        %s2902 = smul.addr %s2901, 8
        %s2903 = scalar_lea.vmem %s3, %s2902
      $region51: #{cnn1_forward.5} parent=46 // pred_fallthru
        _
    $region47: #{cnn1_forward.5} parent=5 // pred_fallthru
      _
  $region6: #{cnn1_forward.5} parent=0 // loop_footer
    %s13 = sadd.s32 1, %s9
  $region7: #{cnn1_forward.5} parent=0 // loop_footer_branch
    %8 = sbr.rel target = $region3
  $region8: #{cnn1_forward.5} parent=0 // loop_exit
    _

// kernel: cnn1_forward.6
$region0: #{cnn1_forward.6}
  #allocation0 [shape = 'u32[]', space=smem, size = 0x4, offset = 0x4, fixed_abs, tag = 'smem constant byte address 0x4 - core index']
  #allocation1 [shape = 'u32[144,128]{1,0:T(1,128)}', space=vmem, size = 0x12000, scoped, tag = 'internal scratch']
  %s0 = inlined_call_operand.vmem [shape: f32[2,30,30,32], index: 0, kind: input, shape index: {}]
  %s1 = inlined_call_operand.vmem [shape: f32[3,3,32,64], index: 1, kind: input, shape index: {}]
  %s2 = inlined_call_operand.vmem [shape: f32[1,64], index: 2, kind: input, shape index: {}]
  %s3 = inlined_call_operand.vmem [shape: f32[2,14,14,64], index: 3, kind: output, shape index: {}]
  %s4 = sld [smem:[#allocation0]]
  $region52: #{cnn1_forward.6} parent=0
    _
  %s6 = ssub.s32 1, %s4
  %s7 = scalar_select 0, %s6, %s4
  loop: start=0, step=1, limit=4
  $region2: #{cnn1_forward.6} parent=0 // loop_pre_header
    _
  $region3: #{cnn1_forward.6} parent=0 // loop_header
    %s9 = sphi 0, %s13
    %p10 = scmp.ge.s32.totalorder %s9, 4
    %s19 = sphi 0, %s21
    %s22 = sphi 0, %s19
    %s23 = sphi 0, %s22
    %s39 = sphi 0, %s23
    %s43 = sphi 0, %s43
    %s45 = sphi 0, %s43
    %s46 = sphi 0, %s45
    %s60 = sphi 0, %s46
    %s64 = sphi 0, %s64
    %s66 = sphi 0, %s64
    %s67 = sphi 0, %s66
    %s81 = sphi 0, %s67
    %s87 = sphi 0, %s89
    %s90 = sphi 0, %s87
    %s91 = sphi 0, %s90
    %s107 = sphi 0, %s91
  $region4: #{cnn1_forward.6} parent=0 // loop_header_branch
    %12 = sbr.rel (%p10) target = $region8
  $region5: #{cnn1_forward.6} parent=0 // loop_body
    %s14 = ssub.s32 %s9, 1
    %s15 = ssub.s32 %s9, 2
    %s16 = sadd.s32 %s9, 1
    %s17 = ssub.s32 %s9, %s16
    %p18 = scmp.eq.s32.totalorder %s17, 0
    %s20 = sadd.s32 %s19, 1
    %s21 = scalar_select %p18, %s19, %s20
    %p24 = pneg %p18
    %p25 = scmp.eq.s32.totalorder %s9, 1
    %p26 = por %p24, %p25
    %p27 = scmp.ne.s32.totalorder %s19, %s22
    %p28 = scmp.eq.s32.totalorder %s9, 0
    %p29 = por %p27, %p28
    %p30 = scmp.ne.s32.totalorder %s19, %s22
    %p31 = scmp.eq.s32.totalorder %s14, 1
    %p32 = por %p30, %p31
    %p33 = scmp.ne.s32.totalorder %s22, %s23
    %p34 = scmp.eq.s32.totalorder %s14, 0
    %p35 = por %p33, %p34
    %p36 = scmp.ne.s32.totalorder %s22, %s23
    %p37 = scmp.eq.s32.totalorder %s15, 1
    %p38 = por %p36, %p37
    %p40 = scmp.ne.s32.totalorder %s23, %s39
    %p41 = scmp.eq.s32.totalorder %s15, 0
    %p42 = por %p40, %p41
    %s44 = sadd.s32 %s43, 1
    %p47 = scmp.eq.s32.totalorder %s9, 1
    %p48 = scmp.ne.s32.totalorder %s43, %s45
    %p49 = scmp.eq.s32.totalorder %s9, 0
    %p50 = por %p48, %p49
    %p51 = scmp.ne.s32.totalorder %s43, %s45
    %p52 = scmp.eq.s32.totalorder %s14, 1
    %p53 = por %p51, %p52
    %p54 = scmp.ne.s32.totalorder %s45, %s46
    %p55 = scmp.eq.s32.totalorder %s14, 0
    %p56 = por %p54, %p55
    %p57 = scmp.ne.s32.totalorder %s45, %s46
    %p58 = scmp.eq.s32.totalorder %s15, 1
    %p59 = por %p57, %p58
    %p61 = scmp.ne.s32.totalorder %s46, %s60
    %p62 = scmp.eq.s32.totalorder %s15, 0
    %p63 = por %p61, %p62
    %s65 = sadd.s32 %s64, 1
    %p68 = scmp.eq.s32.totalorder %s9, 1
    %p69 = scmp.ne.s32.totalorder %s64, %s66
    %p70 = scmp.eq.s32.totalorder %s9, 0
    %p71 = por %p69, %p70
    %p72 = scmp.ne.s32.totalorder %s64, %s66
    %p73 = scmp.eq.s32.totalorder %s14, 1
    %p74 = por %p72, %p73
    %p75 = scmp.ne.s32.totalorder %s66, %s67
    %p76 = scmp.eq.s32.totalorder %s14, 0
    %p77 = por %p75, %p76
    %p78 = scmp.ne.s32.totalorder %s66, %s67
    %p79 = scmp.eq.s32.totalorder %s15, 1
    %p80 = por %p78, %p79
    %p82 = scmp.ne.s32.totalorder %s67, %s81
    %p83 = scmp.eq.s32.totalorder %s15, 0
    %p84 = por %p82, %p83
    %s85 = ssub.s32 %s9, %s16
    %p86 = scmp.eq.s32.totalorder %s85, 0
    %s88 = sadd.s32 %s87, 1
    %s89 = scalar_select %p86, %s87, %s88
    %p92 = pneg %p86
    %p93 = scmp.eq.s32.totalorder %s9, 1
    %p94 = por %p92, %p93
    %p95 = scmp.ne.s32.totalorder %s87, %s90
    %p96 = scmp.eq.s32.totalorder %s9, 0
    %p97 = por %p95, %p96
    %p98 = scmp.ne.s32.totalorder %s87, %s90
    %p99 = scmp.eq.s32.totalorder %s14, 1
    %p100 = por %p98, %p99
    %p101 = scmp.ne.s32.totalorder %s90, %s91
    %p102 = scmp.eq.s32.totalorder %s14, 0
    %p103 = por %p101, %p102
    %p104 = scmp.ne.s32.totalorder %s90, %s91
    %p105 = scmp.eq.s32.totalorder %s15, 1
    %p106 = por %p104, %p105
    %p108 = scmp.ne.s32.totalorder %s91, %s107
    %p109 = scmp.eq.s32.totalorder %s15, 0
    %p110 = por %p108, %p109
    %p111 = scmp.le.s32.totalorder 1, %s9
    %p112 = scmp.lt.s32.totalorder %s9, 3
    %p113 = pnand %p111, %p112
    %p114 = pneg %p113
    // Predicated region
    $region9: #{cnn1_forward.6} parent=5 // pred_check
      _
    $region10: #{cnn1_forward.6} parent=5 // pred_check_branch
      %116 = sbr.rel (%p113) target = $region12
    $region11: #{cnn1_forward.6} parent=5 // pred_region
      %s117 = ssub.s32 %s9, 1
      // Predicated region
      $region13: #{cnn1_forward.6} parent=11 // pred_check
        %p118 = pneg %p56
      $region14: #{cnn1_forward.6} parent=11 // pred_check_branch
        %120 = sbr.rel (%p118) target = $region16
      $region15: #{cnn1_forward.6} parent=11 // pred_region
        _
      $region16: #{cnn1_forward.6} parent=11 // pred_fallthru
        _
      // Predicated region
      $region17: #{cnn1_forward.6} parent=11 // pred_check
        %p121 = pneg %p77
      $region18: #{cnn1_forward.6} parent=11 // pred_check_branch
        %123 = sbr.rel (%p121) target = $region20
      $region19: #{cnn1_forward.6} parent=11 // pred_region
        _
      $region20: #{cnn1_forward.6} parent=11 // pred_fallthru
        _
    $region12: #{cnn1_forward.6} parent=5 // pred_fallthru
      _
    %p124 = scmp.lt.s32.totalorder %s9, 2
    // Predicated region
    $region21: #{cnn1_forward.6} parent=5 // pred_check
      %p125 = pneg %p124
    $region22: #{cnn1_forward.6} parent=5 // pred_check_branch
      %127 = sbr.rel (%p125) target = $region24
    $region23: #{cnn1_forward.6} parent=5 // pred_region
      // Predicated region
      $region25: #{cnn1_forward.6} parent=23 // pred_check
        %p128 = pneg %p29
      $region26: #{cnn1_forward.6} parent=23 // pred_check_branch
        %130 = sbr.rel (%p128) target = $region28
      $region27: #{cnn1_forward.6} parent=23 // pred_region
        %p131 = scmp.lt.s32.totalorder %s9, 1
        %s132 = scalar_select %p131, %s9, 1
        %s133 = smul.addr %s132, 120
        %s134 = smul.addr %s133, 8
        %s135 = scalar_lea.vmem %s0, %s134
      $region28: #{cnn1_forward.6} parent=23 // pred_fallthru
        _
    $region24: #{cnn1_forward.6} parent=5 // pred_fallthru
      _
    %p136 = scmp.le.s32.totalorder 1, %s9
    %p137 = scmp.lt.s32.totalorder %s9, 3
    %p138 = pnand %p136, %p137
    %p139 = pneg %p138
    // Predicated region
    $region29: #{cnn1_forward.6} parent=5 // pred_check
      _
    $region30: #{cnn1_forward.6} parent=5 // pred_check_branch
      %141 = sbr.rel (%p138) target = $region32
    $region31: #{cnn1_forward.6} parent=5 // pred_region
      %s142 = ssub.s32 %s9, 1
      %p143 = scmp.lt.s32.totalorder %s14, 1
      %s144 = scalar_select %p143, %s14, 1
      %s145 = smul.addr %s144, 120
      %s146 = smul.addr %s145, 8
      %s147 = scalar_lea.vmem %s0, %s146
      %p148 = pneg %p35
      %p149 = pneg %p32
      %p150 = pneg %p56
      %p151 = pneg %p53
      %p152 = pneg %p77
      %p153 = pneg %p74
      %p154 = pneg %p103
      %p155 = pneg %p100
      %p156 = scmp.lt.s32.totalorder %s14, 1
      %s157 = scalar_select %p156, %s14, 1
      %s158 = smul.addr %s157, 28
      %s159 = smul.addr %s158, 8
      %s160 = scalar_lea.vmem %s3, %s159
      %p161 = scmp.lt.s32.totalorder %s14, 1
      %s162 = scalar_select %p161, %s14, 1
      %s163 = smul.addr %s162, 120
      %s164 = smul.addr %s163, 8
      %s165 = scalar_lea.vmem %s0, %s164
      %p166 = scmp.lt.s32.totalorder %s14, 1
      %s167 = scalar_select %p166, %s14, 1
      %s168 = smul.addr %s167, 28
      %s169 = smul.addr %s168, 8
      %s170 = scalar_lea.vmem %s3, %s169
      %v171 = vld [vmem:[%s1] sm:$0xff]
      %v172 = vld [vmem:[%s1 + $0x8] sm:$0xff]
      %v173 = vld [vmem:[%s1 + $0x10] sm:$0xff]
      %v174 = vld [vmem:[%s1 + $0x18] sm:$0xff]
      %s175 = scalar_lea.vmem %s1, 32
      %v176 = vld [vmem:[%s175] sm:$0xff]
      %v177 = vld [vmem:[%s175 + $0x8] sm:$0xff]
      %v178 = vld [vmem:[%s175 + $0x10] sm:$0xff]
      %v179 = vld [vmem:[%s175 + $0x18] sm:$0xff]
      %s180 = scalar_lea.vmem %s1, 64
      %v181 = vld [vmem:[%s180] sm:$0xff]
      %v182 = vld [vmem:[%s180 + $0x8] sm:$0xff]
      %v183 = vld [vmem:[%s180 + $0x10] sm:$0xff]
      %v184 = vld [vmem:[%s180 + $0x18] sm:$0xff]
      %s185 = scalar_lea.vmem %s1, 96
      %v186 = vld [vmem:[%s185] sm:$0xff]
      %v187 = vld [vmem:[%s185 + $0x8] sm:$0xff]
      %v188 = vld [vmem:[%s185 + $0x10] sm:$0xff]
      %v189 = vld [vmem:[%s185 + $0x18] sm:$0xff]
      %s190 = scalar_lea.vmem %s1, 128
      %v191 = vld [vmem:[%s190] sm:$0xff]
      %v192 = vld [vmem:[%s190 + $0x8] sm:$0xff]
      %v193 = vld [vmem:[%s190 + $0x10] sm:$0xff]
      %v194 = vld [vmem:[%s190 + $0x18] sm:$0xff]
      %s195 = scalar_lea.vmem %s1, 160
      %v196 = vld [vmem:[%s195] sm:$0xff]
      %v197 = vld [vmem:[%s195 + $0x8] sm:$0xff]
      %v198 = vld [vmem:[%s195 + $0x10] sm:$0xff]
      %v199 = vld [vmem:[%s195 + $0x18] sm:$0xff]
      %s200 = scalar_lea.vmem %s1, 192
      %v201 = vld [vmem:[%s200] sm:$0xff]
      %v202 = vld [vmem:[%s200 + $0x8] sm:$0xff]
      %v203 = vld [vmem:[%s200 + $0x10] sm:$0xff]
      %v204 = vld [vmem:[%s200 + $0x18] sm:$0xff]
      %s205 = scalar_lea.vmem %s1, 224
      %v206 = vld [vmem:[%s205] sm:$0xff]
      %v207 = vld [vmem:[%s205 + $0x8] sm:$0xff]
      %v208 = vld [vmem:[%s205 + $0x10] sm:$0xff]
      %v209 = vld [vmem:[%s205 + $0x18] sm:$0xff]
      %s210 = scalar_lea.vmem %s1, 256
      %v211 = vld [vmem:[%s210] sm:$0xff]
      %v212 = vld [vmem:[%s210 + $0x8] sm:$0xff]
      %v213 = vld [vmem:[%s210 + $0x10] sm:$0xff]
      %v214 = vld [vmem:[%s210 + $0x18] sm:$0xff]
      %v215 = vld [vmem:[%s2] sm:$0x1]
      %v216 = vlaneseq
      %v217 = vshrl.u32 %v216, 7
      %v218 = vadd.s32 %v217, 8
      %v219 = vlaneseq
      %v220 = vand.u32 %v219, 127
      %v221 = vmul.u32 %v217, 2
      %v222 = vmul.u32 %v218, 2
      %vm223 = vcmp.eq.s32.totalorder %v220, %v221
      %vm224 = vcmp.eq.s32.totalorder %v220, %v222
      %v225 = vsel %vm223, 1, 0
      %v226 = vsel %vm224, 1, 0
      %v227 = vcvt.s32.f32 %v225
      %v228 = vcvt.s32.f32 %v226
      %v229 = vadd.s32 %v221, 1
      %v230 = vadd.s32 %v222, 1
      %vm231 = vcmp.eq.s32.totalorder %v220, %v229
      %vm232 = vcmp.eq.s32.totalorder %v220, %v230
      %v233 = vsel %vm231, 1, 0
      %v234 = vsel %vm232, 1, 0
      %v235 = vcvt.s32.f32 %v233
      %v236 = vcvt.s32.f32 %v234
      loop: start=0, step=1, limit=14
      $region33: #{cnn1_forward.6} parent=31 // loop_pre_header
        _
      $region34: #{cnn1_forward.6} parent=31 // loop_header
        %s238 = sphi 0, %s242
        %p239 = scmp.ge.s32.totalorder %s238, 14
      $region35: #{cnn1_forward.6} parent=31 // loop_header_branch
        %241 = sbr.rel (%p239) target = $region39
      $region36: #{cnn1_forward.6} parent=31 // loop_body
        %s243 = smul.u32 %s238, 2
        %s244 = smul.u32 %s243, 32
        %s245 = scalar_lea.vmem %s165, %s244
        %v246 = vld [vmem:[%s245] sm:$0xff]
        %v247 = vld [vmem:[%s245 + $0x8] sm:$0xff]
        %v248 = vld [vmem:[%s245 + $0x10] sm:$0xff]
        %v249 = vld [vmem:[%s245 + $0x18] sm:$0xf]
        %v250 = vld [vmem:[%s245 + $0x1] sm:$0xff]
        %v251 = vld [vmem:[%s245 + $0x9] sm:$0xff]
        %v252 = vld [vmem:[%s245 + $0x11] sm:$0xff]
        %v253 = vld [vmem:[%s245 + $0x19] sm:$0xf]
        %vm254 = vcmask 261120
        %v256 = vsel %vm254, %v250, 0
        %v259 = vsel %vm254, %v251, 0
        %v262 = vsel %vm254, %v252, 0
        %v265 = vsel %vm254, %v253, 0
        %267 = vmatprep.subr.mxu0 0.0
        %268 = vmatpush1.msra.mxu0 0.0
        %269 = vmatprep.subr.mxu0 0.0
        %270 = vmatpush1.msra.mxu0 0.0
        %271 = vmatprep.subr.mxu0 0.0
        %272 = vmatpush1.msra.mxu0 0.0
        %273 = vmatprep.subr.mxu0 0.0
        %274 = vmatpush1.msra.mxu0 0.0
        %275 = vmatprep.subr.mxu0 0.0
        %276 = vmatpush1.msra.mxu0 0.0
        %277 = vmatprep.subr.mxu0 0.0
        %278 = vmatpush1.msra.mxu0 0.0
        %279 = vmatprep.subr.mxu0 0.0
        %280 = vmatpush1.msra.mxu0 0.0
        %281 = vmatprep.subr.mxu0 0.0
        %282 = vmatpush1.msra.mxu0 0.0
        %283 = vmatprep.subr.mxu0 0.0
        %284 = vmatpush1.msra.mxu0 0.0
        %285 = vmatprep.subr.mxu0 0.0
        %286 = vmatpush1.msra.mxu0 0.0
        %287 = vmatprep.subr.mxu0 0.0
        %288 = vmatpush1.msra.mxu0 0.0
        %289 = vmatprep.subr.mxu0 0.0
        %290 = vmatpush1.msra.mxu0 0.0
        %291 = vmatprep.subr.mxu0 0.0
        %292 = vmatpush1.msra.mxu0 %v179
        %293 = vmatprep.subr.mxu0 0.0
        %294 = vmatpush1.msra.mxu0 %v178
        %295 = vmatprep.subr.mxu0 0.0
        %296 = vmatpush1.msra.mxu0 %v177
        %297 = vmatprep.subr.mxu0 0.0
        %298 = vmatpush1.msra.mxu0 %v176
        %299 = vmatprep.subr.mxu0 0.0
        %300 = vmatpush2.msra.mxu0 0.0
        %301 = vmatprep.subr.mxu0 0.0
        %302 = vmatpush2.msra.mxu0 0.0
        %303 = vmatprep.subr.mxu0 0.0
        %304 = vmatpush2.msra.mxu0 0.0
        %305 = vmatprep.subr.mxu0 0.0
        %306 = vmatpush2.msra.mxu0 0.0
        %307 = vmatprep.subr.mxu0 0.0
        %308 = vmatpush2.msra.mxu0 0.0
        %309 = vmatprep.subr.mxu0 0.0
        %310 = vmatpush2.msra.mxu0 0.0
        %311 = vmatprep.subr.mxu0 0.0
        %312 = vmatpush2.msra.mxu0 0.0
        %313 = vmatprep.subr.mxu0 0.0
        %314 = vmatpush2.msra.mxu0 0.0
        %315 = vmatprep.subr.mxu0 0.0
        %316 = vmatpush2.msra.mxu0 0.0
        %317 = vmatprep.subr.mxu0 0.0
        %318 = vmatpush2.msra.mxu0 0.0
        %319 = vmatprep.subr.mxu0 0.0
        %320 = vmatpush2.msra.mxu0 0.0
        %321 = vmatprep.subr.mxu0 0.0
        %322 = vmatpush2.msra.mxu0 0.0
        %323 = vmatprep.subr.mxu0 0.0
        %324 = vmatpush2.msra.mxu0 0.0
        %325 = vmatprep.subr.mxu0 0.0
        %326 = vmatpush2.msra.mxu0 0.0
        %327 = vmatprep.subr.mxu0 0.0
        %328 = vmatpush2.msra.mxu0 0.0
        %329 = vmatprep.subr.mxu0 0.0
        %330 = vmatpush2.msra.mxu0 0.0
        %331 = vmatprep.mubr.f32.mxu0 0.0
        %332 = vmatmul.mubr.f32.gmra.mxu0 %v256
        %v333 = vpop.f32.mrf.mxu0
        %v334 = vadd.f32 0.0, %v333
        %v335 = vpop.f32.mrf.mxu0
        %336 = vmatprep.mubr.f32.mxu0 0.0
        %337 = vmatmul.mubr.f32.gmra.mxu0 %v259
        %v338 = vpop.f32.mrf.mxu0
        %v339 = vadd.f32 0.0, %v338
        %v340 = vpop.f32.mrf.mxu0
        %341 = vmatprep.mubr.f32.mxu0 0.0
        %342 = vmatmul.mubr.f32.gmra.mxu0 %v262
        %v343 = vpop.f32.mrf.mxu0
        %v344 = vadd.f32 0.0, %v343
        %v345 = vpop.f32.mrf.mxu0
        %346 = vmatprep.mubr.f32.mxu0 0.0
        %347 = vmatmul.mubr.f32.gmra.mxu0 %v265
        %v348 = vpop.f32.mrf.mxu0
        %v349 = vadd.f32 0.0, %v348
        %v350 = vpop.f32.mrf.mxu0
        %351 = vdwg.mxu0
        %v353 = vsel %vm254, %v246, 0
        %v356 = vsel %vm254, %v247, 0
        %v359 = vsel %vm254, %v248, 0
        %v362 = vsel %vm254, %v249, 0
        %364 = vmatprep.subr.mxu0 0.0
        %365 = vmatpush1.msra.mxu0 0.0
        %366 = vmatprep.subr.mxu0 0.0
        %367 = vmatpush1.msra.mxu0 0.0
        %368 = vmatprep.subr.mxu0 0.0
        %369 = vmatpush1.msra.mxu0 0.0
        %370 = vmatprep.subr.mxu0 0.0
        %371 = vmatpush1.msra.mxu0 0.0
        %372 = vmatprep.subr.mxu0 0.0
        %373 = vmatpush1.msra.mxu0 0.0
        %374 = vmatprep.subr.mxu0 0.0
        %375 = vmatpush1.msra.mxu0 0.0
        %376 = vmatprep.subr.mxu0 0.0
        %377 = vmatpush1.msra.mxu0 0.0
        %378 = vmatprep.subr.mxu0 0.0
        %379 = vmatpush1.msra.mxu0 0.0
        %380 = vmatprep.subr.mxu0 0.0
        %381 = vmatpush1.msra.mxu0 0.0
        %382 = vmatprep.subr.mxu0 0.0
        %383 = vmatpush1.msra.mxu0 0.0
        %384 = vmatprep.subr.mxu0 0.0
        %385 = vmatpush1.msra.mxu0 0.0
        %386 = vmatprep.subr.mxu0 0.0
        %387 = vmatpush1.msra.mxu0 0.0
        %388 = vmatprep.subr.mxu0 0.0
        %389 = vmatpush1.msra.mxu0 %v174
        %390 = vmatprep.subr.mxu0 0.0
        %391 = vmatpush1.msra.mxu0 %v173
        %392 = vmatprep.subr.mxu0 0.0
        %393 = vmatpush1.msra.mxu0 %v172
        %394 = vmatprep.subr.mxu0 0.0
        %395 = vmatpush1.msra.mxu0 %v171
        %396 = vmatprep.subr.mxu0 0.0
        %397 = vmatpush2.msra.mxu0 0.0
        %398 = vmatprep.subr.mxu0 0.0
        %399 = vmatpush2.msra.mxu0 0.0
        %400 = vmatprep.subr.mxu0 0.0
        %401 = vmatpush2.msra.mxu0 0.0
        %402 = vmatprep.subr.mxu0 0.0
        %403 = vmatpush2.msra.mxu0 0.0
        %404 = vmatprep.subr.mxu0 0.0
        %405 = vmatpush2.msra.mxu0 0.0
        %406 = vmatprep.subr.mxu0 0.0
        %407 = vmatpush2.msra.mxu0 0.0
        %408 = vmatprep.subr.mxu0 0.0
        %409 = vmatpush2.msra.mxu0 0.0
        %410 = vmatprep.subr.mxu0 0.0
        %411 = vmatpush2.msra.mxu0 0.0
        %412 = vmatprep.subr.mxu0 0.0
        %413 = vmatpush2.msra.mxu0 0.0
        %414 = vmatprep.subr.mxu0 0.0
        %415 = vmatpush2.msra.mxu0 0.0
        %416 = vmatprep.subr.mxu0 0.0
        %417 = vmatpush2.msra.mxu0 0.0
        %418 = vmatprep.subr.mxu0 0.0
        %419 = vmatpush2.msra.mxu0 0.0
        %420 = vmatprep.subr.mxu0 0.0
        %421 = vmatpush2.msra.mxu0 0.0
        %422 = vmatprep.subr.mxu0 0.0
        %423 = vmatpush2.msra.mxu0 0.0
        %424 = vmatprep.subr.mxu0 0.0
        %425 = vmatpush2.msra.mxu0 0.0
        %426 = vmatprep.subr.mxu0 0.0
        %427 = vmatpush2.msra.mxu0 0.0
        %428 = vmatprep.mubr.f32.mxu0 0.0
        %429 = vmatmul.mubr.f32.gmra.mxu0 %v353
        %v430 = vpop.f32.mrf.mxu0
        %v431 = vadd.f32 %v334, %v430
        %v432 = vpop.f32.mrf.mxu0
        %433 = vmatprep.mubr.f32.mxu0 0.0
        %434 = vmatmul.mubr.f32.gmra.mxu0 %v356
        %v435 = vpop.f32.mrf.mxu0
        %v436 = vadd.f32 %v339, %v435
        %v437 = vpop.f32.mrf.mxu0
        %438 = vmatprep.mubr.f32.mxu0 0.0
        %439 = vmatmul.mubr.f32.gmra.mxu0 %v359
        %v440 = vpop.f32.mrf.mxu0
        %v441 = vadd.f32 %v344, %v440
        %v442 = vpop.f32.mrf.mxu0
        %443 = vmatprep.mubr.f32.mxu0 0.0
        %444 = vmatmul.mubr.f32.gmra.mxu0 %v362
        %v445 = vpop.f32.mrf.mxu0
        %v446 = vadd.f32 %v349, %v445
        %v447 = vpop.f32.mrf.mxu0
        %448 = vdwg.mxu0
        %v449 = vld [vmem:[%s245 + $0x2] sm:$0xff]
        %v450 = vld [vmem:[%s245 + $0xa] sm:$0xff]
        %v451 = vld [vmem:[%s245 + $0x12] sm:$0xff]
        %v452 = vld [vmem:[%s245 + $0x1a] sm:$0xf]
        %v454 = vsel %vm254, %v449, 0
        %v457 = vsel %vm254, %v450, 0
        %v460 = vsel %vm254, %v451, 0
        %v463 = vsel %vm254, %v452, 0
        %465 = vmatprep.subr.mxu0 0.0
        %466 = vmatpush1.msra.mxu0 0.0
        %467 = vmatprep.subr.mxu0 0.0
        %468 = vmatpush1.msra.mxu0 0.0
        %469 = vmatprep.subr.mxu0 0.0
        %470 = vmatpush1.msra.mxu0 0.0
        %471 = vmatprep.subr.mxu0 0.0
        %472 = vmatpush1.msra.mxu0 0.0
        %473 = vmatprep.subr.mxu0 0.0
        %474 = vmatpush1.msra.mxu0 0.0
        %475 = vmatprep.subr.mxu0 0.0
        %476 = vmatpush1.msra.mxu0 0.0
        %477 = vmatprep.subr.mxu0 0.0
        %478 = vmatpush1.msra.mxu0 0.0
        %479 = vmatprep.subr.mxu0 0.0
        %480 = vmatpush1.msra.mxu0 0.0
        %481 = vmatprep.subr.mxu0 0.0
        %482 = vmatpush1.msra.mxu0 0.0
        %483 = vmatprep.subr.mxu0 0.0
        %484 = vmatpush1.msra.mxu0 0.0
        %485 = vmatprep.subr.mxu0 0.0
        %486 = vmatpush1.msra.mxu0 0.0
        %487 = vmatprep.subr.mxu0 0.0
        %488 = vmatpush1.msra.mxu0 0.0
        %489 = vmatprep.subr.mxu0 0.0
        %490 = vmatpush1.msra.mxu0 %v184
        %491 = vmatprep.subr.mxu0 0.0
        %492 = vmatpush1.msra.mxu0 %v183
        %493 = vmatprep.subr.mxu0 0.0
        %494 = vmatpush1.msra.mxu0 %v182
        %495 = vmatprep.subr.mxu0 0.0
        %496 = vmatpush1.msra.mxu0 %v181
        %497 = vmatprep.subr.mxu0 0.0
        %498 = vmatpush2.msra.mxu0 0.0
        %499 = vmatprep.subr.mxu0 0.0
        %500 = vmatpush2.msra.mxu0 0.0
        %501 = vmatprep.subr.mxu0 0.0
        %502 = vmatpush2.msra.mxu0 0.0
        %503 = vmatprep.subr.mxu0 0.0
        %504 = vmatpush2.msra.mxu0 0.0
        %505 = vmatprep.subr.mxu0 0.0
        %506 = vmatpush2.msra.mxu0 0.0
        %507 = vmatprep.subr.mxu0 0.0
        %508 = vmatpush2.msra.mxu0 0.0
        %509 = vmatprep.subr.mxu0 0.0
        %510 = vmatpush2.msra.mxu0 0.0
        %511 = vmatprep.subr.mxu0 0.0
        %512 = vmatpush2.msra.mxu0 0.0
        %513 = vmatprep.subr.mxu0 0.0
        %514 = vmatpush2.msra.mxu0 0.0
        %515 = vmatprep.subr.mxu0 0.0
        %516 = vmatpush2.msra.mxu0 0.0
        %517 = vmatprep.subr.mxu0 0.0
        %518 = vmatpush2.msra.mxu0 0.0
        %519 = vmatprep.subr.mxu0 0.0
        %520 = vmatpush2.msra.mxu0 0.0
        %521 = vmatprep.subr.mxu0 0.0
        %522 = vmatpush2.msra.mxu0 0.0
        %523 = vmatprep.subr.mxu0 0.0
        %524 = vmatpush2.msra.mxu0 0.0
        %525 = vmatprep.subr.mxu0 0.0
        %526 = vmatpush2.msra.mxu0 0.0
        %527 = vmatprep.subr.mxu0 0.0
        %528 = vmatpush2.msra.mxu0 0.0
        %529 = vmatprep.mubr.f32.mxu0 0.0
        %530 = vmatmul.mubr.f32.gmra.mxu0 %v454
        %v531 = vpop.f32.mrf.mxu0
        %v532 = vadd.f32 0.0, %v531
        %v533 = vpop.f32.mrf.mxu0
        %534 = vmatprep.mubr.f32.mxu0 0.0
        %535 = vmatmul.mubr.f32.gmra.mxu0 %v457
        %v536 = vpop.f32.mrf.mxu0
        %v537 = vadd.f32 0.0, %v536
        %v538 = vpop.f32.mrf.mxu0
        %539 = vmatprep.mubr.f32.mxu0 0.0
        %540 = vmatmul.mubr.f32.gmra.mxu0 %v460
        %v541 = vpop.f32.mrf.mxu0
        %v542 = vadd.f32 0.0, %v541
        %v543 = vpop.f32.mrf.mxu0
        %544 = vmatprep.mubr.f32.mxu0 0.0
        %545 = vmatmul.mubr.f32.gmra.mxu0 %v463
        %v546 = vpop.f32.mrf.mxu0
        %v547 = vadd.f32 0.0, %v546
        %v548 = vpop.f32.mrf.mxu0
        %549 = vdwg.mxu0
        %v550 = vadd.f32 %v431, %v532
        %v551 = vadd.f32 %v436, %v537
        %v552 = vadd.f32 %v441, %v542
        %v553 = vadd.f32 %v446, %v547
        %s554 = sadd.s32 %s243, 1
        %s555 = smul.u32 %s554, 32
        %s556 = scalar_lea.vmem %s165, %s555
        %v557 = vld [vmem:[%s556] sm:$0xff]
        %v558 = vld [vmem:[%s556 + $0x8] sm:$0xff]
        %v559 = vld [vmem:[%s556 + $0x10] sm:$0xff]
        %v560 = vld [vmem:[%s556 + $0x18] sm:$0xf]
        %v562 = vsel %vm254, %v557, 0
        %v565 = vsel %vm254, %v558, 0
        %v568 = vsel %vm254, %v559, 0
        %v571 = vsel %vm254, %v560, 0
        %573 = vmatprep.subr.mxu0 0.0
        %574 = vmatpush1.msra.mxu0 0.0
        %575 = vmatprep.subr.mxu0 0.0
        %576 = vmatpush1.msra.mxu0 0.0
        %577 = vmatprep.subr.mxu0 0.0
        %578 = vmatpush1.msra.mxu0 0.0
        %579 = vmatprep.subr.mxu0 0.0
        %580 = vmatpush1.msra.mxu0 0.0
        %581 = vmatprep.subr.mxu0 0.0
        %582 = vmatpush1.msra.mxu0 0.0
        %583 = vmatprep.subr.mxu0 0.0
        %584 = vmatpush1.msra.mxu0 0.0
        %585 = vmatprep.subr.mxu0 0.0
        %586 = vmatpush1.msra.mxu0 0.0
        %587 = vmatprep.subr.mxu0 0.0
        %588 = vmatpush1.msra.mxu0 0.0
        %589 = vmatprep.subr.mxu0 0.0
        %590 = vmatpush1.msra.mxu0 0.0
        %591 = vmatprep.subr.mxu0 0.0
        %592 = vmatpush1.msra.mxu0 0.0
        %593 = vmatprep.subr.mxu0 0.0
        %594 = vmatpush1.msra.mxu0 0.0
        %595 = vmatprep.subr.mxu0 0.0
        %596 = vmatpush1.msra.mxu0 0.0
        %597 = vmatprep.subr.mxu0 0.0
        %598 = vmatpush1.msra.mxu0 %v189
        %599 = vmatprep.subr.mxu0 0.0
        %600 = vmatpush1.msra.mxu0 %v188
        %601 = vmatprep.subr.mxu0 0.0
        %602 = vmatpush1.msra.mxu0 %v187
        %603 = vmatprep.subr.mxu0 0.0
        %604 = vmatpush1.msra.mxu0 %v186
        %605 = vmatprep.subr.mxu0 0.0
        %606 = vmatpush2.msra.mxu0 0.0
        %607 = vmatprep.subr.mxu0 0.0
        %608 = vmatpush2.msra.mxu0 0.0
        %609 = vmatprep.subr.mxu0 0.0
        %610 = vmatpush2.msra.mxu0 0.0
        %611 = vmatprep.subr.mxu0 0.0
        %612 = vmatpush2.msra.mxu0 0.0
        %613 = vmatprep.subr.mxu0 0.0
        %614 = vmatpush2.msra.mxu0 0.0
        %615 = vmatprep.subr.mxu0 0.0
        %616 = vmatpush2.msra.mxu0 0.0
        %617 = vmatprep.subr.mxu0 0.0
        %618 = vmatpush2.msra.mxu0 0.0
        %619 = vmatprep.subr.mxu0 0.0
        %620 = vmatpush2.msra.mxu0 0.0
        %621 = vmatprep.subr.mxu0 0.0
        %622 = vmatpush2.msra.mxu0 0.0
        %623 = vmatprep.subr.mxu0 0.0
        %624 = vmatpush2.msra.mxu0 0.0
        %625 = vmatprep.subr.mxu0 0.0
        %626 = vmatpush2.msra.mxu0 0.0
        %627 = vmatprep.subr.mxu0 0.0
        %628 = vmatpush2.msra.mxu0 0.0
        %629 = vmatprep.subr.mxu0 0.0
        %630 = vmatpush2.msra.mxu0 0.0
        %631 = vmatprep.subr.mxu0 0.0
        %632 = vmatpush2.msra.mxu0 0.0
        %633 = vmatprep.subr.mxu0 0.0
        %634 = vmatpush2.msra.mxu0 0.0
        %635 = vmatprep.subr.mxu0 0.0
        %636 = vmatpush2.msra.mxu0 0.0
        %637 = vmatprep.mubr.f32.mxu0 0.0
        %638 = vmatmul.mubr.f32.gmra.mxu0 %v562
        %v639 = vpop.f32.mrf.mxu0
        %v640 = vadd.f32 0.0, %v639
        %v641 = vpop.f32.mrf.mxu0
        %642 = vmatprep.mubr.f32.mxu0 0.0
        %643 = vmatmul.mubr.f32.gmra.mxu0 %v565
        %v644 = vpop.f32.mrf.mxu0
        %v645 = vadd.f32 0.0, %v644
        %v646 = vpop.f32.mrf.mxu0
        %647 = vmatprep.mubr.f32.mxu0 0.0
        %648 = vmatmul.mubr.f32.gmra.mxu0 %v568
        %v649 = vpop.f32.mrf.mxu0
        %v650 = vadd.f32 0.0, %v649
        %v651 = vpop.f32.mrf.mxu0
        %652 = vmatprep.mubr.f32.mxu0 0.0
        %653 = vmatmul.mubr.f32.gmra.mxu0 %v571
        %v654 = vpop.f32.mrf.mxu0
        %v655 = vadd.f32 0.0, %v654
        %v656 = vpop.f32.mrf.mxu0
        %657 = vdwg.mxu0
        %v658 = vadd.f32 %v550, %v640
        %v659 = vadd.f32 %v551, %v645
        %v660 = vadd.f32 %v552, %v650
        %v661 = vadd.f32 %v553, %v655
        %v662 = vld [vmem:[%s556 + $0x1] sm:$0xff]
        %v663 = vld [vmem:[%s556 + $0x9] sm:$0xff]
        %v664 = vld [vmem:[%s556 + $0x11] sm:$0xff]
        %v665 = vld [vmem:[%s556 + $0x19] sm:$0xf]
        %v667 = vsel %vm254, %v662, 0
        %v670 = vsel %vm254, %v663, 0
        %v673 = vsel %vm254, %v664, 0
        %v676 = vsel %vm254, %v665, 0
        %678 = vmatprep.subr.mxu0 0.0
        %679 = vmatpush1.msra.mxu0 0.0
        %680 = vmatprep.subr.mxu0 0.0
        %681 = vmatpush1.msra.mxu0 0.0
        %682 = vmatprep.subr.mxu0 0.0
        %683 = vmatpush1.msra.mxu0 0.0
        %684 = vmatprep.subr.mxu0 0.0
        %685 = vmatpush1.msra.mxu0 0.0
        %686 = vmatprep.subr.mxu0 0.0
        %687 = vmatpush1.msra.mxu0 0.0
        %688 = vmatprep.subr.mxu0 0.0
        %689 = vmatpush1.msra.mxu0 0.0
        %690 = vmatprep.subr.mxu0 0.0
        %691 = vmatpush1.msra.mxu0 0.0
        %692 = vmatprep.subr.mxu0 0.0
        %693 = vmatpush1.msra.mxu0 0.0
        %694 = vmatprep.subr.mxu0 0.0
        %695 = vmatpush1.msra.mxu0 0.0
        %696 = vmatprep.subr.mxu0 0.0
        %697 = vmatpush1.msra.mxu0 0.0
        %698 = vmatprep.subr.mxu0 0.0
        %699 = vmatpush1.msra.mxu0 0.0
        %700 = vmatprep.subr.mxu0 0.0
        %701 = vmatpush1.msra.mxu0 0.0
        %702 = vmatprep.subr.mxu0 0.0
        %703 = vmatpush1.msra.mxu0 %v194
        %704 = vmatprep.subr.mxu0 0.0
        %705 = vmatpush1.msra.mxu0 %v193
        %706 = vmatprep.subr.mxu0 0.0
        %707 = vmatpush1.msra.mxu0 %v192
        %708 = vmatprep.subr.mxu0 0.0
        %709 = vmatpush1.msra.mxu0 %v191
        %710 = vmatprep.subr.mxu0 0.0
        %711 = vmatpush2.msra.mxu0 0.0
        %712 = vmatprep.subr.mxu0 0.0
        %713 = vmatpush2.msra.mxu0 0.0
        %714 = vmatprep.subr.mxu0 0.0
        %715 = vmatpush2.msra.mxu0 0.0
        %716 = vmatprep.subr.mxu0 0.0
        %717 = vmatpush2.msra.mxu0 0.0
        %718 = vmatprep.subr.mxu0 0.0
        %719 = vmatpush2.msra.mxu0 0.0
        %720 = vmatprep.subr.mxu0 0.0
        %721 = vmatpush2.msra.mxu0 0.0
        %722 = vmatprep.subr.mxu0 0.0
        %723 = vmatpush2.msra.mxu0 0.0
        %724 = vmatprep.subr.mxu0 0.0
        %725 = vmatpush2.msra.mxu0 0.0
        %726 = vmatprep.subr.mxu0 0.0
        %727 = vmatpush2.msra.mxu0 0.0
        %728 = vmatprep.subr.mxu0 0.0
        %729 = vmatpush2.msra.mxu0 0.0
        %730 = vmatprep.subr.mxu0 0.0
        %731 = vmatpush2.msra.mxu0 0.0
        %732 = vmatprep.subr.mxu0 0.0
        %733 = vmatpush2.msra.mxu0 0.0
        %734 = vmatprep.subr.mxu0 0.0
        %735 = vmatpush2.msra.mxu0 0.0
        %736 = vmatprep.subr.mxu0 0.0
        %737 = vmatpush2.msra.mxu0 0.0
        %738 = vmatprep.subr.mxu0 0.0
        %739 = vmatpush2.msra.mxu0 0.0
        %740 = vmatprep.subr.mxu0 0.0
        %741 = vmatpush2.msra.mxu0 0.0
        %742 = vmatprep.mubr.f32.mxu0 0.0
        %743 = vmatmul.mubr.f32.gmra.mxu0 %v667
        %v744 = vpop.f32.mrf.mxu0
        %v745 = vadd.f32 0.0, %v744
        %v746 = vpop.f32.mrf.mxu0
        %747 = vmatprep.mubr.f32.mxu0 0.0
        %748 = vmatmul.mubr.f32.gmra.mxu0 %v670
        %v749 = vpop.f32.mrf.mxu0
        %v750 = vadd.f32 0.0, %v749
        %v751 = vpop.f32.mrf.mxu0
        %752 = vmatprep.mubr.f32.mxu0 0.0
        %753 = vmatmul.mubr.f32.gmra.mxu0 %v673
        %v754 = vpop.f32.mrf.mxu0
        %v755 = vadd.f32 0.0, %v754
        %v756 = vpop.f32.mrf.mxu0
        %757 = vmatprep.mubr.f32.mxu0 0.0
        %758 = vmatmul.mubr.f32.gmra.mxu0 %v676
        %v759 = vpop.f32.mrf.mxu0
        %v760 = vadd.f32 0.0, %v759
        %v761 = vpop.f32.mrf.mxu0
        %762 = vdwg.mxu0
        %v763 = vadd.f32 %v658, %v745
        %v764 = vadd.f32 %v659, %v750
        %v765 = vadd.f32 %v660, %v755
        %v766 = vadd.f32 %v661, %v760
        %767 = vmatprep.subr.mxu0 0.0
        %768 = vmatpush1.msra.mxu0 0.0
        %769 = vmatprep.subr.mxu0 0.0
        %770 = vmatpush1.msra.mxu0 0.0
        %771 = vmatprep.subr.mxu0 0.0
        %772 = vmatpush1.msra.mxu0 0.0
        %773 = vmatprep.subr.mxu0 0.0
        %774 = vmatpush1.msra.mxu0 0.0
        %775 = vmatprep.subr.mxu0 0.0
        %776 = vmatpush1.msra.mxu0 0.0
        %777 = vmatprep.subr.mxu0 0.0
        %778 = vmatpush1.msra.mxu0 0.0
        %779 = vmatprep.subr.mxu0 0.0
        %780 = vmatpush1.msra.mxu0 0.0
        %781 = vmatprep.subr.mxu0 0.0
        %782 = vmatpush1.msra.mxu0 0.0
        %783 = vmatprep.subr.mxu0 0.0
        %784 = vmatpush1.msra.mxu0 0.0
        %785 = vmatprep.subr.mxu0 0.0
        %786 = vmatpush1.msra.mxu0 0.0
        %787 = vmatprep.subr.mxu0 0.0
        %788 = vmatpush1.msra.mxu0 0.0
        %789 = vmatprep.subr.mxu0 0.0
        %790 = vmatpush1.msra.mxu0 0.0
        %791 = vmatprep.subr.mxu0 0.0
        %792 = vmatpush1.msra.mxu0 %v179
        %793 = vmatprep.subr.mxu0 0.0
        %794 = vmatpush1.msra.mxu0 %v178
        %795 = vmatprep.subr.mxu0 0.0
        %796 = vmatpush1.msra.mxu0 %v177
        %797 = vmatprep.subr.mxu0 0.0
        %798 = vmatpush1.msra.mxu0 %v176
        %799 = vmatprep.subr.mxu0 0.0
        %800 = vmatpush2.msra.mxu0 0.0
        %801 = vmatprep.subr.mxu0 0.0
        %802 = vmatpush2.msra.mxu0 0.0
        %803 = vmatprep.subr.mxu0 0.0
        %804 = vmatpush2.msra.mxu0 0.0
        %805 = vmatprep.subr.mxu0 0.0
        %806 = vmatpush2.msra.mxu0 0.0
        %807 = vmatprep.subr.mxu0 0.0
        %808 = vmatpush2.msra.mxu0 0.0
        %809 = vmatprep.subr.mxu0 0.0
        %810 = vmatpush2.msra.mxu0 0.0
        %811 = vmatprep.subr.mxu0 0.0
        %812 = vmatpush2.msra.mxu0 0.0
        %813 = vmatprep.subr.mxu0 0.0
        %814 = vmatpush2.msra.mxu0 0.0
        %815 = vmatprep.subr.mxu0 0.0
        %816 = vmatpush2.msra.mxu0 0.0
        %817 = vmatprep.subr.mxu0 0.0
        %818 = vmatpush2.msra.mxu0 0.0
        %819 = vmatprep.subr.mxu0 0.0
        %820 = vmatpush2.msra.mxu0 0.0
        %821 = vmatprep.subr.mxu0 0.0
        %822 = vmatpush2.msra.mxu0 0.0
        %823 = vmatprep.subr.mxu0 0.0
        %824 = vmatpush2.msra.mxu0 0.0
        %825 = vmatprep.subr.mxu0 0.0
        %826 = vmatpush2.msra.mxu0 0.0
        %827 = vmatprep.subr.mxu0 0.0
        %828 = vmatpush2.msra.mxu0 0.0
        %829 = vmatprep.subr.mxu0 0.0
        %830 = vmatpush2.msra.mxu0 0.0
        %831 = vmatprep.mubr.f32.mxu0 0.0
        %832 = vmatmul.mubr.f32.gmra.mxu0 %v667
        %v833 = vpop.f32.mrf.mxu0
        %v834 = vadd.f32 0.0, %v833
        %v835 = vpop.f32.mrf.mxu0
        %836 = vmatprep.mubr.f32.mxu0 0.0
        %837 = vmatmul.mubr.f32.gmra.mxu0 %v670
        %v838 = vpop.f32.mrf.mxu0
        %v839 = vadd.f32 0.0, %v838
        %v840 = vpop.f32.mrf.mxu0
        %841 = vmatprep.mubr.f32.mxu0 0.0
        %842 = vmatmul.mubr.f32.gmra.mxu0 %v673
        %v843 = vpop.f32.mrf.mxu0
        %v844 = vadd.f32 0.0, %v843
        %v845 = vpop.f32.mrf.mxu0
        %846 = vmatprep.mubr.f32.mxu0 0.0
        %847 = vmatmul.mubr.f32.gmra.mxu0 %v676
        %v848 = vpop.f32.mrf.mxu0
        %v849 = vadd.f32 0.0, %v848
        %v850 = vpop.f32.mrf.mxu0
        %851 = vdwg.mxu0
        %852 = vmatprep.subr.mxu0 0.0
        %853 = vmatpush1.msra.mxu0 0.0
        %854 = vmatprep.subr.mxu0 0.0
        %855 = vmatpush1.msra.mxu0 0.0
        %856 = vmatprep.subr.mxu0 0.0
        %857 = vmatpush1.msra.mxu0 0.0
        %858 = vmatprep.subr.mxu0 0.0
        %859 = vmatpush1.msra.mxu0 0.0
        %860 = vmatprep.subr.mxu0 0.0
        %861 = vmatpush1.msra.mxu0 0.0
        %862 = vmatprep.subr.mxu0 0.0
        %863 = vmatpush1.msra.mxu0 0.0
        %864 = vmatprep.subr.mxu0 0.0
        %865 = vmatpush1.msra.mxu0 0.0
        %866 = vmatprep.subr.mxu0 0.0
        %867 = vmatpush1.msra.mxu0 0.0
        %868 = vmatprep.subr.mxu0 0.0
        %869 = vmatpush1.msra.mxu0 0.0
        %870 = vmatprep.subr.mxu0 0.0
        %871 = vmatpush1.msra.mxu0 0.0
        %872 = vmatprep.subr.mxu0 0.0
        %873 = vmatpush1.msra.mxu0 0.0
        %874 = vmatprep.subr.mxu0 0.0
        %875 = vmatpush1.msra.mxu0 0.0
        %876 = vmatprep.subr.mxu0 0.0
        %877 = vmatpush1.msra.mxu0 %v174
        %878 = vmatprep.subr.mxu0 0.0
        %879 = vmatpush1.msra.mxu0 %v173
        %880 = vmatprep.subr.mxu0 0.0
        %881 = vmatpush1.msra.mxu0 %v172
        %882 = vmatprep.subr.mxu0 0.0
        %883 = vmatpush1.msra.mxu0 %v171
        %884 = vmatprep.subr.mxu0 0.0
        %885 = vmatpush2.msra.mxu0 0.0
        %886 = vmatprep.subr.mxu0 0.0
        %887 = vmatpush2.msra.mxu0 0.0
        %888 = vmatprep.subr.mxu0 0.0
        %889 = vmatpush2.msra.mxu0 0.0
        %890 = vmatprep.subr.mxu0 0.0
        %891 = vmatpush2.msra.mxu0 0.0
        %892 = vmatprep.subr.mxu0 0.0
        %893 = vmatpush2.msra.mxu0 0.0
        %894 = vmatprep.subr.mxu0 0.0
        %895 = vmatpush2.msra.mxu0 0.0
        %896 = vmatprep.subr.mxu0 0.0
        %897 = vmatpush2.msra.mxu0 0.0
        %898 = vmatprep.subr.mxu0 0.0
        %899 = vmatpush2.msra.mxu0 0.0
        %900 = vmatprep.subr.mxu0 0.0
        %901 = vmatpush2.msra.mxu0 0.0
        %902 = vmatprep.subr.mxu0 0.0
        %903 = vmatpush2.msra.mxu0 0.0
        %904 = vmatprep.subr.mxu0 0.0
        %905 = vmatpush2.msra.mxu0 0.0
        %906 = vmatprep.subr.mxu0 0.0
        %907 = vmatpush2.msra.mxu0 0.0
        %908 = vmatprep.subr.mxu0 0.0
        %909 = vmatpush2.msra.mxu0 0.0
        %910 = vmatprep.subr.mxu0 0.0
        %911 = vmatpush2.msra.mxu0 0.0
        %912 = vmatprep.subr.mxu0 0.0
        %913 = vmatpush2.msra.mxu0 0.0
        %914 = vmatprep.subr.mxu0 0.0
        %915 = vmatpush2.msra.mxu0 0.0
        %916 = vmatprep.mubr.f32.mxu0 0.0
        %917 = vmatmul.mubr.f32.gmra.mxu0 %v562
        %v918 = vpop.f32.mrf.mxu0
        %v919 = vadd.f32 %v834, %v918
        %v920 = vpop.f32.mrf.mxu0
        %921 = vmatprep.mubr.f32.mxu0 0.0
        %922 = vmatmul.mubr.f32.gmra.mxu0 %v565
        %v923 = vpop.f32.mrf.mxu0
        %v924 = vadd.f32 %v839, %v923
        %v925 = vpop.f32.mrf.mxu0
        %926 = vmatprep.mubr.f32.mxu0 0.0
        %927 = vmatmul.mubr.f32.gmra.mxu0 %v568
        %v928 = vpop.f32.mrf.mxu0
        %v929 = vadd.f32 %v844, %v928
        %v930 = vpop.f32.mrf.mxu0
        %931 = vmatprep.mubr.f32.mxu0 0.0
        %932 = vmatmul.mubr.f32.gmra.mxu0 %v571
        %v933 = vpop.f32.mrf.mxu0
        %v934 = vadd.f32 %v849, %v933
        %v935 = vpop.f32.mrf.mxu0
        %936 = vdwg.mxu0
        %v937 = vld [vmem:[%s556 + $0x2] sm:$0xff]
        %v938 = vld [vmem:[%s556 + $0xa] sm:$0xff]
        %v939 = vld [vmem:[%s556 + $0x12] sm:$0xff]
        %v940 = vld [vmem:[%s556 + $0x1a] sm:$0xf]
        %v942 = vsel %vm254, %v937, 0
        %v945 = vsel %vm254, %v938, 0
        %v948 = vsel %vm254, %v939, 0
        %v951 = vsel %vm254, %v940, 0
        %953 = vmatprep.subr.mxu0 0.0
        %954 = vmatpush1.msra.mxu0 0.0
        %955 = vmatprep.subr.mxu0 0.0
        %956 = vmatpush1.msra.mxu0 0.0
        %957 = vmatprep.subr.mxu0 0.0
        %958 = vmatpush1.msra.mxu0 0.0
        %959 = vmatprep.subr.mxu0 0.0
        %960 = vmatpush1.msra.mxu0 0.0
        %961 = vmatprep.subr.mxu0 0.0
        %962 = vmatpush1.msra.mxu0 0.0
        %963 = vmatprep.subr.mxu0 0.0
        %964 = vmatpush1.msra.mxu0 0.0
        %965 = vmatprep.subr.mxu0 0.0
        %966 = vmatpush1.msra.mxu0 0.0
        %967 = vmatprep.subr.mxu0 0.0
        %968 = vmatpush1.msra.mxu0 0.0
        %969 = vmatprep.subr.mxu0 0.0
        %970 = vmatpush1.msra.mxu0 0.0
        %971 = vmatprep.subr.mxu0 0.0
        %972 = vmatpush1.msra.mxu0 0.0
        %973 = vmatprep.subr.mxu0 0.0
        %974 = vmatpush1.msra.mxu0 0.0
        %975 = vmatprep.subr.mxu0 0.0
        %976 = vmatpush1.msra.mxu0 0.0
        %977 = vmatprep.subr.mxu0 0.0
        %978 = vmatpush1.msra.mxu0 %v199
        %979 = vmatprep.subr.mxu0 0.0
        %980 = vmatpush1.msra.mxu0 %v198
        %981 = vmatprep.subr.mxu0 0.0
        %982 = vmatpush1.msra.mxu0 %v197
        %983 = vmatprep.subr.mxu0 0.0
        %984 = vmatpush1.msra.mxu0 %v196
        %985 = vmatprep.subr.mxu0 0.0
        %986 = vmatpush2.msra.mxu0 0.0
        %987 = vmatprep.subr.mxu0 0.0
        %988 = vmatpush2.msra.mxu0 0.0
        %989 = vmatprep.subr.mxu0 0.0
        %990 = vmatpush2.msra.mxu0 0.0
        %991 = vmatprep.subr.mxu0 0.0
        %992 = vmatpush2.msra.mxu0 0.0
        %993 = vmatprep.subr.mxu0 0.0
        %994 = vmatpush2.msra.mxu0 0.0
        %995 = vmatprep.subr.mxu0 0.0
        %996 = vmatpush2.msra.mxu0 0.0
        %997 = vmatprep.subr.mxu0 0.0
        %998 = vmatpush2.msra.mxu0 0.0
        %999 = vmatprep.subr.mxu0 0.0
        %1000 = vmatpush2.msra.mxu0 0.0
        %1001 = vmatprep.subr.mxu0 0.0
        %1002 = vmatpush2.msra.mxu0 0.0
        %1003 = vmatprep.subr.mxu0 0.0
        %1004 = vmatpush2.msra.mxu0 0.0
        %1005 = vmatprep.subr.mxu0 0.0
        %1006 = vmatpush2.msra.mxu0 0.0
        %1007 = vmatprep.subr.mxu0 0.0
        %1008 = vmatpush2.msra.mxu0 0.0
        %1009 = vmatprep.subr.mxu0 0.0
        %1010 = vmatpush2.msra.mxu0 0.0
        %1011 = vmatprep.subr.mxu0 0.0
        %1012 = vmatpush2.msra.mxu0 0.0
        %1013 = vmatprep.subr.mxu0 0.0
        %1014 = vmatpush2.msra.mxu0 0.0
        %1015 = vmatprep.subr.mxu0 0.0
        %1016 = vmatpush2.msra.mxu0 0.0
        %1017 = vmatprep.mubr.f32.mxu0 0.0
        %1018 = vmatmul.mubr.f32.gmra.mxu0 %v942
        %v1019 = vpop.f32.mrf.mxu0
        %v1020 = vadd.f32 0.0, %v1019
        %v1021 = vpop.f32.mrf.mxu0
        %1022 = vmatprep.mubr.f32.mxu0 0.0
        %1023 = vmatmul.mubr.f32.gmra.mxu0 %v945
        %v1024 = vpop.f32.mrf.mxu0
        %v1025 = vadd.f32 0.0, %v1024
        %v1026 = vpop.f32.mrf.mxu0
        %1027 = vmatprep.mubr.f32.mxu0 0.0
        %1028 = vmatmul.mubr.f32.gmra.mxu0 %v948
        %v1029 = vpop.f32.mrf.mxu0
        %v1030 = vadd.f32 0.0, %v1029
        %v1031 = vpop.f32.mrf.mxu0
        %1032 = vmatprep.mubr.f32.mxu0 0.0
        %1033 = vmatmul.mubr.f32.gmra.mxu0 %v951
        %v1034 = vpop.f32.mrf.mxu0
        %v1035 = vadd.f32 0.0, %v1034
        %v1036 = vpop.f32.mrf.mxu0
        %1037 = vdwg.mxu0
        %v1038 = vadd.f32 %v763, %v1020
        %v1039 = vadd.f32 %v764, %v1025
        %v1040 = vadd.f32 %v765, %v1030
        %v1041 = vadd.f32 %v766, %v1035
        %1042 = vmatprep.subr.mxu0 0.0
        %1043 = vmatpush1.msra.mxu0 0.0
        %1044 = vmatprep.subr.mxu0 0.0
        %1045 = vmatpush1.msra.mxu0 0.0
        %1046 = vmatprep.subr.mxu0 0.0
        %1047 = vmatpush1.msra.mxu0 0.0
        %1048 = vmatprep.subr.mxu0 0.0
        %1049 = vmatpush1.msra.mxu0 0.0
        %1050 = vmatprep.subr.mxu0 0.0
        %1051 = vmatpush1.msra.mxu0 0.0
        %1052 = vmatprep.subr.mxu0 0.0
        %1053 = vmatpush1.msra.mxu0 0.0
        %1054 = vmatprep.subr.mxu0 0.0
        %1055 = vmatpush1.msra.mxu0 0.0
        %1056 = vmatprep.subr.mxu0 0.0
        %1057 = vmatpush1.msra.mxu0 0.0
        %1058 = vmatprep.subr.mxu0 0.0
        %1059 = vmatpush1.msra.mxu0 0.0
        %1060 = vmatprep.subr.mxu0 0.0
        %1061 = vmatpush1.msra.mxu0 0.0
        %1062 = vmatprep.subr.mxu0 0.0
        %1063 = vmatpush1.msra.mxu0 0.0
        %1064 = vmatprep.subr.mxu0 0.0
        %1065 = vmatpush1.msra.mxu0 0.0
        %1066 = vmatprep.subr.mxu0 0.0
        %1067 = vmatpush1.msra.mxu0 %v184
        %1068 = vmatprep.subr.mxu0 0.0
        %1069 = vmatpush1.msra.mxu0 %v183
        %1070 = vmatprep.subr.mxu0 0.0
        %1071 = vmatpush1.msra.mxu0 %v182
        %1072 = vmatprep.subr.mxu0 0.0
        %1073 = vmatpush1.msra.mxu0 %v181
        %1074 = vmatprep.subr.mxu0 0.0
        %1075 = vmatpush2.msra.mxu0 0.0
        %1076 = vmatprep.subr.mxu0 0.0
        %1077 = vmatpush2.msra.mxu0 0.0
        %1078 = vmatprep.subr.mxu0 0.0
        %1079 = vmatpush2.msra.mxu0 0.0
        %1080 = vmatprep.subr.mxu0 0.0
        %1081 = vmatpush2.msra.mxu0 0.0
        %1082 = vmatprep.subr.mxu0 0.0
        %1083 = vmatpush2.msra.mxu0 0.0
        %1084 = vmatprep.subr.mxu0 0.0
        %1085 = vmatpush2.msra.mxu0 0.0
        %1086 = vmatprep.subr.mxu0 0.0
        %1087 = vmatpush2.msra.mxu0 0.0
        %1088 = vmatprep.subr.mxu0 0.0
        %1089 = vmatpush2.msra.mxu0 0.0
        %1090 = vmatprep.subr.mxu0 0.0
        %1091 = vmatpush2.msra.mxu0 0.0
        %1092 = vmatprep.subr.mxu0 0.0
        %1093 = vmatpush2.msra.mxu0 0.0
        %1094 = vmatprep.subr.mxu0 0.0
        %1095 = vmatpush2.msra.mxu0 0.0
        %1096 = vmatprep.subr.mxu0 0.0
        %1097 = vmatpush2.msra.mxu0 0.0
        %1098 = vmatprep.subr.mxu0 0.0
        %1099 = vmatpush2.msra.mxu0 0.0
        %1100 = vmatprep.subr.mxu0 0.0
        %1101 = vmatpush2.msra.mxu0 0.0
        %1102 = vmatprep.subr.mxu0 0.0
        %1103 = vmatpush2.msra.mxu0 0.0
        %1104 = vmatprep.subr.mxu0 0.0
        %1105 = vmatpush2.msra.mxu0 0.0
        %1106 = vmatprep.mubr.f32.mxu0 0.0
        %1107 = vmatmul.mubr.f32.gmra.mxu0 %v942
        %v1108 = vpop.f32.mrf.mxu0
        %v1109 = vadd.f32 0.0, %v1108
        %v1110 = vpop.f32.mrf.mxu0
        %1111 = vmatprep.mubr.f32.mxu0 0.0
        %1112 = vmatmul.mubr.f32.gmra.mxu0 %v945
        %v1113 = vpop.f32.mrf.mxu0
        %v1114 = vadd.f32 0.0, %v1113
        %v1115 = vpop.f32.mrf.mxu0
        %1116 = vmatprep.mubr.f32.mxu0 0.0
        %1117 = vmatmul.mubr.f32.gmra.mxu0 %v948
        %v1118 = vpop.f32.mrf.mxu0
        %v1119 = vadd.f32 0.0, %v1118
        %v1120 = vpop.f32.mrf.mxu0
        %1121 = vmatprep.mubr.f32.mxu0 0.0
        %1122 = vmatmul.mubr.f32.gmra.mxu0 %v951
        %v1123 = vpop.f32.mrf.mxu0
        %v1124 = vadd.f32 0.0, %v1123
        %v1125 = vpop.f32.mrf.mxu0
        %1126 = vdwg.mxu0
        %v1127 = vadd.f32 %v919, %v1109
        %v1128 = vadd.f32 %v924, %v1114
        %v1129 = vadd.f32 %v929, %v1119
        %v1130 = vadd.f32 %v934, %v1124
        %s1131 = sadd.s32 %s243, 2
        %s1132 = smul.u32 %s1131, 32
        %s1133 = scalar_lea.vmem %s165, %s1132
        %v1134 = vld [vmem:[%s1133] sm:$0xff]
        %v1135 = vld [vmem:[%s1133 + $0x8] sm:$0xff]
        %v1136 = vld [vmem:[%s1133 + $0x10] sm:$0xff]
        %v1137 = vld [vmem:[%s1133 + $0x18] sm:$0xf]
        %v1139 = vsel %vm254, %v1134, 0
        %v1142 = vsel %vm254, %v1135, 0
        %v1145 = vsel %vm254, %v1136, 0
        %v1148 = vsel %vm254, %v1137, 0
        %1150 = vmatprep.subr.mxu0 0.0
        %1151 = vmatpush1.msra.mxu0 0.0
        %1152 = vmatprep.subr.mxu0 0.0
        %1153 = vmatpush1.msra.mxu0 0.0
        %1154 = vmatprep.subr.mxu0 0.0
        %1155 = vmatpush1.msra.mxu0 0.0
        %1156 = vmatprep.subr.mxu0 0.0
        %1157 = vmatpush1.msra.mxu0 0.0
        %1158 = vmatprep.subr.mxu0 0.0
        %1159 = vmatpush1.msra.mxu0 0.0
        %1160 = vmatprep.subr.mxu0 0.0
        %1161 = vmatpush1.msra.mxu0 0.0
        %1162 = vmatprep.subr.mxu0 0.0
        %1163 = vmatpush1.msra.mxu0 0.0
        %1164 = vmatprep.subr.mxu0 0.0
        %1165 = vmatpush1.msra.mxu0 0.0
        %1166 = vmatprep.subr.mxu0 0.0
        %1167 = vmatpush1.msra.mxu0 0.0
        %1168 = vmatprep.subr.mxu0 0.0
        %1169 = vmatpush1.msra.mxu0 0.0
        %1170 = vmatprep.subr.mxu0 0.0
        %1171 = vmatpush1.msra.mxu0 0.0
        %1172 = vmatprep.subr.mxu0 0.0
        %1173 = vmatpush1.msra.mxu0 0.0
        %1174 = vmatprep.subr.mxu0 0.0
        %1175 = vmatpush1.msra.mxu0 %v204
        %1176 = vmatprep.subr.mxu0 0.0
        %1177 = vmatpush1.msra.mxu0 %v203
        %1178 = vmatprep.subr.mxu0 0.0
        %1179 = vmatpush1.msra.mxu0 %v202
        %1180 = vmatprep.subr.mxu0 0.0
        %1181 = vmatpush1.msra.mxu0 %v201
        %1182 = vmatprep.subr.mxu0 0.0
        %1183 = vmatpush2.msra.mxu0 0.0
        %1184 = vmatprep.subr.mxu0 0.0
        %1185 = vmatpush2.msra.mxu0 0.0
        %1186 = vmatprep.subr.mxu0 0.0
        %1187 = vmatpush2.msra.mxu0 0.0
        %1188 = vmatprep.subr.mxu0 0.0
        %1189 = vmatpush2.msra.mxu0 0.0
        %1190 = vmatprep.subr.mxu0 0.0
        %1191 = vmatpush2.msra.mxu0 0.0
        %1192 = vmatprep.subr.mxu0 0.0
        %1193 = vmatpush2.msra.mxu0 0.0
        %1194 = vmatprep.subr.mxu0 0.0
        %1195 = vmatpush2.msra.mxu0 0.0
        %1196 = vmatprep.subr.mxu0 0.0
        %1197 = vmatpush2.msra.mxu0 0.0
        %1198 = vmatprep.subr.mxu0 0.0
        %1199 = vmatpush2.msra.mxu0 0.0
        %1200 = vmatprep.subr.mxu0 0.0
        %1201 = vmatpush2.msra.mxu0 0.0
        %1202 = vmatprep.subr.mxu0 0.0
        %1203 = vmatpush2.msra.mxu0 0.0
        %1204 = vmatprep.subr.mxu0 0.0
        %1205 = vmatpush2.msra.mxu0 0.0
        %1206 = vmatprep.subr.mxu0 0.0
        %1207 = vmatpush2.msra.mxu0 0.0
        %1208 = vmatprep.subr.mxu0 0.0
        %1209 = vmatpush2.msra.mxu0 0.0
        %1210 = vmatprep.subr.mxu0 0.0
        %1211 = vmatpush2.msra.mxu0 0.0
        %1212 = vmatprep.subr.mxu0 0.0
        %1213 = vmatpush2.msra.mxu0 0.0
        %1214 = vmatprep.mubr.f32.mxu0 0.0
        %1215 = vmatmul.mubr.f32.gmra.mxu0 %v1139
        %v1216 = vpop.f32.mrf.mxu0
        %v1217 = vadd.f32 0.0, %v1216
        %v1218 = vpop.f32.mrf.mxu0
        %1219 = vmatprep.mubr.f32.mxu0 0.0
        %1220 = vmatmul.mubr.f32.gmra.mxu0 %v1142
        %v1221 = vpop.f32.mrf.mxu0
        %v1222 = vadd.f32 0.0, %v1221
        %v1223 = vpop.f32.mrf.mxu0
        %1224 = vmatprep.mubr.f32.mxu0 0.0
        %1225 = vmatmul.mubr.f32.gmra.mxu0 %v1145
        %v1226 = vpop.f32.mrf.mxu0
        %v1227 = vadd.f32 0.0, %v1226
        %v1228 = vpop.f32.mrf.mxu0
        %1229 = vmatprep.mubr.f32.mxu0 0.0
        %1230 = vmatmul.mubr.f32.gmra.mxu0 %v1148
        %v1231 = vpop.f32.mrf.mxu0
        %v1232 = vadd.f32 0.0, %v1231
        %v1233 = vpop.f32.mrf.mxu0
        %1234 = vdwg.mxu0
        %v1235 = vadd.f32 %v1038, %v1217
        %v1236 = vadd.f32 %v1039, %v1222
        %v1237 = vadd.f32 %v1040, %v1227
        %v1238 = vadd.f32 %v1041, %v1232
        %1239 = vmatprep.subr.mxu0 0.0
        %1240 = vmatpush1.msra.mxu0 0.0
        %1241 = vmatprep.subr.mxu0 0.0
        %1242 = vmatpush1.msra.mxu0 0.0
        %1243 = vmatprep.subr.mxu0 0.0
        %1244 = vmatpush1.msra.mxu0 0.0
        %1245 = vmatprep.subr.mxu0 0.0
        %1246 = vmatpush1.msra.mxu0 0.0
        %1247 = vmatprep.subr.mxu0 0.0
        %1248 = vmatpush1.msra.mxu0 0.0
        %1249 = vmatprep.subr.mxu0 0.0
        %1250 = vmatpush1.msra.mxu0 0.0
        %1251 = vmatprep.subr.mxu0 0.0
        %1252 = vmatpush1.msra.mxu0 0.0
        %1253 = vmatprep.subr.mxu0 0.0
        %1254 = vmatpush1.msra.mxu0 0.0
        %1255 = vmatprep.subr.mxu0 0.0
        %1256 = vmatpush1.msra.mxu0 0.0
        %1257 = vmatprep.subr.mxu0 0.0
        %1258 = vmatpush1.msra.mxu0 0.0
        %1259 = vmatprep.subr.mxu0 0.0
        %1260 = vmatpush1.msra.mxu0 0.0
        %1261 = vmatprep.subr.mxu0 0.0
        %1262 = vmatpush1.msra.mxu0 0.0
        %1263 = vmatprep.subr.mxu0 0.0
        %1264 = vmatpush1.msra.mxu0 %v189
        %1265 = vmatprep.subr.mxu0 0.0
        %1266 = vmatpush1.msra.mxu0 %v188
        %1267 = vmatprep.subr.mxu0 0.0
        %1268 = vmatpush1.msra.mxu0 %v187
        %1269 = vmatprep.subr.mxu0 0.0
        %1270 = vmatpush1.msra.mxu0 %v186
        %1271 = vmatprep.subr.mxu0 0.0
        %1272 = vmatpush2.msra.mxu0 0.0
        %1273 = vmatprep.subr.mxu0 0.0
        %1274 = vmatpush2.msra.mxu0 0.0
        %1275 = vmatprep.subr.mxu0 0.0
        %1276 = vmatpush2.msra.mxu0 0.0
        %1277 = vmatprep.subr.mxu0 0.0
        %1278 = vmatpush2.msra.mxu0 0.0
        %1279 = vmatprep.subr.mxu0 0.0
        %1280 = vmatpush2.msra.mxu0 0.0
        %1281 = vmatprep.subr.mxu0 0.0
        %1282 = vmatpush2.msra.mxu0 0.0
        %1283 = vmatprep.subr.mxu0 0.0
        %1284 = vmatpush2.msra.mxu0 0.0
        %1285 = vmatprep.subr.mxu0 0.0
        %1286 = vmatpush2.msra.mxu0 0.0
        %1287 = vmatprep.subr.mxu0 0.0
        %1288 = vmatpush2.msra.mxu0 0.0
        %1289 = vmatprep.subr.mxu0 0.0
        %1290 = vmatpush2.msra.mxu0 0.0
        %1291 = vmatprep.subr.mxu0 0.0
        %1292 = vmatpush2.msra.mxu0 0.0
        %1293 = vmatprep.subr.mxu0 0.0
        %1294 = vmatpush2.msra.mxu0 0.0
        %1295 = vmatprep.subr.mxu0 0.0
        %1296 = vmatpush2.msra.mxu0 0.0
        %1297 = vmatprep.subr.mxu0 0.0
        %1298 = vmatpush2.msra.mxu0 0.0
        %1299 = vmatprep.subr.mxu0 0.0
        %1300 = vmatpush2.msra.mxu0 0.0
        %1301 = vmatprep.subr.mxu0 0.0
        %1302 = vmatpush2.msra.mxu0 0.0
        %1303 = vmatprep.mubr.f32.mxu0 0.0
        %1304 = vmatmul.mubr.f32.gmra.mxu0 %v1139
        %v1305 = vpop.f32.mrf.mxu0
        %v1306 = vadd.f32 0.0, %v1305
        %v1307 = vpop.f32.mrf.mxu0
        %1308 = vmatprep.mubr.f32.mxu0 0.0
        %1309 = vmatmul.mubr.f32.gmra.mxu0 %v1142
        %v1310 = vpop.f32.mrf.mxu0
        %v1311 = vadd.f32 0.0, %v1310
        %v1312 = vpop.f32.mrf.mxu0
        %1313 = vmatprep.mubr.f32.mxu0 0.0
        %1314 = vmatmul.mubr.f32.gmra.mxu0 %v1145
        %v1315 = vpop.f32.mrf.mxu0
        %v1316 = vadd.f32 0.0, %v1315
        %v1317 = vpop.f32.mrf.mxu0
        %1318 = vmatprep.mubr.f32.mxu0 0.0
        %1319 = vmatmul.mubr.f32.gmra.mxu0 %v1148
        %v1320 = vpop.f32.mrf.mxu0
        %v1321 = vadd.f32 0.0, %v1320
        %v1322 = vpop.f32.mrf.mxu0
        %1323 = vdwg.mxu0
        %v1324 = vadd.f32 %v1127, %v1306
        %v1325 = vadd.f32 %v1128, %v1311
        %v1326 = vadd.f32 %v1129, %v1316
        %v1327 = vadd.f32 %v1130, %v1321
        %v1328 = vld [vmem:[%s1133 + $0x1] sm:$0xff]
        %v1329 = vld [vmem:[%s1133 + $0x9] sm:$0xff]
        %v1330 = vld [vmem:[%s1133 + $0x11] sm:$0xff]
        %v1331 = vld [vmem:[%s1133 + $0x19] sm:$0xf]
        %v1333 = vsel %vm254, %v1328, 0
        %v1336 = vsel %vm254, %v1329, 0
        %v1339 = vsel %vm254, %v1330, 0
        %v1342 = vsel %vm254, %v1331, 0
        %1344 = vmatprep.subr.mxu0 0.0
        %1345 = vmatpush1.msra.mxu0 0.0
        %1346 = vmatprep.subr.mxu0 0.0
        %1347 = vmatpush1.msra.mxu0 0.0
        %1348 = vmatprep.subr.mxu0 0.0
        %1349 = vmatpush1.msra.mxu0 0.0
        %1350 = vmatprep.subr.mxu0 0.0
        %1351 = vmatpush1.msra.mxu0 0.0
        %1352 = vmatprep.subr.mxu0 0.0
        %1353 = vmatpush1.msra.mxu0 0.0
        %1354 = vmatprep.subr.mxu0 0.0
        %1355 = vmatpush1.msra.mxu0 0.0
        %1356 = vmatprep.subr.mxu0 0.0
        %1357 = vmatpush1.msra.mxu0 0.0
        %1358 = vmatprep.subr.mxu0 0.0
        %1359 = vmatpush1.msra.mxu0 0.0
        %1360 = vmatprep.subr.mxu0 0.0
        %1361 = vmatpush1.msra.mxu0 0.0
        %1362 = vmatprep.subr.mxu0 0.0
        %1363 = vmatpush1.msra.mxu0 0.0
        %1364 = vmatprep.subr.mxu0 0.0
        %1365 = vmatpush1.msra.mxu0 0.0
        %1366 = vmatprep.subr.mxu0 0.0
        %1367 = vmatpush1.msra.mxu0 0.0
        %1368 = vmatprep.subr.mxu0 0.0
        %1369 = vmatpush1.msra.mxu0 %v209
        %1370 = vmatprep.subr.mxu0 0.0
        %1371 = vmatpush1.msra.mxu0 %v208
        %1372 = vmatprep.subr.mxu0 0.0
        %1373 = vmatpush1.msra.mxu0 %v207
        %1374 = vmatprep.subr.mxu0 0.0
        %1375 = vmatpush1.msra.mxu0 %v206
        %1376 = vmatprep.subr.mxu0 0.0
        %1377 = vmatpush2.msra.mxu0 0.0
        %1378 = vmatprep.subr.mxu0 0.0
        %1379 = vmatpush2.msra.mxu0 0.0
        %1380 = vmatprep.subr.mxu0 0.0
        %1381 = vmatpush2.msra.mxu0 0.0
        %1382 = vmatprep.subr.mxu0 0.0
        %1383 = vmatpush2.msra.mxu0 0.0
        %1384 = vmatprep.subr.mxu0 0.0
        %1385 = vmatpush2.msra.mxu0 0.0
        %1386 = vmatprep.subr.mxu0 0.0
        %1387 = vmatpush2.msra.mxu0 0.0
        %1388 = vmatprep.subr.mxu0 0.0
        %1389 = vmatpush2.msra.mxu0 0.0
        %1390 = vmatprep.subr.mxu0 0.0
        %1391 = vmatpush2.msra.mxu0 0.0
        %1392 = vmatprep.subr.mxu0 0.0
        %1393 = vmatpush2.msra.mxu0 0.0
        %1394 = vmatprep.subr.mxu0 0.0
        %1395 = vmatpush2.msra.mxu0 0.0
        %1396 = vmatprep.subr.mxu0 0.0
        %1397 = vmatpush2.msra.mxu0 0.0
        %1398 = vmatprep.subr.mxu0 0.0
        %1399 = vmatpush2.msra.mxu0 0.0
        %1400 = vmatprep.subr.mxu0 0.0
        %1401 = vmatpush2.msra.mxu0 0.0
        %1402 = vmatprep.subr.mxu0 0.0
        %1403 = vmatpush2.msra.mxu0 0.0
        %1404 = vmatprep.subr.mxu0 0.0
        %1405 = vmatpush2.msra.mxu0 0.0
        %1406 = vmatprep.subr.mxu0 0.0
        %1407 = vmatpush2.msra.mxu0 0.0
        %1408 = vmatprep.mubr.f32.mxu0 0.0
        %1409 = vmatmul.mubr.f32.gmra.mxu0 %v1333
        %v1410 = vpop.f32.mrf.mxu0
        %v1411 = vadd.f32 0.0, %v1410
        %v1412 = vpop.f32.mrf.mxu0
        %1413 = vmatprep.mubr.f32.mxu0 0.0
        %1414 = vmatmul.mubr.f32.gmra.mxu0 %v1336
        %v1415 = vpop.f32.mrf.mxu0
        %v1416 = vadd.f32 0.0, %v1415
        %v1417 = vpop.f32.mrf.mxu0
        %1418 = vmatprep.mubr.f32.mxu0 0.0
        %1419 = vmatmul.mubr.f32.gmra.mxu0 %v1339
        %v1420 = vpop.f32.mrf.mxu0
        %v1421 = vadd.f32 0.0, %v1420
        %v1422 = vpop.f32.mrf.mxu0
        %1423 = vmatprep.mubr.f32.mxu0 0.0
        %1424 = vmatmul.mubr.f32.gmra.mxu0 %v1342
        %v1425 = vpop.f32.mrf.mxu0
        %v1426 = vadd.f32 0.0, %v1425
        %v1427 = vpop.f32.mrf.mxu0
        %1428 = vdwg.mxu0
        %v1429 = vadd.f32 %v1235, %v1411
        %v1430 = vadd.f32 %v1236, %v1416
        %v1431 = vadd.f32 %v1237, %v1421
        %v1432 = vadd.f32 %v1238, %v1426
        %1433 = vmatprep.subr.mxu0 0.0
        %1434 = vmatpush1.msra.mxu0 0.0
        %1435 = vmatprep.subr.mxu0 0.0
        %1436 = vmatpush1.msra.mxu0 0.0
        %1437 = vmatprep.subr.mxu0 0.0
        %1438 = vmatpush1.msra.mxu0 0.0
        %1439 = vmatprep.subr.mxu0 0.0
        %1440 = vmatpush1.msra.mxu0 0.0
        %1441 = vmatprep.subr.mxu0 0.0
        %1442 = vmatpush1.msra.mxu0 0.0
        %1443 = vmatprep.subr.mxu0 0.0
        %1444 = vmatpush1.msra.mxu0 0.0
        %1445 = vmatprep.subr.mxu0 0.0
        %1446 = vmatpush1.msra.mxu0 0.0
        %1447 = vmatprep.subr.mxu0 0.0
        %1448 = vmatpush1.msra.mxu0 0.0
        %1449 = vmatprep.subr.mxu0 0.0
        %1450 = vmatpush1.msra.mxu0 0.0
        %1451 = vmatprep.subr.mxu0 0.0
        %1452 = vmatpush1.msra.mxu0 0.0
        %1453 = vmatprep.subr.mxu0 0.0
        %1454 = vmatpush1.msra.mxu0 0.0
        %1455 = vmatprep.subr.mxu0 0.0
        %1456 = vmatpush1.msra.mxu0 0.0
        %1457 = vmatprep.subr.mxu0 0.0
        %1458 = vmatpush1.msra.mxu0 %v194
        %1459 = vmatprep.subr.mxu0 0.0
        %1460 = vmatpush1.msra.mxu0 %v193
        %1461 = vmatprep.subr.mxu0 0.0
        %1462 = vmatpush1.msra.mxu0 %v192
        %1463 = vmatprep.subr.mxu0 0.0
        %1464 = vmatpush1.msra.mxu0 %v191
        %1465 = vmatprep.subr.mxu0 0.0
        %1466 = vmatpush2.msra.mxu0 0.0
        %1467 = vmatprep.subr.mxu0 0.0
        %1468 = vmatpush2.msra.mxu0 0.0
        %1469 = vmatprep.subr.mxu0 0.0
        %1470 = vmatpush2.msra.mxu0 0.0
        %1471 = vmatprep.subr.mxu0 0.0
        %1472 = vmatpush2.msra.mxu0 0.0
        %1473 = vmatprep.subr.mxu0 0.0
        %1474 = vmatpush2.msra.mxu0 0.0
        %1475 = vmatprep.subr.mxu0 0.0
        %1476 = vmatpush2.msra.mxu0 0.0
        %1477 = vmatprep.subr.mxu0 0.0
        %1478 = vmatpush2.msra.mxu0 0.0
        %1479 = vmatprep.subr.mxu0 0.0
        %1480 = vmatpush2.msra.mxu0 0.0
        %1481 = vmatprep.subr.mxu0 0.0
        %1482 = vmatpush2.msra.mxu0 0.0
        %1483 = vmatprep.subr.mxu0 0.0
        %1484 = vmatpush2.msra.mxu0 0.0
        %1485 = vmatprep.subr.mxu0 0.0
        %1486 = vmatpush2.msra.mxu0 0.0
        %1487 = vmatprep.subr.mxu0 0.0
        %1488 = vmatpush2.msra.mxu0 0.0
        %1489 = vmatprep.subr.mxu0 0.0
        %1490 = vmatpush2.msra.mxu0 0.0
        %1491 = vmatprep.subr.mxu0 0.0
        %1492 = vmatpush2.msra.mxu0 0.0
        %1493 = vmatprep.subr.mxu0 0.0
        %1494 = vmatpush2.msra.mxu0 0.0
        %1495 = vmatprep.subr.mxu0 0.0
        %1496 = vmatpush2.msra.mxu0 0.0
        %1497 = vmatprep.mubr.f32.mxu0 0.0
        %1498 = vmatmul.mubr.f32.gmra.mxu0 %v1333
        %v1499 = vpop.f32.mrf.mxu0
        %v1500 = vadd.f32 0.0, %v1499
        %v1501 = vpop.f32.mrf.mxu0
        %1502 = vmatprep.mubr.f32.mxu0 0.0
        %1503 = vmatmul.mubr.f32.gmra.mxu0 %v1336
        %v1504 = vpop.f32.mrf.mxu0
        %v1505 = vadd.f32 0.0, %v1504
        %v1506 = vpop.f32.mrf.mxu0
        %1507 = vmatprep.mubr.f32.mxu0 0.0
        %1508 = vmatmul.mubr.f32.gmra.mxu0 %v1339
        %v1509 = vpop.f32.mrf.mxu0
        %v1510 = vadd.f32 0.0, %v1509
        %v1511 = vpop.f32.mrf.mxu0
        %1512 = vmatprep.mubr.f32.mxu0 0.0
        %1513 = vmatmul.mubr.f32.gmra.mxu0 %v1342
        %v1514 = vpop.f32.mrf.mxu0
        %v1515 = vadd.f32 0.0, %v1514
        %v1516 = vpop.f32.mrf.mxu0
        %1517 = vdwg.mxu0
        %v1518 = vadd.f32 %v1324, %v1500
        %v1519 = vadd.f32 %v1325, %v1505
        %v1520 = vadd.f32 %v1326, %v1510
        %v1521 = vadd.f32 %v1327, %v1515
        %v1522 = vld [vmem:[%s1133 + $0x2] sm:$0xff]
        %v1523 = vld [vmem:[%s1133 + $0xa] sm:$0xff]
        %v1524 = vld [vmem:[%s1133 + $0x12] sm:$0xff]
        %v1525 = vld [vmem:[%s1133 + $0x1a] sm:$0xf]
        %v1527 = vsel %vm254, %v1522, 0
        %v1530 = vsel %vm254, %v1523, 0
        %v1533 = vsel %vm254, %v1524, 0
        %v1536 = vsel %vm254, %v1525, 0
        %1538 = vmatprep.subr.mxu0 0.0
        %1539 = vmatpush1.msra.mxu0 0.0
        %1540 = vmatprep.subr.mxu0 0.0
        %1541 = vmatpush1.msra.mxu0 0.0
        %1542 = vmatprep.subr.mxu0 0.0
        %1543 = vmatpush1.msra.mxu0 0.0
        %1544 = vmatprep.subr.mxu0 0.0
        %1545 = vmatpush1.msra.mxu0 0.0
        %1546 = vmatprep.subr.mxu0 0.0
        %1547 = vmatpush1.msra.mxu0 0.0
        %1548 = vmatprep.subr.mxu0 0.0
        %1549 = vmatpush1.msra.mxu0 0.0
        %1550 = vmatprep.subr.mxu0 0.0
        %1551 = vmatpush1.msra.mxu0 0.0
        %1552 = vmatprep.subr.mxu0 0.0
        %1553 = vmatpush1.msra.mxu0 0.0
        %1554 = vmatprep.subr.mxu0 0.0
        %1555 = vmatpush1.msra.mxu0 0.0
        %1556 = vmatprep.subr.mxu0 0.0
        %1557 = vmatpush1.msra.mxu0 0.0
        %1558 = vmatprep.subr.mxu0 0.0
        %1559 = vmatpush1.msra.mxu0 0.0
        %1560 = vmatprep.subr.mxu0 0.0
        %1561 = vmatpush1.msra.mxu0 0.0
        %1562 = vmatprep.subr.mxu0 0.0
        %1563 = vmatpush1.msra.mxu0 %v214
        %1564 = vmatprep.subr.mxu0 0.0
        %1565 = vmatpush1.msra.mxu0 %v213
        %1566 = vmatprep.subr.mxu0 0.0
        %1567 = vmatpush1.msra.mxu0 %v212
        %1568 = vmatprep.subr.mxu0 0.0
        %1569 = vmatpush1.msra.mxu0 %v211
        %1570 = vmatprep.subr.mxu0 0.0
        %1571 = vmatpush2.msra.mxu0 0.0
        %1572 = vmatprep.subr.mxu0 0.0
        %1573 = vmatpush2.msra.mxu0 0.0
        %1574 = vmatprep.subr.mxu0 0.0
        %1575 = vmatpush2.msra.mxu0 0.0
        %1576 = vmatprep.subr.mxu0 0.0
        %1577 = vmatpush2.msra.mxu0 0.0
        %1578 = vmatprep.subr.mxu0 0.0
        %1579 = vmatpush2.msra.mxu0 0.0
        %1580 = vmatprep.subr.mxu0 0.0
        %1581 = vmatpush2.msra.mxu0 0.0
        %1582 = vmatprep.subr.mxu0 0.0
        %1583 = vmatpush2.msra.mxu0 0.0
        %1584 = vmatprep.subr.mxu0 0.0
        %1585 = vmatpush2.msra.mxu0 0.0
        %1586 = vmatprep.subr.mxu0 0.0
        %1587 = vmatpush2.msra.mxu0 0.0
        %1588 = vmatprep.subr.mxu0 0.0
        %1589 = vmatpush2.msra.mxu0 0.0
        %1590 = vmatprep.subr.mxu0 0.0
        %1591 = vmatpush2.msra.mxu0 0.0
        %1592 = vmatprep.subr.mxu0 0.0
        %1593 = vmatpush2.msra.mxu0 0.0
        %1594 = vmatprep.subr.mxu0 0.0
        %1595 = vmatpush2.msra.mxu0 0.0
        %1596 = vmatprep.subr.mxu0 0.0
        %1597 = vmatpush2.msra.mxu0 0.0
        %1598 = vmatprep.subr.mxu0 0.0
        %1599 = vmatpush2.msra.mxu0 0.0
        %1600 = vmatprep.subr.mxu0 0.0
        %1601 = vmatpush2.msra.mxu0 0.0
        %1602 = vmatprep.mubr.f32.mxu0 0.0
        %1603 = vmatmul.mubr.f32.gmra.mxu0 %v1527
        %v1604 = vpop.f32.mrf.mxu0
        %v1605 = vadd.f32 0.0, %v1604
        %v1606 = vpop.f32.mrf.mxu0
        %1607 = vmatprep.mubr.f32.mxu0 0.0
        %1608 = vmatmul.mubr.f32.gmra.mxu0 %v1530
        %v1609 = vpop.f32.mrf.mxu0
        %v1610 = vadd.f32 0.0, %v1609
        %v1611 = vpop.f32.mrf.mxu0
        %1612 = vmatprep.mubr.f32.mxu0 0.0
        %1613 = vmatmul.mubr.f32.gmra.mxu0 %v1533
        %v1614 = vpop.f32.mrf.mxu0
        %v1615 = vadd.f32 0.0, %v1614
        %v1616 = vpop.f32.mrf.mxu0
        %1617 = vmatprep.mubr.f32.mxu0 0.0
        %1618 = vmatmul.mubr.f32.gmra.mxu0 %v1536
        %v1619 = vpop.f32.mrf.mxu0
        %v1620 = vadd.f32 0.0, %v1619
        %v1621 = vpop.f32.mrf.mxu0
        %1622 = vdwg.mxu0
        %v1623 = vadd.f32 %v1429, %v1605
        %v1624 = vadd.f32 %v1430, %v1610
        %v1625 = vadd.f32 %v1431, %v1615
        %v1626 = vadd.f32 %v1432, %v1620
        %1627 = vmatprep.subr.mxu0 0.0
        %1628 = vmatpush1.msra.mxu0 0.0
        %1629 = vmatprep.subr.mxu0 0.0
        %1630 = vmatpush1.msra.mxu0 0.0
        %1631 = vmatprep.subr.mxu0 0.0
        %1632 = vmatpush1.msra.mxu0 0.0
        %1633 = vmatprep.subr.mxu0 0.0
        %1634 = vmatpush1.msra.mxu0 0.0
        %1635 = vmatprep.subr.mxu0 0.0
        %1636 = vmatpush1.msra.mxu0 0.0
        %1637 = vmatprep.subr.mxu0 0.0
        %1638 = vmatpush1.msra.mxu0 0.0
        %1639 = vmatprep.subr.mxu0 0.0
        %1640 = vmatpush1.msra.mxu0 0.0
        %1641 = vmatprep.subr.mxu0 0.0
        %1642 = vmatpush1.msra.mxu0 0.0
        %1643 = vmatprep.subr.mxu0 0.0
        %1644 = vmatpush1.msra.mxu0 0.0
        %1645 = vmatprep.subr.mxu0 0.0
        %1646 = vmatpush1.msra.mxu0 0.0
        %1647 = vmatprep.subr.mxu0 0.0
        %1648 = vmatpush1.msra.mxu0 0.0
        %1649 = vmatprep.subr.mxu0 0.0
        %1650 = vmatpush1.msra.mxu0 0.0
        %1651 = vmatprep.subr.mxu0 0.0
        %1652 = vmatpush1.msra.mxu0 %v199
        %1653 = vmatprep.subr.mxu0 0.0
        %1654 = vmatpush1.msra.mxu0 %v198
        %1655 = vmatprep.subr.mxu0 0.0
        %1656 = vmatpush1.msra.mxu0 %v197
        %1657 = vmatprep.subr.mxu0 0.0
        %1658 = vmatpush1.msra.mxu0 %v196
        %1659 = vmatprep.subr.mxu0 0.0
        %1660 = vmatpush2.msra.mxu0 0.0
        %1661 = vmatprep.subr.mxu0 0.0
        %1662 = vmatpush2.msra.mxu0 0.0
        %1663 = vmatprep.subr.mxu0 0.0
        %1664 = vmatpush2.msra.mxu0 0.0
        %1665 = vmatprep.subr.mxu0 0.0
        %1666 = vmatpush2.msra.mxu0 0.0
        %1667 = vmatprep.subr.mxu0 0.0
        %1668 = vmatpush2.msra.mxu0 0.0
        %1669 = vmatprep.subr.mxu0 0.0
        %1670 = vmatpush2.msra.mxu0 0.0
        %1671 = vmatprep.subr.mxu0 0.0
        %1672 = vmatpush2.msra.mxu0 0.0
        %1673 = vmatprep.subr.mxu0 0.0
        %1674 = vmatpush2.msra.mxu0 0.0
        %1675 = vmatprep.subr.mxu0 0.0
        %1676 = vmatpush2.msra.mxu0 0.0
        %1677 = vmatprep.subr.mxu0 0.0
        %1678 = vmatpush2.msra.mxu0 0.0
        %1679 = vmatprep.subr.mxu0 0.0
        %1680 = vmatpush2.msra.mxu0 0.0
        %1681 = vmatprep.subr.mxu0 0.0
        %1682 = vmatpush2.msra.mxu0 0.0
        %1683 = vmatprep.subr.mxu0 0.0
        %1684 = vmatpush2.msra.mxu0 0.0
        %1685 = vmatprep.subr.mxu0 0.0
        %1686 = vmatpush2.msra.mxu0 0.0
        %1687 = vmatprep.subr.mxu0 0.0
        %1688 = vmatpush2.msra.mxu0 0.0
        %1689 = vmatprep.subr.mxu0 0.0
        %1690 = vmatpush2.msra.mxu0 0.0
        %1691 = vmatprep.mubr.f32.mxu0 0.0
        %1692 = vmatmul.mubr.f32.gmra.mxu0 %v1527
        %v1693 = vpop.f32.mrf.mxu0
        %v1694 = vadd.f32 0.0, %v1693
        %v1695 = vpop.f32.mrf.mxu0
        %1696 = vmatprep.mubr.f32.mxu0 0.0
        %1697 = vmatmul.mubr.f32.gmra.mxu0 %v1530
        %v1698 = vpop.f32.mrf.mxu0
        %v1699 = vadd.f32 0.0, %v1698
        %v1700 = vpop.f32.mrf.mxu0
        %1701 = vmatprep.mubr.f32.mxu0 0.0
        %1702 = vmatmul.mubr.f32.gmra.mxu0 %v1533
        %v1703 = vpop.f32.mrf.mxu0
        %v1704 = vadd.f32 0.0, %v1703
        %v1705 = vpop.f32.mrf.mxu0
        %1706 = vmatprep.mubr.f32.mxu0 0.0
        %1707 = vmatmul.mubr.f32.gmra.mxu0 %v1536
        %v1708 = vpop.f32.mrf.mxu0
        %v1709 = vadd.f32 0.0, %v1708
        %v1710 = vpop.f32.mrf.mxu0
        %1711 = vdwg.mxu0
        %v1712 = vadd.f32 %v1518, %v1694
        %v1713 = vadd.f32 %v1519, %v1699
        %v1714 = vadd.f32 %v1520, %v1704
        %v1715 = vadd.f32 %v1521, %v1709
        %s1716 = sadd.s32 %s243, 3
        %s1717 = smul.u32 %s1716, 32
        %s1718 = scalar_lea.vmem %s165, %s1717
        %v1719 = vld [vmem:[%s1718] sm:$0xff]
        %v1720 = vld [vmem:[%s1718 + $0x8] sm:$0xff]
        %v1721 = vld [vmem:[%s1718 + $0x10] sm:$0xff]
        %v1722 = vld [vmem:[%s1718 + $0x18] sm:$0xf]
        %v1724 = vsel %vm254, %v1719, 0
        %v1727 = vsel %vm254, %v1720, 0
        %v1730 = vsel %vm254, %v1721, 0
        %v1733 = vsel %vm254, %v1722, 0
        %1735 = vmatprep.subr.mxu0 0.0
        %1736 = vmatpush1.msra.mxu0 0.0
        %1737 = vmatprep.subr.mxu0 0.0
        %1738 = vmatpush1.msra.mxu0 0.0
        %1739 = vmatprep.subr.mxu0 0.0
        %1740 = vmatpush1.msra.mxu0 0.0
        %1741 = vmatprep.subr.mxu0 0.0
        %1742 = vmatpush1.msra.mxu0 0.0
        %1743 = vmatprep.subr.mxu0 0.0
        %1744 = vmatpush1.msra.mxu0 0.0
        %1745 = vmatprep.subr.mxu0 0.0
        %1746 = vmatpush1.msra.mxu0 0.0
        %1747 = vmatprep.subr.mxu0 0.0
        %1748 = vmatpush1.msra.mxu0 0.0
        %1749 = vmatprep.subr.mxu0 0.0
        %1750 = vmatpush1.msra.mxu0 0.0
        %1751 = vmatprep.subr.mxu0 0.0
        %1752 = vmatpush1.msra.mxu0 0.0
        %1753 = vmatprep.subr.mxu0 0.0
        %1754 = vmatpush1.msra.mxu0 0.0
        %1755 = vmatprep.subr.mxu0 0.0
        %1756 = vmatpush1.msra.mxu0 0.0
        %1757 = vmatprep.subr.mxu0 0.0
        %1758 = vmatpush1.msra.mxu0 0.0
        %1759 = vmatprep.subr.mxu0 0.0
        %1760 = vmatpush1.msra.mxu0 %v204
        %1761 = vmatprep.subr.mxu0 0.0
        %1762 = vmatpush1.msra.mxu0 %v203
        %1763 = vmatprep.subr.mxu0 0.0
        %1764 = vmatpush1.msra.mxu0 %v202
        %1765 = vmatprep.subr.mxu0 0.0
        %1766 = vmatpush1.msra.mxu0 %v201
        %1767 = vmatprep.subr.mxu0 0.0
        %1768 = vmatpush2.msra.mxu0 0.0
        %1769 = vmatprep.subr.mxu0 0.0
        %1770 = vmatpush2.msra.mxu0 0.0
        %1771 = vmatprep.subr.mxu0 0.0
        %1772 = vmatpush2.msra.mxu0 0.0
        %1773 = vmatprep.subr.mxu0 0.0
        %1774 = vmatpush2.msra.mxu0 0.0
        %1775 = vmatprep.subr.mxu0 0.0
        %1776 = vmatpush2.msra.mxu0 0.0
        %1777 = vmatprep.subr.mxu0 0.0
        %1778 = vmatpush2.msra.mxu0 0.0
        %1779 = vmatprep.subr.mxu0 0.0
        %1780 = vmatpush2.msra.mxu0 0.0
        %1781 = vmatprep.subr.mxu0 0.0
        %1782 = vmatpush2.msra.mxu0 0.0
        %1783 = vmatprep.subr.mxu0 0.0
        %1784 = vmatpush2.msra.mxu0 0.0
        %1785 = vmatprep.subr.mxu0 0.0
        %1786 = vmatpush2.msra.mxu0 0.0
        %1787 = vmatprep.subr.mxu0 0.0
        %1788 = vmatpush2.msra.mxu0 0.0
        %1789 = vmatprep.subr.mxu0 0.0
        %1790 = vmatpush2.msra.mxu0 0.0
        %1791 = vmatprep.subr.mxu0 0.0
        %1792 = vmatpush2.msra.mxu0 0.0
        %1793 = vmatprep.subr.mxu0 0.0
        %1794 = vmatpush2.msra.mxu0 0.0
        %1795 = vmatprep.subr.mxu0 0.0
        %1796 = vmatpush2.msra.mxu0 0.0
        %1797 = vmatprep.subr.mxu0 0.0
        %1798 = vmatpush2.msra.mxu0 0.0
        %1799 = vmatprep.mubr.f32.mxu0 0.0
        %1800 = vmatmul.mubr.f32.gmra.mxu0 %v1724
        %v1801 = vpop.f32.mrf.mxu0
        %v1802 = vadd.f32 0.0, %v1801
        %v1803 = vpop.f32.mrf.mxu0
        %1804 = vmatprep.mubr.f32.mxu0 0.0
        %1805 = vmatmul.mubr.f32.gmra.mxu0 %v1727
        %v1806 = vpop.f32.mrf.mxu0
        %v1807 = vadd.f32 0.0, %v1806
        %v1808 = vpop.f32.mrf.mxu0
        %1809 = vmatprep.mubr.f32.mxu0 0.0
        %1810 = vmatmul.mubr.f32.gmra.mxu0 %v1730
        %v1811 = vpop.f32.mrf.mxu0
        %v1812 = vadd.f32 0.0, %v1811
        %v1813 = vpop.f32.mrf.mxu0
        %1814 = vmatprep.mubr.f32.mxu0 0.0
        %1815 = vmatmul.mubr.f32.gmra.mxu0 %v1733
        %v1816 = vpop.f32.mrf.mxu0
        %v1817 = vadd.f32 0.0, %v1816
        %v1818 = vpop.f32.mrf.mxu0
        %1819 = vdwg.mxu0
        %v1820 = vadd.f32 %v1712, %v1802
        %v1821 = vadd.f32 %v1713, %v1807
        %v1822 = vadd.f32 %v1714, %v1812
        %v1823 = vadd.f32 %v1715, %v1817
        %v1824 = vld [vmem:[%s1718 + $0x1] sm:$0xff]
        %v1825 = vld [vmem:[%s1718 + $0x9] sm:$0xff]
        %v1826 = vld [vmem:[%s1718 + $0x11] sm:$0xff]
        %v1827 = vld [vmem:[%s1718 + $0x19] sm:$0xf]
        %v1829 = vsel %vm254, %v1824, 0
        %v1832 = vsel %vm254, %v1825, 0
        %v1835 = vsel %vm254, %v1826, 0
        %v1838 = vsel %vm254, %v1827, 0
        %1840 = vmatprep.subr.mxu0 0.0
        %1841 = vmatpush1.msra.mxu0 0.0
        %1842 = vmatprep.subr.mxu0 0.0
        %1843 = vmatpush1.msra.mxu0 0.0
        %1844 = vmatprep.subr.mxu0 0.0
        %1845 = vmatpush1.msra.mxu0 0.0
        %1846 = vmatprep.subr.mxu0 0.0
        %1847 = vmatpush1.msra.mxu0 0.0
        %1848 = vmatprep.subr.mxu0 0.0
        %1849 = vmatpush1.msra.mxu0 0.0
        %1850 = vmatprep.subr.mxu0 0.0
        %1851 = vmatpush1.msra.mxu0 0.0
        %1852 = vmatprep.subr.mxu0 0.0
        %1853 = vmatpush1.msra.mxu0 0.0
        %1854 = vmatprep.subr.mxu0 0.0
        %1855 = vmatpush1.msra.mxu0 0.0
        %1856 = vmatprep.subr.mxu0 0.0
        %1857 = vmatpush1.msra.mxu0 0.0
        %1858 = vmatprep.subr.mxu0 0.0
        %1859 = vmatpush1.msra.mxu0 0.0
        %1860 = vmatprep.subr.mxu0 0.0
        %1861 = vmatpush1.msra.mxu0 0.0
        %1862 = vmatprep.subr.mxu0 0.0
        %1863 = vmatpush1.msra.mxu0 0.0
        %1864 = vmatprep.subr.mxu0 0.0
        %1865 = vmatpush1.msra.mxu0 %v209
        %1866 = vmatprep.subr.mxu0 0.0
        %1867 = vmatpush1.msra.mxu0 %v208
        %1868 = vmatprep.subr.mxu0 0.0
        %1869 = vmatpush1.msra.mxu0 %v207
        %1870 = vmatprep.subr.mxu0 0.0
        %1871 = vmatpush1.msra.mxu0 %v206
        %1872 = vmatprep.subr.mxu0 0.0
        %1873 = vmatpush2.msra.mxu0 0.0
        %1874 = vmatprep.subr.mxu0 0.0
        %1875 = vmatpush2.msra.mxu0 0.0
        %1876 = vmatprep.subr.mxu0 0.0
        %1877 = vmatpush2.msra.mxu0 0.0
        %1878 = vmatprep.subr.mxu0 0.0
        %1879 = vmatpush2.msra.mxu0 0.0
        %1880 = vmatprep.subr.mxu0 0.0
        %1881 = vmatpush2.msra.mxu0 0.0
        %1882 = vmatprep.subr.mxu0 0.0
        %1883 = vmatpush2.msra.mxu0 0.0
        %1884 = vmatprep.subr.mxu0 0.0
        %1885 = vmatpush2.msra.mxu0 0.0
        %1886 = vmatprep.subr.mxu0 0.0
        %1887 = vmatpush2.msra.mxu0 0.0
        %1888 = vmatprep.subr.mxu0 0.0
        %1889 = vmatpush2.msra.mxu0 0.0
        %1890 = vmatprep.subr.mxu0 0.0
        %1891 = vmatpush2.msra.mxu0 0.0
        %1892 = vmatprep.subr.mxu0 0.0
        %1893 = vmatpush2.msra.mxu0 0.0
        %1894 = vmatprep.subr.mxu0 0.0
        %1895 = vmatpush2.msra.mxu0 0.0
        %1896 = vmatprep.subr.mxu0 0.0
        %1897 = vmatpush2.msra.mxu0 0.0
        %1898 = vmatprep.subr.mxu0 0.0
        %1899 = vmatpush2.msra.mxu0 0.0
        %1900 = vmatprep.subr.mxu0 0.0
        %1901 = vmatpush2.msra.mxu0 0.0
        %1902 = vmatprep.subr.mxu0 0.0
        %1903 = vmatpush2.msra.mxu0 0.0
        %1904 = vmatprep.mubr.f32.mxu0 0.0
        %1905 = vmatmul.mubr.f32.gmra.mxu0 %v1829
        %v1906 = vpop.f32.mrf.mxu0
        %v1907 = vadd.f32 0.0, %v1906
        %v1908 = vpop.f32.mrf.mxu0
        %1909 = vmatprep.mubr.f32.mxu0 0.0
        %1910 = vmatmul.mubr.f32.gmra.mxu0 %v1832
        %v1911 = vpop.f32.mrf.mxu0
        %v1912 = vadd.f32 0.0, %v1911
        %v1913 = vpop.f32.mrf.mxu0
        %1914 = vmatprep.mubr.f32.mxu0 0.0
        %1915 = vmatmul.mubr.f32.gmra.mxu0 %v1835
        %v1916 = vpop.f32.mrf.mxu0
        %v1917 = vadd.f32 0.0, %v1916
        %v1918 = vpop.f32.mrf.mxu0
        %1919 = vmatprep.mubr.f32.mxu0 0.0
        %1920 = vmatmul.mubr.f32.gmra.mxu0 %v1838
        %v1921 = vpop.f32.mrf.mxu0
        %v1922 = vadd.f32 0.0, %v1921
        %v1923 = vpop.f32.mrf.mxu0
        %1924 = vdwg.mxu0
        %v1925 = vadd.f32 %v1820, %v1907
        %v1926 = vadd.f32 %v1821, %v1912
        %v1927 = vadd.f32 %v1822, %v1917
        %v1928 = vadd.f32 %v1823, %v1922
        %v1929 = vld [vmem:[%s1718 + $0x2] sm:$0xff]
        %v1930 = vld [vmem:[%s1718 + $0xa] sm:$0xff]
        %v1931 = vld [vmem:[%s1718 + $0x12] sm:$0xff]
        %v1932 = vld [vmem:[%s1718 + $0x1a] sm:$0xf]
        %v1934 = vsel %vm254, %v1929, 0
        %v1937 = vsel %vm254, %v1930, 0
        %v1940 = vsel %vm254, %v1931, 0
        %v1943 = vsel %vm254, %v1932, 0
        %1945 = vmatprep.subr.mxu0 0.0
        %1946 = vmatpush1.msra.mxu0 0.0
        %1947 = vmatprep.subr.mxu0 0.0
        %1948 = vmatpush1.msra.mxu0 0.0
        %1949 = vmatprep.subr.mxu0 0.0
        %1950 = vmatpush1.msra.mxu0 0.0
        %1951 = vmatprep.subr.mxu0 0.0
        %1952 = vmatpush1.msra.mxu0 0.0
        %1953 = vmatprep.subr.mxu0 0.0
        %1954 = vmatpush1.msra.mxu0 0.0
        %1955 = vmatprep.subr.mxu0 0.0
        %1956 = vmatpush1.msra.mxu0 0.0
        %1957 = vmatprep.subr.mxu0 0.0
        %1958 = vmatpush1.msra.mxu0 0.0
        %1959 = vmatprep.subr.mxu0 0.0
        %1960 = vmatpush1.msra.mxu0 0.0
        %1961 = vmatprep.subr.mxu0 0.0
        %1962 = vmatpush1.msra.mxu0 0.0
        %1963 = vmatprep.subr.mxu0 0.0
        %1964 = vmatpush1.msra.mxu0 0.0
        %1965 = vmatprep.subr.mxu0 0.0
        %1966 = vmatpush1.msra.mxu0 0.0
        %1967 = vmatprep.subr.mxu0 0.0
        %1968 = vmatpush1.msra.mxu0 0.0
        %1969 = vmatprep.subr.mxu0 0.0
        %1970 = vmatpush1.msra.mxu0 %v214
        %1971 = vmatprep.subr.mxu0 0.0
        %1972 = vmatpush1.msra.mxu0 %v213
        %1973 = vmatprep.subr.mxu0 0.0
        %1974 = vmatpush1.msra.mxu0 %v212
        %1975 = vmatprep.subr.mxu0 0.0
        %1976 = vmatpush1.msra.mxu0 %v211
        %1977 = vmatprep.subr.mxu0 0.0
        %1978 = vmatpush2.msra.mxu0 0.0
        %1979 = vmatprep.subr.mxu0 0.0
        %1980 = vmatpush2.msra.mxu0 0.0
        %1981 = vmatprep.subr.mxu0 0.0
        %1982 = vmatpush2.msra.mxu0 0.0
        %1983 = vmatprep.subr.mxu0 0.0
        %1984 = vmatpush2.msra.mxu0 0.0
        %1985 = vmatprep.subr.mxu0 0.0
        %1986 = vmatpush2.msra.mxu0 0.0
        %1987 = vmatprep.subr.mxu0 0.0
        %1988 = vmatpush2.msra.mxu0 0.0
        %1989 = vmatprep.subr.mxu0 0.0
        %1990 = vmatpush2.msra.mxu0 0.0
        %1991 = vmatprep.subr.mxu0 0.0
        %1992 = vmatpush2.msra.mxu0 0.0
        %1993 = vmatprep.subr.mxu0 0.0
        %1994 = vmatpush2.msra.mxu0 0.0
        %1995 = vmatprep.subr.mxu0 0.0
        %1996 = vmatpush2.msra.mxu0 0.0
        %1997 = vmatprep.subr.mxu0 0.0
        %1998 = vmatpush2.msra.mxu0 0.0
        %1999 = vmatprep.subr.mxu0 0.0
        %2000 = vmatpush2.msra.mxu0 0.0
        %2001 = vmatprep.subr.mxu0 0.0
        %2002 = vmatpush2.msra.mxu0 0.0
        %2003 = vmatprep.subr.mxu0 0.0
        %2004 = vmatpush2.msra.mxu0 0.0
        %2005 = vmatprep.subr.mxu0 0.0
        %2006 = vmatpush2.msra.mxu0 0.0
        %2007 = vmatprep.subr.mxu0 0.0
        %2008 = vmatpush2.msra.mxu0 0.0
        %2009 = vmatprep.mubr.f32.mxu0 0.0
        %2010 = vmatmul.mubr.f32.gmra.mxu0 %v1934
        %v2011 = vpop.f32.mrf.mxu0
        %v2012 = vadd.f32 0.0, %v2011
        %v2013 = vpop.f32.mrf.mxu0
        %2014 = vmatprep.mubr.f32.mxu0 0.0
        %2015 = vmatmul.mubr.f32.gmra.mxu0 %v1937
        %v2016 = vpop.f32.mrf.mxu0
        %v2017 = vadd.f32 0.0, %v2016
        %v2018 = vpop.f32.mrf.mxu0
        %2019 = vmatprep.mubr.f32.mxu0 0.0
        %2020 = vmatmul.mubr.f32.gmra.mxu0 %v1940
        %v2021 = vpop.f32.mrf.mxu0
        %v2022 = vadd.f32 0.0, %v2021
        %v2023 = vpop.f32.mrf.mxu0
        %2024 = vmatprep.mubr.f32.mxu0 0.0
        %2025 = vmatmul.mubr.f32.gmra.mxu0 %v1943
        %v2026 = vpop.f32.mrf.mxu0
        %v2027 = vadd.f32 0.0, %v2026
        %v2028 = vpop.f32.mrf.mxu0
        %2029 = vdwg.mxu0
        %v2030 = vadd.f32 %v1925, %v2012
        %v2031 = vadd.f32 %v1926, %v2017
        %v2032 = vadd.f32 %v1927, %v2022
        %v2033 = vadd.f32 %v1928, %v2027
        %v2034 = vmax.f32 %v1623, %v2030
        %v2035 = vmax.f32 %v1624, %v2031
        %v2036 = vmax.f32 %v1625, %v2032
        %v2037 = vmax.f32 %v1626, %v2033
        %v2039 = vlaneseq
        %v2040 = vshrl.u32 %v2039, 7
        %v2041 = vsub.s32 0, %v2040
        %v2042 = vrot.slane %v215, %v2041
        %v2044 = vadd.f32 %v2034, %v2042
        %v2045 = vadd.f32 %v2035, %v2042
        %v2046 = vadd.f32 %v2036, %v2042
        %v2047 = vadd.f32 %v2037, %v2042
        %v2048 = vmax.f32 %v2044, 0.0
        %v2049 = vmax.f32 %v2045, 0.0
        %v2050 = vmax.f32 %v2046, 0.0
        %v2051 = vmax.f32 %v2047, 0.0
        %vm2052 = vcmask 228352
        %v2054 = vsel %vm2052, %v227, 0
        %v2057 = vsel %vm2052, %v228, 0
        %vm2059 = vcmask 1043456
        %v2061 = vsel %vm2059, %v2051, 0
        %2063 = vmatprep.subr.mxu0 0.0
        %2064 = vmatpush1.msra.mxu0 0.0
        %2065 = vmatprep.subr.mxu0 0.0
        %2066 = vmatpush1.msra.mxu0 0.0
        %2067 = vmatprep.subr.mxu0 0.0
        %2068 = vmatpush1.msra.mxu0 0.0
        %2069 = vmatprep.subr.mxu0 0.0
        %2070 = vmatpush1.msra.mxu0 0.0
        %2071 = vmatprep.subr.mxu0 0.0
        %2072 = vmatpush1.msra.mxu0 0.0
        %2073 = vmatprep.subr.mxu0 0.0
        %2074 = vmatpush1.msra.mxu0 0.0
        %2075 = vmatprep.subr.mxu0 0.0
        %2076 = vmatpush1.msra.mxu0 0.0
        %2077 = vmatprep.subr.mxu0 0.0
        %2078 = vmatpush1.msra.mxu0 0.0
        %2079 = vmatprep.subr.mxu0 0.0
        %2080 = vmatpush1.msra.mxu0 0.0
        %2081 = vmatprep.subr.mxu0 0.0
        %2082 = vmatpush1.msra.mxu0 0.0
        %2083 = vmatprep.subr.mxu0 0.0
        %2084 = vmatpush1.msra.mxu0 0.0
        %2085 = vmatprep.subr.mxu0 0.0
        %2086 = vmatpush1.msra.mxu0 0.0
        %2087 = vmatprep.subr.mxu0 0.0
        %2088 = vmatpush1.msra.mxu0 %v2061
        %2089 = vmatprep.subr.mxu0 0.0
        %2090 = vmatpush1.msra.mxu0 %v2050
        %2091 = vmatprep.subr.mxu0 0.0
        %2092 = vmatpush1.msra.mxu0 %v2049
        %2093 = vmatprep.subr.mxu0 0.0
        %2094 = vmatpush1.msra.mxu0 %v2048
        %2095 = vmatprep.subr.mxu0 0.0
        %2096 = vmatpush2.msra.mxu0 0.0
        %2097 = vmatprep.subr.mxu0 0.0
        %2098 = vmatpush2.msra.mxu0 0.0
        %2099 = vmatprep.subr.mxu0 0.0
        %2100 = vmatpush2.msra.mxu0 0.0
        %2101 = vmatprep.subr.mxu0 0.0
        %2102 = vmatpush2.msra.mxu0 0.0
        %2103 = vmatprep.subr.mxu0 0.0
        %2104 = vmatpush2.msra.mxu0 0.0
        %2105 = vmatprep.subr.mxu0 0.0
        %2106 = vmatpush2.msra.mxu0 0.0
        %2107 = vmatprep.subr.mxu0 0.0
        %2108 = vmatpush2.msra.mxu0 0.0
        %2109 = vmatprep.subr.mxu0 0.0
        %2110 = vmatpush2.msra.mxu0 0.0
        %2111 = vmatprep.subr.mxu0 0.0
        %2112 = vmatpush2.msra.mxu0 0.0
        %2113 = vmatprep.subr.mxu0 0.0
        %2114 = vmatpush2.msra.mxu0 0.0
        %2115 = vmatprep.subr.mxu0 0.0
        %2116 = vmatpush2.msra.mxu0 0.0
        %2117 = vmatprep.subr.mxu0 0.0
        %2118 = vmatpush2.msra.mxu0 0.0
        %2119 = vmatprep.subr.mxu0 0.0
        %2120 = vmatpush2.msra.mxu0 0.0
        %2121 = vmatprep.subr.mxu0 0.0
        %2122 = vmatpush2.msra.mxu0 0.0
        %2123 = vmatprep.subr.mxu0 0.0
        %2124 = vmatpush2.msra.mxu0 0.0
        %2125 = vmatprep.subr.mxu0 0.0
        %2126 = vmatpush2.msra.mxu0 0.0
        %2127 = vmatprep.mubr.f32.mxu0 0.0
        %2128 = vmatmul.mubr.f32.gmra.mxu0 %v2054
        %v2129 = vpop.f32.mrf.mxu0
        %v2130 = vadd.f32 0.0, %v2129
        %v2131 = vpop.f32.mrf.mxu0
        %2132 = vmatprep.mubr.f32.mxu0 0.0
        %2133 = vmatmul.mubr.f32.gmra.mxu0 %v2057
        %v2134 = vpop.f32.mrf.mxu0
        %v2135 = vadd.f32 0.0, %v2134
        %v2136 = vpop.f32.mrf.mxu0
        %2137 = vdwg.mxu0
        %v2139 = vsel %vm2052, %v235, 0
        %v2142 = vsel %vm2052, %v236, 0
        %2144 = vmatprep.subr.mxu0 0.0
        %2145 = vmatpush1.msra.mxu0 0.0
        %2146 = vmatprep.subr.mxu0 0.0
        %2147 = vmatpush1.msra.mxu0 0.0
        %2148 = vmatprep.subr.mxu0 0.0
        %2149 = vmatpush1.msra.mxu0 0.0
        %2150 = vmatprep.subr.mxu0 0.0
        %2151 = vmatpush1.msra.mxu0 0.0
        %2152 = vmatprep.subr.mxu0 0.0
        %2153 = vmatpush1.msra.mxu0 0.0
        %2154 = vmatprep.subr.mxu0 0.0
        %2155 = vmatpush1.msra.mxu0 0.0
        %2156 = vmatprep.subr.mxu0 0.0
        %2157 = vmatpush1.msra.mxu0 0.0
        %2158 = vmatprep.subr.mxu0 0.0
        %2159 = vmatpush1.msra.mxu0 0.0
        %2160 = vmatprep.subr.mxu0 0.0
        %2161 = vmatpush1.msra.mxu0 0.0
        %2162 = vmatprep.subr.mxu0 0.0
        %2163 = vmatpush1.msra.mxu0 0.0
        %2164 = vmatprep.subr.mxu0 0.0
        %2165 = vmatpush1.msra.mxu0 0.0
        %2166 = vmatprep.subr.mxu0 0.0
        %2167 = vmatpush1.msra.mxu0 0.0
        %2168 = vmatprep.subr.mxu0 0.0
        %2169 = vmatpush1.msra.mxu0 %v2061
        %2170 = vmatprep.subr.mxu0 0.0
        %2171 = vmatpush1.msra.mxu0 %v2050
        %2172 = vmatprep.subr.mxu0 0.0
        %2173 = vmatpush1.msra.mxu0 %v2049
        %2174 = vmatprep.subr.mxu0 0.0
        %2175 = vmatpush1.msra.mxu0 %v2048
        %2176 = vmatprep.subr.mxu0 0.0
        %2177 = vmatpush2.msra.mxu0 0.0
        %2178 = vmatprep.subr.mxu0 0.0
        %2179 = vmatpush2.msra.mxu0 0.0
        %2180 = vmatprep.subr.mxu0 0.0
        %2181 = vmatpush2.msra.mxu0 0.0
        %2182 = vmatprep.subr.mxu0 0.0
        %2183 = vmatpush2.msra.mxu0 0.0
        %2184 = vmatprep.subr.mxu0 0.0
        %2185 = vmatpush2.msra.mxu0 0.0
        %2186 = vmatprep.subr.mxu0 0.0
        %2187 = vmatpush2.msra.mxu0 0.0
        %2188 = vmatprep.subr.mxu0 0.0
        %2189 = vmatpush2.msra.mxu0 0.0
        %2190 = vmatprep.subr.mxu0 0.0
        %2191 = vmatpush2.msra.mxu0 0.0
        %2192 = vmatprep.subr.mxu0 0.0
        %2193 = vmatpush2.msra.mxu0 0.0
        %2194 = vmatprep.subr.mxu0 0.0
        %2195 = vmatpush2.msra.mxu0 0.0
        %2196 = vmatprep.subr.mxu0 0.0
        %2197 = vmatpush2.msra.mxu0 0.0
        %2198 = vmatprep.subr.mxu0 0.0
        %2199 = vmatpush2.msra.mxu0 0.0
        %2200 = vmatprep.subr.mxu0 0.0
        %2201 = vmatpush2.msra.mxu0 0.0
        %2202 = vmatprep.subr.mxu0 0.0
        %2203 = vmatpush2.msra.mxu0 0.0
        %2204 = vmatprep.subr.mxu0 0.0
        %2205 = vmatpush2.msra.mxu0 0.0
        %2206 = vmatprep.subr.mxu0 0.0
        %2207 = vmatpush2.msra.mxu0 0.0
        %2208 = vmatprep.mubr.f32.mxu0 0.0
        %2209 = vmatmul.mubr.f32.gmra.mxu0 %v2139
        %v2210 = vpop.f32.mrf.mxu0
        %v2211 = vadd.f32 0.0, %v2210
        %v2212 = vpop.f32.mrf.mxu0
        %2213 = vmatprep.mubr.f32.mxu0 0.0
        %2214 = vmatmul.mubr.f32.gmra.mxu0 %v2142
        %v2215 = vpop.f32.mrf.mxu0
        %v2216 = vadd.f32 0.0, %v2215
        %v2217 = vpop.f32.mrf.mxu0
        %2218 = vdwg.mxu0
        %v2219 = vmax.f32 %v2130, %v2211
        %v2220 = vmax.f32 %v2135, %v2216
        %s2221 = smul.u32 %s238, 16
        %s2222 = scalar_lea.vmem %s170, %s2221
        %vm2223 = vcmask 523264
        %2224 = vst.msk [vmem:[%s2222] sm:$0xff] %vm2223, %v2219
        %vm2225 = vcmask 521216
        %2226 = vst.msk [vmem:[%s2222 + $0x8] sm:$0x3f] %vm2225, %v2220
      $region37: #{cnn1_forward.6} parent=31 // loop_footer
        %s242 = sadd.s32 1, %s238
      $region38: #{cnn1_forward.6} parent=31 // loop_footer_branch
        %237 = sbr.rel target = $region34
      $region39: #{cnn1_forward.6} parent=31 // loop_exit
        _
      %p2227 = scmp.lt.s32.totalorder %s14, 1
      %s2228 = scalar_select %p2227, %s14, 1
      %s2229 = smul.addr %s2228, 28
      %s2230 = smul.addr %s2229, 8
      %s2231 = scalar_lea.vmem %s3, %s2230
      // Predicated region
      $region40: #{cnn1_forward.6} parent=31 // pred_check
        %p2232 = pneg %p100
      $region41: #{cnn1_forward.6} parent=31 // pred_check_branch
        %2234 = sbr.rel (%p2232) target = $region43
      $region42: #{cnn1_forward.6} parent=31 // pred_region
        _
      $region43: #{cnn1_forward.6} parent=31 // pred_fallthru
        _
    $region32: #{cnn1_forward.6} parent=5 // pred_fallthru
      _
    %p2235 = scmp.le.s32.totalorder 2, %s9
    // Predicated region
    $region44: #{cnn1_forward.6} parent=5 // pred_check
      %p2236 = pneg %p2235
    $region45: #{cnn1_forward.6} parent=5 // pred_check_branch
      %2238 = sbr.rel (%p2236) target = $region47
    $region46: #{cnn1_forward.6} parent=5 // pred_region
      %s2239 = ssub.s32 %s9, 2
      // Predicated region
      $region48: #{cnn1_forward.6} parent=46 // pred_check
        %p2240 = pneg %p106
      $region49: #{cnn1_forward.6} parent=46 // pred_check_branch
        %2242 = sbr.rel (%p2240) target = $region51
      $region50: #{cnn1_forward.6} parent=46 // pred_region
        %p2243 = scmp.lt.s32.totalorder %s15, 1
        %s2244 = scalar_select %p2243, %s15, 1
        %s2245 = smul.addr %s2244, 28
        %s2246 = smul.addr %s2245, 8
        %s2247 = scalar_lea.vmem %s3, %s2246
      $region51: #{cnn1_forward.6} parent=46 // pred_fallthru
        _
    $region47: #{cnn1_forward.6} parent=5 // pred_fallthru
      _
  $region6: #{cnn1_forward.6} parent=0 // loop_footer
    %s13 = sadd.s32 1, %s9
  $region7: #{cnn1_forward.6} parent=0 // loop_footer_branch
    %8 = sbr.rel target = $region3
  $region8: #{cnn1_forward.6} parent=0 // loop_exit
    _

// kernel: cnn1_forward.4
$region0: #{cnn1_forward.4}
  #allocation0 [shape = 'u32[]', space=smem, size = 0x4, offset = 0x4, fixed_abs, tag = 'smem constant byte address 0x4 - core index']
  #allocation1 [shape = 'u32[144,128]{1,0:T(1,128)}', space=vmem, size = 0x12000, scoped, tag = 'internal scratch']
  %s0 = inlined_call_operand.vmem [shape: f32[2,126,126,3], index: 0, kind: input, shape index: {}]
  %s1 = inlined_call_operand.vmem [shape: f32[3,3,3,16], index: 1, kind: input, shape index: {}]
  %s2 = inlined_call_operand.vmem [shape: f32[1,16], index: 2, kind: input, shape index: {}]
  %s3 = inlined_call_operand.vmem [shape: f32[2,62,62,16], index: 3, kind: output, shape index: {}]
  %s4 = sld [smem:[#allocation0]]
  $region52: #{cnn1_forward.4} parent=0
    _
  %s6 = ssub.s32 1, %s4
  %s7 = scalar_select 0, %s6, %s4
  loop: start=0, step=1, limit=4
  $region2: #{cnn1_forward.4} parent=0 // loop_pre_header
    _
  $region3: #{cnn1_forward.4} parent=0 // loop_header
    %s9 = sphi 0, %s13
    %p10 = scmp.ge.s32.totalorder %s9, 4
    %s19 = sphi 0, %s21
    %s22 = sphi 0, %s19
    %s23 = sphi 0, %s22
    %s39 = sphi 0, %s23
    %s43 = sphi 0, %s43
    %s45 = sphi 0, %s43
    %s46 = sphi 0, %s45
    %s60 = sphi 0, %s46
    %s64 = sphi 0, %s64
    %s66 = sphi 0, %s64
    %s67 = sphi 0, %s66
    %s81 = sphi 0, %s67
    %s87 = sphi 0, %s89
    %s90 = sphi 0, %s87
    %s91 = sphi 0, %s90
    %s107 = sphi 0, %s91
  $region4: #{cnn1_forward.4} parent=0 // loop_header_branch
    %12 = sbr.rel (%p10) target = $region8
  $region5: #{cnn1_forward.4} parent=0 // loop_body
    %s14 = ssub.s32 %s9, 1
    %s15 = ssub.s32 %s9, 2
    %s16 = sadd.s32 %s9, 1
    %s17 = ssub.s32 %s9, %s16
    %p18 = scmp.eq.s32.totalorder %s17, 0
    %s20 = sadd.s32 %s19, 1
    %s21 = scalar_select %p18, %s19, %s20
    %p24 = pneg %p18
    %p25 = scmp.eq.s32.totalorder %s9, 1
    %p26 = por %p24, %p25
    %p27 = scmp.ne.s32.totalorder %s19, %s22
    %p28 = scmp.eq.s32.totalorder %s9, 0
    %p29 = por %p27, %p28
    %p30 = scmp.ne.s32.totalorder %s19, %s22
    %p31 = scmp.eq.s32.totalorder %s14, 1
    %p32 = por %p30, %p31
    %p33 = scmp.ne.s32.totalorder %s22, %s23
    %p34 = scmp.eq.s32.totalorder %s14, 0
    %p35 = por %p33, %p34
    %p36 = scmp.ne.s32.totalorder %s22, %s23
    %p37 = scmp.eq.s32.totalorder %s15, 1
    %p38 = por %p36, %p37
    %p40 = scmp.ne.s32.totalorder %s23, %s39
    %p41 = scmp.eq.s32.totalorder %s15, 0
    %p42 = por %p40, %p41
    %s44 = sadd.s32 %s43, 1
    %p47 = scmp.eq.s32.totalorder %s9, 1
    %p48 = scmp.ne.s32.totalorder %s43, %s45
    %p49 = scmp.eq.s32.totalorder %s9, 0
    %p50 = por %p48, %p49
    %p51 = scmp.ne.s32.totalorder %s43, %s45
    %p52 = scmp.eq.s32.totalorder %s14, 1
    %p53 = por %p51, %p52
    %p54 = scmp.ne.s32.totalorder %s45, %s46
    %p55 = scmp.eq.s32.totalorder %s14, 0
    %p56 = por %p54, %p55
    %p57 = scmp.ne.s32.totalorder %s45, %s46
    %p58 = scmp.eq.s32.totalorder %s15, 1
    %p59 = por %p57, %p58
    %p61 = scmp.ne.s32.totalorder %s46, %s60
    %p62 = scmp.eq.s32.totalorder %s15, 0
    %p63 = por %p61, %p62
    %s65 = sadd.s32 %s64, 1
    %p68 = scmp.eq.s32.totalorder %s9, 1
    %p69 = scmp.ne.s32.totalorder %s64, %s66
    %p70 = scmp.eq.s32.totalorder %s9, 0
    %p71 = por %p69, %p70
    %p72 = scmp.ne.s32.totalorder %s64, %s66
    %p73 = scmp.eq.s32.totalorder %s14, 1
    %p74 = por %p72, %p73
    %p75 = scmp.ne.s32.totalorder %s66, %s67
    %p76 = scmp.eq.s32.totalorder %s14, 0
    %p77 = por %p75, %p76
    %p78 = scmp.ne.s32.totalorder %s66, %s67
    %p79 = scmp.eq.s32.totalorder %s15, 1
    %p80 = por %p78, %p79
    %p82 = scmp.ne.s32.totalorder %s67, %s81
    %p83 = scmp.eq.s32.totalorder %s15, 0
    %p84 = por %p82, %p83
    %s85 = ssub.s32 %s9, %s16
    %p86 = scmp.eq.s32.totalorder %s85, 0
    %s88 = sadd.s32 %s87, 1
    %s89 = scalar_select %p86, %s87, %s88
    %p92 = pneg %p86
    %p93 = scmp.eq.s32.totalorder %s9, 1
    %p94 = por %p92, %p93
    %p95 = scmp.ne.s32.totalorder %s87, %s90
    %p96 = scmp.eq.s32.totalorder %s9, 0
    %p97 = por %p95, %p96
    %p98 = scmp.ne.s32.totalorder %s87, %s90
    %p99 = scmp.eq.s32.totalorder %s14, 1
    %p100 = por %p98, %p99
    %p101 = scmp.ne.s32.totalorder %s90, %s91
    %p102 = scmp.eq.s32.totalorder %s14, 0
    %p103 = por %p101, %p102
    %p104 = scmp.ne.s32.totalorder %s90, %s91
    %p105 = scmp.eq.s32.totalorder %s15, 1
    %p106 = por %p104, %p105
    %p108 = scmp.ne.s32.totalorder %s91, %s107
    %p109 = scmp.eq.s32.totalorder %s15, 0
    %p110 = por %p108, %p109
    %p111 = scmp.le.s32.totalorder 1, %s9
    %p112 = scmp.lt.s32.totalorder %s9, 3
    %p113 = pnand %p111, %p112
    %p114 = pneg %p113
    // Predicated region
    $region9: #{cnn1_forward.4} parent=5 // pred_check
      _
    $region10: #{cnn1_forward.4} parent=5 // pred_check_branch
      %116 = sbr.rel (%p113) target = $region12
    $region11: #{cnn1_forward.4} parent=5 // pred_region
      %s117 = ssub.s32 %s9, 1
      // Predicated region
      $region13: #{cnn1_forward.4} parent=11 // pred_check
        %p118 = pneg %p56
      $region14: #{cnn1_forward.4} parent=11 // pred_check_branch
        %120 = sbr.rel (%p118) target = $region16
      $region15: #{cnn1_forward.4} parent=11 // pred_region
        _
      $region16: #{cnn1_forward.4} parent=11 // pred_fallthru
        _
      // Predicated region
      $region17: #{cnn1_forward.4} parent=11 // pred_check
        %p121 = pneg %p77
      $region18: #{cnn1_forward.4} parent=11 // pred_check_branch
        %123 = sbr.rel (%p121) target = $region20
      $region19: #{cnn1_forward.4} parent=11 // pred_region
        _
      $region20: #{cnn1_forward.4} parent=11 // pred_fallthru
        _
    $region12: #{cnn1_forward.4} parent=5 // pred_fallthru
      _
    %p124 = scmp.lt.s32.totalorder %s9, 2
    // Predicated region
    $region21: #{cnn1_forward.4} parent=5 // pred_check
      %p125 = pneg %p124
    $region22: #{cnn1_forward.4} parent=5 // pred_check_branch
      %127 = sbr.rel (%p125) target = $region24
    $region23: #{cnn1_forward.4} parent=5 // pred_region
      // Predicated region
      $region25: #{cnn1_forward.4} parent=23 // pred_check
        %p128 = pneg %p29
      $region26: #{cnn1_forward.4} parent=23 // pred_check_branch
        %130 = sbr.rel (%p128) target = $region28
      $region27: #{cnn1_forward.4} parent=23 // pred_region
        %p131 = scmp.lt.s32.totalorder %s9, 1
        %s132 = scalar_select %p131, %s9, 1
        %s133 = smul.addr %s132, 2016
        %s134 = smul.addr %s133, 8
        %s135 = scalar_lea.vmem %s0, %s134
      $region28: #{cnn1_forward.4} parent=23 // pred_fallthru
        _
    $region24: #{cnn1_forward.4} parent=5 // pred_fallthru
      _
    %p136 = scmp.le.s32.totalorder 1, %s9
    %p137 = scmp.lt.s32.totalorder %s9, 3
    %p138 = pnand %p136, %p137
    %p139 = pneg %p138
    // Predicated region
    $region29: #{cnn1_forward.4} parent=5 // pred_check
      _
    $region30: #{cnn1_forward.4} parent=5 // pred_check_branch
      %141 = sbr.rel (%p138) target = $region32
    $region31: #{cnn1_forward.4} parent=5 // pred_region
      %s142 = ssub.s32 %s9, 1
      %p143 = scmp.lt.s32.totalorder %s14, 1
      %s144 = scalar_select %p143, %s14, 1
      %s145 = smul.addr %s144, 2016
      %s146 = smul.addr %s145, 8
      %s147 = scalar_lea.vmem %s0, %s146
      %p148 = pneg %p35
      %p149 = pneg %p32
      %p150 = pneg %p56
      %p151 = pneg %p53
      %p152 = pneg %p77
      %p153 = pneg %p74
      %p154 = pneg %p103
      %p155 = pneg %p100
      %p156 = scmp.lt.s32.totalorder %s14, 1
      %s157 = scalar_select %p156, %s14, 1
      %s158 = smul.addr %s157, 496
      %s159 = smul.addr %s158, 8
      %s160 = scalar_lea.vmem %s3, %s159
      %p161 = scmp.lt.s32.totalorder %s14, 1
      %s162 = scalar_select %p161, %s14, 1
      %s163 = smul.addr %s162, 2016
      %s164 = smul.addr %s163, 8
      %s165 = scalar_lea.vmem %s0, %s164
      %p166 = scmp.lt.s32.totalorder %s14, 1
      %s167 = scalar_select %p166, %s14, 1
      %s168 = smul.addr %s167, 496
      %s169 = smul.addr %s168, 8
      %s170 = scalar_lea.vmem %s3, %s169
      %v171 = vld [vmem:[%s1] sm:$0x7]
      %s172 = scalar_lea.vmem %s1, 4
      %v173 = vld [vmem:[%s172] sm:$0x7]
      %s174 = scalar_lea.vmem %s1, 8
      %v175 = vld [vmem:[%s174] sm:$0x7]
      %s176 = scalar_lea.vmem %s1, 12
      %v177 = vld [vmem:[%s176] sm:$0x7]
      %s178 = scalar_lea.vmem %s1, 16
      %v179 = vld [vmem:[%s178] sm:$0x7]
      %s180 = scalar_lea.vmem %s1, 20
      %v181 = vld [vmem:[%s180] sm:$0x7]
      %s182 = scalar_lea.vmem %s1, 24
      %v183 = vld [vmem:[%s182] sm:$0x7]
      %s184 = scalar_lea.vmem %s1, 28
      %v185 = vld [vmem:[%s184] sm:$0x7]
      %s186 = scalar_lea.vmem %s1, 32
      %v187 = vld [vmem:[%s186] sm:$0x7]
      %v188 = vld [vmem:[%s2] sm:$0x1]
      %v189 = vlaneseq
      %v190 = vshrl.u32 %v189, 7
      %v191 = vadd.s32 %v190, 8
      %v192 = vadd.s32 %v190, 16
      %v193 = vadd.s32 %v190, 24
      %v194 = vadd.s32 %v190, 32
      %v195 = vadd.s32 %v190, 40
      %v196 = vadd.s32 %v190, 48
      %v197 = vadd.s32 %v190, 56
      %v198 = vlaneseq
      %v199 = vand.u32 %v198, 127
      %v200 = vmul.u32 %v190, 2
      %v201 = vmul.u32 %v191, 2
      %v202 = vmul.u32 %v192, 2
      %v203 = vmul.u32 %v193, 2
      %v204 = vmul.u32 %v194, 2
      %v205 = vmul.u32 %v195, 2
      %v206 = vmul.u32 %v196, 2
      %v207 = vmul.u32 %v197, 2
      %vm208 = vcmp.eq.s32.totalorder %v199, %v200
      %vm209 = vcmp.eq.s32.totalorder %v199, %v201
      %vm210 = vcmp.eq.s32.totalorder %v199, %v202
      %vm211 = vcmp.eq.s32.totalorder %v199, %v203
      %vm212 = vcmp.eq.s32.totalorder %v199, %v204
      %vm213 = vcmp.eq.s32.totalorder %v199, %v205
      %vm214 = vcmp.eq.s32.totalorder %v199, %v206
      %vm215 = vcmp.eq.s32.totalorder %v199, %v207
      %v216 = vsel %vm208, 1, 0
      %v217 = vsel %vm209, 1, 0
      %v218 = vsel %vm210, 1, 0
      %v219 = vsel %vm211, 1, 0
      %v220 = vsel %vm212, 1, 0
      %v221 = vsel %vm213, 1, 0
      %v222 = vsel %vm214, 1, 0
      %v223 = vsel %vm215, 1, 0
      %v224 = vcvt.s32.f32 %v216
      %v225 = vcvt.s32.f32 %v217
      %v226 = vcvt.s32.f32 %v218
      %v227 = vcvt.s32.f32 %v219
      %v228 = vcvt.s32.f32 %v220
      %v229 = vcvt.s32.f32 %v221
      %v230 = vcvt.s32.f32 %v222
      %v231 = vcvt.s32.f32 %v223
      %v232 = vadd.s32 %v200, 1
      %v233 = vadd.s32 %v201, 1
      %v234 = vadd.s32 %v202, 1
      %v235 = vadd.s32 %v203, 1
      %v236 = vadd.s32 %v204, 1
      %v237 = vadd.s32 %v205, 1
      %v238 = vadd.s32 %v206, 1
      %v239 = vadd.s32 %v207, 1
      %vm240 = vcmp.eq.s32.totalorder %v199, %v232
      %vm241 = vcmp.eq.s32.totalorder %v199, %v233
      %vm242 = vcmp.eq.s32.totalorder %v199, %v234
      %vm243 = vcmp.eq.s32.totalorder %v199, %v235
      %vm244 = vcmp.eq.s32.totalorder %v199, %v236
      %vm245 = vcmp.eq.s32.totalorder %v199, %v237
      %vm246 = vcmp.eq.s32.totalorder %v199, %v238
      %vm247 = vcmp.eq.s32.totalorder %v199, %v239
      %v248 = vsel %vm240, 1, 0
      %v249 = vsel %vm241, 1, 0
      %v250 = vsel %vm242, 1, 0
      %v251 = vsel %vm243, 1, 0
      %v252 = vsel %vm244, 1, 0
      %v253 = vsel %vm245, 1, 0
      %v254 = vsel %vm246, 1, 0
      %v255 = vsel %vm247, 1, 0
      %v256 = vcvt.s32.f32 %v248
      %v257 = vcvt.s32.f32 %v249
      %v258 = vcvt.s32.f32 %v250
      %v259 = vcvt.s32.f32 %v251
      %v260 = vcvt.s32.f32 %v252
      %v261 = vcvt.s32.f32 %v253
      %v262 = vcvt.s32.f32 %v254
      %v263 = vcvt.s32.f32 %v255
      loop: start=0, step=1, limit=62
      $region33: #{cnn1_forward.4} parent=31 // loop_pre_header
        _
      $region34: #{cnn1_forward.4} parent=31 // loop_header
        %s265 = sphi 0, %s269
        %p266 = scmp.ge.s32.totalorder %s265, 62
      $region35: #{cnn1_forward.4} parent=31 // loop_header_branch
        %268 = sbr.rel (%p266) target = $region39
      $region36: #{cnn1_forward.4} parent=31 // loop_body
        %s270 = smul.u32 %s265, 2
        %s271 = smul.u32 %s270, 128
        %s272 = scalar_lea.vmem %s165, %s271
        %v273 = vld [vmem:[%s272] sm:$0xff]
        %v274 = vld [vmem:[%s272 + $0x8] sm:$0xff]
        %v275 = vld [vmem:[%s272 + $0x10] sm:$0xff]
        %v276 = vld [vmem:[%s272 + $0x18] sm:$0xff]
        %v277 = vld [vmem:[%s272 + $0x20] sm:$0xff]
        %v278 = vld [vmem:[%s272 + $0x28] sm:$0xff]
        %v279 = vld [vmem:[%s272 + $0x30] sm:$0xff]
        %v280 = vld [vmem:[%s272 + $0x38] sm:$0xff]
        %v281 = vld [vmem:[%s272 + $0x40] sm:$0xff]
        %v282 = vld [vmem:[%s272 + $0x48] sm:$0xff]
        %v283 = vld [vmem:[%s272 + $0x50] sm:$0xff]
        %v284 = vld [vmem:[%s272 + $0x58] sm:$0xff]
        %v285 = vld [vmem:[%s272 + $0x60] sm:$0xff]
        %v286 = vld [vmem:[%s272 + $0x68] sm:$0xff]
        %v287 = vld [vmem:[%s272 + $0x70] sm:$0xff]
        %v288 = vld [vmem:[%s272 + $0x78] sm:$0xf]
        %v289 = vld [vmem:[%s272 + $0x1] sm:$0xff]
        %v290 = vld [vmem:[%s272 + $0x9] sm:$0xff]
        %v291 = vld [vmem:[%s272 + $0x11] sm:$0xff]
        %v292 = vld [vmem:[%s272 + $0x19] sm:$0xff]
        %v293 = vld [vmem:[%s272 + $0x21] sm:$0xff]
        %v294 = vld [vmem:[%s272 + $0x29] sm:$0xff]
        %v295 = vld [vmem:[%s272 + $0x31] sm:$0xff]
        %v296 = vld [vmem:[%s272 + $0x39] sm:$0xff]
        %v297 = vld [vmem:[%s272 + $0x41] sm:$0xff]
        %v298 = vld [vmem:[%s272 + $0x49] sm:$0xff]
        %v299 = vld [vmem:[%s272 + $0x51] sm:$0xff]
        %v300 = vld [vmem:[%s272 + $0x59] sm:$0xff]
        %v301 = vld [vmem:[%s272 + $0x61] sm:$0xff]
        %v302 = vld [vmem:[%s272 + $0x69] sm:$0xff]
        %v303 = vld [vmem:[%s272 + $0x71] sm:$0xff]
        %v304 = vld [vmem:[%s272 + $0x79] sm:$0xf]
        %vm305 = vcmask 23552
        %v307 = vsel %vm305, %v289, 0
        %v310 = vsel %vm305, %v290, 0
        %v313 = vsel %vm305, %v291, 0
        %v316 = vsel %vm305, %v292, 0
        %v319 = vsel %vm305, %v293, 0
        %v322 = vsel %vm305, %v294, 0
        %v325 = vsel %vm305, %v295, 0
        %v328 = vsel %vm305, %v296, 0
        %v331 = vsel %vm305, %v297, 0
        %v334 = vsel %vm305, %v298, 0
        %v337 = vsel %vm305, %v299, 0
        %v340 = vsel %vm305, %v300, 0
        %v343 = vsel %vm305, %v301, 0
        %v346 = vsel %vm305, %v302, 0
        %v349 = vsel %vm305, %v303, 0
        %v352 = vsel %vm305, %v304, 0
        %vm354 = vcmask 1042432
        %v356 = vsel %vm354, %v173, 0
        %358 = vmatprep.subr.mxu0 0.0
        %359 = vmatpush1.msra.mxu0 0.0
        %360 = vmatprep.subr.mxu0 0.0
        %361 = vmatpush1.msra.mxu0 0.0
        %362 = vmatprep.subr.mxu0 0.0
        %363 = vmatpush1.msra.mxu0 0.0
        %364 = vmatprep.subr.mxu0 0.0
        %365 = vmatpush1.msra.mxu0 0.0
        %366 = vmatprep.subr.mxu0 0.0
        %367 = vmatpush1.msra.mxu0 0.0
        %368 = vmatprep.subr.mxu0 0.0
        %369 = vmatpush1.msra.mxu0 0.0
        %370 = vmatprep.subr.mxu0 0.0
        %371 = vmatpush1.msra.mxu0 0.0
        %372 = vmatprep.subr.mxu0 0.0
        %373 = vmatpush1.msra.mxu0 0.0
        %374 = vmatprep.subr.mxu0 0.0
        %375 = vmatpush1.msra.mxu0 0.0
        %376 = vmatprep.subr.mxu0 0.0
        %377 = vmatpush1.msra.mxu0 0.0
        %378 = vmatprep.subr.mxu0 0.0
        %379 = vmatpush1.msra.mxu0 0.0
        %380 = vmatprep.subr.mxu0 0.0
        %381 = vmatpush1.msra.mxu0 0.0
        %382 = vmatprep.subr.mxu0 0.0
        %383 = vmatpush1.msra.mxu0 0.0
        %384 = vmatprep.subr.mxu0 0.0
        %385 = vmatpush1.msra.mxu0 0.0
        %386 = vmatprep.subr.mxu0 0.0
        %387 = vmatpush1.msra.mxu0 0.0
        %388 = vmatprep.subr.mxu0 0.0
        %389 = vmatpush1.msra.mxu0 %v356
        %390 = vmatprep.subr.mxu0 0.0
        %391 = vmatpush2.msra.mxu0 0.0
        %392 = vmatprep.subr.mxu0 0.0
        %393 = vmatpush2.msra.mxu0 0.0
        %394 = vmatprep.subr.mxu0 0.0
        %395 = vmatpush2.msra.mxu0 0.0
        %396 = vmatprep.subr.mxu0 0.0
        %397 = vmatpush2.msra.mxu0 0.0
        %398 = vmatprep.subr.mxu0 0.0
        %399 = vmatpush2.msra.mxu0 0.0
        %400 = vmatprep.subr.mxu0 0.0
        %401 = vmatpush2.msra.mxu0 0.0
        %402 = vmatprep.subr.mxu0 0.0
        %403 = vmatpush2.msra.mxu0 0.0
        %404 = vmatprep.subr.mxu0 0.0
        %405 = vmatpush2.msra.mxu0 0.0
        %406 = vmatprep.subr.mxu0 0.0
        %407 = vmatpush2.msra.mxu0 0.0
        %408 = vmatprep.subr.mxu0 0.0
        %409 = vmatpush2.msra.mxu0 0.0
        %410 = vmatprep.subr.mxu0 0.0
        %411 = vmatpush2.msra.mxu0 0.0
        %412 = vmatprep.subr.mxu0 0.0
        %413 = vmatpush2.msra.mxu0 0.0
        %414 = vmatprep.subr.mxu0 0.0
        %415 = vmatpush2.msra.mxu0 0.0
        %416 = vmatprep.subr.mxu0 0.0
        %417 = vmatpush2.msra.mxu0 0.0
        %418 = vmatprep.subr.mxu0 0.0
        %419 = vmatpush2.msra.mxu0 0.0
        %420 = vmatprep.subr.mxu0 0.0
        %421 = vmatpush2.msra.mxu0 0.0
        %422 = vmatprep.mubr.f32.mxu0 0.0
        %423 = vmatmul.mubr.f32.gmra.mxu0 %v307
        %v424 = vpop.f32.mrf.mxu0
        %v425 = vadd.f32 0.0, %v424
        %v426 = vpop.f32.mrf.mxu0
        %427 = vmatprep.mubr.f32.mxu0 0.0
        %428 = vmatmul.mubr.f32.gmra.mxu0 %v310
        %v429 = vpop.f32.mrf.mxu0
        %v430 = vadd.f32 0.0, %v429
        %v431 = vpop.f32.mrf.mxu0
        %432 = vmatprep.mubr.f32.mxu0 0.0
        %433 = vmatmul.mubr.f32.gmra.mxu0 %v313
        %v434 = vpop.f32.mrf.mxu0
        %v435 = vadd.f32 0.0, %v434
        %v436 = vpop.f32.mrf.mxu0
        %437 = vmatprep.mubr.f32.mxu0 0.0
        %438 = vmatmul.mubr.f32.gmra.mxu0 %v316
        %v439 = vpop.f32.mrf.mxu0
        %v440 = vadd.f32 0.0, %v439
        %v441 = vpop.f32.mrf.mxu0
        %442 = vmatprep.mubr.f32.mxu0 0.0
        %443 = vmatmul.mubr.f32.gmra.mxu0 %v319
        %v444 = vpop.f32.mrf.mxu0
        %v445 = vadd.f32 0.0, %v444
        %v446 = vpop.f32.mrf.mxu0
        %447 = vmatprep.mubr.f32.mxu0 0.0
        %448 = vmatmul.mubr.f32.gmra.mxu0 %v322
        %v449 = vpop.f32.mrf.mxu0
        %v450 = vadd.f32 0.0, %v449
        %v451 = vpop.f32.mrf.mxu0
        %452 = vmatprep.mubr.f32.mxu0 0.0
        %453 = vmatmul.mubr.f32.gmra.mxu0 %v325
        %v454 = vpop.f32.mrf.mxu0
        %v455 = vadd.f32 0.0, %v454
        %v456 = vpop.f32.mrf.mxu0
        %457 = vmatprep.mubr.f32.mxu0 0.0
        %458 = vmatmul.mubr.f32.gmra.mxu0 %v328
        %v459 = vpop.f32.mrf.mxu0
        %v460 = vadd.f32 0.0, %v459
        %v461 = vpop.f32.mrf.mxu0
        %462 = vmatprep.mubr.f32.mxu0 0.0
        %463 = vmatmul.mubr.f32.gmra.mxu0 %v331
        %v464 = vpop.f32.mrf.mxu0
        %v465 = vadd.f32 0.0, %v464
        %v466 = vpop.f32.mrf.mxu0
        %467 = vmatprep.mubr.f32.mxu0 0.0
        %468 = vmatmul.mubr.f32.gmra.mxu0 %v334
        %v469 = vpop.f32.mrf.mxu0
        %v470 = vadd.f32 0.0, %v469
        %v471 = vpop.f32.mrf.mxu0
        %472 = vmatprep.mubr.f32.mxu0 0.0
        %473 = vmatmul.mubr.f32.gmra.mxu0 %v337
        %v474 = vpop.f32.mrf.mxu0
        %v475 = vadd.f32 0.0, %v474
        %v476 = vpop.f32.mrf.mxu0
        %477 = vmatprep.mubr.f32.mxu0 0.0
        %478 = vmatmul.mubr.f32.gmra.mxu0 %v340
        %v479 = vpop.f32.mrf.mxu0
        %v480 = vadd.f32 0.0, %v479
        %v481 = vpop.f32.mrf.mxu0
        %482 = vmatprep.mubr.f32.mxu0 0.0
        %483 = vmatmul.mubr.f32.gmra.mxu0 %v343
        %v484 = vpop.f32.mrf.mxu0
        %v485 = vadd.f32 0.0, %v484
        %v486 = vpop.f32.mrf.mxu0
        %487 = vmatprep.mubr.f32.mxu0 0.0
        %488 = vmatmul.mubr.f32.gmra.mxu0 %v346
        %v489 = vpop.f32.mrf.mxu0
        %v490 = vadd.f32 0.0, %v489
        %v491 = vpop.f32.mrf.mxu0
        %492 = vmatprep.mubr.f32.mxu0 0.0
        %493 = vmatmul.mubr.f32.gmra.mxu0 %v349
        %v494 = vpop.f32.mrf.mxu0
        %v495 = vadd.f32 0.0, %v494
        %v496 = vpop.f32.mrf.mxu0
        %497 = vmatprep.mubr.f32.mxu0 0.0
        %498 = vmatmul.mubr.f32.gmra.mxu0 %v352
        %v499 = vpop.f32.mrf.mxu0
        %v500 = vadd.f32 0.0, %v499
        %v501 = vpop.f32.mrf.mxu0
        %502 = vdwg.mxu0
        %v504 = vsel %vm305, %v273, 0
        %v507 = vsel %vm305, %v274, 0
        %v510 = vsel %vm305, %v275, 0
        %v513 = vsel %vm305, %v276, 0
        %v516 = vsel %vm305, %v277, 0
        %v519 = vsel %vm305, %v278, 0
        %v522 = vsel %vm305, %v279, 0
        %v525 = vsel %vm305, %v280, 0
        %v528 = vsel %vm305, %v281, 0
        %v531 = vsel %vm305, %v282, 0
        %v534 = vsel %vm305, %v283, 0
        %v537 = vsel %vm305, %v284, 0
        %v540 = vsel %vm305, %v285, 0
        %v543 = vsel %vm305, %v286, 0
        %v546 = vsel %vm305, %v287, 0
        %v549 = vsel %vm305, %v288, 0
        %v552 = vsel %vm354, %v171, 0
        %554 = vmatprep.subr.mxu0 0.0
        %555 = vmatpush1.msra.mxu0 0.0
        %556 = vmatprep.subr.mxu0 0.0
        %557 = vmatpush1.msra.mxu0 0.0
        %558 = vmatprep.subr.mxu0 0.0
        %559 = vmatpush1.msra.mxu0 0.0
        %560 = vmatprep.subr.mxu0 0.0
        %561 = vmatpush1.msra.mxu0 0.0
        %562 = vmatprep.subr.mxu0 0.0
        %563 = vmatpush1.msra.mxu0 0.0
        %564 = vmatprep.subr.mxu0 0.0
        %565 = vmatpush1.msra.mxu0 0.0
        %566 = vmatprep.subr.mxu0 0.0
        %567 = vmatpush1.msra.mxu0 0.0
        %568 = vmatprep.subr.mxu0 0.0
        %569 = vmatpush1.msra.mxu0 0.0
        %570 = vmatprep.subr.mxu0 0.0
        %571 = vmatpush1.msra.mxu0 0.0
        %572 = vmatprep.subr.mxu0 0.0
        %573 = vmatpush1.msra.mxu0 0.0
        %574 = vmatprep.subr.mxu0 0.0
        %575 = vmatpush1.msra.mxu0 0.0
        %576 = vmatprep.subr.mxu0 0.0
        %577 = vmatpush1.msra.mxu0 0.0
        %578 = vmatprep.subr.mxu0 0.0
        %579 = vmatpush1.msra.mxu0 0.0
        %580 = vmatprep.subr.mxu0 0.0
        %581 = vmatpush1.msra.mxu0 0.0
        %582 = vmatprep.subr.mxu0 0.0
        %583 = vmatpush1.msra.mxu0 0.0
        %584 = vmatprep.subr.mxu0 0.0
        %585 = vmatpush1.msra.mxu0 %v552
        %586 = vmatprep.subr.mxu0 0.0
        %587 = vmatpush2.msra.mxu0 0.0
        %588 = vmatprep.subr.mxu0 0.0
        %589 = vmatpush2.msra.mxu0 0.0
        %590 = vmatprep.subr.mxu0 0.0
        %591 = vmatpush2.msra.mxu0 0.0
        %592 = vmatprep.subr.mxu0 0.0
        %593 = vmatpush2.msra.mxu0 0.0
        %594 = vmatprep.subr.mxu0 0.0
        %595 = vmatpush2.msra.mxu0 0.0
        %596 = vmatprep.subr.mxu0 0.0
        %597 = vmatpush2.msra.mxu0 0.0
        %598 = vmatprep.subr.mxu0 0.0
        %599 = vmatpush2.msra.mxu0 0.0
        %600 = vmatprep.subr.mxu0 0.0
        %601 = vmatpush2.msra.mxu0 0.0
        %602 = vmatprep.subr.mxu0 0.0
        %603 = vmatpush2.msra.mxu0 0.0
        %604 = vmatprep.subr.mxu0 0.0
        %605 = vmatpush2.msra.mxu0 0.0
        %606 = vmatprep.subr.mxu0 0.0
        %607 = vmatpush2.msra.mxu0 0.0
        %608 = vmatprep.subr.mxu0 0.0
        %609 = vmatpush2.msra.mxu0 0.0
        %610 = vmatprep.subr.mxu0 0.0
        %611 = vmatpush2.msra.mxu0 0.0
        %612 = vmatprep.subr.mxu0 0.0
        %613 = vmatpush2.msra.mxu0 0.0
        %614 = vmatprep.subr.mxu0 0.0
        %615 = vmatpush2.msra.mxu0 0.0
        %616 = vmatprep.subr.mxu0 0.0
        %617 = vmatpush2.msra.mxu0 0.0
        %618 = vmatprep.mubr.f32.mxu0 0.0
        %619 = vmatmul.mubr.f32.gmra.mxu0 %v504
        %v620 = vpop.f32.mrf.mxu0
        %v621 = vadd.f32 %v425, %v620
        %v622 = vpop.f32.mrf.mxu0
        %623 = vmatprep.mubr.f32.mxu0 0.0
        %624 = vmatmul.mubr.f32.gmra.mxu0 %v507
        %v625 = vpop.f32.mrf.mxu0
        %v626 = vadd.f32 %v430, %v625
        %v627 = vpop.f32.mrf.mxu0
        %628 = vmatprep.mubr.f32.mxu0 0.0
        %629 = vmatmul.mubr.f32.gmra.mxu0 %v510
        %v630 = vpop.f32.mrf.mxu0
        %v631 = vadd.f32 %v435, %v630
        %v632 = vpop.f32.mrf.mxu0
        %633 = vmatprep.mubr.f32.mxu0 0.0
        %634 = vmatmul.mubr.f32.gmra.mxu0 %v513
        %v635 = vpop.f32.mrf.mxu0
        %v636 = vadd.f32 %v440, %v635
        %v637 = vpop.f32.mrf.mxu0
        %638 = vmatprep.mubr.f32.mxu0 0.0
        %639 = vmatmul.mubr.f32.gmra.mxu0 %v516
        %v640 = vpop.f32.mrf.mxu0
        %v641 = vadd.f32 %v445, %v640
        %v642 = vpop.f32.mrf.mxu0
        %643 = vmatprep.mubr.f32.mxu0 0.0
        %644 = vmatmul.mubr.f32.gmra.mxu0 %v519
        %v645 = vpop.f32.mrf.mxu0
        %v646 = vadd.f32 %v450, %v645
        %v647 = vpop.f32.mrf.mxu0
        %648 = vmatprep.mubr.f32.mxu0 0.0
        %649 = vmatmul.mubr.f32.gmra.mxu0 %v522
        %v650 = vpop.f32.mrf.mxu0
        %v651 = vadd.f32 %v455, %v650
        %v652 = vpop.f32.mrf.mxu0
        %653 = vmatprep.mubr.f32.mxu0 0.0
        %654 = vmatmul.mubr.f32.gmra.mxu0 %v525
        %v655 = vpop.f32.mrf.mxu0
        %v656 = vadd.f32 %v460, %v655
        %v657 = vpop.f32.mrf.mxu0
        %658 = vmatprep.mubr.f32.mxu0 0.0
        %659 = vmatmul.mubr.f32.gmra.mxu0 %v528
        %v660 = vpop.f32.mrf.mxu0
        %v661 = vadd.f32 %v465, %v660
        %v662 = vpop.f32.mrf.mxu0
        %663 = vmatprep.mubr.f32.mxu0 0.0
        %664 = vmatmul.mubr.f32.gmra.mxu0 %v531
        %v665 = vpop.f32.mrf.mxu0
        %v666 = vadd.f32 %v470, %v665
        %v667 = vpop.f32.mrf.mxu0
        %668 = vmatprep.mubr.f32.mxu0 0.0
        %669 = vmatmul.mubr.f32.gmra.mxu0 %v534
        %v670 = vpop.f32.mrf.mxu0
        %v671 = vadd.f32 %v475, %v670
        %v672 = vpop.f32.mrf.mxu0
        %673 = vmatprep.mubr.f32.mxu0 0.0
        %674 = vmatmul.mubr.f32.gmra.mxu0 %v537
        %v675 = vpop.f32.mrf.mxu0
        %v676 = vadd.f32 %v480, %v675
        %v677 = vpop.f32.mrf.mxu0
        %678 = vmatprep.mubr.f32.mxu0 0.0
        %679 = vmatmul.mubr.f32.gmra.mxu0 %v540
        %v680 = vpop.f32.mrf.mxu0
        %v681 = vadd.f32 %v485, %v680
        %v682 = vpop.f32.mrf.mxu0
        %683 = vmatprep.mubr.f32.mxu0 0.0
        %684 = vmatmul.mubr.f32.gmra.mxu0 %v543
        %v685 = vpop.f32.mrf.mxu0
        %v686 = vadd.f32 %v490, %v685
        %v687 = vpop.f32.mrf.mxu0
        %688 = vmatprep.mubr.f32.mxu0 0.0
        %689 = vmatmul.mubr.f32.gmra.mxu0 %v546
        %v690 = vpop.f32.mrf.mxu0
        %v691 = vadd.f32 %v495, %v690
        %v692 = vpop.f32.mrf.mxu0
        %693 = vmatprep.mubr.f32.mxu0 0.0
        %694 = vmatmul.mubr.f32.gmra.mxu0 %v549
        %v695 = vpop.f32.mrf.mxu0
        %v696 = vadd.f32 %v500, %v695
        %v697 = vpop.f32.mrf.mxu0
        %698 = vdwg.mxu0
        %v699 = vld [vmem:[%s272 + $0x2] sm:$0xff]
        %v700 = vld [vmem:[%s272 + $0xa] sm:$0xff]
        %v701 = vld [vmem:[%s272 + $0x12] sm:$0xff]
        %v702 = vld [vmem:[%s272 + $0x1a] sm:$0xff]
        %v703 = vld [vmem:[%s272 + $0x22] sm:$0xff]
        %v704 = vld [vmem:[%s272 + $0x2a] sm:$0xff]
        %v705 = vld [vmem:[%s272 + $0x32] sm:$0xff]
        %v706 = vld [vmem:[%s272 + $0x3a] sm:$0xff]
        %v707 = vld [vmem:[%s272 + $0x42] sm:$0xff]
        %v708 = vld [vmem:[%s272 + $0x4a] sm:$0xff]
        %v709 = vld [vmem:[%s272 + $0x52] sm:$0xff]
        %v710 = vld [vmem:[%s272 + $0x5a] sm:$0xff]
        %v711 = vld [vmem:[%s272 + $0x62] sm:$0xff]
        %v712 = vld [vmem:[%s272 + $0x6a] sm:$0xff]
        %v713 = vld [vmem:[%s272 + $0x72] sm:$0xff]
        %v714 = vld [vmem:[%s272 + $0x7a] sm:$0xf]
        %v716 = vsel %vm305, %v699, 0
        %v719 = vsel %vm305, %v700, 0
        %v722 = vsel %vm305, %v701, 0
        %v725 = vsel %vm305, %v702, 0
        %v728 = vsel %vm305, %v703, 0
        %v731 = vsel %vm305, %v704, 0
        %v734 = vsel %vm305, %v705, 0
        %v737 = vsel %vm305, %v706, 0
        %v740 = vsel %vm305, %v707, 0
        %v743 = vsel %vm305, %v708, 0
        %v746 = vsel %vm305, %v709, 0
        %v749 = vsel %vm305, %v710, 0
        %v752 = vsel %vm305, %v711, 0
        %v755 = vsel %vm305, %v712, 0
        %v758 = vsel %vm305, %v713, 0
        %v761 = vsel %vm305, %v714, 0
        %v764 = vsel %vm354, %v175, 0
        %766 = vmatprep.subr.mxu0 0.0
        %767 = vmatpush1.msra.mxu0 0.0
        %768 = vmatprep.subr.mxu0 0.0
        %769 = vmatpush1.msra.mxu0 0.0
        %770 = vmatprep.subr.mxu0 0.0
        %771 = vmatpush1.msra.mxu0 0.0
        %772 = vmatprep.subr.mxu0 0.0
        %773 = vmatpush1.msra.mxu0 0.0
        %774 = vmatprep.subr.mxu0 0.0
        %775 = vmatpush1.msra.mxu0 0.0
        %776 = vmatprep.subr.mxu0 0.0
        %777 = vmatpush1.msra.mxu0 0.0
        %778 = vmatprep.subr.mxu0 0.0
        %779 = vmatpush1.msra.mxu0 0.0
        %780 = vmatprep.subr.mxu0 0.0
        %781 = vmatpush1.msra.mxu0 0.0
        %782 = vmatprep.subr.mxu0 0.0
        %783 = vmatpush1.msra.mxu0 0.0
        %784 = vmatprep.subr.mxu0 0.0
        %785 = vmatpush1.msra.mxu0 0.0
        %786 = vmatprep.subr.mxu0 0.0
        %787 = vmatpush1.msra.mxu0 0.0
        %788 = vmatprep.subr.mxu0 0.0
        %789 = vmatpush1.msra.mxu0 0.0
        %790 = vmatprep.subr.mxu0 0.0
        %791 = vmatpush1.msra.mxu0 0.0
        %792 = vmatprep.subr.mxu0 0.0
        %793 = vmatpush1.msra.mxu0 0.0
        %794 = vmatprep.subr.mxu0 0.0
        %795 = vmatpush1.msra.mxu0 0.0
        %796 = vmatprep.subr.mxu0 0.0
        %797 = vmatpush1.msra.mxu0 %v764
        %798 = vmatprep.subr.mxu0 0.0
        %799 = vmatpush2.msra.mxu0 0.0
        %800 = vmatprep.subr.mxu0 0.0
        %801 = vmatpush2.msra.mxu0 0.0
        %802 = vmatprep.subr.mxu0 0.0
        %803 = vmatpush2.msra.mxu0 0.0
        %804 = vmatprep.subr.mxu0 0.0
        %805 = vmatpush2.msra.mxu0 0.0
        %806 = vmatprep.subr.mxu0 0.0
        %807 = vmatpush2.msra.mxu0 0.0
        %808 = vmatprep.subr.mxu0 0.0
        %809 = vmatpush2.msra.mxu0 0.0
        %810 = vmatprep.subr.mxu0 0.0
        %811 = vmatpush2.msra.mxu0 0.0
        %812 = vmatprep.subr.mxu0 0.0
        %813 = vmatpush2.msra.mxu0 0.0
        %814 = vmatprep.subr.mxu0 0.0
        %815 = vmatpush2.msra.mxu0 0.0
        %816 = vmatprep.subr.mxu0 0.0
        %817 = vmatpush2.msra.mxu0 0.0
        %818 = vmatprep.subr.mxu0 0.0
        %819 = vmatpush2.msra.mxu0 0.0
        %820 = vmatprep.subr.mxu0 0.0
        %821 = vmatpush2.msra.mxu0 0.0
        %822 = vmatprep.subr.mxu0 0.0
        %823 = vmatpush2.msra.mxu0 0.0
        %824 = vmatprep.subr.mxu0 0.0
        %825 = vmatpush2.msra.mxu0 0.0
        %826 = vmatprep.subr.mxu0 0.0
        %827 = vmatpush2.msra.mxu0 0.0
        %828 = vmatprep.subr.mxu0 0.0
        %829 = vmatpush2.msra.mxu0 0.0
        %830 = vmatprep.mubr.f32.mxu0 0.0
        %831 = vmatmul.mubr.f32.gmra.mxu0 %v716
        %v832 = vpop.f32.mrf.mxu0
        %v833 = vadd.f32 0.0, %v832
        %v834 = vpop.f32.mrf.mxu0
        %835 = vmatprep.mubr.f32.mxu0 0.0
        %836 = vmatmul.mubr.f32.gmra.mxu0 %v719
        %v837 = vpop.f32.mrf.mxu0
        %v838 = vadd.f32 0.0, %v837
        %v839 = vpop.f32.mrf.mxu0
        %840 = vmatprep.mubr.f32.mxu0 0.0
        %841 = vmatmul.mubr.f32.gmra.mxu0 %v722
        %v842 = vpop.f32.mrf.mxu0
        %v843 = vadd.f32 0.0, %v842
        %v844 = vpop.f32.mrf.mxu0
        %845 = vmatprep.mubr.f32.mxu0 0.0
        %846 = vmatmul.mubr.f32.gmra.mxu0 %v725
        %v847 = vpop.f32.mrf.mxu0
        %v848 = vadd.f32 0.0, %v847
        %v849 = vpop.f32.mrf.mxu0
        %850 = vmatprep.mubr.f32.mxu0 0.0
        %851 = vmatmul.mubr.f32.gmra.mxu0 %v728
        %v852 = vpop.f32.mrf.mxu0
        %v853 = vadd.f32 0.0, %v852
        %v854 = vpop.f32.mrf.mxu0
        %855 = vmatprep.mubr.f32.mxu0 0.0
        %856 = vmatmul.mubr.f32.gmra.mxu0 %v731
        %v857 = vpop.f32.mrf.mxu0
        %v858 = vadd.f32 0.0, %v857
        %v859 = vpop.f32.mrf.mxu0
        %860 = vmatprep.mubr.f32.mxu0 0.0
        %861 = vmatmul.mubr.f32.gmra.mxu0 %v734
        %v862 = vpop.f32.mrf.mxu0
        %v863 = vadd.f32 0.0, %v862
        %v864 = vpop.f32.mrf.mxu0
        %865 = vmatprep.mubr.f32.mxu0 0.0
        %866 = vmatmul.mubr.f32.gmra.mxu0 %v737
        %v867 = vpop.f32.mrf.mxu0
        %v868 = vadd.f32 0.0, %v867
        %v869 = vpop.f32.mrf.mxu0
        %870 = vmatprep.mubr.f32.mxu0 0.0
        %871 = vmatmul.mubr.f32.gmra.mxu0 %v740
        %v872 = vpop.f32.mrf.mxu0
        %v873 = vadd.f32 0.0, %v872
        %v874 = vpop.f32.mrf.mxu0
        %875 = vmatprep.mubr.f32.mxu0 0.0
        %876 = vmatmul.mubr.f32.gmra.mxu0 %v743
        %v877 = vpop.f32.mrf.mxu0
        %v878 = vadd.f32 0.0, %v877
        %v879 = vpop.f32.mrf.mxu0
        %880 = vmatprep.mubr.f32.mxu0 0.0
        %881 = vmatmul.mubr.f32.gmra.mxu0 %v746
        %v882 = vpop.f32.mrf.mxu0
        %v883 = vadd.f32 0.0, %v882
        %v884 = vpop.f32.mrf.mxu0
        %885 = vmatprep.mubr.f32.mxu0 0.0
        %886 = vmatmul.mubr.f32.gmra.mxu0 %v749
        %v887 = vpop.f32.mrf.mxu0
        %v888 = vadd.f32 0.0, %v887
        %v889 = vpop.f32.mrf.mxu0
        %890 = vmatprep.mubr.f32.mxu0 0.0
        %891 = vmatmul.mubr.f32.gmra.mxu0 %v752
        %v892 = vpop.f32.mrf.mxu0
        %v893 = vadd.f32 0.0, %v892
        %v894 = vpop.f32.mrf.mxu0
        %895 = vmatprep.mubr.f32.mxu0 0.0
        %896 = vmatmul.mubr.f32.gmra.mxu0 %v755
        %v897 = vpop.f32.mrf.mxu0
        %v898 = vadd.f32 0.0, %v897
        %v899 = vpop.f32.mrf.mxu0
        %900 = vmatprep.mubr.f32.mxu0 0.0
        %901 = vmatmul.mubr.f32.gmra.mxu0 %v758
        %v902 = vpop.f32.mrf.mxu0
        %v903 = vadd.f32 0.0, %v902
        %v904 = vpop.f32.mrf.mxu0
        %905 = vmatprep.mubr.f32.mxu0 0.0
        %906 = vmatmul.mubr.f32.gmra.mxu0 %v761
        %v907 = vpop.f32.mrf.mxu0
        %v908 = vadd.f32 0.0, %v907
        %v909 = vpop.f32.mrf.mxu0
        %910 = vdwg.mxu0
        %v911 = vadd.f32 %v621, %v833
        %v912 = vadd.f32 %v626, %v838
        %v913 = vadd.f32 %v631, %v843
        %v914 = vadd.f32 %v636, %v848
        %v915 = vadd.f32 %v641, %v853
        %v916 = vadd.f32 %v646, %v858
        %v917 = vadd.f32 %v651, %v863
        %v918 = vadd.f32 %v656, %v868
        %v919 = vadd.f32 %v661, %v873
        %v920 = vadd.f32 %v666, %v878
        %v921 = vadd.f32 %v671, %v883
        %v922 = vadd.f32 %v676, %v888
        %v923 = vadd.f32 %v681, %v893
        %v924 = vadd.f32 %v686, %v898
        %v925 = vadd.f32 %v691, %v903
        %v926 = vadd.f32 %v696, %v908
        %s927 = sadd.s32 %s270, 1
        %s928 = smul.u32 %s927, 128
        %s929 = scalar_lea.vmem %s165, %s928
        %v930 = vld [vmem:[%s929] sm:$0xff]
        %v931 = vld [vmem:[%s929 + $0x8] sm:$0xff]
        %v932 = vld [vmem:[%s929 + $0x10] sm:$0xff]
        %v933 = vld [vmem:[%s929 + $0x18] sm:$0xff]
        %v934 = vld [vmem:[%s929 + $0x20] sm:$0xff]
        %v935 = vld [vmem:[%s929 + $0x28] sm:$0xff]
        %v936 = vld [vmem:[%s929 + $0x30] sm:$0xff]
        %v937 = vld [vmem:[%s929 + $0x38] sm:$0xff]
        %v938 = vld [vmem:[%s929 + $0x40] sm:$0xff]
        %v939 = vld [vmem:[%s929 + $0x48] sm:$0xff]
        %v940 = vld [vmem:[%s929 + $0x50] sm:$0xff]
        %v941 = vld [vmem:[%s929 + $0x58] sm:$0xff]
        %v942 = vld [vmem:[%s929 + $0x60] sm:$0xff]
        %v943 = vld [vmem:[%s929 + $0x68] sm:$0xff]
        %v944 = vld [vmem:[%s929 + $0x70] sm:$0xff]
        %v945 = vld [vmem:[%s929 + $0x78] sm:$0xf]
        %v947 = vsel %vm305, %v930, 0
        %v950 = vsel %vm305, %v931, 0
        %v953 = vsel %vm305, %v932, 0
        %v956 = vsel %vm305, %v933, 0
        %v959 = vsel %vm305, %v934, 0
        %v962 = vsel %vm305, %v935, 0
        %v965 = vsel %vm305, %v936, 0
        %v968 = vsel %vm305, %v937, 0
        %v971 = vsel %vm305, %v938, 0
        %v974 = vsel %vm305, %v939, 0
        %v977 = vsel %vm305, %v940, 0
        %v980 = vsel %vm305, %v941, 0
        %v983 = vsel %vm305, %v942, 0
        %v986 = vsel %vm305, %v943, 0
        %v989 = vsel %vm305, %v944, 0
        %v992 = vsel %vm305, %v945, 0
        %v995 = vsel %vm354, %v177, 0
        %997 = vmatprep.subr.mxu0 0.0
        %998 = vmatpush1.msra.mxu0 0.0
        %999 = vmatprep.subr.mxu0 0.0
        %1000 = vmatpush1.msra.mxu0 0.0
        %1001 = vmatprep.subr.mxu0 0.0
        %1002 = vmatpush1.msra.mxu0 0.0
        %1003 = vmatprep.subr.mxu0 0.0
        %1004 = vmatpush1.msra.mxu0 0.0
        %1005 = vmatprep.subr.mxu0 0.0
        %1006 = vmatpush1.msra.mxu0 0.0
        %1007 = vmatprep.subr.mxu0 0.0
        %1008 = vmatpush1.msra.mxu0 0.0
        %1009 = vmatprep.subr.mxu0 0.0
        %1010 = vmatpush1.msra.mxu0 0.0
        %1011 = vmatprep.subr.mxu0 0.0
        %1012 = vmatpush1.msra.mxu0 0.0
        %1013 = vmatprep.subr.mxu0 0.0
        %1014 = vmatpush1.msra.mxu0 0.0
        %1015 = vmatprep.subr.mxu0 0.0
        %1016 = vmatpush1.msra.mxu0 0.0
        %1017 = vmatprep.subr.mxu0 0.0
        %1018 = vmatpush1.msra.mxu0 0.0
        %1019 = vmatprep.subr.mxu0 0.0
        %1020 = vmatpush1.msra.mxu0 0.0
        %1021 = vmatprep.subr.mxu0 0.0
        %1022 = vmatpush1.msra.mxu0 0.0
        %1023 = vmatprep.subr.mxu0 0.0
        %1024 = vmatpush1.msra.mxu0 0.0
        %1025 = vmatprep.subr.mxu0 0.0
        %1026 = vmatpush1.msra.mxu0 0.0
        %1027 = vmatprep.subr.mxu0 0.0
        %1028 = vmatpush1.msra.mxu0 %v995
        %1029 = vmatprep.subr.mxu0 0.0
        %1030 = vmatpush2.msra.mxu0 0.0
        %1031 = vmatprep.subr.mxu0 0.0
        %1032 = vmatpush2.msra.mxu0 0.0
        %1033 = vmatprep.subr.mxu0 0.0
        %1034 = vmatpush2.msra.mxu0 0.0
        %1035 = vmatprep.subr.mxu0 0.0
        %1036 = vmatpush2.msra.mxu0 0.0
        %1037 = vmatprep.subr.mxu0 0.0
        %1038 = vmatpush2.msra.mxu0 0.0
        %1039 = vmatprep.subr.mxu0 0.0
        %1040 = vmatpush2.msra.mxu0 0.0
        %1041 = vmatprep.subr.mxu0 0.0
        %1042 = vmatpush2.msra.mxu0 0.0
        %1043 = vmatprep.subr.mxu0 0.0
        %1044 = vmatpush2.msra.mxu0 0.0
        %1045 = vmatprep.subr.mxu0 0.0
        %1046 = vmatpush2.msra.mxu0 0.0
        %1047 = vmatprep.subr.mxu0 0.0
        %1048 = vmatpush2.msra.mxu0 0.0
        %1049 = vmatprep.subr.mxu0 0.0
        %1050 = vmatpush2.msra.mxu0 0.0
        %1051 = vmatprep.subr.mxu0 0.0
        %1052 = vmatpush2.msra.mxu0 0.0
        %1053 = vmatprep.subr.mxu0 0.0
        %1054 = vmatpush2.msra.mxu0 0.0
        %1055 = vmatprep.subr.mxu0 0.0
        %1056 = vmatpush2.msra.mxu0 0.0
        %1057 = vmatprep.subr.mxu0 0.0
        %1058 = vmatpush2.msra.mxu0 0.0
        %1059 = vmatprep.subr.mxu0 0.0
        %1060 = vmatpush2.msra.mxu0 0.0
        %1061 = vmatprep.mubr.f32.mxu0 0.0
        %1062 = vmatmul.mubr.f32.gmra.mxu0 %v947
        %v1063 = vpop.f32.mrf.mxu0
        %v1064 = vadd.f32 0.0, %v1063
        %v1065 = vpop.f32.mrf.mxu0
        %1066 = vmatprep.mubr.f32.mxu0 0.0
        %1067 = vmatmul.mubr.f32.gmra.mxu0 %v950
        %v1068 = vpop.f32.mrf.mxu0
        %v1069 = vadd.f32 0.0, %v1068
        %v1070 = vpop.f32.mrf.mxu0
        %1071 = vmatprep.mubr.f32.mxu0 0.0
        %1072 = vmatmul.mubr.f32.gmra.mxu0 %v953
        %v1073 = vpop.f32.mrf.mxu0
        %v1074 = vadd.f32 0.0, %v1073
        %v1075 = vpop.f32.mrf.mxu0
        %1076 = vmatprep.mubr.f32.mxu0 0.0
        %1077 = vmatmul.mubr.f32.gmra.mxu0 %v956
        %v1078 = vpop.f32.mrf.mxu0
        %v1079 = vadd.f32 0.0, %v1078
        %v1080 = vpop.f32.mrf.mxu0
        %1081 = vmatprep.mubr.f32.mxu0 0.0
        %1082 = vmatmul.mubr.f32.gmra.mxu0 %v959
        %v1083 = vpop.f32.mrf.mxu0
        %v1084 = vadd.f32 0.0, %v1083
        %v1085 = vpop.f32.mrf.mxu0
        %1086 = vmatprep.mubr.f32.mxu0 0.0
        %1087 = vmatmul.mubr.f32.gmra.mxu0 %v962
        %v1088 = vpop.f32.mrf.mxu0
        %v1089 = vadd.f32 0.0, %v1088
        %v1090 = vpop.f32.mrf.mxu0
        %1091 = vmatprep.mubr.f32.mxu0 0.0
        %1092 = vmatmul.mubr.f32.gmra.mxu0 %v965
        %v1093 = vpop.f32.mrf.mxu0
        %v1094 = vadd.f32 0.0, %v1093
        %v1095 = vpop.f32.mrf.mxu0
        %1096 = vmatprep.mubr.f32.mxu0 0.0
        %1097 = vmatmul.mubr.f32.gmra.mxu0 %v968
        %v1098 = vpop.f32.mrf.mxu0
        %v1099 = vadd.f32 0.0, %v1098
        %v1100 = vpop.f32.mrf.mxu0
        %1101 = vmatprep.mubr.f32.mxu0 0.0
        %1102 = vmatmul.mubr.f32.gmra.mxu0 %v971
        %v1103 = vpop.f32.mrf.mxu0
        %v1104 = vadd.f32 0.0, %v1103
        %v1105 = vpop.f32.mrf.mxu0
        %1106 = vmatprep.mubr.f32.mxu0 0.0
        %1107 = vmatmul.mubr.f32.gmra.mxu0 %v974
        %v1108 = vpop.f32.mrf.mxu0
        %v1109 = vadd.f32 0.0, %v1108
        %v1110 = vpop.f32.mrf.mxu0
        %1111 = vmatprep.mubr.f32.mxu0 0.0
        %1112 = vmatmul.mubr.f32.gmra.mxu0 %v977
        %v1113 = vpop.f32.mrf.mxu0
        %v1114 = vadd.f32 0.0, %v1113
        %v1115 = vpop.f32.mrf.mxu0
        %1116 = vmatprep.mubr.f32.mxu0 0.0
        %1117 = vmatmul.mubr.f32.gmra.mxu0 %v980
        %v1118 = vpop.f32.mrf.mxu0
        %v1119 = vadd.f32 0.0, %v1118
        %v1120 = vpop.f32.mrf.mxu0
        %1121 = vmatprep.mubr.f32.mxu0 0.0
        %1122 = vmatmul.mubr.f32.gmra.mxu0 %v983
        %v1123 = vpop.f32.mrf.mxu0
        %v1124 = vadd.f32 0.0, %v1123
        %v1125 = vpop.f32.mrf.mxu0
        %1126 = vmatprep.mubr.f32.mxu0 0.0
        %1127 = vmatmul.mubr.f32.gmra.mxu0 %v986
        %v1128 = vpop.f32.mrf.mxu0
        %v1129 = vadd.f32 0.0, %v1128
        %v1130 = vpop.f32.mrf.mxu0
        %1131 = vmatprep.mubr.f32.mxu0 0.0
        %1132 = vmatmul.mubr.f32.gmra.mxu0 %v989
        %v1133 = vpop.f32.mrf.mxu0
        %v1134 = vadd.f32 0.0, %v1133
        %v1135 = vpop.f32.mrf.mxu0
        %1136 = vmatprep.mubr.f32.mxu0 0.0
        %1137 = vmatmul.mubr.f32.gmra.mxu0 %v992
        %v1138 = vpop.f32.mrf.mxu0
        %v1139 = vadd.f32 0.0, %v1138
        %v1140 = vpop.f32.mrf.mxu0
        %1141 = vdwg.mxu0
        %v1142 = vadd.f32 %v911, %v1064
        %v1143 = vadd.f32 %v912, %v1069
        %v1144 = vadd.f32 %v913, %v1074
        %v1145 = vadd.f32 %v914, %v1079
        %v1146 = vadd.f32 %v915, %v1084
        %v1147 = vadd.f32 %v916, %v1089
        %v1148 = vadd.f32 %v917, %v1094
        %v1149 = vadd.f32 %v918, %v1099
        %v1150 = vadd.f32 %v919, %v1104
        %v1151 = vadd.f32 %v920, %v1109
        %v1152 = vadd.f32 %v921, %v1114
        %v1153 = vadd.f32 %v922, %v1119
        %v1154 = vadd.f32 %v923, %v1124
        %v1155 = vadd.f32 %v924, %v1129
        %v1156 = vadd.f32 %v925, %v1134
        %v1157 = vadd.f32 %v926, %v1139
        %v1158 = vld [vmem:[%s929 + $0x1] sm:$0xff]
        %v1159 = vld [vmem:[%s929 + $0x9] sm:$0xff]
        %v1160 = vld [vmem:[%s929 + $0x11] sm:$0xff]
        %v1161 = vld [vmem:[%s929 + $0x19] sm:$0xff]
        %v1162 = vld [vmem:[%s929 + $0x21] sm:$0xff]
        %v1163 = vld [vmem:[%s929 + $0x29] sm:$0xff]
        %v1164 = vld [vmem:[%s929 + $0x31] sm:$0xff]
        %v1165 = vld [vmem:[%s929 + $0x39] sm:$0xff]
        %v1166 = vld [vmem:[%s929 + $0x41] sm:$0xff]
        %v1167 = vld [vmem:[%s929 + $0x49] sm:$0xff]
        %v1168 = vld [vmem:[%s929 + $0x51] sm:$0xff]
        %v1169 = vld [vmem:[%s929 + $0x59] sm:$0xff]
        %v1170 = vld [vmem:[%s929 + $0x61] sm:$0xff]
        %v1171 = vld [vmem:[%s929 + $0x69] sm:$0xff]
        %v1172 = vld [vmem:[%s929 + $0x71] sm:$0xff]
        %v1173 = vld [vmem:[%s929 + $0x79] sm:$0xf]
        %v1175 = vsel %vm305, %v1158, 0
        %v1178 = vsel %vm305, %v1159, 0
        %v1181 = vsel %vm305, %v1160, 0
        %v1184 = vsel %vm305, %v1161, 0
        %v1187 = vsel %vm305, %v1162, 0
        %v1190 = vsel %vm305, %v1163, 0
        %v1193 = vsel %vm305, %v1164, 0
        %v1196 = vsel %vm305, %v1165, 0
        %v1199 = vsel %vm305, %v1166, 0
        %v1202 = vsel %vm305, %v1167, 0
        %v1205 = vsel %vm305, %v1168, 0
        %v1208 = vsel %vm305, %v1169, 0
        %v1211 = vsel %vm305, %v1170, 0
        %v1214 = vsel %vm305, %v1171, 0
        %v1217 = vsel %vm305, %v1172, 0
        %v1220 = vsel %vm305, %v1173, 0
        %v1223 = vsel %vm354, %v179, 0
        %1225 = vmatprep.subr.mxu0 0.0
        %1226 = vmatpush1.msra.mxu0 0.0
        %1227 = vmatprep.subr.mxu0 0.0
        %1228 = vmatpush1.msra.mxu0 0.0
        %1229 = vmatprep.subr.mxu0 0.0
        %1230 = vmatpush1.msra.mxu0 0.0
        %1231 = vmatprep.subr.mxu0 0.0
        %1232 = vmatpush1.msra.mxu0 0.0
        %1233 = vmatprep.subr.mxu0 0.0
        %1234 = vmatpush1.msra.mxu0 0.0
        %1235 = vmatprep.subr.mxu0 0.0
        %1236 = vmatpush1.msra.mxu0 0.0
        %1237 = vmatprep.subr.mxu0 0.0
        %1238 = vmatpush1.msra.mxu0 0.0
        %1239 = vmatprep.subr.mxu0 0.0
        %1240 = vmatpush1.msra.mxu0 0.0
        %1241 = vmatprep.subr.mxu0 0.0
        %1242 = vmatpush1.msra.mxu0 0.0
        %1243 = vmatprep.subr.mxu0 0.0
        %1244 = vmatpush1.msra.mxu0 0.0
        %1245 = vmatprep.subr.mxu0 0.0
        %1246 = vmatpush1.msra.mxu0 0.0
        %1247 = vmatprep.subr.mxu0 0.0
        %1248 = vmatpush1.msra.mxu0 0.0
        %1249 = vmatprep.subr.mxu0 0.0
        %1250 = vmatpush1.msra.mxu0 0.0
        %1251 = vmatprep.subr.mxu0 0.0
        %1252 = vmatpush1.msra.mxu0 0.0
        %1253 = vmatprep.subr.mxu0 0.0
        %1254 = vmatpush1.msra.mxu0 0.0
        %1255 = vmatprep.subr.mxu0 0.0
        %1256 = vmatpush1.msra.mxu0 %v1223
        %1257 = vmatprep.subr.mxu0 0.0
        %1258 = vmatpush2.msra.mxu0 0.0
        %1259 = vmatprep.subr.mxu0 0.0
        %1260 = vmatpush2.msra.mxu0 0.0
        %1261 = vmatprep.subr.mxu0 0.0
        %1262 = vmatpush2.msra.mxu0 0.0
        %1263 = vmatprep.subr.mxu0 0.0
        %1264 = vmatpush2.msra.mxu0 0.0
        %1265 = vmatprep.subr.mxu0 0.0
        %1266 = vmatpush2.msra.mxu0 0.0
        %1267 = vmatprep.subr.mxu0 0.0
        %1268 = vmatpush2.msra.mxu0 0.0
        %1269 = vmatprep.subr.mxu0 0.0
        %1270 = vmatpush2.msra.mxu0 0.0
        %1271 = vmatprep.subr.mxu0 0.0
        %1272 = vmatpush2.msra.mxu0 0.0
        %1273 = vmatprep.subr.mxu0 0.0
        %1274 = vmatpush2.msra.mxu0 0.0
        %1275 = vmatprep.subr.mxu0 0.0
        %1276 = vmatpush2.msra.mxu0 0.0
        %1277 = vmatprep.subr.mxu0 0.0
        %1278 = vmatpush2.msra.mxu0 0.0
        %1279 = vmatprep.subr.mxu0 0.0
        %1280 = vmatpush2.msra.mxu0 0.0
        %1281 = vmatprep.subr.mxu0 0.0
        %1282 = vmatpush2.msra.mxu0 0.0
        %1283 = vmatprep.subr.mxu0 0.0
        %1284 = vmatpush2.msra.mxu0 0.0
        %1285 = vmatprep.subr.mxu0 0.0
        %1286 = vmatpush2.msra.mxu0 0.0
        %1287 = vmatprep.subr.mxu0 0.0
        %1288 = vmatpush2.msra.mxu0 0.0
        %1289 = vmatprep.mubr.f32.mxu0 0.0
        %1290 = vmatmul.mubr.f32.gmra.mxu0 %v1175
        %v1291 = vpop.f32.mrf.mxu0
        %v1292 = vadd.f32 0.0, %v1291
        %v1293 = vpop.f32.mrf.mxu0
        %1294 = vmatprep.mubr.f32.mxu0 0.0
        %1295 = vmatmul.mubr.f32.gmra.mxu0 %v1178
        %v1296 = vpop.f32.mrf.mxu0
        %v1297 = vadd.f32 0.0, %v1296
        %v1298 = vpop.f32.mrf.mxu0
        %1299 = vmatprep.mubr.f32.mxu0 0.0
        %1300 = vmatmul.mubr.f32.gmra.mxu0 %v1181
        %v1301 = vpop.f32.mrf.mxu0
        %v1302 = vadd.f32 0.0, %v1301
        %v1303 = vpop.f32.mrf.mxu0
        %1304 = vmatprep.mubr.f32.mxu0 0.0
        %1305 = vmatmul.mubr.f32.gmra.mxu0 %v1184
        %v1306 = vpop.f32.mrf.mxu0
        %v1307 = vadd.f32 0.0, %v1306
        %v1308 = vpop.f32.mrf.mxu0
        %1309 = vmatprep.mubr.f32.mxu0 0.0
        %1310 = vmatmul.mubr.f32.gmra.mxu0 %v1187
        %v1311 = vpop.f32.mrf.mxu0
        %v1312 = vadd.f32 0.0, %v1311
        %v1313 = vpop.f32.mrf.mxu0
        %1314 = vmatprep.mubr.f32.mxu0 0.0
        %1315 = vmatmul.mubr.f32.gmra.mxu0 %v1190
        %v1316 = vpop.f32.mrf.mxu0
        %v1317 = vadd.f32 0.0, %v1316
        %v1318 = vpop.f32.mrf.mxu0
        %1319 = vmatprep.mubr.f32.mxu0 0.0
        %1320 = vmatmul.mubr.f32.gmra.mxu0 %v1193
        %v1321 = vpop.f32.mrf.mxu0
        %v1322 = vadd.f32 0.0, %v1321
        %v1323 = vpop.f32.mrf.mxu0
        %1324 = vmatprep.mubr.f32.mxu0 0.0
        %1325 = vmatmul.mubr.f32.gmra.mxu0 %v1196
        %v1326 = vpop.f32.mrf.mxu0
        %v1327 = vadd.f32 0.0, %v1326
        %v1328 = vpop.f32.mrf.mxu0
        %1329 = vmatprep.mubr.f32.mxu0 0.0
        %1330 = vmatmul.mubr.f32.gmra.mxu0 %v1199
        %v1331 = vpop.f32.mrf.mxu0
        %v1332 = vadd.f32 0.0, %v1331
        %v1333 = vpop.f32.mrf.mxu0
        %1334 = vmatprep.mubr.f32.mxu0 0.0
        %1335 = vmatmul.mubr.f32.gmra.mxu0 %v1202
        %v1336 = vpop.f32.mrf.mxu0
        %v1337 = vadd.f32 0.0, %v1336
        %v1338 = vpop.f32.mrf.mxu0
        %1339 = vmatprep.mubr.f32.mxu0 0.0
        %1340 = vmatmul.mubr.f32.gmra.mxu0 %v1205
        %v1341 = vpop.f32.mrf.mxu0
        %v1342 = vadd.f32 0.0, %v1341
        %v1343 = vpop.f32.mrf.mxu0
        %1344 = vmatprep.mubr.f32.mxu0 0.0
        %1345 = vmatmul.mubr.f32.gmra.mxu0 %v1208
        %v1346 = vpop.f32.mrf.mxu0
        %v1347 = vadd.f32 0.0, %v1346
        %v1348 = vpop.f32.mrf.mxu0
        %1349 = vmatprep.mubr.f32.mxu0 0.0
        %1350 = vmatmul.mubr.f32.gmra.mxu0 %v1211
        %v1351 = vpop.f32.mrf.mxu0
        %v1352 = vadd.f32 0.0, %v1351
        %v1353 = vpop.f32.mrf.mxu0
        %1354 = vmatprep.mubr.f32.mxu0 0.0
        %1355 = vmatmul.mubr.f32.gmra.mxu0 %v1214
        %v1356 = vpop.f32.mrf.mxu0
        %v1357 = vadd.f32 0.0, %v1356
        %v1358 = vpop.f32.mrf.mxu0
        %1359 = vmatprep.mubr.f32.mxu0 0.0
        %1360 = vmatmul.mubr.f32.gmra.mxu0 %v1217
        %v1361 = vpop.f32.mrf.mxu0
        %v1362 = vadd.f32 0.0, %v1361
        %v1363 = vpop.f32.mrf.mxu0
        %1364 = vmatprep.mubr.f32.mxu0 0.0
        %1365 = vmatmul.mubr.f32.gmra.mxu0 %v1220
        %v1366 = vpop.f32.mrf.mxu0
        %v1367 = vadd.f32 0.0, %v1366
        %v1368 = vpop.f32.mrf.mxu0
        %1369 = vdwg.mxu0
        %v1370 = vadd.f32 %v1142, %v1292
        %v1371 = vadd.f32 %v1143, %v1297
        %v1372 = vadd.f32 %v1144, %v1302
        %v1373 = vadd.f32 %v1145, %v1307
        %v1374 = vadd.f32 %v1146, %v1312
        %v1375 = vadd.f32 %v1147, %v1317
        %v1376 = vadd.f32 %v1148, %v1322
        %v1377 = vadd.f32 %v1149, %v1327
        %v1378 = vadd.f32 %v1150, %v1332
        %v1379 = vadd.f32 %v1151, %v1337
        %v1380 = vadd.f32 %v1152, %v1342
        %v1381 = vadd.f32 %v1153, %v1347
        %v1382 = vadd.f32 %v1154, %v1352
        %v1383 = vadd.f32 %v1155, %v1357
        %v1384 = vadd.f32 %v1156, %v1362
        %v1385 = vadd.f32 %v1157, %v1367
        %1386 = vmatprep.subr.mxu0 0.0
        %1387 = vmatpush1.msra.mxu0 0.0
        %1388 = vmatprep.subr.mxu0 0.0
        %1389 = vmatpush1.msra.mxu0 0.0
        %1390 = vmatprep.subr.mxu0 0.0
        %1391 = vmatpush1.msra.mxu0 0.0
        %1392 = vmatprep.subr.mxu0 0.0
        %1393 = vmatpush1.msra.mxu0 0.0
        %1394 = vmatprep.subr.mxu0 0.0
        %1395 = vmatpush1.msra.mxu0 0.0
        %1396 = vmatprep.subr.mxu0 0.0
        %1397 = vmatpush1.msra.mxu0 0.0
        %1398 = vmatprep.subr.mxu0 0.0
        %1399 = vmatpush1.msra.mxu0 0.0
        %1400 = vmatprep.subr.mxu0 0.0
        %1401 = vmatpush1.msra.mxu0 0.0
        %1402 = vmatprep.subr.mxu0 0.0
        %1403 = vmatpush1.msra.mxu0 0.0
        %1404 = vmatprep.subr.mxu0 0.0
        %1405 = vmatpush1.msra.mxu0 0.0
        %1406 = vmatprep.subr.mxu0 0.0
        %1407 = vmatpush1.msra.mxu0 0.0
        %1408 = vmatprep.subr.mxu0 0.0
        %1409 = vmatpush1.msra.mxu0 0.0
        %1410 = vmatprep.subr.mxu0 0.0
        %1411 = vmatpush1.msra.mxu0 0.0
        %1412 = vmatprep.subr.mxu0 0.0
        %1413 = vmatpush1.msra.mxu0 0.0
        %1414 = vmatprep.subr.mxu0 0.0
        %1415 = vmatpush1.msra.mxu0 0.0
        %1416 = vmatprep.subr.mxu0 0.0
        %1417 = vmatpush1.msra.mxu0 %v356
        %1418 = vmatprep.subr.mxu0 0.0
        %1419 = vmatpush2.msra.mxu0 0.0
        %1420 = vmatprep.subr.mxu0 0.0
        %1421 = vmatpush2.msra.mxu0 0.0
        %1422 = vmatprep.subr.mxu0 0.0
        %1423 = vmatpush2.msra.mxu0 0.0
        %1424 = vmatprep.subr.mxu0 0.0
        %1425 = vmatpush2.msra.mxu0 0.0
        %1426 = vmatprep.subr.mxu0 0.0
        %1427 = vmatpush2.msra.mxu0 0.0
        %1428 = vmatprep.subr.mxu0 0.0
        %1429 = vmatpush2.msra.mxu0 0.0
        %1430 = vmatprep.subr.mxu0 0.0
        %1431 = vmatpush2.msra.mxu0 0.0
        %1432 = vmatprep.subr.mxu0 0.0
        %1433 = vmatpush2.msra.mxu0 0.0
        %1434 = vmatprep.subr.mxu0 0.0
        %1435 = vmatpush2.msra.mxu0 0.0
        %1436 = vmatprep.subr.mxu0 0.0
        %1437 = vmatpush2.msra.mxu0 0.0
        %1438 = vmatprep.subr.mxu0 0.0
        %1439 = vmatpush2.msra.mxu0 0.0
        %1440 = vmatprep.subr.mxu0 0.0
        %1441 = vmatpush2.msra.mxu0 0.0
        %1442 = vmatprep.subr.mxu0 0.0
        %1443 = vmatpush2.msra.mxu0 0.0
        %1444 = vmatprep.subr.mxu0 0.0
        %1445 = vmatpush2.msra.mxu0 0.0
        %1446 = vmatprep.subr.mxu0 0.0
        %1447 = vmatpush2.msra.mxu0 0.0
        %1448 = vmatprep.subr.mxu0 0.0
        %1449 = vmatpush2.msra.mxu0 0.0
        %1450 = vmatprep.mubr.f32.mxu0 0.0
        %1451 = vmatmul.mubr.f32.gmra.mxu0 %v1175
        %v1452 = vpop.f32.mrf.mxu0
        %v1453 = vadd.f32 0.0, %v1452
        %v1454 = vpop.f32.mrf.mxu0
        %1455 = vmatprep.mubr.f32.mxu0 0.0
        %1456 = vmatmul.mubr.f32.gmra.mxu0 %v1178
        %v1457 = vpop.f32.mrf.mxu0
        %v1458 = vadd.f32 0.0, %v1457
        %v1459 = vpop.f32.mrf.mxu0
        %1460 = vmatprep.mubr.f32.mxu0 0.0
        %1461 = vmatmul.mubr.f32.gmra.mxu0 %v1181
        %v1462 = vpop.f32.mrf.mxu0
        %v1463 = vadd.f32 0.0, %v1462
        %v1464 = vpop.f32.mrf.mxu0
        %1465 = vmatprep.mubr.f32.mxu0 0.0
        %1466 = vmatmul.mubr.f32.gmra.mxu0 %v1184
        %v1467 = vpop.f32.mrf.mxu0
        %v1468 = vadd.f32 0.0, %v1467
        %v1469 = vpop.f32.mrf.mxu0
        %1470 = vmatprep.mubr.f32.mxu0 0.0
        %1471 = vmatmul.mubr.f32.gmra.mxu0 %v1187
        %v1472 = vpop.f32.mrf.mxu0
        %v1473 = vadd.f32 0.0, %v1472
        %v1474 = vpop.f32.mrf.mxu0
        %1475 = vmatprep.mubr.f32.mxu0 0.0
        %1476 = vmatmul.mubr.f32.gmra.mxu0 %v1190
        %v1477 = vpop.f32.mrf.mxu0
        %v1478 = vadd.f32 0.0, %v1477
        %v1479 = vpop.f32.mrf.mxu0
        %1480 = vmatprep.mubr.f32.mxu0 0.0
        %1481 = vmatmul.mubr.f32.gmra.mxu0 %v1193
        %v1482 = vpop.f32.mrf.mxu0
        %v1483 = vadd.f32 0.0, %v1482
        %v1484 = vpop.f32.mrf.mxu0
        %1485 = vmatprep.mubr.f32.mxu0 0.0
        %1486 = vmatmul.mubr.f32.gmra.mxu0 %v1196
        %v1487 = vpop.f32.mrf.mxu0
        %v1488 = vadd.f32 0.0, %v1487
        %v1489 = vpop.f32.mrf.mxu0
        %1490 = vmatprep.mubr.f32.mxu0 0.0
        %1491 = vmatmul.mubr.f32.gmra.mxu0 %v1199
        %v1492 = vpop.f32.mrf.mxu0
        %v1493 = vadd.f32 0.0, %v1492
        %v1494 = vpop.f32.mrf.mxu0
        %1495 = vmatprep.mubr.f32.mxu0 0.0
        %1496 = vmatmul.mubr.f32.gmra.mxu0 %v1202
        %v1497 = vpop.f32.mrf.mxu0
        %v1498 = vadd.f32 0.0, %v1497
        %v1499 = vpop.f32.mrf.mxu0
        %1500 = vmatprep.mubr.f32.mxu0 0.0
        %1501 = vmatmul.mubr.f32.gmra.mxu0 %v1205
        %v1502 = vpop.f32.mrf.mxu0
        %v1503 = vadd.f32 0.0, %v1502
        %v1504 = vpop.f32.mrf.mxu0
        %1505 = vmatprep.mubr.f32.mxu0 0.0
        %1506 = vmatmul.mubr.f32.gmra.mxu0 %v1208
        %v1507 = vpop.f32.mrf.mxu0
        %v1508 = vadd.f32 0.0, %v1507
        %v1509 = vpop.f32.mrf.mxu0
        %1510 = vmatprep.mubr.f32.mxu0 0.0
        %1511 = vmatmul.mubr.f32.gmra.mxu0 %v1211
        %v1512 = vpop.f32.mrf.mxu0
        %v1513 = vadd.f32 0.0, %v1512
        %v1514 = vpop.f32.mrf.mxu0
        %1515 = vmatprep.mubr.f32.mxu0 0.0
        %1516 = vmatmul.mubr.f32.gmra.mxu0 %v1214
        %v1517 = vpop.f32.mrf.mxu0
        %v1518 = vadd.f32 0.0, %v1517
        %v1519 = vpop.f32.mrf.mxu0
        %1520 = vmatprep.mubr.f32.mxu0 0.0
        %1521 = vmatmul.mubr.f32.gmra.mxu0 %v1217
        %v1522 = vpop.f32.mrf.mxu0
        %v1523 = vadd.f32 0.0, %v1522
        %v1524 = vpop.f32.mrf.mxu0
        %1525 = vmatprep.mubr.f32.mxu0 0.0
        %1526 = vmatmul.mubr.f32.gmra.mxu0 %v1220
        %v1527 = vpop.f32.mrf.mxu0
        %v1528 = vadd.f32 0.0, %v1527
        %v1529 = vpop.f32.mrf.mxu0
        %1530 = vdwg.mxu0
        %1531 = vmatprep.subr.mxu0 0.0
        %1532 = vmatpush1.msra.mxu0 0.0
        %1533 = vmatprep.subr.mxu0 0.0
        %1534 = vmatpush1.msra.mxu0 0.0
        %1535 = vmatprep.subr.mxu0 0.0
        %1536 = vmatpush1.msra.mxu0 0.0
        %1537 = vmatprep.subr.mxu0 0.0
        %1538 = vmatpush1.msra.mxu0 0.0
        %1539 = vmatprep.subr.mxu0 0.0
        %1540 = vmatpush1.msra.mxu0 0.0
        %1541 = vmatprep.subr.mxu0 0.0
        %1542 = vmatpush1.msra.mxu0 0.0
        %1543 = vmatprep.subr.mxu0 0.0
        %1544 = vmatpush1.msra.mxu0 0.0
        %1545 = vmatprep.subr.mxu0 0.0
        %1546 = vmatpush1.msra.mxu0 0.0
        %1547 = vmatprep.subr.mxu0 0.0
        %1548 = vmatpush1.msra.mxu0 0.0
        %1549 = vmatprep.subr.mxu0 0.0
        %1550 = vmatpush1.msra.mxu0 0.0
        %1551 = vmatprep.subr.mxu0 0.0
        %1552 = vmatpush1.msra.mxu0 0.0
        %1553 = vmatprep.subr.mxu0 0.0
        %1554 = vmatpush1.msra.mxu0 0.0
        %1555 = vmatprep.subr.mxu0 0.0
        %1556 = vmatpush1.msra.mxu0 0.0
        %1557 = vmatprep.subr.mxu0 0.0
        %1558 = vmatpush1.msra.mxu0 0.0
        %1559 = vmatprep.subr.mxu0 0.0
        %1560 = vmatpush1.msra.mxu0 0.0
        %1561 = vmatprep.subr.mxu0 0.0
        %1562 = vmatpush1.msra.mxu0 %v552
        %1563 = vmatprep.subr.mxu0 0.0
        %1564 = vmatpush2.msra.mxu0 0.0
        %1565 = vmatprep.subr.mxu0 0.0
        %1566 = vmatpush2.msra.mxu0 0.0
        %1567 = vmatprep.subr.mxu0 0.0
        %1568 = vmatpush2.msra.mxu0 0.0
        %1569 = vmatprep.subr.mxu0 0.0
        %1570 = vmatpush2.msra.mxu0 0.0
        %1571 = vmatprep.subr.mxu0 0.0
        %1572 = vmatpush2.msra.mxu0 0.0
        %1573 = vmatprep.subr.mxu0 0.0
        %1574 = vmatpush2.msra.mxu0 0.0
        %1575 = vmatprep.subr.mxu0 0.0
        %1576 = vmatpush2.msra.mxu0 0.0
        %1577 = vmatprep.subr.mxu0 0.0
        %1578 = vmatpush2.msra.mxu0 0.0
        %1579 = vmatprep.subr.mxu0 0.0
        %1580 = vmatpush2.msra.mxu0 0.0
        %1581 = vmatprep.subr.mxu0 0.0
        %1582 = vmatpush2.msra.mxu0 0.0
        %1583 = vmatprep.subr.mxu0 0.0
        %1584 = vmatpush2.msra.mxu0 0.0
        %1585 = vmatprep.subr.mxu0 0.0
        %1586 = vmatpush2.msra.mxu0 0.0
        %1587 = vmatprep.subr.mxu0 0.0
        %1588 = vmatpush2.msra.mxu0 0.0
        %1589 = vmatprep.subr.mxu0 0.0
        %1590 = vmatpush2.msra.mxu0 0.0
        %1591 = vmatprep.subr.mxu0 0.0
        %1592 = vmatpush2.msra.mxu0 0.0
        %1593 = vmatprep.subr.mxu0 0.0
        %1594 = vmatpush2.msra.mxu0 0.0
        %1595 = vmatprep.mubr.f32.mxu0 0.0
        %1596 = vmatmul.mubr.f32.gmra.mxu0 %v947
        %v1597 = vpop.f32.mrf.mxu0
        %v1598 = vadd.f32 %v1453, %v1597
        %v1599 = vpop.f32.mrf.mxu0
        %1600 = vmatprep.mubr.f32.mxu0 0.0
        %1601 = vmatmul.mubr.f32.gmra.mxu0 %v950
        %v1602 = vpop.f32.mrf.mxu0
        %v1603 = vadd.f32 %v1458, %v1602
        %v1604 = vpop.f32.mrf.mxu0
        %1605 = vmatprep.mubr.f32.mxu0 0.0
        %1606 = vmatmul.mubr.f32.gmra.mxu0 %v953
        %v1607 = vpop.f32.mrf.mxu0
        %v1608 = vadd.f32 %v1463, %v1607
        %v1609 = vpop.f32.mrf.mxu0
        %1610 = vmatprep.mubr.f32.mxu0 0.0
        %1611 = vmatmul.mubr.f32.gmra.mxu0 %v956
        %v1612 = vpop.f32.mrf.mxu0
        %v1613 = vadd.f32 %v1468, %v1612
        %v1614 = vpop.f32.mrf.mxu0
        %1615 = vmatprep.mubr.f32.mxu0 0.0
        %1616 = vmatmul.mubr.f32.gmra.mxu0 %v959
        %v1617 = vpop.f32.mrf.mxu0
        %v1618 = vadd.f32 %v1473, %v1617
        %v1619 = vpop.f32.mrf.mxu0
        %1620 = vmatprep.mubr.f32.mxu0 0.0
        %1621 = vmatmul.mubr.f32.gmra.mxu0 %v962
        %v1622 = vpop.f32.mrf.mxu0
        %v1623 = vadd.f32 %v1478, %v1622
        %v1624 = vpop.f32.mrf.mxu0
        %1625 = vmatprep.mubr.f32.mxu0 0.0
        %1626 = vmatmul.mubr.f32.gmra.mxu0 %v965
        %v1627 = vpop.f32.mrf.mxu0
        %v1628 = vadd.f32 %v1483, %v1627
        %v1629 = vpop.f32.mrf.mxu0
        %1630 = vmatprep.mubr.f32.mxu0 0.0
        %1631 = vmatmul.mubr.f32.gmra.mxu0 %v968
        %v1632 = vpop.f32.mrf.mxu0
        %v1633 = vadd.f32 %v1488, %v1632
        %v1634 = vpop.f32.mrf.mxu0
        %1635 = vmatprep.mubr.f32.mxu0 0.0
        %1636 = vmatmul.mubr.f32.gmra.mxu0 %v971
        %v1637 = vpop.f32.mrf.mxu0
        %v1638 = vadd.f32 %v1493, %v1637
        %v1639 = vpop.f32.mrf.mxu0
        %1640 = vmatprep.mubr.f32.mxu0 0.0
        %1641 = vmatmul.mubr.f32.gmra.mxu0 %v974
        %v1642 = vpop.f32.mrf.mxu0
        %v1643 = vadd.f32 %v1498, %v1642
        %v1644 = vpop.f32.mrf.mxu0
        %1645 = vmatprep.mubr.f32.mxu0 0.0
        %1646 = vmatmul.mubr.f32.gmra.mxu0 %v977
        %v1647 = vpop.f32.mrf.mxu0
        %v1648 = vadd.f32 %v1503, %v1647
        %v1649 = vpop.f32.mrf.mxu0
        %1650 = vmatprep.mubr.f32.mxu0 0.0
        %1651 = vmatmul.mubr.f32.gmra.mxu0 %v980
        %v1652 = vpop.f32.mrf.mxu0
        %v1653 = vadd.f32 %v1508, %v1652
        %v1654 = vpop.f32.mrf.mxu0
        %1655 = vmatprep.mubr.f32.mxu0 0.0
        %1656 = vmatmul.mubr.f32.gmra.mxu0 %v983
        %v1657 = vpop.f32.mrf.mxu0
        %v1658 = vadd.f32 %v1513, %v1657
        %v1659 = vpop.f32.mrf.mxu0
        %1660 = vmatprep.mubr.f32.mxu0 0.0
        %1661 = vmatmul.mubr.f32.gmra.mxu0 %v986
        %v1662 = vpop.f32.mrf.mxu0
        %v1663 = vadd.f32 %v1518, %v1662
        %v1664 = vpop.f32.mrf.mxu0
        %1665 = vmatprep.mubr.f32.mxu0 0.0
        %1666 = vmatmul.mubr.f32.gmra.mxu0 %v989
        %v1667 = vpop.f32.mrf.mxu0
        %v1668 = vadd.f32 %v1523, %v1667
        %v1669 = vpop.f32.mrf.mxu0
        %1670 = vmatprep.mubr.f32.mxu0 0.0
        %1671 = vmatmul.mubr.f32.gmra.mxu0 %v992
        %v1672 = vpop.f32.mrf.mxu0
        %v1673 = vadd.f32 %v1528, %v1672
        %v1674 = vpop.f32.mrf.mxu0
        %1675 = vdwg.mxu0
        %v1676 = vld [vmem:[%s929 + $0x2] sm:$0xff]
        %v1677 = vld [vmem:[%s929 + $0xa] sm:$0xff]
        %v1678 = vld [vmem:[%s929 + $0x12] sm:$0xff]
        %v1679 = vld [vmem:[%s929 + $0x1a] sm:$0xff]
        %v1680 = vld [vmem:[%s929 + $0x22] sm:$0xff]
        %v1681 = vld [vmem:[%s929 + $0x2a] sm:$0xff]
        %v1682 = vld [vmem:[%s929 + $0x32] sm:$0xff]
        %v1683 = vld [vmem:[%s929 + $0x3a] sm:$0xff]
        %v1684 = vld [vmem:[%s929 + $0x42] sm:$0xff]
        %v1685 = vld [vmem:[%s929 + $0x4a] sm:$0xff]
        %v1686 = vld [vmem:[%s929 + $0x52] sm:$0xff]
        %v1687 = vld [vmem:[%s929 + $0x5a] sm:$0xff]
        %v1688 = vld [vmem:[%s929 + $0x62] sm:$0xff]
        %v1689 = vld [vmem:[%s929 + $0x6a] sm:$0xff]
        %v1690 = vld [vmem:[%s929 + $0x72] sm:$0xff]
        %v1691 = vld [vmem:[%s929 + $0x7a] sm:$0xf]
        %v1693 = vsel %vm305, %v1676, 0
        %v1696 = vsel %vm305, %v1677, 0
        %v1699 = vsel %vm305, %v1678, 0
        %v1702 = vsel %vm305, %v1679, 0
        %v1705 = vsel %vm305, %v1680, 0
        %v1708 = vsel %vm305, %v1681, 0
        %v1711 = vsel %vm305, %v1682, 0
        %v1714 = vsel %vm305, %v1683, 0
        %v1717 = vsel %vm305, %v1684, 0
        %v1720 = vsel %vm305, %v1685, 0
        %v1723 = vsel %vm305, %v1686, 0
        %v1726 = vsel %vm305, %v1687, 0
        %v1729 = vsel %vm305, %v1688, 0
        %v1732 = vsel %vm305, %v1689, 0
        %v1735 = vsel %vm305, %v1690, 0
        %v1738 = vsel %vm305, %v1691, 0
        %v1741 = vsel %vm354, %v181, 0
        %1743 = vmatprep.subr.mxu0 0.0
        %1744 = vmatpush1.msra.mxu0 0.0
        %1745 = vmatprep.subr.mxu0 0.0
        %1746 = vmatpush1.msra.mxu0 0.0
        %1747 = vmatprep.subr.mxu0 0.0
        %1748 = vmatpush1.msra.mxu0 0.0
        %1749 = vmatprep.subr.mxu0 0.0
        %1750 = vmatpush1.msra.mxu0 0.0
        %1751 = vmatprep.subr.mxu0 0.0
        %1752 = vmatpush1.msra.mxu0 0.0
        %1753 = vmatprep.subr.mxu0 0.0
        %1754 = vmatpush1.msra.mxu0 0.0
        %1755 = vmatprep.subr.mxu0 0.0
        %1756 = vmatpush1.msra.mxu0 0.0
        %1757 = vmatprep.subr.mxu0 0.0
        %1758 = vmatpush1.msra.mxu0 0.0
        %1759 = vmatprep.subr.mxu0 0.0
        %1760 = vmatpush1.msra.mxu0 0.0
        %1761 = vmatprep.subr.mxu0 0.0
        %1762 = vmatpush1.msra.mxu0 0.0
        %1763 = vmatprep.subr.mxu0 0.0
        %1764 = vmatpush1.msra.mxu0 0.0
        %1765 = vmatprep.subr.mxu0 0.0
        %1766 = vmatpush1.msra.mxu0 0.0
        %1767 = vmatprep.subr.mxu0 0.0
        %1768 = vmatpush1.msra.mxu0 0.0
        %1769 = vmatprep.subr.mxu0 0.0
        %1770 = vmatpush1.msra.mxu0 0.0
        %1771 = vmatprep.subr.mxu0 0.0
        %1772 = vmatpush1.msra.mxu0 0.0
        %1773 = vmatprep.subr.mxu0 0.0
        %1774 = vmatpush1.msra.mxu0 %v1741
        %1775 = vmatprep.subr.mxu0 0.0
        %1776 = vmatpush2.msra.mxu0 0.0
        %1777 = vmatprep.subr.mxu0 0.0
        %1778 = vmatpush2.msra.mxu0 0.0
        %1779 = vmatprep.subr.mxu0 0.0
        %1780 = vmatpush2.msra.mxu0 0.0
        %1781 = vmatprep.subr.mxu0 0.0
        %1782 = vmatpush2.msra.mxu0 0.0
        %1783 = vmatprep.subr.mxu0 0.0
        %1784 = vmatpush2.msra.mxu0 0.0
        %1785 = vmatprep.subr.mxu0 0.0
        %1786 = vmatpush2.msra.mxu0 0.0
        %1787 = vmatprep.subr.mxu0 0.0
        %1788 = vmatpush2.msra.mxu0 0.0
        %1789 = vmatprep.subr.mxu0 0.0
        %1790 = vmatpush2.msra.mxu0 0.0
        %1791 = vmatprep.subr.mxu0 0.0
        %1792 = vmatpush2.msra.mxu0 0.0
        %1793 = vmatprep.subr.mxu0 0.0
        %1794 = vmatpush2.msra.mxu0 0.0
        %1795 = vmatprep.subr.mxu0 0.0
        %1796 = vmatpush2.msra.mxu0 0.0
        %1797 = vmatprep.subr.mxu0 0.0
        %1798 = vmatpush2.msra.mxu0 0.0
        %1799 = vmatprep.subr.mxu0 0.0
        %1800 = vmatpush2.msra.mxu0 0.0
        %1801 = vmatprep.subr.mxu0 0.0
        %1802 = vmatpush2.msra.mxu0 0.0
        %1803 = vmatprep.subr.mxu0 0.0
        %1804 = vmatpush2.msra.mxu0 0.0
        %1805 = vmatprep.subr.mxu0 0.0
        %1806 = vmatpush2.msra.mxu0 0.0
        %1807 = vmatprep.mubr.f32.mxu0 0.0
        %1808 = vmatmul.mubr.f32.gmra.mxu0 %v1693
        %v1809 = vpop.f32.mrf.mxu0
        %v1810 = vadd.f32 0.0, %v1809
        %v1811 = vpop.f32.mrf.mxu0
        %1812 = vmatprep.mubr.f32.mxu0 0.0
        %1813 = vmatmul.mubr.f32.gmra.mxu0 %v1696
        %v1814 = vpop.f32.mrf.mxu0
        %v1815 = vadd.f32 0.0, %v1814
        %v1816 = vpop.f32.mrf.mxu0
        %1817 = vmatprep.mubr.f32.mxu0 0.0
        %1818 = vmatmul.mubr.f32.gmra.mxu0 %v1699
        %v1819 = vpop.f32.mrf.mxu0
        %v1820 = vadd.f32 0.0, %v1819
        %v1821 = vpop.f32.mrf.mxu0
        %1822 = vmatprep.mubr.f32.mxu0 0.0
        %1823 = vmatmul.mubr.f32.gmra.mxu0 %v1702
        %v1824 = vpop.f32.mrf.mxu0
        %v1825 = vadd.f32 0.0, %v1824
        %v1826 = vpop.f32.mrf.mxu0
        %1827 = vmatprep.mubr.f32.mxu0 0.0
        %1828 = vmatmul.mubr.f32.gmra.mxu0 %v1705
        %v1829 = vpop.f32.mrf.mxu0
        %v1830 = vadd.f32 0.0, %v1829
        %v1831 = vpop.f32.mrf.mxu0
        %1832 = vmatprep.mubr.f32.mxu0 0.0
        %1833 = vmatmul.mubr.f32.gmra.mxu0 %v1708
        %v1834 = vpop.f32.mrf.mxu0
        %v1835 = vadd.f32 0.0, %v1834
        %v1836 = vpop.f32.mrf.mxu0
        %1837 = vmatprep.mubr.f32.mxu0 0.0
        %1838 = vmatmul.mubr.f32.gmra.mxu0 %v1711
        %v1839 = vpop.f32.mrf.mxu0
        %v1840 = vadd.f32 0.0, %v1839
        %v1841 = vpop.f32.mrf.mxu0
        %1842 = vmatprep.mubr.f32.mxu0 0.0
        %1843 = vmatmul.mubr.f32.gmra.mxu0 %v1714
        %v1844 = vpop.f32.mrf.mxu0
        %v1845 = vadd.f32 0.0, %v1844
        %v1846 = vpop.f32.mrf.mxu0
        %1847 = vmatprep.mubr.f32.mxu0 0.0
        %1848 = vmatmul.mubr.f32.gmra.mxu0 %v1717
        %v1849 = vpop.f32.mrf.mxu0
        %v1850 = vadd.f32 0.0, %v1849
        %v1851 = vpop.f32.mrf.mxu0
        %1852 = vmatprep.mubr.f32.mxu0 0.0
        %1853 = vmatmul.mubr.f32.gmra.mxu0 %v1720
        %v1854 = vpop.f32.mrf.mxu0
        %v1855 = vadd.f32 0.0, %v1854
        %v1856 = vpop.f32.mrf.mxu0
        %1857 = vmatprep.mubr.f32.mxu0 0.0
        %1858 = vmatmul.mubr.f32.gmra.mxu0 %v1723
        %v1859 = vpop.f32.mrf.mxu0
        %v1860 = vadd.f32 0.0, %v1859
        %v1861 = vpop.f32.mrf.mxu0
        %1862 = vmatprep.mubr.f32.mxu0 0.0
        %1863 = vmatmul.mubr.f32.gmra.mxu0 %v1726
        %v1864 = vpop.f32.mrf.mxu0
        %v1865 = vadd.f32 0.0, %v1864
        %v1866 = vpop.f32.mrf.mxu0
        %1867 = vmatprep.mubr.f32.mxu0 0.0
        %1868 = vmatmul.mubr.f32.gmra.mxu0 %v1729
        %v1869 = vpop.f32.mrf.mxu0
        %v1870 = vadd.f32 0.0, %v1869
        %v1871 = vpop.f32.mrf.mxu0
        %1872 = vmatprep.mubr.f32.mxu0 0.0
        %1873 = vmatmul.mubr.f32.gmra.mxu0 %v1732
        %v1874 = vpop.f32.mrf.mxu0
        %v1875 = vadd.f32 0.0, %v1874
        %v1876 = vpop.f32.mrf.mxu0
        %1877 = vmatprep.mubr.f32.mxu0 0.0
        %1878 = vmatmul.mubr.f32.gmra.mxu0 %v1735
        %v1879 = vpop.f32.mrf.mxu0
        %v1880 = vadd.f32 0.0, %v1879
        %v1881 = vpop.f32.mrf.mxu0
        %1882 = vmatprep.mubr.f32.mxu0 0.0
        %1883 = vmatmul.mubr.f32.gmra.mxu0 %v1738
        %v1884 = vpop.f32.mrf.mxu0
        %v1885 = vadd.f32 0.0, %v1884
        %v1886 = vpop.f32.mrf.mxu0
        %1887 = vdwg.mxu0
        %v1888 = vadd.f32 %v1370, %v1810
        %v1889 = vadd.f32 %v1371, %v1815
        %v1890 = vadd.f32 %v1372, %v1820
        %v1891 = vadd.f32 %v1373, %v1825
        %v1892 = vadd.f32 %v1374, %v1830
        %v1893 = vadd.f32 %v1375, %v1835
        %v1894 = vadd.f32 %v1376, %v1840
        %v1895 = vadd.f32 %v1377, %v1845
        %v1896 = vadd.f32 %v1378, %v1850
        %v1897 = vadd.f32 %v1379, %v1855
        %v1898 = vadd.f32 %v1380, %v1860
        %v1899 = vadd.f32 %v1381, %v1865
        %v1900 = vadd.f32 %v1382, %v1870
        %v1901 = vadd.f32 %v1383, %v1875
        %v1902 = vadd.f32 %v1384, %v1880
        %v1903 = vadd.f32 %v1385, %v1885
        %1904 = vmatprep.subr.mxu0 0.0
        %1905 = vmatpush1.msra.mxu0 0.0
        %1906 = vmatprep.subr.mxu0 0.0
        %1907 = vmatpush1.msra.mxu0 0.0
        %1908 = vmatprep.subr.mxu0 0.0
        %1909 = vmatpush1.msra.mxu0 0.0
        %1910 = vmatprep.subr.mxu0 0.0
        %1911 = vmatpush1.msra.mxu0 0.0
        %1912 = vmatprep.subr.mxu0 0.0
        %1913 = vmatpush1.msra.mxu0 0.0
        %1914 = vmatprep.subr.mxu0 0.0
        %1915 = vmatpush1.msra.mxu0 0.0
        %1916 = vmatprep.subr.mxu0 0.0
        %1917 = vmatpush1.msra.mxu0 0.0
        %1918 = vmatprep.subr.mxu0 0.0
        %1919 = vmatpush1.msra.mxu0 0.0
        %1920 = vmatprep.subr.mxu0 0.0
        %1921 = vmatpush1.msra.mxu0 0.0
        %1922 = vmatprep.subr.mxu0 0.0
        %1923 = vmatpush1.msra.mxu0 0.0
        %1924 = vmatprep.subr.mxu0 0.0
        %1925 = vmatpush1.msra.mxu0 0.0
        %1926 = vmatprep.subr.mxu0 0.0
        %1927 = vmatpush1.msra.mxu0 0.0
        %1928 = vmatprep.subr.mxu0 0.0
        %1929 = vmatpush1.msra.mxu0 0.0
        %1930 = vmatprep.subr.mxu0 0.0
        %1931 = vmatpush1.msra.mxu0 0.0
        %1932 = vmatprep.subr.mxu0 0.0
        %1933 = vmatpush1.msra.mxu0 0.0
        %1934 = vmatprep.subr.mxu0 0.0
        %1935 = vmatpush1.msra.mxu0 %v764
        %1936 = vmatprep.subr.mxu0 0.0
        %1937 = vmatpush2.msra.mxu0 0.0
        %1938 = vmatprep.subr.mxu0 0.0
        %1939 = vmatpush2.msra.mxu0 0.0
        %1940 = vmatprep.subr.mxu0 0.0
        %1941 = vmatpush2.msra.mxu0 0.0
        %1942 = vmatprep.subr.mxu0 0.0
        %1943 = vmatpush2.msra.mxu0 0.0
        %1944 = vmatprep.subr.mxu0 0.0
        %1945 = vmatpush2.msra.mxu0 0.0
        %1946 = vmatprep.subr.mxu0 0.0
        %1947 = vmatpush2.msra.mxu0 0.0
        %1948 = vmatprep.subr.mxu0 0.0
        %1949 = vmatpush2.msra.mxu0 0.0
        %1950 = vmatprep.subr.mxu0 0.0
        %1951 = vmatpush2.msra.mxu0 0.0
        %1952 = vmatprep.subr.mxu0 0.0
        %1953 = vmatpush2.msra.mxu0 0.0
        %1954 = vmatprep.subr.mxu0 0.0
        %1955 = vmatpush2.msra.mxu0 0.0
        %1956 = vmatprep.subr.mxu0 0.0
        %1957 = vmatpush2.msra.mxu0 0.0
        %1958 = vmatprep.subr.mxu0 0.0
        %1959 = vmatpush2.msra.mxu0 0.0
        %1960 = vmatprep.subr.mxu0 0.0
        %1961 = vmatpush2.msra.mxu0 0.0
        %1962 = vmatprep.subr.mxu0 0.0
        %1963 = vmatpush2.msra.mxu0 0.0
        %1964 = vmatprep.subr.mxu0 0.0
        %1965 = vmatpush2.msra.mxu0 0.0
        %1966 = vmatprep.subr.mxu0 0.0
        %1967 = vmatpush2.msra.mxu0 0.0
        %1968 = vmatprep.mubr.f32.mxu0 0.0
        %1969 = vmatmul.mubr.f32.gmra.mxu0 %v1693
        %v1970 = vpop.f32.mrf.mxu0
        %v1971 = vadd.f32 0.0, %v1970
        %v1972 = vpop.f32.mrf.mxu0
        %1973 = vmatprep.mubr.f32.mxu0 0.0
        %1974 = vmatmul.mubr.f32.gmra.mxu0 %v1696
        %v1975 = vpop.f32.mrf.mxu0
        %v1976 = vadd.f32 0.0, %v1975
        %v1977 = vpop.f32.mrf.mxu0
        %1978 = vmatprep.mubr.f32.mxu0 0.0
        %1979 = vmatmul.mubr.f32.gmra.mxu0 %v1699
        %v1980 = vpop.f32.mrf.mxu0
        %v1981 = vadd.f32 0.0, %v1980
        %v1982 = vpop.f32.mrf.mxu0
        %1983 = vmatprep.mubr.f32.mxu0 0.0
        %1984 = vmatmul.mubr.f32.gmra.mxu0 %v1702
        %v1985 = vpop.f32.mrf.mxu0
        %v1986 = vadd.f32 0.0, %v1985
        %v1987 = vpop.f32.mrf.mxu0
        %1988 = vmatprep.mubr.f32.mxu0 0.0
        %1989 = vmatmul.mubr.f32.gmra.mxu0 %v1705
        %v1990 = vpop.f32.mrf.mxu0
        %v1991 = vadd.f32 0.0, %v1990
        %v1992 = vpop.f32.mrf.mxu0
        %1993 = vmatprep.mubr.f32.mxu0 0.0
        %1994 = vmatmul.mubr.f32.gmra.mxu0 %v1708
        %v1995 = vpop.f32.mrf.mxu0
        %v1996 = vadd.f32 0.0, %v1995
        %v1997 = vpop.f32.mrf.mxu0
        %1998 = vmatprep.mubr.f32.mxu0 0.0
        %1999 = vmatmul.mubr.f32.gmra.mxu0 %v1711
        %v2000 = vpop.f32.mrf.mxu0
        %v2001 = vadd.f32 0.0, %v2000
        %v2002 = vpop.f32.mrf.mxu0
        %2003 = vmatprep.mubr.f32.mxu0 0.0
        %2004 = vmatmul.mubr.f32.gmra.mxu0 %v1714
        %v2005 = vpop.f32.mrf.mxu0
        %v2006 = vadd.f32 0.0, %v2005
        %v2007 = vpop.f32.mrf.mxu0
        %2008 = vmatprep.mubr.f32.mxu0 0.0
        %2009 = vmatmul.mubr.f32.gmra.mxu0 %v1717
        %v2010 = vpop.f32.mrf.mxu0
        %v2011 = vadd.f32 0.0, %v2010
        %v2012 = vpop.f32.mrf.mxu0
        %2013 = vmatprep.mubr.f32.mxu0 0.0
        %2014 = vmatmul.mubr.f32.gmra.mxu0 %v1720
        %v2015 = vpop.f32.mrf.mxu0
        %v2016 = vadd.f32 0.0, %v2015
        %v2017 = vpop.f32.mrf.mxu0
        %2018 = vmatprep.mubr.f32.mxu0 0.0
        %2019 = vmatmul.mubr.f32.gmra.mxu0 %v1723
        %v2020 = vpop.f32.mrf.mxu0
        %v2021 = vadd.f32 0.0, %v2020
        %v2022 = vpop.f32.mrf.mxu0
        %2023 = vmatprep.mubr.f32.mxu0 0.0
        %2024 = vmatmul.mubr.f32.gmra.mxu0 %v1726
        %v2025 = vpop.f32.mrf.mxu0
        %v2026 = vadd.f32 0.0, %v2025
        %v2027 = vpop.f32.mrf.mxu0
        %2028 = vmatprep.mubr.f32.mxu0 0.0
        %2029 = vmatmul.mubr.f32.gmra.mxu0 %v1729
        %v2030 = vpop.f32.mrf.mxu0
        %v2031 = vadd.f32 0.0, %v2030
        %v2032 = vpop.f32.mrf.mxu0
        %2033 = vmatprep.mubr.f32.mxu0 0.0
        %2034 = vmatmul.mubr.f32.gmra.mxu0 %v1732
        %v2035 = vpop.f32.mrf.mxu0
        %v2036 = vadd.f32 0.0, %v2035
        %v2037 = vpop.f32.mrf.mxu0
        %2038 = vmatprep.mubr.f32.mxu0 0.0
        %2039 = vmatmul.mubr.f32.gmra.mxu0 %v1735
        %v2040 = vpop.f32.mrf.mxu0
        %v2041 = vadd.f32 0.0, %v2040
        %v2042 = vpop.f32.mrf.mxu0
        %2043 = vmatprep.mubr.f32.mxu0 0.0
        %2044 = vmatmul.mubr.f32.gmra.mxu0 %v1738
        %v2045 = vpop.f32.mrf.mxu0
        %v2046 = vadd.f32 0.0, %v2045
        %v2047 = vpop.f32.mrf.mxu0
        %2048 = vdwg.mxu0
        %v2049 = vadd.f32 %v1598, %v1971
        %v2050 = vadd.f32 %v1603, %v1976
        %v2051 = vadd.f32 %v1608, %v1981
        %v2052 = vadd.f32 %v1613, %v1986
        %v2053 = vadd.f32 %v1618, %v1991
        %v2054 = vadd.f32 %v1623, %v1996
        %v2055 = vadd.f32 %v1628, %v2001
        %v2056 = vadd.f32 %v1633, %v2006
        %v2057 = vadd.f32 %v1638, %v2011
        %v2058 = vadd.f32 %v1643, %v2016
        %v2059 = vadd.f32 %v1648, %v2021
        %v2060 = vadd.f32 %v1653, %v2026
        %v2061 = vadd.f32 %v1658, %v2031
        %v2062 = vadd.f32 %v1663, %v2036
        %v2063 = vadd.f32 %v1668, %v2041
        %v2064 = vadd.f32 %v1673, %v2046
        %s2065 = sadd.s32 %s270, 2
        %s2066 = smul.u32 %s2065, 128
        %s2067 = scalar_lea.vmem %s165, %s2066
        %v2068 = vld [vmem:[%s2067] sm:$0xff]
        %v2069 = vld [vmem:[%s2067 + $0x8] sm:$0xff]
        %v2070 = vld [vmem:[%s2067 + $0x10] sm:$0xff]
        %v2071 = vld [vmem:[%s2067 + $0x18] sm:$0xff]
        %v2072 = vld [vmem:[%s2067 + $0x20] sm:$0xff]
        %v2073 = vld [vmem:[%s2067 + $0x28] sm:$0xff]
        %v2074 = vld [vmem:[%s2067 + $0x30] sm:$0xff]
        %v2075 = vld [vmem:[%s2067 + $0x38] sm:$0xff]
        %v2076 = vld [vmem:[%s2067 + $0x40] sm:$0xff]
        %v2077 = vld [vmem:[%s2067 + $0x48] sm:$0xff]
        %v2078 = vld [vmem:[%s2067 + $0x50] sm:$0xff]
        %v2079 = vld [vmem:[%s2067 + $0x58] sm:$0xff]
        %v2080 = vld [vmem:[%s2067 + $0x60] sm:$0xff]
        %v2081 = vld [vmem:[%s2067 + $0x68] sm:$0xff]
        %v2082 = vld [vmem:[%s2067 + $0x70] sm:$0xff]
        %v2083 = vld [vmem:[%s2067 + $0x78] sm:$0xf]
        %v2085 = vsel %vm305, %v2068, 0
        %v2088 = vsel %vm305, %v2069, 0
        %v2091 = vsel %vm305, %v2070, 0
        %v2094 = vsel %vm305, %v2071, 0
        %v2097 = vsel %vm305, %v2072, 0
        %v2100 = vsel %vm305, %v2073, 0
        %v2103 = vsel %vm305, %v2074, 0
        %v2106 = vsel %vm305, %v2075, 0
        %v2109 = vsel %vm305, %v2076, 0
        %v2112 = vsel %vm305, %v2077, 0
        %v2115 = vsel %vm305, %v2078, 0
        %v2118 = vsel %vm305, %v2079, 0
        %v2121 = vsel %vm305, %v2080, 0
        %v2124 = vsel %vm305, %v2081, 0
        %v2127 = vsel %vm305, %v2082, 0
        %v2130 = vsel %vm305, %v2083, 0
        %v2133 = vsel %vm354, %v183, 0
        %2135 = vmatprep.subr.mxu0 0.0
        %2136 = vmatpush1.msra.mxu0 0.0
        %2137 = vmatprep.subr.mxu0 0.0
        %2138 = vmatpush1.msra.mxu0 0.0
        %2139 = vmatprep.subr.mxu0 0.0
        %2140 = vmatpush1.msra.mxu0 0.0
        %2141 = vmatprep.subr.mxu0 0.0
        %2142 = vmatpush1.msra.mxu0 0.0
        %2143 = vmatprep.subr.mxu0 0.0
        %2144 = vmatpush1.msra.mxu0 0.0
        %2145 = vmatprep.subr.mxu0 0.0
        %2146 = vmatpush1.msra.mxu0 0.0
        %2147 = vmatprep.subr.mxu0 0.0
        %2148 = vmatpush1.msra.mxu0 0.0
        %2149 = vmatprep.subr.mxu0 0.0
        %2150 = vmatpush1.msra.mxu0 0.0
        %2151 = vmatprep.subr.mxu0 0.0
        %2152 = vmatpush1.msra.mxu0 0.0
        %2153 = vmatprep.subr.mxu0 0.0
        %2154 = vmatpush1.msra.mxu0 0.0
        %2155 = vmatprep.subr.mxu0 0.0
        %2156 = vmatpush1.msra.mxu0 0.0
        %2157 = vmatprep.subr.mxu0 0.0
        %2158 = vmatpush1.msra.mxu0 0.0
        %2159 = vmatprep.subr.mxu0 0.0
        %2160 = vmatpush1.msra.mxu0 0.0
        %2161 = vmatprep.subr.mxu0 0.0
        %2162 = vmatpush1.msra.mxu0 0.0
        %2163 = vmatprep.subr.mxu0 0.0
        %2164 = vmatpush1.msra.mxu0 0.0
        %2165 = vmatprep.subr.mxu0 0.0
        %2166 = vmatpush1.msra.mxu0 %v2133
        %2167 = vmatprep.subr.mxu0 0.0
        %2168 = vmatpush2.msra.mxu0 0.0
        %2169 = vmatprep.subr.mxu0 0.0
        %2170 = vmatpush2.msra.mxu0 0.0
        %2171 = vmatprep.subr.mxu0 0.0
        %2172 = vmatpush2.msra.mxu0 0.0
        %2173 = vmatprep.subr.mxu0 0.0
        %2174 = vmatpush2.msra.mxu0 0.0
        %2175 = vmatprep.subr.mxu0 0.0
        %2176 = vmatpush2.msra.mxu0 0.0
        %2177 = vmatprep.subr.mxu0 0.0
        %2178 = vmatpush2.msra.mxu0 0.0
        %2179 = vmatprep.subr.mxu0 0.0
        %2180 = vmatpush2.msra.mxu0 0.0
        %2181 = vmatprep.subr.mxu0 0.0
        %2182 = vmatpush2.msra.mxu0 0.0
        %2183 = vmatprep.subr.mxu0 0.0
        %2184 = vmatpush2.msra.mxu0 0.0
        %2185 = vmatprep.subr.mxu0 0.0
        %2186 = vmatpush2.msra.mxu0 0.0
        %2187 = vmatprep.subr.mxu0 0.0
        %2188 = vmatpush2.msra.mxu0 0.0
        %2189 = vmatprep.subr.mxu0 0.0
        %2190 = vmatpush2.msra.mxu0 0.0
        %2191 = vmatprep.subr.mxu0 0.0
        %2192 = vmatpush2.msra.mxu0 0.0
        %2193 = vmatprep.subr.mxu0 0.0
        %2194 = vmatpush2.msra.mxu0 0.0
        %2195 = vmatprep.subr.mxu0 0.0
        %2196 = vmatpush2.msra.mxu0 0.0
        %2197 = vmatprep.subr.mxu0 0.0
        %2198 = vmatpush2.msra.mxu0 0.0
        %2199 = vmatprep.mubr.f32.mxu0 0.0
        %2200 = vmatmul.mubr.f32.gmra.mxu0 %v2085
        %v2201 = vpop.f32.mrf.mxu0
        %v2202 = vadd.f32 0.0, %v2201
        %v2203 = vpop.f32.mrf.mxu0
        %2204 = vmatprep.mubr.f32.mxu0 0.0
        %2205 = vmatmul.mubr.f32.gmra.mxu0 %v2088
        %v2206 = vpop.f32.mrf.mxu0
        %v2207 = vadd.f32 0.0, %v2206
        %v2208 = vpop.f32.mrf.mxu0
        %2209 = vmatprep.mubr.f32.mxu0 0.0
        %2210 = vmatmul.mubr.f32.gmra.mxu0 %v2091
        %v2211 = vpop.f32.mrf.mxu0
        %v2212 = vadd.f32 0.0, %v2211
        %v2213 = vpop.f32.mrf.mxu0
        %2214 = vmatprep.mubr.f32.mxu0 0.0
        %2215 = vmatmul.mubr.f32.gmra.mxu0 %v2094
        %v2216 = vpop.f32.mrf.mxu0
        %v2217 = vadd.f32 0.0, %v2216
        %v2218 = vpop.f32.mrf.mxu0
        %2219 = vmatprep.mubr.f32.mxu0 0.0
        %2220 = vmatmul.mubr.f32.gmra.mxu0 %v2097
        %v2221 = vpop.f32.mrf.mxu0
        %v2222 = vadd.f32 0.0, %v2221
        %v2223 = vpop.f32.mrf.mxu0
        %2224 = vmatprep.mubr.f32.mxu0 0.0
        %2225 = vmatmul.mubr.f32.gmra.mxu0 %v2100
        %v2226 = vpop.f32.mrf.mxu0
        %v2227 = vadd.f32 0.0, %v2226
        %v2228 = vpop.f32.mrf.mxu0
        %2229 = vmatprep.mubr.f32.mxu0 0.0
        %2230 = vmatmul.mubr.f32.gmra.mxu0 %v2103
        %v2231 = vpop.f32.mrf.mxu0
        %v2232 = vadd.f32 0.0, %v2231
        %v2233 = vpop.f32.mrf.mxu0
        %2234 = vmatprep.mubr.f32.mxu0 0.0
        %2235 = vmatmul.mubr.f32.gmra.mxu0 %v2106
        %v2236 = vpop.f32.mrf.mxu0
        %v2237 = vadd.f32 0.0, %v2236
        %v2238 = vpop.f32.mrf.mxu0
        %2239 = vmatprep.mubr.f32.mxu0 0.0
        %2240 = vmatmul.mubr.f32.gmra.mxu0 %v2109
        %v2241 = vpop.f32.mrf.mxu0
        %v2242 = vadd.f32 0.0, %v2241
        %v2243 = vpop.f32.mrf.mxu0
        %2244 = vmatprep.mubr.f32.mxu0 0.0
        %2245 = vmatmul.mubr.f32.gmra.mxu0 %v2112
        %v2246 = vpop.f32.mrf.mxu0
        %v2247 = vadd.f32 0.0, %v2246
        %v2248 = vpop.f32.mrf.mxu0
        %2249 = vmatprep.mubr.f32.mxu0 0.0
        %2250 = vmatmul.mubr.f32.gmra.mxu0 %v2115
        %v2251 = vpop.f32.mrf.mxu0
        %v2252 = vadd.f32 0.0, %v2251
        %v2253 = vpop.f32.mrf.mxu0
        %2254 = vmatprep.mubr.f32.mxu0 0.0
        %2255 = vmatmul.mubr.f32.gmra.mxu0 %v2118
        %v2256 = vpop.f32.mrf.mxu0
        %v2257 = vadd.f32 0.0, %v2256
        %v2258 = vpop.f32.mrf.mxu0
        %2259 = vmatprep.mubr.f32.mxu0 0.0
        %2260 = vmatmul.mubr.f32.gmra.mxu0 %v2121
        %v2261 = vpop.f32.mrf.mxu0
        %v2262 = vadd.f32 0.0, %v2261
        %v2263 = vpop.f32.mrf.mxu0
        %2264 = vmatprep.mubr.f32.mxu0 0.0
        %2265 = vmatmul.mubr.f32.gmra.mxu0 %v2124
        %v2266 = vpop.f32.mrf.mxu0
        %v2267 = vadd.f32 0.0, %v2266
        %v2268 = vpop.f32.mrf.mxu0
        %2269 = vmatprep.mubr.f32.mxu0 0.0
        %2270 = vmatmul.mubr.f32.gmra.mxu0 %v2127
        %v2271 = vpop.f32.mrf.mxu0
        %v2272 = vadd.f32 0.0, %v2271
        %v2273 = vpop.f32.mrf.mxu0
        %2274 = vmatprep.mubr.f32.mxu0 0.0
        %2275 = vmatmul.mubr.f32.gmra.mxu0 %v2130
        %v2276 = vpop.f32.mrf.mxu0
        %v2277 = vadd.f32 0.0, %v2276
        %v2278 = vpop.f32.mrf.mxu0
        %2279 = vdwg.mxu0
        %v2280 = vadd.f32 %v1888, %v2202
        %v2281 = vadd.f32 %v1889, %v2207
        %v2282 = vadd.f32 %v1890, %v2212
        %v2283 = vadd.f32 %v1891, %v2217
        %v2284 = vadd.f32 %v1892, %v2222
        %v2285 = vadd.f32 %v1893, %v2227
        %v2286 = vadd.f32 %v1894, %v2232
        %v2287 = vadd.f32 %v1895, %v2237
        %v2288 = vadd.f32 %v1896, %v2242
        %v2289 = vadd.f32 %v1897, %v2247
        %v2290 = vadd.f32 %v1898, %v2252
        %v2291 = vadd.f32 %v1899, %v2257
        %v2292 = vadd.f32 %v1900, %v2262
        %v2293 = vadd.f32 %v1901, %v2267
        %v2294 = vadd.f32 %v1902, %v2272
        %v2295 = vadd.f32 %v1903, %v2277
        %2296 = vmatprep.subr.mxu0 0.0
        %2297 = vmatpush1.msra.mxu0 0.0
        %2298 = vmatprep.subr.mxu0 0.0
        %2299 = vmatpush1.msra.mxu0 0.0
        %2300 = vmatprep.subr.mxu0 0.0
        %2301 = vmatpush1.msra.mxu0 0.0
        %2302 = vmatprep.subr.mxu0 0.0
        %2303 = vmatpush1.msra.mxu0 0.0
        %2304 = vmatprep.subr.mxu0 0.0
        %2305 = vmatpush1.msra.mxu0 0.0
        %2306 = vmatprep.subr.mxu0 0.0
        %2307 = vmatpush1.msra.mxu0 0.0
        %2308 = vmatprep.subr.mxu0 0.0
        %2309 = vmatpush1.msra.mxu0 0.0
        %2310 = vmatprep.subr.mxu0 0.0
        %2311 = vmatpush1.msra.mxu0 0.0
        %2312 = vmatprep.subr.mxu0 0.0
        %2313 = vmatpush1.msra.mxu0 0.0
        %2314 = vmatprep.subr.mxu0 0.0
        %2315 = vmatpush1.msra.mxu0 0.0
        %2316 = vmatprep.subr.mxu0 0.0
        %2317 = vmatpush1.msra.mxu0 0.0
        %2318 = vmatprep.subr.mxu0 0.0
        %2319 = vmatpush1.msra.mxu0 0.0
        %2320 = vmatprep.subr.mxu0 0.0
        %2321 = vmatpush1.msra.mxu0 0.0
        %2322 = vmatprep.subr.mxu0 0.0
        %2323 = vmatpush1.msra.mxu0 0.0
        %2324 = vmatprep.subr.mxu0 0.0
        %2325 = vmatpush1.msra.mxu0 0.0
        %2326 = vmatprep.subr.mxu0 0.0
        %2327 = vmatpush1.msra.mxu0 %v995
        %2328 = vmatprep.subr.mxu0 0.0
        %2329 = vmatpush2.msra.mxu0 0.0
        %2330 = vmatprep.subr.mxu0 0.0
        %2331 = vmatpush2.msra.mxu0 0.0
        %2332 = vmatprep.subr.mxu0 0.0
        %2333 = vmatpush2.msra.mxu0 0.0
        %2334 = vmatprep.subr.mxu0 0.0
        %2335 = vmatpush2.msra.mxu0 0.0
        %2336 = vmatprep.subr.mxu0 0.0
        %2337 = vmatpush2.msra.mxu0 0.0
        %2338 = vmatprep.subr.mxu0 0.0
        %2339 = vmatpush2.msra.mxu0 0.0
        %2340 = vmatprep.subr.mxu0 0.0
        %2341 = vmatpush2.msra.mxu0 0.0
        %2342 = vmatprep.subr.mxu0 0.0
        %2343 = vmatpush2.msra.mxu0 0.0
        %2344 = vmatprep.subr.mxu0 0.0
        %2345 = vmatpush2.msra.mxu0 0.0
        %2346 = vmatprep.subr.mxu0 0.0
        %2347 = vmatpush2.msra.mxu0 0.0
        %2348 = vmatprep.subr.mxu0 0.0
        %2349 = vmatpush2.msra.mxu0 0.0
        %2350 = vmatprep.subr.mxu0 0.0
        %2351 = vmatpush2.msra.mxu0 0.0
        %2352 = vmatprep.subr.mxu0 0.0
        %2353 = vmatpush2.msra.mxu0 0.0
        %2354 = vmatprep.subr.mxu0 0.0
        %2355 = vmatpush2.msra.mxu0 0.0
        %2356 = vmatprep.subr.mxu0 0.0
        %2357 = vmatpush2.msra.mxu0 0.0
        %2358 = vmatprep.subr.mxu0 0.0
        %2359 = vmatpush2.msra.mxu0 0.0
        %2360 = vmatprep.mubr.f32.mxu0 0.0
        %2361 = vmatmul.mubr.f32.gmra.mxu0 %v2085
        %v2362 = vpop.f32.mrf.mxu0
        %v2363 = vadd.f32 0.0, %v2362
        %v2364 = vpop.f32.mrf.mxu0
        %2365 = vmatprep.mubr.f32.mxu0 0.0
        %2366 = vmatmul.mubr.f32.gmra.mxu0 %v2088
        %v2367 = vpop.f32.mrf.mxu0
        %v2368 = vadd.f32 0.0, %v2367
        %v2369 = vpop.f32.mrf.mxu0
        %2370 = vmatprep.mubr.f32.mxu0 0.0
        %2371 = vmatmul.mubr.f32.gmra.mxu0 %v2091
        %v2372 = vpop.f32.mrf.mxu0
        %v2373 = vadd.f32 0.0, %v2372
        %v2374 = vpop.f32.mrf.mxu0
        %2375 = vmatprep.mubr.f32.mxu0 0.0
        %2376 = vmatmul.mubr.f32.gmra.mxu0 %v2094
        %v2377 = vpop.f32.mrf.mxu0
        %v2378 = vadd.f32 0.0, %v2377
        %v2379 = vpop.f32.mrf.mxu0
        %2380 = vmatprep.mubr.f32.mxu0 0.0
        %2381 = vmatmul.mubr.f32.gmra.mxu0 %v2097
        %v2382 = vpop.f32.mrf.mxu0
        %v2383 = vadd.f32 0.0, %v2382
        %v2384 = vpop.f32.mrf.mxu0
        %2385 = vmatprep.mubr.f32.mxu0 0.0
        %2386 = vmatmul.mubr.f32.gmra.mxu0 %v2100
        %v2387 = vpop.f32.mrf.mxu0
        %v2388 = vadd.f32 0.0, %v2387
        %v2389 = vpop.f32.mrf.mxu0
        %2390 = vmatprep.mubr.f32.mxu0 0.0
        %2391 = vmatmul.mubr.f32.gmra.mxu0 %v2103
        %v2392 = vpop.f32.mrf.mxu0
        %v2393 = vadd.f32 0.0, %v2392
        %v2394 = vpop.f32.mrf.mxu0
        %2395 = vmatprep.mubr.f32.mxu0 0.0
        %2396 = vmatmul.mubr.f32.gmra.mxu0 %v2106
        %v2397 = vpop.f32.mrf.mxu0
        %v2398 = vadd.f32 0.0, %v2397
        %v2399 = vpop.f32.mrf.mxu0
        %2400 = vmatprep.mubr.f32.mxu0 0.0
        %2401 = vmatmul.mubr.f32.gmra.mxu0 %v2109
        %v2402 = vpop.f32.mrf.mxu0
        %v2403 = vadd.f32 0.0, %v2402
        %v2404 = vpop.f32.mrf.mxu0
        %2405 = vmatprep.mubr.f32.mxu0 0.0
        %2406 = vmatmul.mubr.f32.gmra.mxu0 %v2112
        %v2407 = vpop.f32.mrf.mxu0
        %v2408 = vadd.f32 0.0, %v2407
        %v2409 = vpop.f32.mrf.mxu0
        %2410 = vmatprep.mubr.f32.mxu0 0.0
        %2411 = vmatmul.mubr.f32.gmra.mxu0 %v2115
        %v2412 = vpop.f32.mrf.mxu0
        %v2413 = vadd.f32 0.0, %v2412
        %v2414 = vpop.f32.mrf.mxu0
        %2415 = vmatprep.mubr.f32.mxu0 0.0
        %2416 = vmatmul.mubr.f32.gmra.mxu0 %v2118
        %v2417 = vpop.f32.mrf.mxu0
        %v2418 = vadd.f32 0.0, %v2417
        %v2419 = vpop.f32.mrf.mxu0
        %2420 = vmatprep.mubr.f32.mxu0 0.0
        %2421 = vmatmul.mubr.f32.gmra.mxu0 %v2121
        %v2422 = vpop.f32.mrf.mxu0
        %v2423 = vadd.f32 0.0, %v2422
        %v2424 = vpop.f32.mrf.mxu0
        %2425 = vmatprep.mubr.f32.mxu0 0.0
        %2426 = vmatmul.mubr.f32.gmra.mxu0 %v2124
        %v2427 = vpop.f32.mrf.mxu0
        %v2428 = vadd.f32 0.0, %v2427
        %v2429 = vpop.f32.mrf.mxu0
        %2430 = vmatprep.mubr.f32.mxu0 0.0
        %2431 = vmatmul.mubr.f32.gmra.mxu0 %v2127
        %v2432 = vpop.f32.mrf.mxu0
        %v2433 = vadd.f32 0.0, %v2432
        %v2434 = vpop.f32.mrf.mxu0
        %2435 = vmatprep.mubr.f32.mxu0 0.0
        %2436 = vmatmul.mubr.f32.gmra.mxu0 %v2130
        %v2437 = vpop.f32.mrf.mxu0
        %v2438 = vadd.f32 0.0, %v2437
        %v2439 = vpop.f32.mrf.mxu0
        %2440 = vdwg.mxu0
        %v2441 = vadd.f32 %v2049, %v2363
        %v2442 = vadd.f32 %v2050, %v2368
        %v2443 = vadd.f32 %v2051, %v2373
        %v2444 = vadd.f32 %v2052, %v2378
        %v2445 = vadd.f32 %v2053, %v2383
        %v2446 = vadd.f32 %v2054, %v2388
        %v2447 = vadd.f32 %v2055, %v2393
        %v2448 = vadd.f32 %v2056, %v2398
        %v2449 = vadd.f32 %v2057, %v2403
        %v2450 = vadd.f32 %v2058, %v2408
        %v2451 = vadd.f32 %v2059, %v2413
        %v2452 = vadd.f32 %v2060, %v2418
        %v2453 = vadd.f32 %v2061, %v2423
        %v2454 = vadd.f32 %v2062, %v2428
        %v2455 = vadd.f32 %v2063, %v2433
        %v2456 = vadd.f32 %v2064, %v2438
        %v2457 = vld [vmem:[%s2067 + $0x1] sm:$0xff]
        %v2458 = vld [vmem:[%s2067 + $0x9] sm:$0xff]
        %v2459 = vld [vmem:[%s2067 + $0x11] sm:$0xff]
        %v2460 = vld [vmem:[%s2067 + $0x19] sm:$0xff]
        %v2461 = vld [vmem:[%s2067 + $0x21] sm:$0xff]
        %v2462 = vld [vmem:[%s2067 + $0x29] sm:$0xff]
        %v2463 = vld [vmem:[%s2067 + $0x31] sm:$0xff]
        %v2464 = vld [vmem:[%s2067 + $0x39] sm:$0xff]
        %v2465 = vld [vmem:[%s2067 + $0x41] sm:$0xff]
        %v2466 = vld [vmem:[%s2067 + $0x49] sm:$0xff]
        %v2467 = vld [vmem:[%s2067 + $0x51] sm:$0xff]
        %v2468 = vld [vmem:[%s2067 + $0x59] sm:$0xff]
        %v2469 = vld [vmem:[%s2067 + $0x61] sm:$0xff]
        %v2470 = vld [vmem:[%s2067 + $0x69] sm:$0xff]
        %v2471 = vld [vmem:[%s2067 + $0x71] sm:$0xff]
        %v2472 = vld [vmem:[%s2067 + $0x79] sm:$0xf]
        %v2474 = vsel %vm305, %v2457, 0
        %v2477 = vsel %vm305, %v2458, 0
        %v2480 = vsel %vm305, %v2459, 0
        %v2483 = vsel %vm305, %v2460, 0
        %v2486 = vsel %vm305, %v2461, 0
        %v2489 = vsel %vm305, %v2462, 0
        %v2492 = vsel %vm305, %v2463, 0
        %v2495 = vsel %vm305, %v2464, 0
        %v2498 = vsel %vm305, %v2465, 0
        %v2501 = vsel %vm305, %v2466, 0
        %v2504 = vsel %vm305, %v2467, 0
        %v2507 = vsel %vm305, %v2468, 0
        %v2510 = vsel %vm305, %v2469, 0
        %v2513 = vsel %vm305, %v2470, 0
        %v2516 = vsel %vm305, %v2471, 0
        %v2519 = vsel %vm305, %v2472, 0
        %v2522 = vsel %vm354, %v185, 0
        %2524 = vmatprep.subr.mxu0 0.0
        %2525 = vmatpush1.msra.mxu0 0.0
        %2526 = vmatprep.subr.mxu0 0.0
        %2527 = vmatpush1.msra.mxu0 0.0
        %2528 = vmatprep.subr.mxu0 0.0
        %2529 = vmatpush1.msra.mxu0 0.0
        %2530 = vmatprep.subr.mxu0 0.0
        %2531 = vmatpush1.msra.mxu0 0.0
        %2532 = vmatprep.subr.mxu0 0.0
        %2533 = vmatpush1.msra.mxu0 0.0
        %2534 = vmatprep.subr.mxu0 0.0
        %2535 = vmatpush1.msra.mxu0 0.0
        %2536 = vmatprep.subr.mxu0 0.0
        %2537 = vmatpush1.msra.mxu0 0.0
        %2538 = vmatprep.subr.mxu0 0.0
        %2539 = vmatpush1.msra.mxu0 0.0
        %2540 = vmatprep.subr.mxu0 0.0
        %2541 = vmatpush1.msra.mxu0 0.0
        %2542 = vmatprep.subr.mxu0 0.0
        %2543 = vmatpush1.msra.mxu0 0.0
        %2544 = vmatprep.subr.mxu0 0.0
        %2545 = vmatpush1.msra.mxu0 0.0
        %2546 = vmatprep.subr.mxu0 0.0
        %2547 = vmatpush1.msra.mxu0 0.0
        %2548 = vmatprep.subr.mxu0 0.0
        %2549 = vmatpush1.msra.mxu0 0.0
        %2550 = vmatprep.subr.mxu0 0.0
        %2551 = vmatpush1.msra.mxu0 0.0
        %2552 = vmatprep.subr.mxu0 0.0
        %2553 = vmatpush1.msra.mxu0 0.0
        %2554 = vmatprep.subr.mxu0 0.0
        %2555 = vmatpush1.msra.mxu0 %v2522
        %2556 = vmatprep.subr.mxu0 0.0
        %2557 = vmatpush2.msra.mxu0 0.0
        %2558 = vmatprep.subr.mxu0 0.0
        %2559 = vmatpush2.msra.mxu0 0.0
        %2560 = vmatprep.subr.mxu0 0.0
        %2561 = vmatpush2.msra.mxu0 0.0
        %2562 = vmatprep.subr.mxu0 0.0
        %2563 = vmatpush2.msra.mxu0 0.0
        %2564 = vmatprep.subr.mxu0 0.0
        %2565 = vmatpush2.msra.mxu0 0.0
        %2566 = vmatprep.subr.mxu0 0.0
        %2567 = vmatpush2.msra.mxu0 0.0
        %2568 = vmatprep.subr.mxu0 0.0
        %2569 = vmatpush2.msra.mxu0 0.0
        %2570 = vmatprep.subr.mxu0 0.0
        %2571 = vmatpush2.msra.mxu0 0.0
        %2572 = vmatprep.subr.mxu0 0.0
        %2573 = vmatpush2.msra.mxu0 0.0
        %2574 = vmatprep.subr.mxu0 0.0
        %2575 = vmatpush2.msra.mxu0 0.0
        %2576 = vmatprep.subr.mxu0 0.0
        %2577 = vmatpush2.msra.mxu0 0.0
        %2578 = vmatprep.subr.mxu0 0.0
        %2579 = vmatpush2.msra.mxu0 0.0
        %2580 = vmatprep.subr.mxu0 0.0
        %2581 = vmatpush2.msra.mxu0 0.0
        %2582 = vmatprep.subr.mxu0 0.0
        %2583 = vmatpush2.msra.mxu0 0.0
        %2584 = vmatprep.subr.mxu0 0.0
        %2585 = vmatpush2.msra.mxu0 0.0
        %2586 = vmatprep.subr.mxu0 0.0
        %2587 = vmatpush2.msra.mxu0 0.0
        %2588 = vmatprep.mubr.f32.mxu0 0.0
        %2589 = vmatmul.mubr.f32.gmra.mxu0 %v2474
        %v2590 = vpop.f32.mrf.mxu0
        %v2591 = vadd.f32 0.0, %v2590
        %v2592 = vpop.f32.mrf.mxu0
        %2593 = vmatprep.mubr.f32.mxu0 0.0
        %2594 = vmatmul.mubr.f32.gmra.mxu0 %v2477
        %v2595 = vpop.f32.mrf.mxu0
        %v2596 = vadd.f32 0.0, %v2595
        %v2597 = vpop.f32.mrf.mxu0
        %2598 = vmatprep.mubr.f32.mxu0 0.0
        %2599 = vmatmul.mubr.f32.gmra.mxu0 %v2480
        %v2600 = vpop.f32.mrf.mxu0
        %v2601 = vadd.f32 0.0, %v2600
        %v2602 = vpop.f32.mrf.mxu0
        %2603 = vmatprep.mubr.f32.mxu0 0.0
        %2604 = vmatmul.mubr.f32.gmra.mxu0 %v2483
        %v2605 = vpop.f32.mrf.mxu0
        %v2606 = vadd.f32 0.0, %v2605
        %v2607 = vpop.f32.mrf.mxu0
        %2608 = vmatprep.mubr.f32.mxu0 0.0
        %2609 = vmatmul.mubr.f32.gmra.mxu0 %v2486
        %v2610 = vpop.f32.mrf.mxu0
        %v2611 = vadd.f32 0.0, %v2610
        %v2612 = vpop.f32.mrf.mxu0
        %2613 = vmatprep.mubr.f32.mxu0 0.0
        %2614 = vmatmul.mubr.f32.gmra.mxu0 %v2489
        %v2615 = vpop.f32.mrf.mxu0
        %v2616 = vadd.f32 0.0, %v2615
        %v2617 = vpop.f32.mrf.mxu0
        %2618 = vmatprep.mubr.f32.mxu0 0.0
        %2619 = vmatmul.mubr.f32.gmra.mxu0 %v2492
        %v2620 = vpop.f32.mrf.mxu0
        %v2621 = vadd.f32 0.0, %v2620
        %v2622 = vpop.f32.mrf.mxu0
        %2623 = vmatprep.mubr.f32.mxu0 0.0
        %2624 = vmatmul.mubr.f32.gmra.mxu0 %v2495
        %v2625 = vpop.f32.mrf.mxu0
        %v2626 = vadd.f32 0.0, %v2625
        %v2627 = vpop.f32.mrf.mxu0
        %2628 = vmatprep.mubr.f32.mxu0 0.0
        %2629 = vmatmul.mubr.f32.gmra.mxu0 %v2498
        %v2630 = vpop.f32.mrf.mxu0
        %v2631 = vadd.f32 0.0, %v2630
        %v2632 = vpop.f32.mrf.mxu0
        %2633 = vmatprep.mubr.f32.mxu0 0.0
        %2634 = vmatmul.mubr.f32.gmra.mxu0 %v2501
        %v2635 = vpop.f32.mrf.mxu0
        %v2636 = vadd.f32 0.0, %v2635
        %v2637 = vpop.f32.mrf.mxu0
        %2638 = vmatprep.mubr.f32.mxu0 0.0
        %2639 = vmatmul.mubr.f32.gmra.mxu0 %v2504
        %v2640 = vpop.f32.mrf.mxu0
        %v2641 = vadd.f32 0.0, %v2640
        %v2642 = vpop.f32.mrf.mxu0
        %2643 = vmatprep.mubr.f32.mxu0 0.0
        %2644 = vmatmul.mubr.f32.gmra.mxu0 %v2507
        %v2645 = vpop.f32.mrf.mxu0
        %v2646 = vadd.f32 0.0, %v2645
        %v2647 = vpop.f32.mrf.mxu0
        %2648 = vmatprep.mubr.f32.mxu0 0.0
        %2649 = vmatmul.mubr.f32.gmra.mxu0 %v2510
        %v2650 = vpop.f32.mrf.mxu0
        %v2651 = vadd.f32 0.0, %v2650
        %v2652 = vpop.f32.mrf.mxu0
        %2653 = vmatprep.mubr.f32.mxu0 0.0
        %2654 = vmatmul.mubr.f32.gmra.mxu0 %v2513
        %v2655 = vpop.f32.mrf.mxu0
        %v2656 = vadd.f32 0.0, %v2655
        %v2657 = vpop.f32.mrf.mxu0
        %2658 = vmatprep.mubr.f32.mxu0 0.0
        %2659 = vmatmul.mubr.f32.gmra.mxu0 %v2516
        %v2660 = vpop.f32.mrf.mxu0
        %v2661 = vadd.f32 0.0, %v2660
        %v2662 = vpop.f32.mrf.mxu0
        %2663 = vmatprep.mubr.f32.mxu0 0.0
        %2664 = vmatmul.mubr.f32.gmra.mxu0 %v2519
        %v2665 = vpop.f32.mrf.mxu0
        %v2666 = vadd.f32 0.0, %v2665
        %v2667 = vpop.f32.mrf.mxu0
        %2668 = vdwg.mxu0
        %v2669 = vadd.f32 %v2280, %v2591
        %v2670 = vadd.f32 %v2281, %v2596
        %v2671 = vadd.f32 %v2282, %v2601
        %v2672 = vadd.f32 %v2283, %v2606
        %v2673 = vadd.f32 %v2284, %v2611
        %v2674 = vadd.f32 %v2285, %v2616
        %v2675 = vadd.f32 %v2286, %v2621
        %v2676 = vadd.f32 %v2287, %v2626
        %v2677 = vadd.f32 %v2288, %v2631
        %v2678 = vadd.f32 %v2289, %v2636
        %v2679 = vadd.f32 %v2290, %v2641
        %v2680 = vadd.f32 %v2291, %v2646
        %v2681 = vadd.f32 %v2292, %v2651
        %v2682 = vadd.f32 %v2293, %v2656
        %v2683 = vadd.f32 %v2294, %v2661
        %v2684 = vadd.f32 %v2295, %v2666
        %2685 = vmatprep.subr.mxu0 0.0
        %2686 = vmatpush1.msra.mxu0 0.0
        %2687 = vmatprep.subr.mxu0 0.0
        %2688 = vmatpush1.msra.mxu0 0.0
        %2689 = vmatprep.subr.mxu0 0.0
        %2690 = vmatpush1.msra.mxu0 0.0
        %2691 = vmatprep.subr.mxu0 0.0
        %2692 = vmatpush1.msra.mxu0 0.0
        %2693 = vmatprep.subr.mxu0 0.0
        %2694 = vmatpush1.msra.mxu0 0.0
        %2695 = vmatprep.subr.mxu0 0.0
        %2696 = vmatpush1.msra.mxu0 0.0
        %2697 = vmatprep.subr.mxu0 0.0
        %2698 = vmatpush1.msra.mxu0 0.0
        %2699 = vmatprep.subr.mxu0 0.0
        %2700 = vmatpush1.msra.mxu0 0.0
        %2701 = vmatprep.subr.mxu0 0.0
        %2702 = vmatpush1.msra.mxu0 0.0
        %2703 = vmatprep.subr.mxu0 0.0
        %2704 = vmatpush1.msra.mxu0 0.0
        %2705 = vmatprep.subr.mxu0 0.0
        %2706 = vmatpush1.msra.mxu0 0.0
        %2707 = vmatprep.subr.mxu0 0.0
        %2708 = vmatpush1.msra.mxu0 0.0
        %2709 = vmatprep.subr.mxu0 0.0
        %2710 = vmatpush1.msra.mxu0 0.0
        %2711 = vmatprep.subr.mxu0 0.0
        %2712 = vmatpush1.msra.mxu0 0.0
        %2713 = vmatprep.subr.mxu0 0.0
        %2714 = vmatpush1.msra.mxu0 0.0
        %2715 = vmatprep.subr.mxu0 0.0
        %2716 = vmatpush1.msra.mxu0 %v1223
        %2717 = vmatprep.subr.mxu0 0.0
        %2718 = vmatpush2.msra.mxu0 0.0
        %2719 = vmatprep.subr.mxu0 0.0
        %2720 = vmatpush2.msra.mxu0 0.0
        %2721 = vmatprep.subr.mxu0 0.0
        %2722 = vmatpush2.msra.mxu0 0.0
        %2723 = vmatprep.subr.mxu0 0.0
        %2724 = vmatpush2.msra.mxu0 0.0
        %2725 = vmatprep.subr.mxu0 0.0
        %2726 = vmatpush2.msra.mxu0 0.0
        %2727 = vmatprep.subr.mxu0 0.0
        %2728 = vmatpush2.msra.mxu0 0.0
        %2729 = vmatprep.subr.mxu0 0.0
        %2730 = vmatpush2.msra.mxu0 0.0
        %2731 = vmatprep.subr.mxu0 0.0
        %2732 = vmatpush2.msra.mxu0 0.0
        %2733 = vmatprep.subr.mxu0 0.0
        %2734 = vmatpush2.msra.mxu0 0.0
        %2735 = vmatprep.subr.mxu0 0.0
        %2736 = vmatpush2.msra.mxu0 0.0
        %2737 = vmatprep.subr.mxu0 0.0
        %2738 = vmatpush2.msra.mxu0 0.0
        %2739 = vmatprep.subr.mxu0 0.0
        %2740 = vmatpush2.msra.mxu0 0.0
        %2741 = vmatprep.subr.mxu0 0.0
        %2742 = vmatpush2.msra.mxu0 0.0
        %2743 = vmatprep.subr.mxu0 0.0
        %2744 = vmatpush2.msra.mxu0 0.0
        %2745 = vmatprep.subr.mxu0 0.0
        %2746 = vmatpush2.msra.mxu0 0.0
        %2747 = vmatprep.subr.mxu0 0.0
        %2748 = vmatpush2.msra.mxu0 0.0
        %2749 = vmatprep.mubr.f32.mxu0 0.0
        %2750 = vmatmul.mubr.f32.gmra.mxu0 %v2474
        %v2751 = vpop.f32.mrf.mxu0
        %v2752 = vadd.f32 0.0, %v2751
        %v2753 = vpop.f32.mrf.mxu0
        %2754 = vmatprep.mubr.f32.mxu0 0.0
        %2755 = vmatmul.mubr.f32.gmra.mxu0 %v2477
        %v2756 = vpop.f32.mrf.mxu0
        %v2757 = vadd.f32 0.0, %v2756
        %v2758 = vpop.f32.mrf.mxu0
        %2759 = vmatprep.mubr.f32.mxu0 0.0
        %2760 = vmatmul.mubr.f32.gmra.mxu0 %v2480
        %v2761 = vpop.f32.mrf.mxu0
        %v2762 = vadd.f32 0.0, %v2761
        %v2763 = vpop.f32.mrf.mxu0
        %2764 = vmatprep.mubr.f32.mxu0 0.0
        %2765 = vmatmul.mubr.f32.gmra.mxu0 %v2483
        %v2766 = vpop.f32.mrf.mxu0
        %v2767 = vadd.f32 0.0, %v2766
        %v2768 = vpop.f32.mrf.mxu0
        %2769 = vmatprep.mubr.f32.mxu0 0.0
        %2770 = vmatmul.mubr.f32.gmra.mxu0 %v2486
        %v2771 = vpop.f32.mrf.mxu0
        %v2772 = vadd.f32 0.0, %v2771
        %v2773 = vpop.f32.mrf.mxu0
        %2774 = vmatprep.mubr.f32.mxu0 0.0
        %2775 = vmatmul.mubr.f32.gmra.mxu0 %v2489
        %v2776 = vpop.f32.mrf.mxu0
        %v2777 = vadd.f32 0.0, %v2776
        %v2778 = vpop.f32.mrf.mxu0
        %2779 = vmatprep.mubr.f32.mxu0 0.0
        %2780 = vmatmul.mubr.f32.gmra.mxu0 %v2492
        %v2781 = vpop.f32.mrf.mxu0
        %v2782 = vadd.f32 0.0, %v2781
        %v2783 = vpop.f32.mrf.mxu0
        %2784 = vmatprep.mubr.f32.mxu0 0.0
        %2785 = vmatmul.mubr.f32.gmra.mxu0 %v2495
        %v2786 = vpop.f32.mrf.mxu0
        %v2787 = vadd.f32 0.0, %v2786
        %v2788 = vpop.f32.mrf.mxu0
        %2789 = vmatprep.mubr.f32.mxu0 0.0
        %2790 = vmatmul.mubr.f32.gmra.mxu0 %v2498
        %v2791 = vpop.f32.mrf.mxu0
        %v2792 = vadd.f32 0.0, %v2791
        %v2793 = vpop.f32.mrf.mxu0
        %2794 = vmatprep.mubr.f32.mxu0 0.0
        %2795 = vmatmul.mubr.f32.gmra.mxu0 %v2501
        %v2796 = vpop.f32.mrf.mxu0
        %v2797 = vadd.f32 0.0, %v2796
        %v2798 = vpop.f32.mrf.mxu0
        %2799 = vmatprep.mubr.f32.mxu0 0.0
        %2800 = vmatmul.mubr.f32.gmra.mxu0 %v2504
        %v2801 = vpop.f32.mrf.mxu0
        %v2802 = vadd.f32 0.0, %v2801
        %v2803 = vpop.f32.mrf.mxu0
        %2804 = vmatprep.mubr.f32.mxu0 0.0
        %2805 = vmatmul.mubr.f32.gmra.mxu0 %v2507
        %v2806 = vpop.f32.mrf.mxu0
        %v2807 = vadd.f32 0.0, %v2806
        %v2808 = vpop.f32.mrf.mxu0
        %2809 = vmatprep.mubr.f32.mxu0 0.0
        %2810 = vmatmul.mubr.f32.gmra.mxu0 %v2510
        %v2811 = vpop.f32.mrf.mxu0
        %v2812 = vadd.f32 0.0, %v2811
        %v2813 = vpop.f32.mrf.mxu0
        %2814 = vmatprep.mubr.f32.mxu0 0.0
        %2815 = vmatmul.mubr.f32.gmra.mxu0 %v2513
        %v2816 = vpop.f32.mrf.mxu0
        %v2817 = vadd.f32 0.0, %v2816
        %v2818 = vpop.f32.mrf.mxu0
        %2819 = vmatprep.mubr.f32.mxu0 0.0
        %2820 = vmatmul.mubr.f32.gmra.mxu0 %v2516
        %v2821 = vpop.f32.mrf.mxu0
        %v2822 = vadd.f32 0.0, %v2821
        %v2823 = vpop.f32.mrf.mxu0
        %2824 = vmatprep.mubr.f32.mxu0 0.0
        %2825 = vmatmul.mubr.f32.gmra.mxu0 %v2519
        %v2826 = vpop.f32.mrf.mxu0
        %v2827 = vadd.f32 0.0, %v2826
        %v2828 = vpop.f32.mrf.mxu0
        %2829 = vdwg.mxu0
        %v2830 = vadd.f32 %v2441, %v2752
        %v2831 = vadd.f32 %v2442, %v2757
        %v2832 = vadd.f32 %v2443, %v2762
        %v2833 = vadd.f32 %v2444, %v2767
        %v2834 = vadd.f32 %v2445, %v2772
        %v2835 = vadd.f32 %v2446, %v2777
        %v2836 = vadd.f32 %v2447, %v2782
        %v2837 = vadd.f32 %v2448, %v2787
        %v2838 = vadd.f32 %v2449, %v2792
        %v2839 = vadd.f32 %v2450, %v2797
        %v2840 = vadd.f32 %v2451, %v2802
        %v2841 = vadd.f32 %v2452, %v2807
        %v2842 = vadd.f32 %v2453, %v2812
        %v2843 = vadd.f32 %v2454, %v2817
        %v2844 = vadd.f32 %v2455, %v2822
        %v2845 = vadd.f32 %v2456, %v2827
        %v2846 = vld [vmem:[%s2067 + $0x2] sm:$0xff]
        %v2847 = vld [vmem:[%s2067 + $0xa] sm:$0xff]
        %v2848 = vld [vmem:[%s2067 + $0x12] sm:$0xff]
        %v2849 = vld [vmem:[%s2067 + $0x1a] sm:$0xff]
        %v2850 = vld [vmem:[%s2067 + $0x22] sm:$0xff]
        %v2851 = vld [vmem:[%s2067 + $0x2a] sm:$0xff]
        %v2852 = vld [vmem:[%s2067 + $0x32] sm:$0xff]
        %v2853 = vld [vmem:[%s2067 + $0x3a] sm:$0xff]
        %v2854 = vld [vmem:[%s2067 + $0x42] sm:$0xff]
        %v2855 = vld [vmem:[%s2067 + $0x4a] sm:$0xff]
        %v2856 = vld [vmem:[%s2067 + $0x52] sm:$0xff]
        %v2857 = vld [vmem:[%s2067 + $0x5a] sm:$0xff]
        %v2858 = vld [vmem:[%s2067 + $0x62] sm:$0xff]
        %v2859 = vld [vmem:[%s2067 + $0x6a] sm:$0xff]
        %v2860 = vld [vmem:[%s2067 + $0x72] sm:$0xff]
        %v2861 = vld [vmem:[%s2067 + $0x7a] sm:$0xf]
        %v2863 = vsel %vm305, %v2846, 0
        %v2866 = vsel %vm305, %v2847, 0
        %v2869 = vsel %vm305, %v2848, 0
        %v2872 = vsel %vm305, %v2849, 0
        %v2875 = vsel %vm305, %v2850, 0
        %v2878 = vsel %vm305, %v2851, 0
        %v2881 = vsel %vm305, %v2852, 0
        %v2884 = vsel %vm305, %v2853, 0
        %v2887 = vsel %vm305, %v2854, 0
        %v2890 = vsel %vm305, %v2855, 0
        %v2893 = vsel %vm305, %v2856, 0
        %v2896 = vsel %vm305, %v2857, 0
        %v2899 = vsel %vm305, %v2858, 0
        %v2902 = vsel %vm305, %v2859, 0
        %v2905 = vsel %vm305, %v2860, 0
        %v2908 = vsel %vm305, %v2861, 0
        %v2911 = vsel %vm354, %v187, 0
        %2913 = vmatprep.subr.mxu0 0.0
        %2914 = vmatpush1.msra.mxu0 0.0
        %2915 = vmatprep.subr.mxu0 0.0
        %2916 = vmatpush1.msra.mxu0 0.0
        %2917 = vmatprep.subr.mxu0 0.0
        %2918 = vmatpush1.msra.mxu0 0.0
        %2919 = vmatprep.subr.mxu0 0.0
        %2920 = vmatpush1.msra.mxu0 0.0
        %2921 = vmatprep.subr.mxu0 0.0
        %2922 = vmatpush1.msra.mxu0 0.0
        %2923 = vmatprep.subr.mxu0 0.0
        %2924 = vmatpush1.msra.mxu0 0.0
        %2925 = vmatprep.subr.mxu0 0.0
        %2926 = vmatpush1.msra.mxu0 0.0
        %2927 = vmatprep.subr.mxu0 0.0
        %2928 = vmatpush1.msra.mxu0 0.0
        %2929 = vmatprep.subr.mxu0 0.0
        %2930 = vmatpush1.msra.mxu0 0.0
        %2931 = vmatprep.subr.mxu0 0.0
        %2932 = vmatpush1.msra.mxu0 0.0
        %2933 = vmatprep.subr.mxu0 0.0
        %2934 = vmatpush1.msra.mxu0 0.0
        %2935 = vmatprep.subr.mxu0 0.0
        %2936 = vmatpush1.msra.mxu0 0.0
        %2937 = vmatprep.subr.mxu0 0.0
        %2938 = vmatpush1.msra.mxu0 0.0
        %2939 = vmatprep.subr.mxu0 0.0
        %2940 = vmatpush1.msra.mxu0 0.0
        %2941 = vmatprep.subr.mxu0 0.0
        %2942 = vmatpush1.msra.mxu0 0.0
        %2943 = vmatprep.subr.mxu0 0.0
        %2944 = vmatpush1.msra.mxu0 %v2911
        %2945 = vmatprep.subr.mxu0 0.0
        %2946 = vmatpush2.msra.mxu0 0.0
        %2947 = vmatprep.subr.mxu0 0.0
        %2948 = vmatpush2.msra.mxu0 0.0
        %2949 = vmatprep.subr.mxu0 0.0
        %2950 = vmatpush2.msra.mxu0 0.0
        %2951 = vmatprep.subr.mxu0 0.0
        %2952 = vmatpush2.msra.mxu0 0.0
        %2953 = vmatprep.subr.mxu0 0.0
        %2954 = vmatpush2.msra.mxu0 0.0
        %2955 = vmatprep.subr.mxu0 0.0
        %2956 = vmatpush2.msra.mxu0 0.0
        %2957 = vmatprep.subr.mxu0 0.0
        %2958 = vmatpush2.msra.mxu0 0.0
        %2959 = vmatprep.subr.mxu0 0.0
        %2960 = vmatpush2.msra.mxu0 0.0
        %2961 = vmatprep.subr.mxu0 0.0
        %2962 = vmatpush2.msra.mxu0 0.0
        %2963 = vmatprep.subr.mxu0 0.0
        %2964 = vmatpush2.msra.mxu0 0.0
        %2965 = vmatprep.subr.mxu0 0.0
        %2966 = vmatpush2.msra.mxu0 0.0
        %2967 = vmatprep.subr.mxu0 0.0
        %2968 = vmatpush2.msra.mxu0 0.0
        %2969 = vmatprep.subr.mxu0 0.0
        %2970 = vmatpush2.msra.mxu0 0.0
        %2971 = vmatprep.subr.mxu0 0.0
        %2972 = vmatpush2.msra.mxu0 0.0
        %2973 = vmatprep.subr.mxu0 0.0
        %2974 = vmatpush2.msra.mxu0 0.0
        %2975 = vmatprep.subr.mxu0 0.0
        %2976 = vmatpush2.msra.mxu0 0.0
        %2977 = vmatprep.mubr.f32.mxu0 0.0
        %2978 = vmatmul.mubr.f32.gmra.mxu0 %v2863
        %v2979 = vpop.f32.mrf.mxu0
        %v2980 = vadd.f32 0.0, %v2979
        %v2981 = vpop.f32.mrf.mxu0
        %2982 = vmatprep.mubr.f32.mxu0 0.0
        %2983 = vmatmul.mubr.f32.gmra.mxu0 %v2866
        %v2984 = vpop.f32.mrf.mxu0
        %v2985 = vadd.f32 0.0, %v2984
        %v2986 = vpop.f32.mrf.mxu0
        %2987 = vmatprep.mubr.f32.mxu0 0.0
        %2988 = vmatmul.mubr.f32.gmra.mxu0 %v2869
        %v2989 = vpop.f32.mrf.mxu0
        %v2990 = vadd.f32 0.0, %v2989
        %v2991 = vpop.f32.mrf.mxu0
        %2992 = vmatprep.mubr.f32.mxu0 0.0
        %2993 = vmatmul.mubr.f32.gmra.mxu0 %v2872
        %v2994 = vpop.f32.mrf.mxu0
        %v2995 = vadd.f32 0.0, %v2994
        %v2996 = vpop.f32.mrf.mxu0
        %2997 = vmatprep.mubr.f32.mxu0 0.0
        %2998 = vmatmul.mubr.f32.gmra.mxu0 %v2875
        %v2999 = vpop.f32.mrf.mxu0
        %v3000 = vadd.f32 0.0, %v2999
        %v3001 = vpop.f32.mrf.mxu0
        %3002 = vmatprep.mubr.f32.mxu0 0.0
        %3003 = vmatmul.mubr.f32.gmra.mxu0 %v2878
        %v3004 = vpop.f32.mrf.mxu0
        %v3005 = vadd.f32 0.0, %v3004
        %v3006 = vpop.f32.mrf.mxu0
        %3007 = vmatprep.mubr.f32.mxu0 0.0
        %3008 = vmatmul.mubr.f32.gmra.mxu0 %v2881
        %v3009 = vpop.f32.mrf.mxu0
        %v3010 = vadd.f32 0.0, %v3009
        %v3011 = vpop.f32.mrf.mxu0
        %3012 = vmatprep.mubr.f32.mxu0 0.0
        %3013 = vmatmul.mubr.f32.gmra.mxu0 %v2884
        %v3014 = vpop.f32.mrf.mxu0
        %v3015 = vadd.f32 0.0, %v3014
        %v3016 = vpop.f32.mrf.mxu0
        %3017 = vmatprep.mubr.f32.mxu0 0.0
        %3018 = vmatmul.mubr.f32.gmra.mxu0 %v2887
        %v3019 = vpop.f32.mrf.mxu0
        %v3020 = vadd.f32 0.0, %v3019
        %v3021 = vpop.f32.mrf.mxu0
        %3022 = vmatprep.mubr.f32.mxu0 0.0
        %3023 = vmatmul.mubr.f32.gmra.mxu0 %v2890
        %v3024 = vpop.f32.mrf.mxu0
        %v3025 = vadd.f32 0.0, %v3024
        %v3026 = vpop.f32.mrf.mxu0
        %3027 = vmatprep.mubr.f32.mxu0 0.0
        %3028 = vmatmul.mubr.f32.gmra.mxu0 %v2893
        %v3029 = vpop.f32.mrf.mxu0
        %v3030 = vadd.f32 0.0, %v3029
        %v3031 = vpop.f32.mrf.mxu0
        %3032 = vmatprep.mubr.f32.mxu0 0.0
        %3033 = vmatmul.mubr.f32.gmra.mxu0 %v2896
        %v3034 = vpop.f32.mrf.mxu0
        %v3035 = vadd.f32 0.0, %v3034
        %v3036 = vpop.f32.mrf.mxu0
        %3037 = vmatprep.mubr.f32.mxu0 0.0
        %3038 = vmatmul.mubr.f32.gmra.mxu0 %v2899
        %v3039 = vpop.f32.mrf.mxu0
        %v3040 = vadd.f32 0.0, %v3039
        %v3041 = vpop.f32.mrf.mxu0
        %3042 = vmatprep.mubr.f32.mxu0 0.0
        %3043 = vmatmul.mubr.f32.gmra.mxu0 %v2902
        %v3044 = vpop.f32.mrf.mxu0
        %v3045 = vadd.f32 0.0, %v3044
        %v3046 = vpop.f32.mrf.mxu0
        %3047 = vmatprep.mubr.f32.mxu0 0.0
        %3048 = vmatmul.mubr.f32.gmra.mxu0 %v2905
        %v3049 = vpop.f32.mrf.mxu0
        %v3050 = vadd.f32 0.0, %v3049
        %v3051 = vpop.f32.mrf.mxu0
        %3052 = vmatprep.mubr.f32.mxu0 0.0
        %3053 = vmatmul.mubr.f32.gmra.mxu0 %v2908
        %v3054 = vpop.f32.mrf.mxu0
        %v3055 = vadd.f32 0.0, %v3054
        %v3056 = vpop.f32.mrf.mxu0
        %3057 = vdwg.mxu0
        %v3058 = vadd.f32 %v2669, %v2980
        %v3059 = vadd.f32 %v2670, %v2985
        %v3060 = vadd.f32 %v2671, %v2990
        %v3061 = vadd.f32 %v2672, %v2995
        %v3062 = vadd.f32 %v2673, %v3000
        %v3063 = vadd.f32 %v2674, %v3005
        %v3064 = vadd.f32 %v2675, %v3010
        %v3065 = vadd.f32 %v2676, %v3015
        %v3066 = vadd.f32 %v2677, %v3020
        %v3067 = vadd.f32 %v2678, %v3025
        %v3068 = vadd.f32 %v2679, %v3030
        %v3069 = vadd.f32 %v2680, %v3035
        %v3070 = vadd.f32 %v2681, %v3040
        %v3071 = vadd.f32 %v2682, %v3045
        %v3072 = vadd.f32 %v2683, %v3050
        %v3073 = vadd.f32 %v2684, %v3055
        %3074 = vmatprep.subr.mxu0 0.0
        %3075 = vmatpush1.msra.mxu0 0.0
        %3076 = vmatprep.subr.mxu0 0.0
        %3077 = vmatpush1.msra.mxu0 0.0
        %3078 = vmatprep.subr.mxu0 0.0
        %3079 = vmatpush1.msra.mxu0 0.0
        %3080 = vmatprep.subr.mxu0 0.0
        %3081 = vmatpush1.msra.mxu0 0.0
        %3082 = vmatprep.subr.mxu0 0.0
        %3083 = vmatpush1.msra.mxu0 0.0
        %3084 = vmatprep.subr.mxu0 0.0
        %3085 = vmatpush1.msra.mxu0 0.0
        %3086 = vmatprep.subr.mxu0 0.0
        %3087 = vmatpush1.msra.mxu0 0.0
        %3088 = vmatprep.subr.mxu0 0.0
        %3089 = vmatpush1.msra.mxu0 0.0
        %3090 = vmatprep.subr.mxu0 0.0
        %3091 = vmatpush1.msra.mxu0 0.0
        %3092 = vmatprep.subr.mxu0 0.0
        %3093 = vmatpush1.msra.mxu0 0.0
        %3094 = vmatprep.subr.mxu0 0.0
        %3095 = vmatpush1.msra.mxu0 0.0
        %3096 = vmatprep.subr.mxu0 0.0
        %3097 = vmatpush1.msra.mxu0 0.0
        %3098 = vmatprep.subr.mxu0 0.0
        %3099 = vmatpush1.msra.mxu0 0.0
        %3100 = vmatprep.subr.mxu0 0.0
        %3101 = vmatpush1.msra.mxu0 0.0
        %3102 = vmatprep.subr.mxu0 0.0
        %3103 = vmatpush1.msra.mxu0 0.0
        %3104 = vmatprep.subr.mxu0 0.0
        %3105 = vmatpush1.msra.mxu0 %v1741
        %3106 = vmatprep.subr.mxu0 0.0
        %3107 = vmatpush2.msra.mxu0 0.0
        %3108 = vmatprep.subr.mxu0 0.0
        %3109 = vmatpush2.msra.mxu0 0.0
        %3110 = vmatprep.subr.mxu0 0.0
        %3111 = vmatpush2.msra.mxu0 0.0
        %3112 = vmatprep.subr.mxu0 0.0
        %3113 = vmatpush2.msra.mxu0 0.0
        %3114 = vmatprep.subr.mxu0 0.0
        %3115 = vmatpush2.msra.mxu0 0.0
        %3116 = vmatprep.subr.mxu0 0.0
        %3117 = vmatpush2.msra.mxu0 0.0
        %3118 = vmatprep.subr.mxu0 0.0
        %3119 = vmatpush2.msra.mxu0 0.0
        %3120 = vmatprep.subr.mxu0 0.0
        %3121 = vmatpush2.msra.mxu0 0.0
        %3122 = vmatprep.subr.mxu0 0.0
        %3123 = vmatpush2.msra.mxu0 0.0
        %3124 = vmatprep.subr.mxu0 0.0
        %3125 = vmatpush2.msra.mxu0 0.0
        %3126 = vmatprep.subr.mxu0 0.0
        %3127 = vmatpush2.msra.mxu0 0.0
        %3128 = vmatprep.subr.mxu0 0.0
        %3129 = vmatpush2.msra.mxu0 0.0
        %3130 = vmatprep.subr.mxu0 0.0
        %3131 = vmatpush2.msra.mxu0 0.0
        %3132 = vmatprep.subr.mxu0 0.0
        %3133 = vmatpush2.msra.mxu0 0.0
        %3134 = vmatprep.subr.mxu0 0.0
        %3135 = vmatpush2.msra.mxu0 0.0
        %3136 = vmatprep.subr.mxu0 0.0
        %3137 = vmatpush2.msra.mxu0 0.0
        %3138 = vmatprep.mubr.f32.mxu0 0.0
        %3139 = vmatmul.mubr.f32.gmra.mxu0 %v2863
        %v3140 = vpop.f32.mrf.mxu0
        %v3141 = vadd.f32 0.0, %v3140
        %v3142 = vpop.f32.mrf.mxu0
        %3143 = vmatprep.mubr.f32.mxu0 0.0
        %3144 = vmatmul.mubr.f32.gmra.mxu0 %v2866
        %v3145 = vpop.f32.mrf.mxu0
        %v3146 = vadd.f32 0.0, %v3145
        %v3147 = vpop.f32.mrf.mxu0
        %3148 = vmatprep.mubr.f32.mxu0 0.0
        %3149 = vmatmul.mubr.f32.gmra.mxu0 %v2869
        %v3150 = vpop.f32.mrf.mxu0
        %v3151 = vadd.f32 0.0, %v3150
        %v3152 = vpop.f32.mrf.mxu0
        %3153 = vmatprep.mubr.f32.mxu0 0.0
        %3154 = vmatmul.mubr.f32.gmra.mxu0 %v2872
        %v3155 = vpop.f32.mrf.mxu0
        %v3156 = vadd.f32 0.0, %v3155
        %v3157 = vpop.f32.mrf.mxu0
        %3158 = vmatprep.mubr.f32.mxu0 0.0
        %3159 = vmatmul.mubr.f32.gmra.mxu0 %v2875
        %v3160 = vpop.f32.mrf.mxu0
        %v3161 = vadd.f32 0.0, %v3160
        %v3162 = vpop.f32.mrf.mxu0
        %3163 = vmatprep.mubr.f32.mxu0 0.0
        %3164 = vmatmul.mubr.f32.gmra.mxu0 %v2878
        %v3165 = vpop.f32.mrf.mxu0
        %v3166 = vadd.f32 0.0, %v3165
        %v3167 = vpop.f32.mrf.mxu0
        %3168 = vmatprep.mubr.f32.mxu0 0.0
        %3169 = vmatmul.mubr.f32.gmra.mxu0 %v2881
        %v3170 = vpop.f32.mrf.mxu0
        %v3171 = vadd.f32 0.0, %v3170
        %v3172 = vpop.f32.mrf.mxu0
        %3173 = vmatprep.mubr.f32.mxu0 0.0
        %3174 = vmatmul.mubr.f32.gmra.mxu0 %v2884
        %v3175 = vpop.f32.mrf.mxu0
        %v3176 = vadd.f32 0.0, %v3175
        %v3177 = vpop.f32.mrf.mxu0
        %3178 = vmatprep.mubr.f32.mxu0 0.0
        %3179 = vmatmul.mubr.f32.gmra.mxu0 %v2887
        %v3180 = vpop.f32.mrf.mxu0
        %v3181 = vadd.f32 0.0, %v3180
        %v3182 = vpop.f32.mrf.mxu0
        %3183 = vmatprep.mubr.f32.mxu0 0.0
        %3184 = vmatmul.mubr.f32.gmra.mxu0 %v2890
        %v3185 = vpop.f32.mrf.mxu0
        %v3186 = vadd.f32 0.0, %v3185
        %v3187 = vpop.f32.mrf.mxu0
        %3188 = vmatprep.mubr.f32.mxu0 0.0
        %3189 = vmatmul.mubr.f32.gmra.mxu0 %v2893
        %v3190 = vpop.f32.mrf.mxu0
        %v3191 = vadd.f32 0.0, %v3190
        %v3192 = vpop.f32.mrf.mxu0
        %3193 = vmatprep.mubr.f32.mxu0 0.0
        %3194 = vmatmul.mubr.f32.gmra.mxu0 %v2896
        %v3195 = vpop.f32.mrf.mxu0
        %v3196 = vadd.f32 0.0, %v3195
        %v3197 = vpop.f32.mrf.mxu0
        %3198 = vmatprep.mubr.f32.mxu0 0.0
        %3199 = vmatmul.mubr.f32.gmra.mxu0 %v2899
        %v3200 = vpop.f32.mrf.mxu0
        %v3201 = vadd.f32 0.0, %v3200
        %v3202 = vpop.f32.mrf.mxu0
        %3203 = vmatprep.mubr.f32.mxu0 0.0
        %3204 = vmatmul.mubr.f32.gmra.mxu0 %v2902
        %v3205 = vpop.f32.mrf.mxu0
        %v3206 = vadd.f32 0.0, %v3205
        %v3207 = vpop.f32.mrf.mxu0
        %3208 = vmatprep.mubr.f32.mxu0 0.0
        %3209 = vmatmul.mubr.f32.gmra.mxu0 %v2905
        %v3210 = vpop.f32.mrf.mxu0
        %v3211 = vadd.f32 0.0, %v3210
        %v3212 = vpop.f32.mrf.mxu0
        %3213 = vmatprep.mubr.f32.mxu0 0.0
        %3214 = vmatmul.mubr.f32.gmra.mxu0 %v2908
        %v3215 = vpop.f32.mrf.mxu0
        %v3216 = vadd.f32 0.0, %v3215
        %v3217 = vpop.f32.mrf.mxu0
        %3218 = vdwg.mxu0
        %v3219 = vadd.f32 %v2830, %v3141
        %v3220 = vadd.f32 %v2831, %v3146
        %v3221 = vadd.f32 %v2832, %v3151
        %v3222 = vadd.f32 %v2833, %v3156
        %v3223 = vadd.f32 %v2834, %v3161
        %v3224 = vadd.f32 %v2835, %v3166
        %v3225 = vadd.f32 %v2836, %v3171
        %v3226 = vadd.f32 %v2837, %v3176
        %v3227 = vadd.f32 %v2838, %v3181
        %v3228 = vadd.f32 %v2839, %v3186
        %v3229 = vadd.f32 %v2840, %v3191
        %v3230 = vadd.f32 %v2841, %v3196
        %v3231 = vadd.f32 %v2842, %v3201
        %v3232 = vadd.f32 %v2843, %v3206
        %v3233 = vadd.f32 %v2844, %v3211
        %v3234 = vadd.f32 %v2845, %v3216
        %s3235 = sadd.s32 %s270, 3
        %s3236 = smul.u32 %s3235, 128
        %s3237 = scalar_lea.vmem %s165, %s3236
        %v3238 = vld [vmem:[%s3237] sm:$0xff]
        %v3239 = vld [vmem:[%s3237 + $0x8] sm:$0xff]
        %v3240 = vld [vmem:[%s3237 + $0x10] sm:$0xff]
        %v3241 = vld [vmem:[%s3237 + $0x18] sm:$0xff]
        %v3242 = vld [vmem:[%s3237 + $0x20] sm:$0xff]
        %v3243 = vld [vmem:[%s3237 + $0x28] sm:$0xff]
        %v3244 = vld [vmem:[%s3237 + $0x30] sm:$0xff]
        %v3245 = vld [vmem:[%s3237 + $0x38] sm:$0xff]
        %v3246 = vld [vmem:[%s3237 + $0x40] sm:$0xff]
        %v3247 = vld [vmem:[%s3237 + $0x48] sm:$0xff]
        %v3248 = vld [vmem:[%s3237 + $0x50] sm:$0xff]
        %v3249 = vld [vmem:[%s3237 + $0x58] sm:$0xff]
        %v3250 = vld [vmem:[%s3237 + $0x60] sm:$0xff]
        %v3251 = vld [vmem:[%s3237 + $0x68] sm:$0xff]
        %v3252 = vld [vmem:[%s3237 + $0x70] sm:$0xff]
        %v3253 = vld [vmem:[%s3237 + $0x78] sm:$0xf]
        %v3255 = vsel %vm305, %v3238, 0
        %v3258 = vsel %vm305, %v3239, 0
        %v3261 = vsel %vm305, %v3240, 0
        %v3264 = vsel %vm305, %v3241, 0
        %v3267 = vsel %vm305, %v3242, 0
        %v3270 = vsel %vm305, %v3243, 0
        %v3273 = vsel %vm305, %v3244, 0
        %v3276 = vsel %vm305, %v3245, 0
        %v3279 = vsel %vm305, %v3246, 0
        %v3282 = vsel %vm305, %v3247, 0
        %v3285 = vsel %vm305, %v3248, 0
        %v3288 = vsel %vm305, %v3249, 0
        %v3291 = vsel %vm305, %v3250, 0
        %v3294 = vsel %vm305, %v3251, 0
        %v3297 = vsel %vm305, %v3252, 0
        %v3300 = vsel %vm305, %v3253, 0
        %3302 = vmatprep.subr.mxu0 0.0
        %3303 = vmatpush1.msra.mxu0 0.0
        %3304 = vmatprep.subr.mxu0 0.0
        %3305 = vmatpush1.msra.mxu0 0.0
        %3306 = vmatprep.subr.mxu0 0.0
        %3307 = vmatpush1.msra.mxu0 0.0
        %3308 = vmatprep.subr.mxu0 0.0
        %3309 = vmatpush1.msra.mxu0 0.0
        %3310 = vmatprep.subr.mxu0 0.0
        %3311 = vmatpush1.msra.mxu0 0.0
        %3312 = vmatprep.subr.mxu0 0.0
        %3313 = vmatpush1.msra.mxu0 0.0
        %3314 = vmatprep.subr.mxu0 0.0
        %3315 = vmatpush1.msra.mxu0 0.0
        %3316 = vmatprep.subr.mxu0 0.0
        %3317 = vmatpush1.msra.mxu0 0.0
        %3318 = vmatprep.subr.mxu0 0.0
        %3319 = vmatpush1.msra.mxu0 0.0
        %3320 = vmatprep.subr.mxu0 0.0
        %3321 = vmatpush1.msra.mxu0 0.0
        %3322 = vmatprep.subr.mxu0 0.0
        %3323 = vmatpush1.msra.mxu0 0.0
        %3324 = vmatprep.subr.mxu0 0.0
        %3325 = vmatpush1.msra.mxu0 0.0
        %3326 = vmatprep.subr.mxu0 0.0
        %3327 = vmatpush1.msra.mxu0 0.0
        %3328 = vmatprep.subr.mxu0 0.0
        %3329 = vmatpush1.msra.mxu0 0.0
        %3330 = vmatprep.subr.mxu0 0.0
        %3331 = vmatpush1.msra.mxu0 0.0
        %3332 = vmatprep.subr.mxu0 0.0
        %3333 = vmatpush1.msra.mxu0 %v2133
        %3334 = vmatprep.subr.mxu0 0.0
        %3335 = vmatpush2.msra.mxu0 0.0
        %3336 = vmatprep.subr.mxu0 0.0
        %3337 = vmatpush2.msra.mxu0 0.0
        %3338 = vmatprep.subr.mxu0 0.0
        %3339 = vmatpush2.msra.mxu0 0.0
        %3340 = vmatprep.subr.mxu0 0.0
        %3341 = vmatpush2.msra.mxu0 0.0
        %3342 = vmatprep.subr.mxu0 0.0
        %3343 = vmatpush2.msra.mxu0 0.0
        %3344 = vmatprep.subr.mxu0 0.0
        %3345 = vmatpush2.msra.mxu0 0.0
        %3346 = vmatprep.subr.mxu0 0.0
        %3347 = vmatpush2.msra.mxu0 0.0
        %3348 = vmatprep.subr.mxu0 0.0
        %3349 = vmatpush2.msra.mxu0 0.0
        %3350 = vmatprep.subr.mxu0 0.0
        %3351 = vmatpush2.msra.mxu0 0.0
        %3352 = vmatprep.subr.mxu0 0.0
        %3353 = vmatpush2.msra.mxu0 0.0
        %3354 = vmatprep.subr.mxu0 0.0
        %3355 = vmatpush2.msra.mxu0 0.0
        %3356 = vmatprep.subr.mxu0 0.0
        %3357 = vmatpush2.msra.mxu0 0.0
        %3358 = vmatprep.subr.mxu0 0.0
        %3359 = vmatpush2.msra.mxu0 0.0
        %3360 = vmatprep.subr.mxu0 0.0
        %3361 = vmatpush2.msra.mxu0 0.0
        %3362 = vmatprep.subr.mxu0 0.0
        %3363 = vmatpush2.msra.mxu0 0.0
        %3364 = vmatprep.subr.mxu0 0.0
        %3365 = vmatpush2.msra.mxu0 0.0
        %3366 = vmatprep.mubr.f32.mxu0 0.0
        %3367 = vmatmul.mubr.f32.gmra.mxu0 %v3255
        %v3368 = vpop.f32.mrf.mxu0
        %v3369 = vadd.f32 0.0, %v3368
        %v3370 = vpop.f32.mrf.mxu0
        %3371 = vmatprep.mubr.f32.mxu0 0.0
        %3372 = vmatmul.mubr.f32.gmra.mxu0 %v3258
        %v3373 = vpop.f32.mrf.mxu0
        %v3374 = vadd.f32 0.0, %v3373
        %v3375 = vpop.f32.mrf.mxu0
        %3376 = vmatprep.mubr.f32.mxu0 0.0
        %3377 = vmatmul.mubr.f32.gmra.mxu0 %v3261
        %v3378 = vpop.f32.mrf.mxu0
        %v3379 = vadd.f32 0.0, %v3378
        %v3380 = vpop.f32.mrf.mxu0
        %3381 = vmatprep.mubr.f32.mxu0 0.0
        %3382 = vmatmul.mubr.f32.gmra.mxu0 %v3264
        %v3383 = vpop.f32.mrf.mxu0
        %v3384 = vadd.f32 0.0, %v3383
        %v3385 = vpop.f32.mrf.mxu0
        %3386 = vmatprep.mubr.f32.mxu0 0.0
        %3387 = vmatmul.mubr.f32.gmra.mxu0 %v3267
        %v3388 = vpop.f32.mrf.mxu0
        %v3389 = vadd.f32 0.0, %v3388
        %v3390 = vpop.f32.mrf.mxu0
        %3391 = vmatprep.mubr.f32.mxu0 0.0
        %3392 = vmatmul.mubr.f32.gmra.mxu0 %v3270
        %v3393 = vpop.f32.mrf.mxu0
        %v3394 = vadd.f32 0.0, %v3393
        %v3395 = vpop.f32.mrf.mxu0
        %3396 = vmatprep.mubr.f32.mxu0 0.0
        %3397 = vmatmul.mubr.f32.gmra.mxu0 %v3273
        %v3398 = vpop.f32.mrf.mxu0
        %v3399 = vadd.f32 0.0, %v3398
        %v3400 = vpop.f32.mrf.mxu0
        %3401 = vmatprep.mubr.f32.mxu0 0.0
        %3402 = vmatmul.mubr.f32.gmra.mxu0 %v3276
        %v3403 = vpop.f32.mrf.mxu0
        %v3404 = vadd.f32 0.0, %v3403
        %v3405 = vpop.f32.mrf.mxu0
        %3406 = vmatprep.mubr.f32.mxu0 0.0
        %3407 = vmatmul.mubr.f32.gmra.mxu0 %v3279
        %v3408 = vpop.f32.mrf.mxu0
        %v3409 = vadd.f32 0.0, %v3408
        %v3410 = vpop.f32.mrf.mxu0
        %3411 = vmatprep.mubr.f32.mxu0 0.0
        %3412 = vmatmul.mubr.f32.gmra.mxu0 %v3282
        %v3413 = vpop.f32.mrf.mxu0
        %v3414 = vadd.f32 0.0, %v3413
        %v3415 = vpop.f32.mrf.mxu0
        %3416 = vmatprep.mubr.f32.mxu0 0.0
        %3417 = vmatmul.mubr.f32.gmra.mxu0 %v3285
        %v3418 = vpop.f32.mrf.mxu0
        %v3419 = vadd.f32 0.0, %v3418
        %v3420 = vpop.f32.mrf.mxu0
        %3421 = vmatprep.mubr.f32.mxu0 0.0
        %3422 = vmatmul.mubr.f32.gmra.mxu0 %v3288
        %v3423 = vpop.f32.mrf.mxu0
        %v3424 = vadd.f32 0.0, %v3423
        %v3425 = vpop.f32.mrf.mxu0
        %3426 = vmatprep.mubr.f32.mxu0 0.0
        %3427 = vmatmul.mubr.f32.gmra.mxu0 %v3291
        %v3428 = vpop.f32.mrf.mxu0
        %v3429 = vadd.f32 0.0, %v3428
        %v3430 = vpop.f32.mrf.mxu0
        %3431 = vmatprep.mubr.f32.mxu0 0.0
        %3432 = vmatmul.mubr.f32.gmra.mxu0 %v3294
        %v3433 = vpop.f32.mrf.mxu0
        %v3434 = vadd.f32 0.0, %v3433
        %v3435 = vpop.f32.mrf.mxu0
        %3436 = vmatprep.mubr.f32.mxu0 0.0
        %3437 = vmatmul.mubr.f32.gmra.mxu0 %v3297
        %v3438 = vpop.f32.mrf.mxu0
        %v3439 = vadd.f32 0.0, %v3438
        %v3440 = vpop.f32.mrf.mxu0
        %3441 = vmatprep.mubr.f32.mxu0 0.0
        %3442 = vmatmul.mubr.f32.gmra.mxu0 %v3300
        %v3443 = vpop.f32.mrf.mxu0
        %v3444 = vadd.f32 0.0, %v3443
        %v3445 = vpop.f32.mrf.mxu0
        %3446 = vdwg.mxu0
        %v3447 = vadd.f32 %v3219, %v3369
        %v3448 = vadd.f32 %v3220, %v3374
        %v3449 = vadd.f32 %v3221, %v3379
        %v3450 = vadd.f32 %v3222, %v3384
        %v3451 = vadd.f32 %v3223, %v3389
        %v3452 = vadd.f32 %v3224, %v3394
        %v3453 = vadd.f32 %v3225, %v3399
        %v3454 = vadd.f32 %v3226, %v3404
        %v3455 = vadd.f32 %v3227, %v3409
        %v3456 = vadd.f32 %v3228, %v3414
        %v3457 = vadd.f32 %v3229, %v3419
        %v3458 = vadd.f32 %v3230, %v3424
        %v3459 = vadd.f32 %v3231, %v3429
        %v3460 = vadd.f32 %v3232, %v3434
        %v3461 = vadd.f32 %v3233, %v3439
        %v3462 = vadd.f32 %v3234, %v3444
        %v3463 = vld [vmem:[%s3237 + $0x1] sm:$0xff]
        %v3464 = vld [vmem:[%s3237 + $0x9] sm:$0xff]
        %v3465 = vld [vmem:[%s3237 + $0x11] sm:$0xff]
        %v3466 = vld [vmem:[%s3237 + $0x19] sm:$0xff]
        %v3467 = vld [vmem:[%s3237 + $0x21] sm:$0xff]
        %v3468 = vld [vmem:[%s3237 + $0x29] sm:$0xff]
        %v3469 = vld [vmem:[%s3237 + $0x31] sm:$0xff]
        %v3470 = vld [vmem:[%s3237 + $0x39] sm:$0xff]
        %v3471 = vld [vmem:[%s3237 + $0x41] sm:$0xff]
        %v3472 = vld [vmem:[%s3237 + $0x49] sm:$0xff]
        %v3473 = vld [vmem:[%s3237 + $0x51] sm:$0xff]
        %v3474 = vld [vmem:[%s3237 + $0x59] sm:$0xff]
        %v3475 = vld [vmem:[%s3237 + $0x61] sm:$0xff]
        %v3476 = vld [vmem:[%s3237 + $0x69] sm:$0xff]
        %v3477 = vld [vmem:[%s3237 + $0x71] sm:$0xff]
        %v3478 = vld [vmem:[%s3237 + $0x79] sm:$0xf]
        %v3480 = vsel %vm305, %v3463, 0
        %v3483 = vsel %vm305, %v3464, 0
        %v3486 = vsel %vm305, %v3465, 0
        %v3489 = vsel %vm305, %v3466, 0
        %v3492 = vsel %vm305, %v3467, 0
        %v3495 = vsel %vm305, %v3468, 0
        %v3498 = vsel %vm305, %v3469, 0
        %v3501 = vsel %vm305, %v3470, 0
        %v3504 = vsel %vm305, %v3471, 0
        %v3507 = vsel %vm305, %v3472, 0
        %v3510 = vsel %vm305, %v3473, 0
        %v3513 = vsel %vm305, %v3474, 0
        %v3516 = vsel %vm305, %v3475, 0
        %v3519 = vsel %vm305, %v3476, 0
        %v3522 = vsel %vm305, %v3477, 0
        %v3525 = vsel %vm305, %v3478, 0
        %3527 = vmatprep.subr.mxu0 0.0
        %3528 = vmatpush1.msra.mxu0 0.0
        %3529 = vmatprep.subr.mxu0 0.0
        %3530 = vmatpush1.msra.mxu0 0.0
        %3531 = vmatprep.subr.mxu0 0.0
        %3532 = vmatpush1.msra.mxu0 0.0
        %3533 = vmatprep.subr.mxu0 0.0
        %3534 = vmatpush1.msra.mxu0 0.0
        %3535 = vmatprep.subr.mxu0 0.0
        %3536 = vmatpush1.msra.mxu0 0.0
        %3537 = vmatprep.subr.mxu0 0.0
        %3538 = vmatpush1.msra.mxu0 0.0
        %3539 = vmatprep.subr.mxu0 0.0
        %3540 = vmatpush1.msra.mxu0 0.0
        %3541 = vmatprep.subr.mxu0 0.0
        %3542 = vmatpush1.msra.mxu0 0.0
        %3543 = vmatprep.subr.mxu0 0.0
        %3544 = vmatpush1.msra.mxu0 0.0
        %3545 = vmatprep.subr.mxu0 0.0
        %3546 = vmatpush1.msra.mxu0 0.0
        %3547 = vmatprep.subr.mxu0 0.0
        %3548 = vmatpush1.msra.mxu0 0.0
        %3549 = vmatprep.subr.mxu0 0.0
        %3550 = vmatpush1.msra.mxu0 0.0
        %3551 = vmatprep.subr.mxu0 0.0
        %3552 = vmatpush1.msra.mxu0 0.0
        %3553 = vmatprep.subr.mxu0 0.0
        %3554 = vmatpush1.msra.mxu0 0.0
        %3555 = vmatprep.subr.mxu0 0.0
        %3556 = vmatpush1.msra.mxu0 0.0
        %3557 = vmatprep.subr.mxu0 0.0
        %3558 = vmatpush1.msra.mxu0 %v2522
        %3559 = vmatprep.subr.mxu0 0.0
        %3560 = vmatpush2.msra.mxu0 0.0
        %3561 = vmatprep.subr.mxu0 0.0
        %3562 = vmatpush2.msra.mxu0 0.0
        %3563 = vmatprep.subr.mxu0 0.0
        %3564 = vmatpush2.msra.mxu0 0.0
        %3565 = vmatprep.subr.mxu0 0.0
        %3566 = vmatpush2.msra.mxu0 0.0
        %3567 = vmatprep.subr.mxu0 0.0
        %3568 = vmatpush2.msra.mxu0 0.0
        %3569 = vmatprep.subr.mxu0 0.0
        %3570 = vmatpush2.msra.mxu0 0.0
        %3571 = vmatprep.subr.mxu0 0.0
        %3572 = vmatpush2.msra.mxu0 0.0
        %3573 = vmatprep.subr.mxu0 0.0
        %3574 = vmatpush2.msra.mxu0 0.0
        %3575 = vmatprep.subr.mxu0 0.0
        %3576 = vmatpush2.msra.mxu0 0.0
        %3577 = vmatprep.subr.mxu0 0.0
        %3578 = vmatpush2.msra.mxu0 0.0
        %3579 = vmatprep.subr.mxu0 0.0
        %3580 = vmatpush2.msra.mxu0 0.0
        %3581 = vmatprep.subr.mxu0 0.0
        %3582 = vmatpush2.msra.mxu0 0.0
        %3583 = vmatprep.subr.mxu0 0.0
        %3584 = vmatpush2.msra.mxu0 0.0
        %3585 = vmatprep.subr.mxu0 0.0
        %3586 = vmatpush2.msra.mxu0 0.0
        %3587 = vmatprep.subr.mxu0 0.0
        %3588 = vmatpush2.msra.mxu0 0.0
        %3589 = vmatprep.subr.mxu0 0.0
        %3590 = vmatpush2.msra.mxu0 0.0
        %3591 = vmatprep.mubr.f32.mxu0 0.0
        %3592 = vmatmul.mubr.f32.gmra.mxu0 %v3480
        %v3593 = vpop.f32.mrf.mxu0
        %v3594 = vadd.f32 0.0, %v3593
        %v3595 = vpop.f32.mrf.mxu0
        %3596 = vmatprep.mubr.f32.mxu0 0.0
        %3597 = vmatmul.mubr.f32.gmra.mxu0 %v3483
        %v3598 = vpop.f32.mrf.mxu0
        %v3599 = vadd.f32 0.0, %v3598
        %v3600 = vpop.f32.mrf.mxu0
        %3601 = vmatprep.mubr.f32.mxu0 0.0
        %3602 = vmatmul.mubr.f32.gmra.mxu0 %v3486
        %v3603 = vpop.f32.mrf.mxu0
        %v3604 = vadd.f32 0.0, %v3603
        %v3605 = vpop.f32.mrf.mxu0
        %3606 = vmatprep.mubr.f32.mxu0 0.0
        %3607 = vmatmul.mubr.f32.gmra.mxu0 %v3489
        %v3608 = vpop.f32.mrf.mxu0
        %v3609 = vadd.f32 0.0, %v3608
        %v3610 = vpop.f32.mrf.mxu0
        %3611 = vmatprep.mubr.f32.mxu0 0.0
        %3612 = vmatmul.mubr.f32.gmra.mxu0 %v3492
        %v3613 = vpop.f32.mrf.mxu0
        %v3614 = vadd.f32 0.0, %v3613
        %v3615 = vpop.f32.mrf.mxu0
        %3616 = vmatprep.mubr.f32.mxu0 0.0
        %3617 = vmatmul.mubr.f32.gmra.mxu0 %v3495
        %v3618 = vpop.f32.mrf.mxu0
        %v3619 = vadd.f32 0.0, %v3618
        %v3620 = vpop.f32.mrf.mxu0
        %3621 = vmatprep.mubr.f32.mxu0 0.0
        %3622 = vmatmul.mubr.f32.gmra.mxu0 %v3498
        %v3623 = vpop.f32.mrf.mxu0
        %v3624 = vadd.f32 0.0, %v3623
        %v3625 = vpop.f32.mrf.mxu0
        %3626 = vmatprep.mubr.f32.mxu0 0.0
        %3627 = vmatmul.mubr.f32.gmra.mxu0 %v3501
        %v3628 = vpop.f32.mrf.mxu0
        %v3629 = vadd.f32 0.0, %v3628
        %v3630 = vpop.f32.mrf.mxu0
        %3631 = vmatprep.mubr.f32.mxu0 0.0
        %3632 = vmatmul.mubr.f32.gmra.mxu0 %v3504
        %v3633 = vpop.f32.mrf.mxu0
        %v3634 = vadd.f32 0.0, %v3633
        %v3635 = vpop.f32.mrf.mxu0
        %3636 = vmatprep.mubr.f32.mxu0 0.0
        %3637 = vmatmul.mubr.f32.gmra.mxu0 %v3507
        %v3638 = vpop.f32.mrf.mxu0
        %v3639 = vadd.f32 0.0, %v3638
        %v3640 = vpop.f32.mrf.mxu0
        %3641 = vmatprep.mubr.f32.mxu0 0.0
        %3642 = vmatmul.mubr.f32.gmra.mxu0 %v3510
        %v3643 = vpop.f32.mrf.mxu0
        %v3644 = vadd.f32 0.0, %v3643
        %v3645 = vpop.f32.mrf.mxu0
        %3646 = vmatprep.mubr.f32.mxu0 0.0
        %3647 = vmatmul.mubr.f32.gmra.mxu0 %v3513
        %v3648 = vpop.f32.mrf.mxu0
        %v3649 = vadd.f32 0.0, %v3648
        %v3650 = vpop.f32.mrf.mxu0
        %3651 = vmatprep.mubr.f32.mxu0 0.0
        %3652 = vmatmul.mubr.f32.gmra.mxu0 %v3516
        %v3653 = vpop.f32.mrf.mxu0
        %v3654 = vadd.f32 0.0, %v3653
        %v3655 = vpop.f32.mrf.mxu0
        %3656 = vmatprep.mubr.f32.mxu0 0.0
        %3657 = vmatmul.mubr.f32.gmra.mxu0 %v3519
        %v3658 = vpop.f32.mrf.mxu0
        %v3659 = vadd.f32 0.0, %v3658
        %v3660 = vpop.f32.mrf.mxu0
        %3661 = vmatprep.mubr.f32.mxu0 0.0
        %3662 = vmatmul.mubr.f32.gmra.mxu0 %v3522
        %v3663 = vpop.f32.mrf.mxu0
        %v3664 = vadd.f32 0.0, %v3663
        %v3665 = vpop.f32.mrf.mxu0
        %3666 = vmatprep.mubr.f32.mxu0 0.0
        %3667 = vmatmul.mubr.f32.gmra.mxu0 %v3525
        %v3668 = vpop.f32.mrf.mxu0
        %v3669 = vadd.f32 0.0, %v3668
        %v3670 = vpop.f32.mrf.mxu0
        %3671 = vdwg.mxu0
        %v3672 = vadd.f32 %v3447, %v3594
        %v3673 = vadd.f32 %v3448, %v3599
        %v3674 = vadd.f32 %v3449, %v3604
        %v3675 = vadd.f32 %v3450, %v3609
        %v3676 = vadd.f32 %v3451, %v3614
        %v3677 = vadd.f32 %v3452, %v3619
        %v3678 = vadd.f32 %v3453, %v3624
        %v3679 = vadd.f32 %v3454, %v3629
        %v3680 = vadd.f32 %v3455, %v3634
        %v3681 = vadd.f32 %v3456, %v3639
        %v3682 = vadd.f32 %v3457, %v3644
        %v3683 = vadd.f32 %v3458, %v3649
        %v3684 = vadd.f32 %v3459, %v3654
        %v3685 = vadd.f32 %v3460, %v3659
        %v3686 = vadd.f32 %v3461, %v3664
        %v3687 = vadd.f32 %v3462, %v3669
        %v3688 = vld [vmem:[%s3237 + $0x2] sm:$0xff]
        %v3689 = vld [vmem:[%s3237 + $0xa] sm:$0xff]
        %v3690 = vld [vmem:[%s3237 + $0x12] sm:$0xff]
        %v3691 = vld [vmem:[%s3237 + $0x1a] sm:$0xff]
        %v3692 = vld [vmem:[%s3237 + $0x22] sm:$0xff]
        %v3693 = vld [vmem:[%s3237 + $0x2a] sm:$0xff]
        %v3694 = vld [vmem:[%s3237 + $0x32] sm:$0xff]
        %v3695 = vld [vmem:[%s3237 + $0x3a] sm:$0xff]
        %v3696 = vld [vmem:[%s3237 + $0x42] sm:$0xff]
        %v3697 = vld [vmem:[%s3237 + $0x4a] sm:$0xff]
        %v3698 = vld [vmem:[%s3237 + $0x52] sm:$0xff]
        %v3699 = vld [vmem:[%s3237 + $0x5a] sm:$0xff]
        %v3700 = vld [vmem:[%s3237 + $0x62] sm:$0xff]
        %v3701 = vld [vmem:[%s3237 + $0x6a] sm:$0xff]
        %v3702 = vld [vmem:[%s3237 + $0x72] sm:$0xff]
        %v3703 = vld [vmem:[%s3237 + $0x7a] sm:$0xf]
        %v3705 = vsel %vm305, %v3688, 0
        %v3708 = vsel %vm305, %v3689, 0
        %v3711 = vsel %vm305, %v3690, 0
        %v3714 = vsel %vm305, %v3691, 0
        %v3717 = vsel %vm305, %v3692, 0
        %v3720 = vsel %vm305, %v3693, 0
        %v3723 = vsel %vm305, %v3694, 0
        %v3726 = vsel %vm305, %v3695, 0
        %v3729 = vsel %vm305, %v3696, 0
        %v3732 = vsel %vm305, %v3697, 0
        %v3735 = vsel %vm305, %v3698, 0
        %v3738 = vsel %vm305, %v3699, 0
        %v3741 = vsel %vm305, %v3700, 0
        %v3744 = vsel %vm305, %v3701, 0
        %v3747 = vsel %vm305, %v3702, 0
        %v3750 = vsel %vm305, %v3703, 0
        %3752 = vmatprep.subr.mxu0 0.0
        %3753 = vmatpush1.msra.mxu0 0.0
        %3754 = vmatprep.subr.mxu0 0.0
        %3755 = vmatpush1.msra.mxu0 0.0
        %3756 = vmatprep.subr.mxu0 0.0
        %3757 = vmatpush1.msra.mxu0 0.0
        %3758 = vmatprep.subr.mxu0 0.0
        %3759 = vmatpush1.msra.mxu0 0.0
        %3760 = vmatprep.subr.mxu0 0.0
        %3761 = vmatpush1.msra.mxu0 0.0
        %3762 = vmatprep.subr.mxu0 0.0
        %3763 = vmatpush1.msra.mxu0 0.0
        %3764 = vmatprep.subr.mxu0 0.0
        %3765 = vmatpush1.msra.mxu0 0.0
        %3766 = vmatprep.subr.mxu0 0.0
        %3767 = vmatpush1.msra.mxu0 0.0
        %3768 = vmatprep.subr.mxu0 0.0
        %3769 = vmatpush1.msra.mxu0 0.0
        %3770 = vmatprep.subr.mxu0 0.0
        %3771 = vmatpush1.msra.mxu0 0.0
        %3772 = vmatprep.subr.mxu0 0.0
        %3773 = vmatpush1.msra.mxu0 0.0
        %3774 = vmatprep.subr.mxu0 0.0
        %3775 = vmatpush1.msra.mxu0 0.0
        %3776 = vmatprep.subr.mxu0 0.0
        %3777 = vmatpush1.msra.mxu0 0.0
        %3778 = vmatprep.subr.mxu0 0.0
        %3779 = vmatpush1.msra.mxu0 0.0
        %3780 = vmatprep.subr.mxu0 0.0
        %3781 = vmatpush1.msra.mxu0 0.0
        %3782 = vmatprep.subr.mxu0 0.0
        %3783 = vmatpush1.msra.mxu0 %v2911
        %3784 = vmatprep.subr.mxu0 0.0
        %3785 = vmatpush2.msra.mxu0 0.0
        %3786 = vmatprep.subr.mxu0 0.0
        %3787 = vmatpush2.msra.mxu0 0.0
        %3788 = vmatprep.subr.mxu0 0.0
        %3789 = vmatpush2.msra.mxu0 0.0
        %3790 = vmatprep.subr.mxu0 0.0
        %3791 = vmatpush2.msra.mxu0 0.0
        %3792 = vmatprep.subr.mxu0 0.0
        %3793 = vmatpush2.msra.mxu0 0.0
        %3794 = vmatprep.subr.mxu0 0.0
        %3795 = vmatpush2.msra.mxu0 0.0
        %3796 = vmatprep.subr.mxu0 0.0
        %3797 = vmatpush2.msra.mxu0 0.0
        %3798 = vmatprep.subr.mxu0 0.0
        %3799 = vmatpush2.msra.mxu0 0.0
        %3800 = vmatprep.subr.mxu0 0.0
        %3801 = vmatpush2.msra.mxu0 0.0
        %3802 = vmatprep.subr.mxu0 0.0
        %3803 = vmatpush2.msra.mxu0 0.0
        %3804 = vmatprep.subr.mxu0 0.0
        %3805 = vmatpush2.msra.mxu0 0.0
        %3806 = vmatprep.subr.mxu0 0.0
        %3807 = vmatpush2.msra.mxu0 0.0
        %3808 = vmatprep.subr.mxu0 0.0
        %3809 = vmatpush2.msra.mxu0 0.0
        %3810 = vmatprep.subr.mxu0 0.0
        %3811 = vmatpush2.msra.mxu0 0.0
        %3812 = vmatprep.subr.mxu0 0.0
        %3813 = vmatpush2.msra.mxu0 0.0
        %3814 = vmatprep.subr.mxu0 0.0
        %3815 = vmatpush2.msra.mxu0 0.0
        %3816 = vmatprep.mubr.f32.mxu0 0.0
        %3817 = vmatmul.mubr.f32.gmra.mxu0 %v3705
        %v3818 = vpop.f32.mrf.mxu0
        %v3819 = vadd.f32 0.0, %v3818
        %v3820 = vpop.f32.mrf.mxu0
        %3821 = vmatprep.mubr.f32.mxu0 0.0
        %3822 = vmatmul.mubr.f32.gmra.mxu0 %v3708
        %v3823 = vpop.f32.mrf.mxu0
        %v3824 = vadd.f32 0.0, %v3823
        %v3825 = vpop.f32.mrf.mxu0
        %3826 = vmatprep.mubr.f32.mxu0 0.0
        %3827 = vmatmul.mubr.f32.gmra.mxu0 %v3711
        %v3828 = vpop.f32.mrf.mxu0
        %v3829 = vadd.f32 0.0, %v3828
        %v3830 = vpop.f32.mrf.mxu0
        %3831 = vmatprep.mubr.f32.mxu0 0.0
        %3832 = vmatmul.mubr.f32.gmra.mxu0 %v3714
        %v3833 = vpop.f32.mrf.mxu0
        %v3834 = vadd.f32 0.0, %v3833
        %v3835 = vpop.f32.mrf.mxu0
        %3836 = vmatprep.mubr.f32.mxu0 0.0
        %3837 = vmatmul.mubr.f32.gmra.mxu0 %v3717
        %v3838 = vpop.f32.mrf.mxu0
        %v3839 = vadd.f32 0.0, %v3838
        %v3840 = vpop.f32.mrf.mxu0
        %3841 = vmatprep.mubr.f32.mxu0 0.0
        %3842 = vmatmul.mubr.f32.gmra.mxu0 %v3720
        %v3843 = vpop.f32.mrf.mxu0
        %v3844 = vadd.f32 0.0, %v3843
        %v3845 = vpop.f32.mrf.mxu0
        %3846 = vmatprep.mubr.f32.mxu0 0.0
        %3847 = vmatmul.mubr.f32.gmra.mxu0 %v3723
        %v3848 = vpop.f32.mrf.mxu0
        %v3849 = vadd.f32 0.0, %v3848
        %v3850 = vpop.f32.mrf.mxu0
        %3851 = vmatprep.mubr.f32.mxu0 0.0
        %3852 = vmatmul.mubr.f32.gmra.mxu0 %v3726
        %v3853 = vpop.f32.mrf.mxu0
        %v3854 = vadd.f32 0.0, %v3853
        %v3855 = vpop.f32.mrf.mxu0
        %3856 = vmatprep.mubr.f32.mxu0 0.0
        %3857 = vmatmul.mubr.f32.gmra.mxu0 %v3729
        %v3858 = vpop.f32.mrf.mxu0
        %v3859 = vadd.f32 0.0, %v3858
        %v3860 = vpop.f32.mrf.mxu0
        %3861 = vmatprep.mubr.f32.mxu0 0.0
        %3862 = vmatmul.mubr.f32.gmra.mxu0 %v3732
        %v3863 = vpop.f32.mrf.mxu0
        %v3864 = vadd.f32 0.0, %v3863
        %v3865 = vpop.f32.mrf.mxu0
        %3866 = vmatprep.mubr.f32.mxu0 0.0
        %3867 = vmatmul.mubr.f32.gmra.mxu0 %v3735
        %v3868 = vpop.f32.mrf.mxu0
        %v3869 = vadd.f32 0.0, %v3868
        %v3870 = vpop.f32.mrf.mxu0
        %3871 = vmatprep.mubr.f32.mxu0 0.0
        %3872 = vmatmul.mubr.f32.gmra.mxu0 %v3738
        %v3873 = vpop.f32.mrf.mxu0
        %v3874 = vadd.f32 0.0, %v3873
        %v3875 = vpop.f32.mrf.mxu0
        %3876 = vmatprep.mubr.f32.mxu0 0.0
        %3877 = vmatmul.mubr.f32.gmra.mxu0 %v3741
        %v3878 = vpop.f32.mrf.mxu0
        %v3879 = vadd.f32 0.0, %v3878
        %v3880 = vpop.f32.mrf.mxu0
        %3881 = vmatprep.mubr.f32.mxu0 0.0
        %3882 = vmatmul.mubr.f32.gmra.mxu0 %v3744
        %v3883 = vpop.f32.mrf.mxu0
        %v3884 = vadd.f32 0.0, %v3883
        %v3885 = vpop.f32.mrf.mxu0
        %3886 = vmatprep.mubr.f32.mxu0 0.0
        %3887 = vmatmul.mubr.f32.gmra.mxu0 %v3747
        %v3888 = vpop.f32.mrf.mxu0
        %v3889 = vadd.f32 0.0, %v3888
        %v3890 = vpop.f32.mrf.mxu0
        %3891 = vmatprep.mubr.f32.mxu0 0.0
        %3892 = vmatmul.mubr.f32.gmra.mxu0 %v3750
        %v3893 = vpop.f32.mrf.mxu0
        %v3894 = vadd.f32 0.0, %v3893
        %v3895 = vpop.f32.mrf.mxu0
        %3896 = vdwg.mxu0
        %v3897 = vadd.f32 %v3672, %v3819
        %v3898 = vadd.f32 %v3673, %v3824
        %v3899 = vadd.f32 %v3674, %v3829
        %v3900 = vadd.f32 %v3675, %v3834
        %v3901 = vadd.f32 %v3676, %v3839
        %v3902 = vadd.f32 %v3677, %v3844
        %v3903 = vadd.f32 %v3678, %v3849
        %v3904 = vadd.f32 %v3679, %v3854
        %v3905 = vadd.f32 %v3680, %v3859
        %v3906 = vadd.f32 %v3681, %v3864
        %v3907 = vadd.f32 %v3682, %v3869
        %v3908 = vadd.f32 %v3683, %v3874
        %v3909 = vadd.f32 %v3684, %v3879
        %v3910 = vadd.f32 %v3685, %v3884
        %v3911 = vadd.f32 %v3686, %v3889
        %v3912 = vadd.f32 %v3687, %v3894
        %v3913 = vmax.f32 %v3058, %v3897
        %v3914 = vmax.f32 %v3059, %v3898
        %v3915 = vmax.f32 %v3060, %v3899
        %v3916 = vmax.f32 %v3061, %v3900
        %v3917 = vmax.f32 %v3062, %v3901
        %v3918 = vmax.f32 %v3063, %v3902
        %v3919 = vmax.f32 %v3064, %v3903
        %v3920 = vmax.f32 %v3065, %v3904
        %v3921 = vmax.f32 %v3066, %v3905
        %v3922 = vmax.f32 %v3067, %v3906
        %v3923 = vmax.f32 %v3068, %v3907
        %v3924 = vmax.f32 %v3069, %v3908
        %v3925 = vmax.f32 %v3070, %v3909
        %v3926 = vmax.f32 %v3071, %v3910
        %v3927 = vmax.f32 %v3072, %v3911
        %v3928 = vmax.f32 %v3073, %v3912
        %v3930 = vlaneseq
        %v3931 = vshrl.u32 %v3930, 7
        %v3932 = vsub.s32 0, %v3931
        %v3933 = vrot.slane %v188, %v3932
        %v3935 = vadd.f32 %v3913, %v3933
        %v3936 = vadd.f32 %v3914, %v3933
        %v3937 = vadd.f32 %v3915, %v3933
        %v3938 = vadd.f32 %v3916, %v3933
        %v3939 = vadd.f32 %v3917, %v3933
        %v3940 = vadd.f32 %v3918, %v3933
        %v3941 = vadd.f32 %v3919, %v3933
        %v3942 = vadd.f32 %v3920, %v3933
        %v3943 = vadd.f32 %v3921, %v3933
        %v3944 = vadd.f32 %v3922, %v3933
        %v3945 = vadd.f32 %v3923, %v3933
        %v3946 = vadd.f32 %v3924, %v3933
        %v3947 = vadd.f32 %v3925, %v3933
        %v3948 = vadd.f32 %v3926, %v3933
        %v3949 = vadd.f32 %v3927, %v3933
        %v3950 = vadd.f32 %v3928, %v3933
        %v3951 = vmax.f32 %v3935, 0.0
        %v3952 = vmax.f32 %v3936, 0.0
        %v3953 = vmax.f32 %v3937, 0.0
        %v3954 = vmax.f32 %v3938, 0.0
        %v3955 = vmax.f32 %v3939, 0.0
        %v3956 = vmax.f32 %v3940, 0.0
        %v3957 = vmax.f32 %v3941, 0.0
        %v3958 = vmax.f32 %v3942, 0.0
        %v3959 = vmax.f32 %v3943, 0.0
        %v3960 = vmax.f32 %v3944, 0.0
        %v3961 = vmax.f32 %v3945, 0.0
        %v3962 = vmax.f32 %v3946, 0.0
        %v3963 = vmax.f32 %v3947, 0.0
        %v3964 = vmax.f32 %v3948, 0.0
        %v3965 = vmax.f32 %v3949, 0.0
        %v3966 = vmax.f32 %v3950, 0.0
        %vm3967 = vcmask 1014784
        %v3969 = vsel %vm3967, %v224, 0
        %v3972 = vsel %vm3967, %v225, 0
        %v3975 = vsel %vm3967, %v226, 0
        %v3978 = vsel %vm3967, %v227, 0
        %v3981 = vsel %vm3967, %v228, 0
        %v3984 = vsel %vm3967, %v229, 0
        %v3987 = vsel %vm3967, %v230, 0
        %v3990 = vsel %vm3967, %v231, 0
        %vm3992 = vcmask 1043456
        %v3994 = vsel %vm3992, %v3966, 0
        %3996 = vmatprep.subr.mxu0 0.0
        %3997 = vmatpush1.msra.mxu0 %v3994
        %3998 = vmatprep.subr.mxu0 0.0
        %3999 = vmatpush1.msra.mxu0 %v3965
        %4000 = vmatprep.subr.mxu0 0.0
        %4001 = vmatpush1.msra.mxu0 %v3964
        %4002 = vmatprep.subr.mxu0 0.0
        %4003 = vmatpush1.msra.mxu0 %v3963
        %4004 = vmatprep.subr.mxu0 0.0
        %4005 = vmatpush1.msra.mxu0 %v3962
        %4006 = vmatprep.subr.mxu0 0.0
        %4007 = vmatpush1.msra.mxu0 %v3961
        %4008 = vmatprep.subr.mxu0 0.0
        %4009 = vmatpush1.msra.mxu0 %v3960
        %4010 = vmatprep.subr.mxu0 0.0
        %4011 = vmatpush1.msra.mxu0 %v3959
        %4012 = vmatprep.subr.mxu0 0.0
        %4013 = vmatpush1.msra.mxu0 %v3958
        %4014 = vmatprep.subr.mxu0 0.0
        %4015 = vmatpush1.msra.mxu0 %v3957
        %4016 = vmatprep.subr.mxu0 0.0
        %4017 = vmatpush1.msra.mxu0 %v3956
        %4018 = vmatprep.subr.mxu0 0.0
        %4019 = vmatpush1.msra.mxu0 %v3955
        %4020 = vmatprep.subr.mxu0 0.0
        %4021 = vmatpush1.msra.mxu0 %v3954
        %4022 = vmatprep.subr.mxu0 0.0
        %4023 = vmatpush1.msra.mxu0 %v3953
        %4024 = vmatprep.subr.mxu0 0.0
        %4025 = vmatpush1.msra.mxu0 %v3952
        %4026 = vmatprep.subr.mxu0 0.0
        %4027 = vmatpush1.msra.mxu0 %v3951
        %4028 = vmatprep.subr.mxu0 0.0
        %4029 = vmatpush2.msra.mxu0 0.0
        %4030 = vmatprep.subr.mxu0 0.0
        %4031 = vmatpush2.msra.mxu0 0.0
        %4032 = vmatprep.subr.mxu0 0.0
        %4033 = vmatpush2.msra.mxu0 0.0
        %4034 = vmatprep.subr.mxu0 0.0
        %4035 = vmatpush2.msra.mxu0 0.0
        %4036 = vmatprep.subr.mxu0 0.0
        %4037 = vmatpush2.msra.mxu0 0.0
        %4038 = vmatprep.subr.mxu0 0.0
        %4039 = vmatpush2.msra.mxu0 0.0
        %4040 = vmatprep.subr.mxu0 0.0
        %4041 = vmatpush2.msra.mxu0 0.0
        %4042 = vmatprep.subr.mxu0 0.0
        %4043 = vmatpush2.msra.mxu0 0.0
        %4044 = vmatprep.subr.mxu0 0.0
        %4045 = vmatpush2.msra.mxu0 0.0
        %4046 = vmatprep.subr.mxu0 0.0
        %4047 = vmatpush2.msra.mxu0 0.0
        %4048 = vmatprep.subr.mxu0 0.0
        %4049 = vmatpush2.msra.mxu0 0.0
        %4050 = vmatprep.subr.mxu0 0.0
        %4051 = vmatpush2.msra.mxu0 0.0
        %4052 = vmatprep.subr.mxu0 0.0
        %4053 = vmatpush2.msra.mxu0 0.0
        %4054 = vmatprep.subr.mxu0 0.0
        %4055 = vmatpush2.msra.mxu0 0.0
        %4056 = vmatprep.subr.mxu0 0.0
        %4057 = vmatpush2.msra.mxu0 0.0
        %4058 = vmatprep.subr.mxu0 0.0
        %4059 = vmatpush2.msra.mxu0 0.0
        %4060 = vmatprep.mubr.f32.mxu0 0.0
        %4061 = vmatmul.mubr.f32.gmra.mxu0 %v3969
        %v4062 = vpop.f32.mrf.mxu0
        %v4063 = vadd.f32 0.0, %v4062
        %v4064 = vpop.f32.mrf.mxu0
        %4065 = vmatprep.mubr.f32.mxu0 0.0
        %4066 = vmatmul.mubr.f32.gmra.mxu0 %v3972
        %v4067 = vpop.f32.mrf.mxu0
        %v4068 = vadd.f32 0.0, %v4067
        %v4069 = vpop.f32.mrf.mxu0
        %4070 = vmatprep.mubr.f32.mxu0 0.0
        %4071 = vmatmul.mubr.f32.gmra.mxu0 %v3975
        %v4072 = vpop.f32.mrf.mxu0
        %v4073 = vadd.f32 0.0, %v4072
        %v4074 = vpop.f32.mrf.mxu0
        %4075 = vmatprep.mubr.f32.mxu0 0.0
        %4076 = vmatmul.mubr.f32.gmra.mxu0 %v3978
        %v4077 = vpop.f32.mrf.mxu0
        %v4078 = vadd.f32 0.0, %v4077
        %v4079 = vpop.f32.mrf.mxu0
        %4080 = vmatprep.mubr.f32.mxu0 0.0
        %4081 = vmatmul.mubr.f32.gmra.mxu0 %v3981
        %v4082 = vpop.f32.mrf.mxu0
        %v4083 = vadd.f32 0.0, %v4082
        %v4084 = vpop.f32.mrf.mxu0
        %4085 = vmatprep.mubr.f32.mxu0 0.0
        %4086 = vmatmul.mubr.f32.gmra.mxu0 %v3984
        %v4087 = vpop.f32.mrf.mxu0
        %v4088 = vadd.f32 0.0, %v4087
        %v4089 = vpop.f32.mrf.mxu0
        %4090 = vmatprep.mubr.f32.mxu0 0.0
        %4091 = vmatmul.mubr.f32.gmra.mxu0 %v3987
        %v4092 = vpop.f32.mrf.mxu0
        %v4093 = vadd.f32 0.0, %v4092
        %v4094 = vpop.f32.mrf.mxu0
        %4095 = vmatprep.mubr.f32.mxu0 0.0
        %4096 = vmatmul.mubr.f32.gmra.mxu0 %v3990
        %v4097 = vpop.f32.mrf.mxu0
        %v4098 = vadd.f32 0.0, %v4097
        %v4099 = vpop.f32.mrf.mxu0
        %4100 = vdwg.mxu0
        %v4102 = vsel %vm3967, %v256, 0
        %v4105 = vsel %vm3967, %v257, 0
        %v4108 = vsel %vm3967, %v258, 0
        %v4111 = vsel %vm3967, %v259, 0
        %v4114 = vsel %vm3967, %v260, 0
        %v4117 = vsel %vm3967, %v261, 0
        %v4120 = vsel %vm3967, %v262, 0
        %v4123 = vsel %vm3967, %v263, 0
        %4125 = vmatprep.subr.mxu0 0.0
        %4126 = vmatpush1.msra.mxu0 %v3994
        %4127 = vmatprep.subr.mxu0 0.0
        %4128 = vmatpush1.msra.mxu0 %v3965
        %4129 = vmatprep.subr.mxu0 0.0
        %4130 = vmatpush1.msra.mxu0 %v3964
        %4131 = vmatprep.subr.mxu0 0.0
        %4132 = vmatpush1.msra.mxu0 %v3963
        %4133 = vmatprep.subr.mxu0 0.0
        %4134 = vmatpush1.msra.mxu0 %v3962
        %4135 = vmatprep.subr.mxu0 0.0
        %4136 = vmatpush1.msra.mxu0 %v3961
        %4137 = vmatprep.subr.mxu0 0.0
        %4138 = vmatpush1.msra.mxu0 %v3960
        %4139 = vmatprep.subr.mxu0 0.0
        %4140 = vmatpush1.msra.mxu0 %v3959
        %4141 = vmatprep.subr.mxu0 0.0
        %4142 = vmatpush1.msra.mxu0 %v3958
        %4143 = vmatprep.subr.mxu0 0.0
        %4144 = vmatpush1.msra.mxu0 %v3957
        %4145 = vmatprep.subr.mxu0 0.0
        %4146 = vmatpush1.msra.mxu0 %v3956
        %4147 = vmatprep.subr.mxu0 0.0
        %4148 = vmatpush1.msra.mxu0 %v3955
        %4149 = vmatprep.subr.mxu0 0.0
        %4150 = vmatpush1.msra.mxu0 %v3954
        %4151 = vmatprep.subr.mxu0 0.0
        %4152 = vmatpush1.msra.mxu0 %v3953
        %4153 = vmatprep.subr.mxu0 0.0
        %4154 = vmatpush1.msra.mxu0 %v3952
        %4155 = vmatprep.subr.mxu0 0.0
        %4156 = vmatpush1.msra.mxu0 %v3951
        %4157 = vmatprep.subr.mxu0 0.0
        %4158 = vmatpush2.msra.mxu0 0.0
        %4159 = vmatprep.subr.mxu0 0.0
        %4160 = vmatpush2.msra.mxu0 0.0
        %4161 = vmatprep.subr.mxu0 0.0
        %4162 = vmatpush2.msra.mxu0 0.0
        %4163 = vmatprep.subr.mxu0 0.0
        %4164 = vmatpush2.msra.mxu0 0.0
        %4165 = vmatprep.subr.mxu0 0.0
        %4166 = vmatpush2.msra.mxu0 0.0
        %4167 = vmatprep.subr.mxu0 0.0
        %4168 = vmatpush2.msra.mxu0 0.0
        %4169 = vmatprep.subr.mxu0 0.0
        %4170 = vmatpush2.msra.mxu0 0.0
        %4171 = vmatprep.subr.mxu0 0.0
        %4172 = vmatpush2.msra.mxu0 0.0
        %4173 = vmatprep.subr.mxu0 0.0
        %4174 = vmatpush2.msra.mxu0 0.0
        %4175 = vmatprep.subr.mxu0 0.0
        %4176 = vmatpush2.msra.mxu0 0.0
        %4177 = vmatprep.subr.mxu0 0.0
        %4178 = vmatpush2.msra.mxu0 0.0
        %4179 = vmatprep.subr.mxu0 0.0
        %4180 = vmatpush2.msra.mxu0 0.0
        %4181 = vmatprep.subr.mxu0 0.0
        %4182 = vmatpush2.msra.mxu0 0.0
        %4183 = vmatprep.subr.mxu0 0.0
        %4184 = vmatpush2.msra.mxu0 0.0
        %4185 = vmatprep.subr.mxu0 0.0
        %4186 = vmatpush2.msra.mxu0 0.0
        %4187 = vmatprep.subr.mxu0 0.0
        %4188 = vmatpush2.msra.mxu0 0.0
        %4189 = vmatprep.mubr.f32.mxu0 0.0
        %4190 = vmatmul.mubr.f32.gmra.mxu0 %v4102
        %v4191 = vpop.f32.mrf.mxu0
        %v4192 = vadd.f32 0.0, %v4191
        %v4193 = vpop.f32.mrf.mxu0
        %4194 = vmatprep.mubr.f32.mxu0 0.0
        %4195 = vmatmul.mubr.f32.gmra.mxu0 %v4105
        %v4196 = vpop.f32.mrf.mxu0
        %v4197 = vadd.f32 0.0, %v4196
        %v4198 = vpop.f32.mrf.mxu0
        %4199 = vmatprep.mubr.f32.mxu0 0.0
        %4200 = vmatmul.mubr.f32.gmra.mxu0 %v4108
        %v4201 = vpop.f32.mrf.mxu0
        %v4202 = vadd.f32 0.0, %v4201
        %v4203 = vpop.f32.mrf.mxu0
        %4204 = vmatprep.mubr.f32.mxu0 0.0
        %4205 = vmatmul.mubr.f32.gmra.mxu0 %v4111
        %v4206 = vpop.f32.mrf.mxu0
        %v4207 = vadd.f32 0.0, %v4206
        %v4208 = vpop.f32.mrf.mxu0
        %4209 = vmatprep.mubr.f32.mxu0 0.0
        %4210 = vmatmul.mubr.f32.gmra.mxu0 %v4114
        %v4211 = vpop.f32.mrf.mxu0
        %v4212 = vadd.f32 0.0, %v4211
        %v4213 = vpop.f32.mrf.mxu0
        %4214 = vmatprep.mubr.f32.mxu0 0.0
        %4215 = vmatmul.mubr.f32.gmra.mxu0 %v4117
        %v4216 = vpop.f32.mrf.mxu0
        %v4217 = vadd.f32 0.0, %v4216
        %v4218 = vpop.f32.mrf.mxu0
        %4219 = vmatprep.mubr.f32.mxu0 0.0
        %4220 = vmatmul.mubr.f32.gmra.mxu0 %v4120
        %v4221 = vpop.f32.mrf.mxu0
        %v4222 = vadd.f32 0.0, %v4221
        %v4223 = vpop.f32.mrf.mxu0
        %4224 = vmatprep.mubr.f32.mxu0 0.0
        %4225 = vmatmul.mubr.f32.gmra.mxu0 %v4123
        %v4226 = vpop.f32.mrf.mxu0
        %v4227 = vadd.f32 0.0, %v4226
        %v4228 = vpop.f32.mrf.mxu0
        %4229 = vdwg.mxu0
        %v4230 = vmax.f32 %v4063, %v4192
        %v4231 = vmax.f32 %v4068, %v4197
        %v4232 = vmax.f32 %v4073, %v4202
        %v4233 = vmax.f32 %v4078, %v4207
        %v4234 = vmax.f32 %v4083, %v4212
        %v4235 = vmax.f32 %v4088, %v4217
        %v4236 = vmax.f32 %v4093, %v4222
        %v4237 = vmax.f32 %v4098, %v4227
        %s4238 = smul.u32 %s265, 64
        %s4239 = scalar_lea.vmem %s170, %s4238
        %vm4240 = vcmask 130048
        %4241 = vst.msk [vmem:[%s4239] sm:$0xff] %vm4240, %v4230
        %4242 = vst.msk [vmem:[%s4239 + $0x8] sm:$0xff] %vm4240, %v4231
        %4243 = vst.msk [vmem:[%s4239 + $0x10] sm:$0xff] %vm4240, %v4232
        %4244 = vst.msk [vmem:[%s4239 + $0x18] sm:$0xff] %vm4240, %v4233
        %4245 = vst.msk [vmem:[%s4239 + $0x20] sm:$0xff] %vm4240, %v4234
        %4246 = vst.msk [vmem:[%s4239 + $0x28] sm:$0xff] %vm4240, %v4235
        %4247 = vst.msk [vmem:[%s4239 + $0x30] sm:$0xff] %vm4240, %v4236
        %vm4248 = vcmask 128000
        %4249 = vst.msk [vmem:[%s4239 + $0x38] sm:$0x3f] %vm4248, %v4237
      $region37: #{cnn1_forward.4} parent=31 // loop_footer
        %s269 = sadd.s32 1, %s265
      $region38: #{cnn1_forward.4} parent=31 // loop_footer_branch
        %264 = sbr.rel target = $region34
      $region39: #{cnn1_forward.4} parent=31 // loop_exit
        _
      %p4250 = scmp.lt.s32.totalorder %s14, 1
      %s4251 = scalar_select %p4250, %s14, 1
      %s4252 = smul.addr %s4251, 496
      %s4253 = smul.addr %s4252, 8
      %s4254 = scalar_lea.vmem %s3, %s4253
      // Predicated region
      $region40: #{cnn1_forward.4} parent=31 // pred_check
        %p4255 = pneg %p100
      $region41: #{cnn1_forward.4} parent=31 // pred_check_branch
        %4257 = sbr.rel (%p4255) target = $region43
      $region42: #{cnn1_forward.4} parent=31 // pred_region
        _
      $region43: #{cnn1_forward.4} parent=31 // pred_fallthru
        _
    $region32: #{cnn1_forward.4} parent=5 // pred_fallthru
      _
    %p4258 = scmp.le.s32.totalorder 2, %s9
    // Predicated region
    $region44: #{cnn1_forward.4} parent=5 // pred_check
      %p4259 = pneg %p4258
    $region45: #{cnn1_forward.4} parent=5 // pred_check_branch
      %4261 = sbr.rel (%p4259) target = $region47
    $region46: #{cnn1_forward.4} parent=5 // pred_region
      %s4262 = ssub.s32 %s9, 2
      // Predicated region
      $region48: #{cnn1_forward.4} parent=46 // pred_check
        %p4263 = pneg %p106
      $region49: #{cnn1_forward.4} parent=46 // pred_check_branch
        %4265 = sbr.rel (%p4263) target = $region51
      $region50: #{cnn1_forward.4} parent=46 // pred_region
        %p4266 = scmp.lt.s32.totalorder %s15, 1
        %s4267 = scalar_select %p4266, %s15, 1
        %s4268 = smul.addr %s4267, 496
        %s4269 = smul.addr %s4268, 8
        %s4270 = scalar_lea.vmem %s3, %s4269
      $region51: #{cnn1_forward.4} parent=46 // pred_fallthru
        _
    $region47: #{cnn1_forward.4} parent=5 // pred_fallthru
      _
  $region6: #{cnn1_forward.4} parent=0 // loop_footer
    %s13 = sadd.s32 1, %s9
  $region7: #{cnn1_forward.4} parent=0 // loop_footer_branch
    %8 = sbr.rel target = $region3
  $region8: #{cnn1_forward.4} parent=0 // loop_exit
    _

// kernel: cnn1_forward.7
$region0: #{cnn1_forward.7}
  #allocation0 [shape = 'u32[]', space=smem, size = 0x4, offset = 0x4, fixed_abs, tag = 'smem constant byte address 0x4 - core index']
  #allocation1 [shape = 'u32[144,128]{1,0:T(1,128)}', space=vmem, size = 0x12000, scoped, tag = 'internal scratch']
  #allocation2 [shape = 'f32[2,128]{1,0:T(2,128)}', space=vmem, size = 0x400, scoped, tag = 'scratch operand']
  %s0 = inlined_call_operand.vmem [shape: f32[2,12544], index: 0, kind: input, shape index: {}]
  %s1 = inlined_call_operand.vmem [shape: f32[12544,128], index: 1, kind: input, shape index: {}]
  %s2 = inlined_call_operand.vmem [shape: f32[1,128], index: 2, kind: input, shape index: {}]
  %s3 = inlined_call_operand.vmem [shape: f32[128,2], index: 3, kind: input, shape index: {}]
  %s4 = inlined_call_operand.vmem [shape: f32[1,2], index: 4, kind: input, shape index: {}]
  %s5 = inlined_call_operand.hbm [shape: f32[2,2], index: 5, kind: output, shape index: {}]
  %s6 = sld [smem:[#allocation0]]
  $region61: #{cnn1_forward.7} parent=0
    _
  %s8 = ssub.s32 1, %s6
  %s9 = scalar_select 0, %s8, %s6
  $region1: #{cnn1_forward.7} parent=0
    #allocation3 [shape = 'u8[1024]{0}', space=vmem, size = 0x400, scoped, tag = 'output window, operand 0, single buffered']
    #allocation4 [shape = 's32[2]{0}', space=sflag, size = 0x8, scoped, tag = 'scoped memory for cnn1_forward.7']
    %10 = vsyncpa [#allocation4], 0
    loop: start=0, step=1, limit=9
    $region2: #{cnn1_forward.7} parent=1 // loop_pre_header
      _
    $region3: #{cnn1_forward.7} parent=1 // loop_header
      %s12 = sphi 0, %s16
      %p13 = scmp.ge.s32.totalorder %s12, 9
      %s22 = sphi 0, %s24
      %s25 = sphi 0, %s22
      %s26 = sphi 0, %s25
      %s42 = sphi 0, %s26
      %s48 = sphi 0, %s50
      %s51 = sphi 0, %s48
      %s52 = sphi 0, %s51
      %s68 = sphi 0, %s52
      %s72 = sphi 0, %s72
      %s74 = sphi 0, %s72
      %s75 = sphi 0, %s74
      %s89 = sphi 0, %s75
      %s93 = sphi 0, %s93
      %s95 = sphi 0, %s93
      %s96 = sphi 0, %s95
      %s110 = sphi 0, %s96
      %s114 = sphi 0, %s114
      %s116 = sphi 0, %s114
      %s117 = sphi 0, %s116
      %s131 = sphi 0, %s117
      %s135 = sphi 0, %s135
      %s137 = sphi 0, %s135
      %s138 = sphi 0, %s137
      %s152 = sphi 0, %s138
    $region4: #{cnn1_forward.7} parent=1 // loop_header_branch
      %15 = sbr.rel (%p13) target = $region8
    $region5: #{cnn1_forward.7} parent=1 // loop_body
      %s17 = ssub.s32 %s12, 1
      %s18 = ssub.s32 %s12, 2
      %s19 = sadd.s32 %s12, 1
      %s20 = ssub.s32 %s12, %s19
      %p21 = scmp.eq.s32.totalorder %s20, 0
      %s23 = sadd.s32 %s22, 1
      %s24 = scalar_select %p21, %s22, %s23
      %p27 = pneg %p21
      %p28 = scmp.eq.s32.totalorder %s12, 6
      %p29 = por %p27, %p28
      %p30 = scmp.ne.s32.totalorder %s22, %s25
      %p31 = scmp.eq.s32.totalorder %s12, 0
      %p32 = por %p30, %p31
      %p33 = scmp.ne.s32.totalorder %s22, %s25
      %p34 = scmp.eq.s32.totalorder %s17, 6
      %p35 = por %p33, %p34
      %p36 = scmp.ne.s32.totalorder %s25, %s26
      %p37 = scmp.eq.s32.totalorder %s17, 0
      %p38 = por %p36, %p37
      %p39 = scmp.ne.s32.totalorder %s25, %s26
      %p40 = scmp.eq.s32.totalorder %s18, 6
      %p41 = por %p39, %p40
      %p43 = scmp.ne.s32.totalorder %s26, %s42
      %p44 = scmp.eq.s32.totalorder %s18, 0
      %p45 = por %p43, %p44
      %s46 = ssub.s32 %s12, %s19
      %p47 = scmp.eq.s32.totalorder %s46, 0
      %s49 = sadd.s32 %s48, 1
      %s50 = scalar_select %p47, %s48, %s49
      %p53 = pneg %p47
      %p54 = scmp.eq.s32.totalorder %s12, 6
      %p55 = por %p53, %p54
      %p56 = scmp.ne.s32.totalorder %s48, %s51
      %p57 = scmp.eq.s32.totalorder %s12, 0
      %p58 = por %p56, %p57
      %p59 = scmp.ne.s32.totalorder %s48, %s51
      %p60 = scmp.eq.s32.totalorder %s17, 6
      %p61 = por %p59, %p60
      %p62 = scmp.ne.s32.totalorder %s51, %s52
      %p63 = scmp.eq.s32.totalorder %s17, 0
      %p64 = por %p62, %p63
      %p65 = scmp.ne.s32.totalorder %s51, %s52
      %p66 = scmp.eq.s32.totalorder %s18, 6
      %p67 = por %p65, %p66
      %p69 = scmp.ne.s32.totalorder %s52, %s68
      %p70 = scmp.eq.s32.totalorder %s18, 0
      %p71 = por %p69, %p70
      %s73 = sadd.s32 %s72, 1
      %p76 = scmp.eq.s32.totalorder %s12, 6
      %p77 = scmp.ne.s32.totalorder %s72, %s74
      %p78 = scmp.eq.s32.totalorder %s12, 0
      %p79 = por %p77, %p78
      %p80 = scmp.ne.s32.totalorder %s72, %s74
      %p81 = scmp.eq.s32.totalorder %s17, 6
      %p82 = por %p80, %p81
      %p83 = scmp.ne.s32.totalorder %s74, %s75
      %p84 = scmp.eq.s32.totalorder %s17, 0
      %p85 = por %p83, %p84
      %p86 = scmp.ne.s32.totalorder %s74, %s75
      %p87 = scmp.eq.s32.totalorder %s18, 6
      %p88 = por %p86, %p87
      %p90 = scmp.ne.s32.totalorder %s75, %s89
      %p91 = scmp.eq.s32.totalorder %s18, 0
      %p92 = por %p90, %p91
      %s94 = sadd.s32 %s93, 1
      %p97 = scmp.eq.s32.totalorder %s12, 6
      %p98 = scmp.ne.s32.totalorder %s93, %s95
      %p99 = scmp.eq.s32.totalorder %s12, 0
      %p100 = por %p98, %p99
      %p101 = scmp.ne.s32.totalorder %s93, %s95
      %p102 = scmp.eq.s32.totalorder %s17, 6
      %p103 = por %p101, %p102
      %p104 = scmp.ne.s32.totalorder %s95, %s96
      %p105 = scmp.eq.s32.totalorder %s17, 0
      %p106 = por %p104, %p105
      %p107 = scmp.ne.s32.totalorder %s95, %s96
      %p108 = scmp.eq.s32.totalorder %s18, 6
      %p109 = por %p107, %p108
      %p111 = scmp.ne.s32.totalorder %s96, %s110
      %p112 = scmp.eq.s32.totalorder %s18, 0
      %p113 = por %p111, %p112
      %s115 = sadd.s32 %s114, 1
      %p118 = scmp.eq.s32.totalorder %s12, 6
      %p119 = scmp.ne.s32.totalorder %s114, %s116
      %p120 = scmp.eq.s32.totalorder %s12, 0
      %p121 = por %p119, %p120
      %p122 = scmp.ne.s32.totalorder %s114, %s116
      %p123 = scmp.eq.s32.totalorder %s17, 6
      %p124 = por %p122, %p123
      %p125 = scmp.ne.s32.totalorder %s116, %s117
      %p126 = scmp.eq.s32.totalorder %s17, 0
      %p127 = por %p125, %p126
      %p128 = scmp.ne.s32.totalorder %s116, %s117
      %p129 = scmp.eq.s32.totalorder %s18, 6
      %p130 = por %p128, %p129
      %p132 = scmp.ne.s32.totalorder %s117, %s131
      %p133 = scmp.eq.s32.totalorder %s18, 0
      %p134 = por %p132, %p133
      %s136 = sadd.s32 %s135, 1
      %p139 = scmp.eq.s32.totalorder %s12, 6
      %p140 = scmp.ne.s32.totalorder %s135, %s137
      %p141 = scmp.eq.s32.totalorder %s12, 0
      %p142 = por %p140, %p141
      %p143 = scmp.ne.s32.totalorder %s135, %s137
      %p144 = scmp.eq.s32.totalorder %s17, 6
      %p145 = por %p143, %p144
      %p146 = scmp.ne.s32.totalorder %s137, %s138
      %p147 = scmp.eq.s32.totalorder %s17, 0
      %p148 = por %p146, %p147
      %p149 = scmp.ne.s32.totalorder %s137, %s138
      %p150 = scmp.eq.s32.totalorder %s18, 6
      %p151 = por %p149, %p150
      %p153 = scmp.ne.s32.totalorder %s138, %s152
      %p154 = scmp.eq.s32.totalorder %s18, 0
      %p155 = por %p153, %p154
      %p156 = scmp.le.s32.totalorder 1, %s12
      %p157 = scmp.lt.s32.totalorder %s12, 8
      %p158 = pnand %p156, %p157
      %p159 = pneg %p158
      // Predicated region
      $region9: #{cnn1_forward.7} parent=5 // pred_check
        _
      $region10: #{cnn1_forward.7} parent=5 // pred_check_branch
        %161 = sbr.rel (%p158) target = $region12
      $region11: #{cnn1_forward.7} parent=5 // pred_region
        %s162 = ssub.s32 %s12, 1
        // Predicated region
        $region13: #{cnn1_forward.7} parent=11 // pred_check
          %p163 = pneg %p85
        $region14: #{cnn1_forward.7} parent=11 // pred_check_branch
          %165 = sbr.rel (%p163) target = $region16
        $region15: #{cnn1_forward.7} parent=11 // pred_region
          _
        $region16: #{cnn1_forward.7} parent=11 // pred_fallthru
          _
        // Predicated region
        $region17: #{cnn1_forward.7} parent=11 // pred_check
          %p166 = pneg %p106
        $region18: #{cnn1_forward.7} parent=11 // pred_check_branch
          %168 = sbr.rel (%p166) target = $region20
        $region19: #{cnn1_forward.7} parent=11 // pred_region
          _
        $region20: #{cnn1_forward.7} parent=11 // pred_fallthru
          _
        // Predicated region
        $region21: #{cnn1_forward.7} parent=11 // pred_check
          %p169 = pneg %p127
        $region22: #{cnn1_forward.7} parent=11 // pred_check_branch
          %171 = sbr.rel (%p169) target = $region24
        $region23: #{cnn1_forward.7} parent=11 // pred_region
          _
        $region24: #{cnn1_forward.7} parent=11 // pred_fallthru
          _
      $region12: #{cnn1_forward.7} parent=5 // pred_fallthru
        _
      %p172 = scmp.lt.s32.totalorder %s12, 7
      // Predicated region
      $region25: #{cnn1_forward.7} parent=5 // pred_check
        %p173 = pneg %p172
      $region26: #{cnn1_forward.7} parent=5 // pred_check_branch
        %175 = sbr.rel (%p173) target = $region28
      $region27: #{cnn1_forward.7} parent=5 // pred_region
        // Predicated region
        $region29: #{cnn1_forward.7} parent=27 // pred_check
          %p176 = pneg %p32
        $region30: #{cnn1_forward.7} parent=27 // pred_check_branch
          %178 = sbr.rel (%p176) target = $region32
        $region31: #{cnn1_forward.7} parent=27 // pred_region
          %s179 = smul.u32 14, %s12
          %p180 = scmp.lt.s32.totalorder %s179, 97
          %s181 = scalar_select %p180, %s179, 97
          %s182 = smul.addr %s181, 2
          %s183 = scalar_lea.vmem %s0, %s182
          %s184 = smul.u32 14, %s12
        $region32: #{cnn1_forward.7} parent=27 // pred_fallthru
          _
        // Predicated region
        $region33: #{cnn1_forward.7} parent=27 // pred_check
          %p185 = pneg %p58
        $region34: #{cnn1_forward.7} parent=27 // pred_check_branch
          %187 = sbr.rel (%p185) target = $region36
        $region35: #{cnn1_forward.7} parent=27 // pred_region
          %s188 = smul.u32 224, %s12
          %p189 = scmp.lt.s32.totalorder %s188, 1567
          %s190 = scalar_select %p189, %s188, 1567
          %s191 = smul.addr %s190, 8
          %s192 = scalar_lea.vmem %s1, %s191
          %s193 = smul.u32 224, %s12
        $region36: #{cnn1_forward.7} parent=27 // pred_fallthru
          _
      $region28: #{cnn1_forward.7} parent=5 // pred_fallthru
        _
      %p194 = scmp.le.s32.totalorder 1, %s12
      %p195 = scmp.lt.s32.totalorder %s12, 8
      %p196 = pnand %p194, %p195
      %p197 = pneg %p196
      // Predicated region
      $region37: #{cnn1_forward.7} parent=5 // pred_check
        _
      $region38: #{cnn1_forward.7} parent=5 // pred_check_branch
        %199 = sbr.rel (%p196) target = $region40
      $region39: #{cnn1_forward.7} parent=5 // pred_region
        %s200 = ssub.s32 %s12, 1
        %s201 = smul.u32 14, %s17
        %p202 = scmp.lt.s32.totalorder %s201, 97
        %s203 = scalar_select %p202, %s201, 97
        %s204 = smul.addr %s203, 2
        %s205 = scalar_lea.vmem %s0, %s204
        %p206 = pneg %p38
        %p207 = pneg %p35
        %s208 = smul.u32 224, %s17
        %p209 = scmp.lt.s32.totalorder %s208, 1567
        %s210 = scalar_select %p209, %s208, 1567
        %s211 = smul.addr %s210, 8
        %s212 = scalar_lea.vmem %s1, %s211
        %p213 = pneg %p64
        %p214 = pneg %p61
        %p215 = pneg %p85
        %p216 = pneg %p82
        %p217 = pneg %p106
        %p218 = pneg %p103
        %p219 = pneg %p127
        %p220 = pneg %p124
        %p221 = pneg %p148
        %p222 = pneg %p145
        %s223 = smul.u32 14, %s17
        %p224 = scmp.lt.s32.totalorder %s223, 97
        %s225 = scalar_select %p224, %s223, 97
        %s226 = smul.addr %s225, 2
        %s227 = scalar_lea.vmem %s0, %s226
        %s228 = smul.u32 14, %s17
        %s229 = smul.u32 224, %s17
        %p230 = scmp.lt.s32.totalorder %s229, 1567
        %s231 = scalar_select %p230, %s229, 1567
        %s232 = smul.addr %s231, 8
        %s233 = scalar_lea.vmem %s1, %s232
        %s234 = smul.u32 224, %s17
        %p235 = scmp.eq.s32.totalorder %s17, 0
        // Predicated region
        $region41: #{cnn1_forward.7} parent=39 // pred_check
          %p236 = pneg %p235
        $region42: #{cnn1_forward.7} parent=39 // pred_check_branch
          %238 = sbr.rel (%p236) target = $region44
        $region43: #{cnn1_forward.7} parent=39 // pred_region
          %239 = vst [vmem:[#allocation2] sm:$0x3] 0.0
        $region44: #{cnn1_forward.7} parent=39 // pred_fallthru
          _
        %v240 = vld [vmem:[#allocation2] sm:$0x3]
        %v241 = vld [vmem:[%s227] sm:$0xff]
        %v242 = vld [vmem:[%s227 + $0x8] sm:$0xff]
        %v243 = vld [vmem:[%s227 + $0x10] sm:$0xff]
        %v244 = vld [vmem:[%s227 + $0x18] sm:$0xf]
        %v245 = vld [vmem:[%s233] sm:$0xff]
        %v246 = vld [vmem:[%s233 + $0x8] sm:$0xff]
        %v247 = vld [vmem:[%s233 + $0x10] sm:$0xff]
        %v248 = vld [vmem:[%s233 + $0x18] sm:$0xff]
        %v249 = vld [vmem:[%s233 + $0x20] sm:$0xff]
        %v250 = vld [vmem:[%s233 + $0x28] sm:$0xff]
        %v251 = vld [vmem:[%s233 + $0x30] sm:$0xff]
        %v252 = vld [vmem:[%s233 + $0x38] sm:$0xff]
        %v253 = vld [vmem:[%s233 + $0x40] sm:$0xff]
        %v254 = vld [vmem:[%s233 + $0x48] sm:$0xff]
        %v255 = vld [vmem:[%s233 + $0x50] sm:$0xff]
        %v256 = vld [vmem:[%s233 + $0x58] sm:$0xff]
        %v257 = vld [vmem:[%s233 + $0x60] sm:$0xff]
        %v258 = vld [vmem:[%s233 + $0x68] sm:$0xff]
        %v259 = vld [vmem:[%s233 + $0x70] sm:$0xff]
        %v260 = vld [vmem:[%s233 + $0x78] sm:$0xff]
        %v261 = vld [vmem:[%s233 + $0x80] sm:$0xff]
        %v262 = vld [vmem:[%s233 + $0x88] sm:$0xff]
        %v263 = vld [vmem:[%s233 + $0x90] sm:$0xff]
        %v264 = vld [vmem:[%s233 + $0x98] sm:$0xff]
        %v265 = vld [vmem:[%s233 + $0xa0] sm:$0xff]
        %v266 = vld [vmem:[%s233 + $0xa8] sm:$0xff]
        %v267 = vld [vmem:[%s233 + $0xb0] sm:$0xff]
        %v268 = vld [vmem:[%s233 + $0xb8] sm:$0xff]
        %v269 = vld [vmem:[%s233 + $0xc0] sm:$0xff]
        %v270 = vld [vmem:[%s233 + $0xc8] sm:$0xff]
        %v271 = vld [vmem:[%s233 + $0xd0] sm:$0xff]
        %v272 = vld [vmem:[%s233 + $0xd8] sm:$0xff]
        %v273 = vld [vmem:[%s233 + $0xe0] sm:$0xff]
        %v274 = vld [vmem:[%s233 + $0xe8] sm:$0xff]
        %v275 = vld [vmem:[%s233 + $0xf0] sm:$0xff]
        %v276 = vld [vmem:[%s233 + $0xf8] sm:$0xff]
        %v277 = vld [vmem:[%s233 + $0x100] sm:$0xff]
        %v278 = vld [vmem:[%s233 + $0x108] sm:$0xff]
        %v279 = vld [vmem:[%s233 + $0x110] sm:$0xff]
        %v280 = vld [vmem:[%s233 + $0x118] sm:$0xff]
        %v281 = vld [vmem:[%s233 + $0x120] sm:$0xff]
        %v282 = vld [vmem:[%s233 + $0x128] sm:$0xff]
        %v283 = vld [vmem:[%s233 + $0x130] sm:$0xff]
        %v284 = vld [vmem:[%s233 + $0x138] sm:$0xff]
        %v285 = vld [vmem:[%s233 + $0x140] sm:$0xff]
        %v286 = vld [vmem:[%s233 + $0x148] sm:$0xff]
        %v287 = vld [vmem:[%s233 + $0x150] sm:$0xff]
        %v288 = vld [vmem:[%s233 + $0x158] sm:$0xff]
        %v289 = vld [vmem:[%s233 + $0x160] sm:$0xff]
        %v290 = vld [vmem:[%s233 + $0x168] sm:$0xff]
        %v291 = vld [vmem:[%s233 + $0x170] sm:$0xff]
        %v292 = vld [vmem:[%s233 + $0x178] sm:$0xff]
        %v293 = vld [vmem:[%s233 + $0x180] sm:$0xff]
        %v294 = vld [vmem:[%s233 + $0x188] sm:$0xff]
        %v295 = vld [vmem:[%s233 + $0x190] sm:$0xff]
        %v296 = vld [vmem:[%s233 + $0x198] sm:$0xff]
        %v297 = vld [vmem:[%s233 + $0x1a0] sm:$0xff]
        %v298 = vld [vmem:[%s233 + $0x1a8] sm:$0xff]
        %v299 = vld [vmem:[%s233 + $0x1b0] sm:$0xff]
        %v300 = vld [vmem:[%s233 + $0x1b8] sm:$0xff]
        %v301 = vld [vmem:[%s233 + $0x1c0] sm:$0xff]
        %v302 = vld [vmem:[%s233 + $0x1c8] sm:$0xff]
        %v303 = vld [vmem:[%s233 + $0x1d0] sm:$0xff]
        %v304 = vld [vmem:[%s233 + $0x1d8] sm:$0xff]
        %v305 = vld [vmem:[%s233 + $0x1e0] sm:$0xff]
        %v306 = vld [vmem:[%s233 + $0x1e8] sm:$0xff]
        %v307 = vld [vmem:[%s233 + $0x1f0] sm:$0xff]
        %v308 = vld [vmem:[%s233 + $0x1f8] sm:$0xff]
        %v309 = vld [vmem:[%s233 + $0x200] sm:$0xff]
        %v310 = vld [vmem:[%s233 + $0x208] sm:$0xff]
        %v311 = vld [vmem:[%s233 + $0x210] sm:$0xff]
        %v312 = vld [vmem:[%s233 + $0x218] sm:$0xff]
        %v313 = vld [vmem:[%s233 + $0x220] sm:$0xff]
        %v314 = vld [vmem:[%s233 + $0x228] sm:$0xff]
        %v315 = vld [vmem:[%s233 + $0x230] sm:$0xff]
        %v316 = vld [vmem:[%s233 + $0x238] sm:$0xff]
        %v317 = vld [vmem:[%s233 + $0x240] sm:$0xff]
        %v318 = vld [vmem:[%s233 + $0x248] sm:$0xff]
        %v319 = vld [vmem:[%s233 + $0x250] sm:$0xff]
        %v320 = vld [vmem:[%s233 + $0x258] sm:$0xff]
        %v321 = vld [vmem:[%s233 + $0x260] sm:$0xff]
        %v322 = vld [vmem:[%s233 + $0x268] sm:$0xff]
        %v323 = vld [vmem:[%s233 + $0x270] sm:$0xff]
        %v324 = vld [vmem:[%s233 + $0x278] sm:$0xff]
        %v325 = vld [vmem:[%s233 + $0x280] sm:$0xff]
        %v326 = vld [vmem:[%s233 + $0x288] sm:$0xff]
        %v327 = vld [vmem:[%s233 + $0x290] sm:$0xff]
        %v328 = vld [vmem:[%s233 + $0x298] sm:$0xff]
        %v329 = vld [vmem:[%s233 + $0x2a0] sm:$0xff]
        %v330 = vld [vmem:[%s233 + $0x2a8] sm:$0xff]
        %v331 = vld [vmem:[%s233 + $0x2b0] sm:$0xff]
        %v332 = vld [vmem:[%s233 + $0x2b8] sm:$0xff]
        %v333 = vld [vmem:[%s233 + $0x2c0] sm:$0xff]
        %v334 = vld [vmem:[%s233 + $0x2c8] sm:$0xff]
        %v335 = vld [vmem:[%s233 + $0x2d0] sm:$0xff]
        %v336 = vld [vmem:[%s233 + $0x2d8] sm:$0xff]
        %v337 = vld [vmem:[%s233 + $0x2e0] sm:$0xff]
        %v338 = vld [vmem:[%s233 + $0x2e8] sm:$0xff]
        %v339 = vld [vmem:[%s233 + $0x2f0] sm:$0xff]
        %v340 = vld [vmem:[%s233 + $0x2f8] sm:$0xff]
        %v341 = vld [vmem:[%s233 + $0x300] sm:$0xff]
        %v342 = vld [vmem:[%s233 + $0x308] sm:$0xff]
        %v343 = vld [vmem:[%s233 + $0x310] sm:$0xff]
        %v344 = vld [vmem:[%s233 + $0x318] sm:$0xff]
        %v345 = vld [vmem:[%s233 + $0x320] sm:$0xff]
        %v346 = vld [vmem:[%s233 + $0x328] sm:$0xff]
        %v347 = vld [vmem:[%s233 + $0x330] sm:$0xff]
        %v348 = vld [vmem:[%s233 + $0x338] sm:$0xff]
        %v349 = vld [vmem:[%s233 + $0x340] sm:$0xff]
        %v350 = vld [vmem:[%s233 + $0x348] sm:$0xff]
        %v351 = vld [vmem:[%s233 + $0x350] sm:$0xff]
        %v352 = vld [vmem:[%s233 + $0x358] sm:$0xff]
        %v353 = vld [vmem:[%s233 + $0x360] sm:$0xff]
        %v354 = vld [vmem:[%s233 + $0x368] sm:$0xff]
        %v355 = vld [vmem:[%s233 + $0x370] sm:$0xff]
        %v356 = vld [vmem:[%s233 + $0x378] sm:$0xff]
        %v357 = vld [vmem:[%s233 + $0x380] sm:$0xff]
        %v358 = vld [vmem:[%s233 + $0x388] sm:$0xff]
        %v359 = vld [vmem:[%s233 + $0x390] sm:$0xff]
        %v360 = vld [vmem:[%s233 + $0x398] sm:$0xff]
        %v361 = vld [vmem:[%s233 + $0x3a0] sm:$0xff]
        %v362 = vld [vmem:[%s233 + $0x3a8] sm:$0xff]
        %v363 = vld [vmem:[%s233 + $0x3b0] sm:$0xff]
        %v364 = vld [vmem:[%s233 + $0x3b8] sm:$0xff]
        %v365 = vld [vmem:[%s233 + $0x3c0] sm:$0xff]
        %v366 = vld [vmem:[%s233 + $0x3c8] sm:$0xff]
        %v367 = vld [vmem:[%s233 + $0x3d0] sm:$0xff]
        %v368 = vld [vmem:[%s233 + $0x3d8] sm:$0xff]
        %v369 = vld [vmem:[%s233 + $0x3e0] sm:$0xff]
        %v370 = vld [vmem:[%s233 + $0x3e8] sm:$0xff]
        %v371 = vld [vmem:[%s233 + $0x3f0] sm:$0xff]
        %v372 = vld [vmem:[%s233 + $0x3f8] sm:$0xff]
        %v373 = vld [vmem:[%s233 + $0x400] sm:$0xff]
        %v374 = vld [vmem:[%s233 + $0x408] sm:$0xff]
        %v375 = vld [vmem:[%s233 + $0x410] sm:$0xff]
        %v376 = vld [vmem:[%s233 + $0x418] sm:$0xff]
        %v377 = vld [vmem:[%s233 + $0x420] sm:$0xff]
        %v378 = vld [vmem:[%s233 + $0x428] sm:$0xff]
        %v379 = vld [vmem:[%s233 + $0x430] sm:$0xff]
        %v380 = vld [vmem:[%s233 + $0x438] sm:$0xff]
        %v381 = vld [vmem:[%s233 + $0x440] sm:$0xff]
        %v382 = vld [vmem:[%s233 + $0x448] sm:$0xff]
        %v383 = vld [vmem:[%s233 + $0x450] sm:$0xff]
        %v384 = vld [vmem:[%s233 + $0x458] sm:$0xff]
        %v385 = vld [vmem:[%s233 + $0x460] sm:$0xff]
        %v386 = vld [vmem:[%s233 + $0x468] sm:$0xff]
        %v387 = vld [vmem:[%s233 + $0x470] sm:$0xff]
        %v388 = vld [vmem:[%s233 + $0x478] sm:$0xff]
        %v389 = vld [vmem:[%s233 + $0x480] sm:$0xff]
        %v390 = vld [vmem:[%s233 + $0x488] sm:$0xff]
        %v391 = vld [vmem:[%s233 + $0x490] sm:$0xff]
        %v392 = vld [vmem:[%s233 + $0x498] sm:$0xff]
        %v393 = vld [vmem:[%s233 + $0x4a0] sm:$0xff]
        %v394 = vld [vmem:[%s233 + $0x4a8] sm:$0xff]
        %v395 = vld [vmem:[%s233 + $0x4b0] sm:$0xff]
        %v396 = vld [vmem:[%s233 + $0x4b8] sm:$0xff]
        %v397 = vld [vmem:[%s233 + $0x4c0] sm:$0xff]
        %v398 = vld [vmem:[%s233 + $0x4c8] sm:$0xff]
        %v399 = vld [vmem:[%s233 + $0x4d0] sm:$0xff]
        %v400 = vld [vmem:[%s233 + $0x4d8] sm:$0xff]
        %v401 = vld [vmem:[%s233 + $0x4e0] sm:$0xff]
        %v402 = vld [vmem:[%s233 + $0x4e8] sm:$0xff]
        %v403 = vld [vmem:[%s233 + $0x4f0] sm:$0xff]
        %v404 = vld [vmem:[%s233 + $0x4f8] sm:$0xff]
        %v405 = vld [vmem:[%s233 + $0x500] sm:$0xff]
        %v406 = vld [vmem:[%s233 + $0x508] sm:$0xff]
        %v407 = vld [vmem:[%s233 + $0x510] sm:$0xff]
        %v408 = vld [vmem:[%s233 + $0x518] sm:$0xff]
        %v409 = vld [vmem:[%s233 + $0x520] sm:$0xff]
        %v410 = vld [vmem:[%s233 + $0x528] sm:$0xff]
        %v411 = vld [vmem:[%s233 + $0x530] sm:$0xff]
        %v412 = vld [vmem:[%s233 + $0x538] sm:$0xff]
        %v413 = vld [vmem:[%s233 + $0x540] sm:$0xff]
        %v414 = vld [vmem:[%s233 + $0x548] sm:$0xff]
        %v415 = vld [vmem:[%s233 + $0x550] sm:$0xff]
        %v416 = vld [vmem:[%s233 + $0x558] sm:$0xff]
        %v417 = vld [vmem:[%s233 + $0x560] sm:$0xff]
        %v418 = vld [vmem:[%s233 + $0x568] sm:$0xff]
        %v419 = vld [vmem:[%s233 + $0x570] sm:$0xff]
        %v420 = vld [vmem:[%s233 + $0x578] sm:$0xff]
        %v421 = vld [vmem:[%s233 + $0x580] sm:$0xff]
        %v422 = vld [vmem:[%s233 + $0x588] sm:$0xff]
        %v423 = vld [vmem:[%s233 + $0x590] sm:$0xff]
        %v424 = vld [vmem:[%s233 + $0x598] sm:$0xff]
        %v425 = vld [vmem:[%s233 + $0x5a0] sm:$0xff]
        %v426 = vld [vmem:[%s233 + $0x5a8] sm:$0xff]
        %v427 = vld [vmem:[%s233 + $0x5b0] sm:$0xff]
        %v428 = vld [vmem:[%s233 + $0x5b8] sm:$0xff]
        %v429 = vld [vmem:[%s233 + $0x5c0] sm:$0xff]
        %v430 = vld [vmem:[%s233 + $0x5c8] sm:$0xff]
        %v431 = vld [vmem:[%s233 + $0x5d0] sm:$0xff]
        %v432 = vld [vmem:[%s233 + $0x5d8] sm:$0xff]
        %v433 = vld [vmem:[%s233 + $0x5e0] sm:$0xff]
        %v434 = vld [vmem:[%s233 + $0x5e8] sm:$0xff]
        %v435 = vld [vmem:[%s233 + $0x5f0] sm:$0xff]
        %v436 = vld [vmem:[%s233 + $0x5f8] sm:$0xff]
        %v437 = vld [vmem:[%s233 + $0x600] sm:$0xff]
        %v438 = vld [vmem:[%s233 + $0x608] sm:$0xff]
        %v439 = vld [vmem:[%s233 + $0x610] sm:$0xff]
        %v440 = vld [vmem:[%s233 + $0x618] sm:$0xff]
        %v441 = vld [vmem:[%s233 + $0x620] sm:$0xff]
        %v442 = vld [vmem:[%s233 + $0x628] sm:$0xff]
        %v443 = vld [vmem:[%s233 + $0x630] sm:$0xff]
        %v444 = vld [vmem:[%s233 + $0x638] sm:$0xff]
        %v445 = vld [vmem:[%s233 + $0x640] sm:$0xff]
        %v446 = vld [vmem:[%s233 + $0x648] sm:$0xff]
        %v447 = vld [vmem:[%s233 + $0x650] sm:$0xff]
        %v448 = vld [vmem:[%s233 + $0x658] sm:$0xff]
        %v449 = vld [vmem:[%s233 + $0x660] sm:$0xff]
        %v450 = vld [vmem:[%s233 + $0x668] sm:$0xff]
        %v451 = vld [vmem:[%s233 + $0x670] sm:$0xff]
        %v452 = vld [vmem:[%s233 + $0x678] sm:$0xff]
        %v453 = vld [vmem:[%s233 + $0x680] sm:$0xff]
        %v454 = vld [vmem:[%s233 + $0x688] sm:$0xff]
        %v455 = vld [vmem:[%s233 + $0x690] sm:$0xff]
        %v456 = vld [vmem:[%s233 + $0x698] sm:$0xff]
        %v457 = vld [vmem:[%s233 + $0x6a0] sm:$0xff]
        %v458 = vld [vmem:[%s233 + $0x6a8] sm:$0xff]
        %v459 = vld [vmem:[%s233 + $0x6b0] sm:$0xff]
        %v460 = vld [vmem:[%s233 + $0x6b8] sm:$0xff]
        %v461 = vld [vmem:[%s233 + $0x6c0] sm:$0xff]
        %v462 = vld [vmem:[%s233 + $0x6c8] sm:$0xff]
        %v463 = vld [vmem:[%s233 + $0x6d0] sm:$0xff]
        %v464 = vld [vmem:[%s233 + $0x6d8] sm:$0xff]
        %v465 = vld [vmem:[%s233 + $0x6e0] sm:$0xff]
        %v466 = vld [vmem:[%s233 + $0x6e8] sm:$0xff]
        %v467 = vld [vmem:[%s233 + $0x6f0] sm:$0xff]
        %v468 = vld [vmem:[%s233 + $0x6f8] sm:$0xff]
        %v473 = vcombine.high %v241, %v241
        %v475 = vunpack.c.l.s4 1983009808
        %v476 = vunpack.c.0.s8 %v475
        %v477 = vlaneseq
        %v478 = vshrl.u32 %v477, 7
        %v479 = vsub.s32 %v476, %v478
        %v480 = vrot.slane %v241, %v479
        %v482 = vunpack.c.l.s4 1983009808
        %v483 = vunpack.c.0.s8 %v482
        %v484 = vlaneseq
        %v485 = vshrl.u32 %v484, 7
        %v486 = vsub.s32 %v483, %v485
        %v487 = vrot.slane %v473, %v486
        %v488 = vcombine.high %v480, %v480
        %v489 = vcombine.high %v487, %v487
        %v490 = vcombine.high %v242, %v242
        %v492 = vunpack.c.l.s4 1983009808
        %v493 = vunpack.c.0.s8 %v492
        %v494 = vlaneseq
        %v495 = vshrl.u32 %v494, 7
        %v496 = vsub.s32 %v493, %v495
        %v497 = vrot.slane %v242, %v496
        %v499 = vunpack.c.l.s4 1983009808
        %v500 = vunpack.c.0.s8 %v499
        %v501 = vlaneseq
        %v502 = vshrl.u32 %v501, 7
        %v503 = vsub.s32 %v500, %v502
        %v504 = vrot.slane %v490, %v503
        %v505 = vcombine.high %v497, %v497
        %v506 = vcombine.high %v504, %v504
        %v507 = vcombine.high %v243, %v243
        %v509 = vunpack.c.l.s4 1983009808
        %v510 = vunpack.c.0.s8 %v509
        %v511 = vlaneseq
        %v512 = vshrl.u32 %v511, 7
        %v513 = vsub.s32 %v510, %v512
        %v514 = vrot.slane %v243, %v513
        %v516 = vunpack.c.l.s4 1983009808
        %v517 = vunpack.c.0.s8 %v516
        %v518 = vlaneseq
        %v519 = vshrl.u32 %v518, 7
        %v520 = vsub.s32 %v517, %v519
        %v521 = vrot.slane %v507, %v520
        %v522 = vcombine.high %v514, %v514
        %v523 = vcombine.high %v521, %v521
        %v525 = vunpack.c.l.s4 1983009808
        %v526 = vunpack.c.0.s8 %v525
        %v527 = vlaneseq
        %v528 = vshrl.u32 %v527, 7
        %v529 = vsub.s32 %v526, %v528
        %v530 = vrot.slane %v244, %v529
        %v531 = vcombine.high %v530, %v530
        %546 = vmatprep.subr.mxu0 0.0
        %547 = vmatpush1.msra.mxu0 %v260
        %548 = vmatprep.subr.mxu0 0.0
        %549 = vmatpush1.msra.mxu0 %v259
        %550 = vmatprep.subr.mxu0 0.0
        %551 = vmatpush1.msra.mxu0 %v258
        %552 = vmatprep.subr.mxu0 0.0
        %553 = vmatpush1.msra.mxu0 %v257
        %554 = vmatprep.subr.mxu0 0.0
        %555 = vmatpush1.msra.mxu0 %v256
        %556 = vmatprep.subr.mxu0 0.0
        %557 = vmatpush1.msra.mxu0 %v255
        %558 = vmatprep.subr.mxu0 0.0
        %559 = vmatpush1.msra.mxu0 %v254
        %560 = vmatprep.subr.mxu0 0.0
        %561 = vmatpush1.msra.mxu0 %v253
        %562 = vmatprep.subr.mxu0 0.0
        %563 = vmatpush1.msra.mxu0 %v252
        %564 = vmatprep.subr.mxu0 0.0
        %565 = vmatpush1.msra.mxu0 %v251
        %566 = vmatprep.subr.mxu0 0.0
        %567 = vmatpush1.msra.mxu0 %v250
        %568 = vmatprep.subr.mxu0 0.0
        %569 = vmatpush1.msra.mxu0 %v249
        %570 = vmatprep.subr.mxu0 0.0
        %571 = vmatpush1.msra.mxu0 %v248
        %572 = vmatprep.subr.mxu0 0.0
        %573 = vmatpush1.msra.mxu0 %v247
        %574 = vmatprep.subr.mxu0 0.0
        %575 = vmatpush1.msra.mxu0 %v246
        %576 = vmatprep.subr.mxu0 0.0
        %577 = vmatpush1.msra.mxu0 %v245
        %578 = vmatprep.subr.mxu0 0.0
        %579 = vmatpush2.msra.mxu0 %v276
        %580 = vmatprep.subr.mxu0 0.0
        %581 = vmatpush2.msra.mxu0 %v275
        %582 = vmatprep.subr.mxu0 0.0
        %583 = vmatpush2.msra.mxu0 %v274
        %584 = vmatprep.subr.mxu0 0.0
        %585 = vmatpush2.msra.mxu0 %v273
        %586 = vmatprep.subr.mxu0 0.0
        %587 = vmatpush2.msra.mxu0 %v272
        %588 = vmatprep.subr.mxu0 0.0
        %589 = vmatpush2.msra.mxu0 %v271
        %590 = vmatprep.subr.mxu0 0.0
        %591 = vmatpush2.msra.mxu0 %v270
        %592 = vmatprep.subr.mxu0 0.0
        %593 = vmatpush2.msra.mxu0 %v269
        %594 = vmatprep.subr.mxu0 0.0
        %595 = vmatpush2.msra.mxu0 %v268
        %596 = vmatprep.subr.mxu0 0.0
        %597 = vmatpush2.msra.mxu0 %v267
        %598 = vmatprep.subr.mxu0 0.0
        %599 = vmatpush2.msra.mxu0 %v266
        %600 = vmatprep.subr.mxu0 0.0
        %601 = vmatpush2.msra.mxu0 %v265
        %602 = vmatprep.subr.mxu0 0.0
        %603 = vmatpush2.msra.mxu0 %v264
        %604 = vmatprep.subr.mxu0 0.0
        %605 = vmatpush2.msra.mxu0 %v263
        %606 = vmatprep.subr.mxu0 0.0
        %607 = vmatpush2.msra.mxu0 %v262
        %608 = vmatprep.subr.mxu0 0.0
        %609 = vmatpush2.msra.mxu0 %v261
        %610 = vmatprep.mubr.f32.mxu0 %v488
        %611 = vmatmul.mubr.f32.gmra.mxu0 %v480
        %v612 = vpop.f32.mrf.mxu0
        %v613 = vadd.f32 0.0, %v612
        %v614 = vpop.f32.mrf.mxu0
        %615 = vdwg.mxu0
        %616 = vmatprep.subr.mxu0 0.0
        %617 = vmatpush1.msra.mxu0 %v292
        %618 = vmatprep.subr.mxu0 0.0
        %619 = vmatpush1.msra.mxu0 %v291
        %620 = vmatprep.subr.mxu0 0.0
        %621 = vmatpush1.msra.mxu0 %v290
        %622 = vmatprep.subr.mxu0 0.0
        %623 = vmatpush1.msra.mxu0 %v289
        %624 = vmatprep.subr.mxu0 0.0
        %625 = vmatpush1.msra.mxu0 %v288
        %626 = vmatprep.subr.mxu0 0.0
        %627 = vmatpush1.msra.mxu0 %v287
        %628 = vmatprep.subr.mxu0 0.0
        %629 = vmatpush1.msra.mxu0 %v286
        %630 = vmatprep.subr.mxu0 0.0
        %631 = vmatpush1.msra.mxu0 %v285
        %632 = vmatprep.subr.mxu0 0.0
        %633 = vmatpush1.msra.mxu0 %v284
        %634 = vmatprep.subr.mxu0 0.0
        %635 = vmatpush1.msra.mxu0 %v283
        %636 = vmatprep.subr.mxu0 0.0
        %637 = vmatpush1.msra.mxu0 %v282
        %638 = vmatprep.subr.mxu0 0.0
        %639 = vmatpush1.msra.mxu0 %v281
        %640 = vmatprep.subr.mxu0 0.0
        %641 = vmatpush1.msra.mxu0 %v280
        %642 = vmatprep.subr.mxu0 0.0
        %643 = vmatpush1.msra.mxu0 %v279
        %644 = vmatprep.subr.mxu0 0.0
        %645 = vmatpush1.msra.mxu0 %v278
        %646 = vmatprep.subr.mxu0 0.0
        %647 = vmatpush1.msra.mxu0 %v277
        %648 = vmatprep.subr.mxu0 0.0
        %649 = vmatpush2.msra.mxu0 %v308
        %650 = vmatprep.subr.mxu0 0.0
        %651 = vmatpush2.msra.mxu0 %v307
        %652 = vmatprep.subr.mxu0 0.0
        %653 = vmatpush2.msra.mxu0 %v306
        %654 = vmatprep.subr.mxu0 0.0
        %655 = vmatpush2.msra.mxu0 %v305
        %656 = vmatprep.subr.mxu0 0.0
        %657 = vmatpush2.msra.mxu0 %v304
        %658 = vmatprep.subr.mxu0 0.0
        %659 = vmatpush2.msra.mxu0 %v303
        %660 = vmatprep.subr.mxu0 0.0
        %661 = vmatpush2.msra.mxu0 %v302
        %662 = vmatprep.subr.mxu0 0.0
        %663 = vmatpush2.msra.mxu0 %v301
        %664 = vmatprep.subr.mxu0 0.0
        %665 = vmatpush2.msra.mxu0 %v300
        %666 = vmatprep.subr.mxu0 0.0
        %667 = vmatpush2.msra.mxu0 %v299
        %668 = vmatprep.subr.mxu0 0.0
        %669 = vmatpush2.msra.mxu0 %v298
        %670 = vmatprep.subr.mxu0 0.0
        %671 = vmatpush2.msra.mxu0 %v297
        %672 = vmatprep.subr.mxu0 0.0
        %673 = vmatpush2.msra.mxu0 %v296
        %674 = vmatprep.subr.mxu0 0.0
        %675 = vmatpush2.msra.mxu0 %v295
        %676 = vmatprep.subr.mxu0 0.0
        %677 = vmatpush2.msra.mxu0 %v294
        %678 = vmatprep.subr.mxu0 0.0
        %679 = vmatpush2.msra.mxu0 %v293
        %680 = vmatprep.mubr.f32.mxu0 %v489
        %681 = vmatmul.mubr.f32.gmra.mxu0 %v487
        %v682 = vpop.f32.mrf.mxu0
        %v683 = vadd.f32 %v613, %v682
        %v684 = vpop.f32.mrf.mxu0
        %685 = vdwg.mxu0
        %686 = vmatprep.subr.mxu0 0.0
        %687 = vmatpush1.msra.mxu0 %v324
        %688 = vmatprep.subr.mxu0 0.0
        %689 = vmatpush1.msra.mxu0 %v323
        %690 = vmatprep.subr.mxu0 0.0
        %691 = vmatpush1.msra.mxu0 %v322
        %692 = vmatprep.subr.mxu0 0.0
        %693 = vmatpush1.msra.mxu0 %v321
        %694 = vmatprep.subr.mxu0 0.0
        %695 = vmatpush1.msra.mxu0 %v320
        %696 = vmatprep.subr.mxu0 0.0
        %697 = vmatpush1.msra.mxu0 %v319
        %698 = vmatprep.subr.mxu0 0.0
        %699 = vmatpush1.msra.mxu0 %v318
        %700 = vmatprep.subr.mxu0 0.0
        %701 = vmatpush1.msra.mxu0 %v317
        %702 = vmatprep.subr.mxu0 0.0
        %703 = vmatpush1.msra.mxu0 %v316
        %704 = vmatprep.subr.mxu0 0.0
        %705 = vmatpush1.msra.mxu0 %v315
        %706 = vmatprep.subr.mxu0 0.0
        %707 = vmatpush1.msra.mxu0 %v314
        %708 = vmatprep.subr.mxu0 0.0
        %709 = vmatpush1.msra.mxu0 %v313
        %710 = vmatprep.subr.mxu0 0.0
        %711 = vmatpush1.msra.mxu0 %v312
        %712 = vmatprep.subr.mxu0 0.0
        %713 = vmatpush1.msra.mxu0 %v311
        %714 = vmatprep.subr.mxu0 0.0
        %715 = vmatpush1.msra.mxu0 %v310
        %716 = vmatprep.subr.mxu0 0.0
        %717 = vmatpush1.msra.mxu0 %v309
        %718 = vmatprep.subr.mxu0 0.0
        %719 = vmatpush2.msra.mxu0 %v340
        %720 = vmatprep.subr.mxu0 0.0
        %721 = vmatpush2.msra.mxu0 %v339
        %722 = vmatprep.subr.mxu0 0.0
        %723 = vmatpush2.msra.mxu0 %v338
        %724 = vmatprep.subr.mxu0 0.0
        %725 = vmatpush2.msra.mxu0 %v337
        %726 = vmatprep.subr.mxu0 0.0
        %727 = vmatpush2.msra.mxu0 %v336
        %728 = vmatprep.subr.mxu0 0.0
        %729 = vmatpush2.msra.mxu0 %v335
        %730 = vmatprep.subr.mxu0 0.0
        %731 = vmatpush2.msra.mxu0 %v334
        %732 = vmatprep.subr.mxu0 0.0
        %733 = vmatpush2.msra.mxu0 %v333
        %734 = vmatprep.subr.mxu0 0.0
        %735 = vmatpush2.msra.mxu0 %v332
        %736 = vmatprep.subr.mxu0 0.0
        %737 = vmatpush2.msra.mxu0 %v331
        %738 = vmatprep.subr.mxu0 0.0
        %739 = vmatpush2.msra.mxu0 %v330
        %740 = vmatprep.subr.mxu0 0.0
        %741 = vmatpush2.msra.mxu0 %v329
        %742 = vmatprep.subr.mxu0 0.0
        %743 = vmatpush2.msra.mxu0 %v328
        %744 = vmatprep.subr.mxu0 0.0
        %745 = vmatpush2.msra.mxu0 %v327
        %746 = vmatprep.subr.mxu0 0.0
        %747 = vmatpush2.msra.mxu0 %v326
        %748 = vmatprep.subr.mxu0 0.0
        %749 = vmatpush2.msra.mxu0 %v325
        %750 = vmatprep.mubr.f32.mxu0 %v505
        %751 = vmatmul.mubr.f32.gmra.mxu0 %v497
        %v752 = vpop.f32.mrf.mxu0
        %v753 = vadd.f32 %v683, %v752
        %v754 = vpop.f32.mrf.mxu0
        %755 = vdwg.mxu0
        %756 = vmatprep.subr.mxu0 0.0
        %757 = vmatpush1.msra.mxu0 %v356
        %758 = vmatprep.subr.mxu0 0.0
        %759 = vmatpush1.msra.mxu0 %v355
        %760 = vmatprep.subr.mxu0 0.0
        %761 = vmatpush1.msra.mxu0 %v354
        %762 = vmatprep.subr.mxu0 0.0
        %763 = vmatpush1.msra.mxu0 %v353
        %764 = vmatprep.subr.mxu0 0.0
        %765 = vmatpush1.msra.mxu0 %v352
        %766 = vmatprep.subr.mxu0 0.0
        %767 = vmatpush1.msra.mxu0 %v351
        %768 = vmatprep.subr.mxu0 0.0
        %769 = vmatpush1.msra.mxu0 %v350
        %770 = vmatprep.subr.mxu0 0.0
        %771 = vmatpush1.msra.mxu0 %v349
        %772 = vmatprep.subr.mxu0 0.0
        %773 = vmatpush1.msra.mxu0 %v348
        %774 = vmatprep.subr.mxu0 0.0
        %775 = vmatpush1.msra.mxu0 %v347
        %776 = vmatprep.subr.mxu0 0.0
        %777 = vmatpush1.msra.mxu0 %v346
        %778 = vmatprep.subr.mxu0 0.0
        %779 = vmatpush1.msra.mxu0 %v345
        %780 = vmatprep.subr.mxu0 0.0
        %781 = vmatpush1.msra.mxu0 %v344
        %782 = vmatprep.subr.mxu0 0.0
        %783 = vmatpush1.msra.mxu0 %v343
        %784 = vmatprep.subr.mxu0 0.0
        %785 = vmatpush1.msra.mxu0 %v342
        %786 = vmatprep.subr.mxu0 0.0
        %787 = vmatpush1.msra.mxu0 %v341
        %788 = vmatprep.subr.mxu0 0.0
        %789 = vmatpush2.msra.mxu0 %v372
        %790 = vmatprep.subr.mxu0 0.0
        %791 = vmatpush2.msra.mxu0 %v371
        %792 = vmatprep.subr.mxu0 0.0
        %793 = vmatpush2.msra.mxu0 %v370
        %794 = vmatprep.subr.mxu0 0.0
        %795 = vmatpush2.msra.mxu0 %v369
        %796 = vmatprep.subr.mxu0 0.0
        %797 = vmatpush2.msra.mxu0 %v368
        %798 = vmatprep.subr.mxu0 0.0
        %799 = vmatpush2.msra.mxu0 %v367
        %800 = vmatprep.subr.mxu0 0.0
        %801 = vmatpush2.msra.mxu0 %v366
        %802 = vmatprep.subr.mxu0 0.0
        %803 = vmatpush2.msra.mxu0 %v365
        %804 = vmatprep.subr.mxu0 0.0
        %805 = vmatpush2.msra.mxu0 %v364
        %806 = vmatprep.subr.mxu0 0.0
        %807 = vmatpush2.msra.mxu0 %v363
        %808 = vmatprep.subr.mxu0 0.0
        %809 = vmatpush2.msra.mxu0 %v362
        %810 = vmatprep.subr.mxu0 0.0
        %811 = vmatpush2.msra.mxu0 %v361
        %812 = vmatprep.subr.mxu0 0.0
        %813 = vmatpush2.msra.mxu0 %v360
        %814 = vmatprep.subr.mxu0 0.0
        %815 = vmatpush2.msra.mxu0 %v359
        %816 = vmatprep.subr.mxu0 0.0
        %817 = vmatpush2.msra.mxu0 %v358
        %818 = vmatprep.subr.mxu0 0.0
        %819 = vmatpush2.msra.mxu0 %v357
        %820 = vmatprep.mubr.f32.mxu0 %v506
        %821 = vmatmul.mubr.f32.gmra.mxu0 %v504
        %v822 = vpop.f32.mrf.mxu0
        %v823 = vadd.f32 %v753, %v822
        %v824 = vpop.f32.mrf.mxu0
        %825 = vdwg.mxu0
        %826 = vmatprep.subr.mxu0 0.0
        %827 = vmatpush1.msra.mxu0 %v388
        %828 = vmatprep.subr.mxu0 0.0
        %829 = vmatpush1.msra.mxu0 %v387
        %830 = vmatprep.subr.mxu0 0.0
        %831 = vmatpush1.msra.mxu0 %v386
        %832 = vmatprep.subr.mxu0 0.0
        %833 = vmatpush1.msra.mxu0 %v385
        %834 = vmatprep.subr.mxu0 0.0
        %835 = vmatpush1.msra.mxu0 %v384
        %836 = vmatprep.subr.mxu0 0.0
        %837 = vmatpush1.msra.mxu0 %v383
        %838 = vmatprep.subr.mxu0 0.0
        %839 = vmatpush1.msra.mxu0 %v382
        %840 = vmatprep.subr.mxu0 0.0
        %841 = vmatpush1.msra.mxu0 %v381
        %842 = vmatprep.subr.mxu0 0.0
        %843 = vmatpush1.msra.mxu0 %v380
        %844 = vmatprep.subr.mxu0 0.0
        %845 = vmatpush1.msra.mxu0 %v379
        %846 = vmatprep.subr.mxu0 0.0
        %847 = vmatpush1.msra.mxu0 %v378
        %848 = vmatprep.subr.mxu0 0.0
        %849 = vmatpush1.msra.mxu0 %v377
        %850 = vmatprep.subr.mxu0 0.0
        %851 = vmatpush1.msra.mxu0 %v376
        %852 = vmatprep.subr.mxu0 0.0
        %853 = vmatpush1.msra.mxu0 %v375
        %854 = vmatprep.subr.mxu0 0.0
        %855 = vmatpush1.msra.mxu0 %v374
        %856 = vmatprep.subr.mxu0 0.0
        %857 = vmatpush1.msra.mxu0 %v373
        %858 = vmatprep.subr.mxu0 0.0
        %859 = vmatpush2.msra.mxu0 %v404
        %860 = vmatprep.subr.mxu0 0.0
        %861 = vmatpush2.msra.mxu0 %v403
        %862 = vmatprep.subr.mxu0 0.0
        %863 = vmatpush2.msra.mxu0 %v402
        %864 = vmatprep.subr.mxu0 0.0
        %865 = vmatpush2.msra.mxu0 %v401
        %866 = vmatprep.subr.mxu0 0.0
        %867 = vmatpush2.msra.mxu0 %v400
        %868 = vmatprep.subr.mxu0 0.0
        %869 = vmatpush2.msra.mxu0 %v399
        %870 = vmatprep.subr.mxu0 0.0
        %871 = vmatpush2.msra.mxu0 %v398
        %872 = vmatprep.subr.mxu0 0.0
        %873 = vmatpush2.msra.mxu0 %v397
        %874 = vmatprep.subr.mxu0 0.0
        %875 = vmatpush2.msra.mxu0 %v396
        %876 = vmatprep.subr.mxu0 0.0
        %877 = vmatpush2.msra.mxu0 %v395
        %878 = vmatprep.subr.mxu0 0.0
        %879 = vmatpush2.msra.mxu0 %v394
        %880 = vmatprep.subr.mxu0 0.0
        %881 = vmatpush2.msra.mxu0 %v393
        %882 = vmatprep.subr.mxu0 0.0
        %883 = vmatpush2.msra.mxu0 %v392
        %884 = vmatprep.subr.mxu0 0.0
        %885 = vmatpush2.msra.mxu0 %v391
        %886 = vmatprep.subr.mxu0 0.0
        %887 = vmatpush2.msra.mxu0 %v390
        %888 = vmatprep.subr.mxu0 0.0
        %889 = vmatpush2.msra.mxu0 %v389
        %890 = vmatprep.mubr.f32.mxu0 %v522
        %891 = vmatmul.mubr.f32.gmra.mxu0 %v514
        %v892 = vpop.f32.mrf.mxu0
        %v893 = vadd.f32 %v823, %v892
        %v894 = vpop.f32.mrf.mxu0
        %895 = vdwg.mxu0
        %896 = vmatprep.subr.mxu0 0.0
        %897 = vmatpush1.msra.mxu0 %v420
        %898 = vmatprep.subr.mxu0 0.0
        %899 = vmatpush1.msra.mxu0 %v419
        %900 = vmatprep.subr.mxu0 0.0
        %901 = vmatpush1.msra.mxu0 %v418
        %902 = vmatprep.subr.mxu0 0.0
        %903 = vmatpush1.msra.mxu0 %v417
        %904 = vmatprep.subr.mxu0 0.0
        %905 = vmatpush1.msra.mxu0 %v416
        %906 = vmatprep.subr.mxu0 0.0
        %907 = vmatpush1.msra.mxu0 %v415
        %908 = vmatprep.subr.mxu0 0.0
        %909 = vmatpush1.msra.mxu0 %v414
        %910 = vmatprep.subr.mxu0 0.0
        %911 = vmatpush1.msra.mxu0 %v413
        %912 = vmatprep.subr.mxu0 0.0
        %913 = vmatpush1.msra.mxu0 %v412
        %914 = vmatprep.subr.mxu0 0.0
        %915 = vmatpush1.msra.mxu0 %v411
        %916 = vmatprep.subr.mxu0 0.0
        %917 = vmatpush1.msra.mxu0 %v410
        %918 = vmatprep.subr.mxu0 0.0
        %919 = vmatpush1.msra.mxu0 %v409
        %920 = vmatprep.subr.mxu0 0.0
        %921 = vmatpush1.msra.mxu0 %v408
        %922 = vmatprep.subr.mxu0 0.0
        %923 = vmatpush1.msra.mxu0 %v407
        %924 = vmatprep.subr.mxu0 0.0
        %925 = vmatpush1.msra.mxu0 %v406
        %926 = vmatprep.subr.mxu0 0.0
        %927 = vmatpush1.msra.mxu0 %v405
        %928 = vmatprep.subr.mxu0 0.0
        %929 = vmatpush2.msra.mxu0 %v436
        %930 = vmatprep.subr.mxu0 0.0
        %931 = vmatpush2.msra.mxu0 %v435
        %932 = vmatprep.subr.mxu0 0.0
        %933 = vmatpush2.msra.mxu0 %v434
        %934 = vmatprep.subr.mxu0 0.0
        %935 = vmatpush2.msra.mxu0 %v433
        %936 = vmatprep.subr.mxu0 0.0
        %937 = vmatpush2.msra.mxu0 %v432
        %938 = vmatprep.subr.mxu0 0.0
        %939 = vmatpush2.msra.mxu0 %v431
        %940 = vmatprep.subr.mxu0 0.0
        %941 = vmatpush2.msra.mxu0 %v430
        %942 = vmatprep.subr.mxu0 0.0
        %943 = vmatpush2.msra.mxu0 %v429
        %944 = vmatprep.subr.mxu0 0.0
        %945 = vmatpush2.msra.mxu0 %v428
        %946 = vmatprep.subr.mxu0 0.0
        %947 = vmatpush2.msra.mxu0 %v427
        %948 = vmatprep.subr.mxu0 0.0
        %949 = vmatpush2.msra.mxu0 %v426
        %950 = vmatprep.subr.mxu0 0.0
        %951 = vmatpush2.msra.mxu0 %v425
        %952 = vmatprep.subr.mxu0 0.0
        %953 = vmatpush2.msra.mxu0 %v424
        %954 = vmatprep.subr.mxu0 0.0
        %955 = vmatpush2.msra.mxu0 %v423
        %956 = vmatprep.subr.mxu0 0.0
        %957 = vmatpush2.msra.mxu0 %v422
        %958 = vmatprep.subr.mxu0 0.0
        %959 = vmatpush2.msra.mxu0 %v421
        %960 = vmatprep.mubr.f32.mxu0 %v523
        %961 = vmatmul.mubr.f32.gmra.mxu0 %v521
        %v962 = vpop.f32.mrf.mxu0
        %v963 = vadd.f32 %v893, %v962
        %v964 = vpop.f32.mrf.mxu0
        %965 = vdwg.mxu0
        %966 = vmatprep.subr.mxu0 0.0
        %967 = vmatpush1.msra.mxu0 %v452
        %968 = vmatprep.subr.mxu0 0.0
        %969 = vmatpush1.msra.mxu0 %v451
        %970 = vmatprep.subr.mxu0 0.0
        %971 = vmatpush1.msra.mxu0 %v450
        %972 = vmatprep.subr.mxu0 0.0
        %973 = vmatpush1.msra.mxu0 %v449
        %974 = vmatprep.subr.mxu0 0.0
        %975 = vmatpush1.msra.mxu0 %v448
        %976 = vmatprep.subr.mxu0 0.0
        %977 = vmatpush1.msra.mxu0 %v447
        %978 = vmatprep.subr.mxu0 0.0
        %979 = vmatpush1.msra.mxu0 %v446
        %980 = vmatprep.subr.mxu0 0.0
        %981 = vmatpush1.msra.mxu0 %v445
        %982 = vmatprep.subr.mxu0 0.0
        %983 = vmatpush1.msra.mxu0 %v444
        %984 = vmatprep.subr.mxu0 0.0
        %985 = vmatpush1.msra.mxu0 %v443
        %986 = vmatprep.subr.mxu0 0.0
        %987 = vmatpush1.msra.mxu0 %v442
        %988 = vmatprep.subr.mxu0 0.0
        %989 = vmatpush1.msra.mxu0 %v441
        %990 = vmatprep.subr.mxu0 0.0
        %991 = vmatpush1.msra.mxu0 %v440
        %992 = vmatprep.subr.mxu0 0.0
        %993 = vmatpush1.msra.mxu0 %v439
        %994 = vmatprep.subr.mxu0 0.0
        %995 = vmatpush1.msra.mxu0 %v438
        %996 = vmatprep.subr.mxu0 0.0
        %997 = vmatpush1.msra.mxu0 %v437
        %998 = vmatprep.subr.mxu0 0.0
        %999 = vmatpush2.msra.mxu0 %v468
        %1000 = vmatprep.subr.mxu0 0.0
        %1001 = vmatpush2.msra.mxu0 %v467
        %1002 = vmatprep.subr.mxu0 0.0
        %1003 = vmatpush2.msra.mxu0 %v466
        %1004 = vmatprep.subr.mxu0 0.0
        %1005 = vmatpush2.msra.mxu0 %v465
        %1006 = vmatprep.subr.mxu0 0.0
        %1007 = vmatpush2.msra.mxu0 %v464
        %1008 = vmatprep.subr.mxu0 0.0
        %1009 = vmatpush2.msra.mxu0 %v463
        %1010 = vmatprep.subr.mxu0 0.0
        %1011 = vmatpush2.msra.mxu0 %v462
        %1012 = vmatprep.subr.mxu0 0.0
        %1013 = vmatpush2.msra.mxu0 %v461
        %1014 = vmatprep.subr.mxu0 0.0
        %1015 = vmatpush2.msra.mxu0 %v460
        %1016 = vmatprep.subr.mxu0 0.0
        %1017 = vmatpush2.msra.mxu0 %v459
        %1018 = vmatprep.subr.mxu0 0.0
        %1019 = vmatpush2.msra.mxu0 %v458
        %1020 = vmatprep.subr.mxu0 0.0
        %1021 = vmatpush2.msra.mxu0 %v457
        %1022 = vmatprep.subr.mxu0 0.0
        %1023 = vmatpush2.msra.mxu0 %v456
        %1024 = vmatprep.subr.mxu0 0.0
        %1025 = vmatpush2.msra.mxu0 %v455
        %1026 = vmatprep.subr.mxu0 0.0
        %1027 = vmatpush2.msra.mxu0 %v454
        %1028 = vmatprep.subr.mxu0 0.0
        %1029 = vmatpush2.msra.mxu0 %v453
        %1030 = vmatprep.mubr.f32.mxu0 %v531
        %1031 = vmatmul.mubr.f32.gmra.mxu0 %v530
        %v1032 = vpop.f32.mrf.mxu0
        %v1033 = vadd.f32 %v963, %v1032
        %v1034 = vpop.f32.mrf.mxu0
        %1035 = vdwg.mxu0
        %v1036 = vadd.f32 %v240, %v1033
        %1037 = vst [vmem:[#allocation2] sm:$0x3] %v1036
        %p1038 = scmp.eq.s32.totalorder %s17, 6
        // Predicated region
        $region45: #{cnn1_forward.7} parent=39 // pred_check
          %p1039 = pneg %p1038
        $region46: #{cnn1_forward.7} parent=39 // pred_check_branch
          %1041 = sbr.rel (%p1039) target = $region48
        $region47: #{cnn1_forward.7} parent=39 // pred_region
          %v1042 = vld [vmem:[#allocation2] sm:$0x3]
          %v1043 = vld [vmem:[%s2] sm:$0x1]
          %v1045 = vlaneseq
          %v1046 = vshrl.u32 %v1045, 7
          %v1047 = vsub.s32 0, %v1046
          %v1048 = vrot.slane %v1043, %v1047
          %v1050 = vadd.f32 %v1042, %v1048
          %v1051 = vmax.f32 %v1050, 0.0
          %v1052 = vld [vmem:[%s3] sm:$0xff]
          %v1053 = vld [vmem:[%s3 + $0x8] sm:$0xff]
          %v1054 = vld [vmem:[%s3 + $0x10] sm:$0xff]
          %v1055 = vld [vmem:[%s3 + $0x18] sm:$0xff]
          %v1056 = vld [vmem:[%s3 + $0x20] sm:$0xff]
          %v1057 = vld [vmem:[%s3 + $0x28] sm:$0xff]
          %v1058 = vld [vmem:[%s3 + $0x30] sm:$0xff]
          %v1059 = vld [vmem:[%s3 + $0x38] sm:$0xff]
          %v1060 = vld [vmem:[%s3 + $0x40] sm:$0xff]
          %v1061 = vld [vmem:[%s3 + $0x48] sm:$0xff]
          %v1062 = vld [vmem:[%s3 + $0x50] sm:$0xff]
          %v1063 = vld [vmem:[%s3 + $0x58] sm:$0xff]
          %v1064 = vld [vmem:[%s3 + $0x60] sm:$0xff]
          %v1065 = vld [vmem:[%s3 + $0x68] sm:$0xff]
          %v1066 = vld [vmem:[%s3 + $0x70] sm:$0xff]
          %v1067 = vld [vmem:[%s3 + $0x78] sm:$0xff]
          %v1068 = vld [vmem:[%s4] sm:$0x1]
          %v1070 = vlaneseq
          %v1071 = vshrl.u32 %v1070, 7
          %v1072 = vsub.s32 0, %v1071
          %v1073 = vrot.slane %v1068, %v1072
          %1075 = vmatprep.subr.mxu0 0.0
          %1076 = vmatpush1.msra.mxu0 %v1067
          %1077 = vmatprep.subr.mxu0 0.0
          %1078 = vmatpush1.msra.mxu0 %v1066
          %1079 = vmatprep.subr.mxu0 0.0
          %1080 = vmatpush1.msra.mxu0 %v1065
          %1081 = vmatprep.subr.mxu0 0.0
          %1082 = vmatpush1.msra.mxu0 %v1064
          %1083 = vmatprep.subr.mxu0 0.0
          %1084 = vmatpush1.msra.mxu0 %v1063
          %1085 = vmatprep.subr.mxu0 0.0
          %1086 = vmatpush1.msra.mxu0 %v1062
          %1087 = vmatprep.subr.mxu0 0.0
          %1088 = vmatpush1.msra.mxu0 %v1061
          %1089 = vmatprep.subr.mxu0 0.0
          %1090 = vmatpush1.msra.mxu0 %v1060
          %1091 = vmatprep.subr.mxu0 0.0
          %1092 = vmatpush1.msra.mxu0 %v1059
          %1093 = vmatprep.subr.mxu0 0.0
          %1094 = vmatpush1.msra.mxu0 %v1058
          %1095 = vmatprep.subr.mxu0 0.0
          %1096 = vmatpush1.msra.mxu0 %v1057
          %1097 = vmatprep.subr.mxu0 0.0
          %1098 = vmatpush1.msra.mxu0 %v1056
          %1099 = vmatprep.subr.mxu0 0.0
          %1100 = vmatpush1.msra.mxu0 %v1055
          %1101 = vmatprep.subr.mxu0 0.0
          %1102 = vmatpush1.msra.mxu0 %v1054
          %1103 = vmatprep.subr.mxu0 0.0
          %1104 = vmatpush1.msra.mxu0 %v1053
          %1105 = vmatprep.subr.mxu0 0.0
          %1106 = vmatpush1.msra.mxu0 %v1052
          %1107 = vmatprep.subr.mxu0 0.0
          %1108 = vmatpush2.msra.mxu0 0.0
          %1109 = vmatprep.subr.mxu0 0.0
          %1110 = vmatpush2.msra.mxu0 0.0
          %1111 = vmatprep.subr.mxu0 0.0
          %1112 = vmatpush2.msra.mxu0 0.0
          %1113 = vmatprep.subr.mxu0 0.0
          %1114 = vmatpush2.msra.mxu0 0.0
          %1115 = vmatprep.subr.mxu0 0.0
          %1116 = vmatpush2.msra.mxu0 0.0
          %1117 = vmatprep.subr.mxu0 0.0
          %1118 = vmatpush2.msra.mxu0 0.0
          %1119 = vmatprep.subr.mxu0 0.0
          %1120 = vmatpush2.msra.mxu0 0.0
          %1121 = vmatprep.subr.mxu0 0.0
          %1122 = vmatpush2.msra.mxu0 0.0
          %1123 = vmatprep.subr.mxu0 0.0
          %1124 = vmatpush2.msra.mxu0 0.0
          %1125 = vmatprep.subr.mxu0 0.0
          %1126 = vmatpush2.msra.mxu0 0.0
          %1127 = vmatprep.subr.mxu0 0.0
          %1128 = vmatpush2.msra.mxu0 0.0
          %1129 = vmatprep.subr.mxu0 0.0
          %1130 = vmatpush2.msra.mxu0 0.0
          %1131 = vmatprep.subr.mxu0 0.0
          %1132 = vmatpush2.msra.mxu0 0.0
          %1133 = vmatprep.subr.mxu0 0.0
          %1134 = vmatpush2.msra.mxu0 0.0
          %1135 = vmatprep.subr.mxu0 0.0
          %1136 = vmatpush2.msra.mxu0 0.0
          %1137 = vmatprep.subr.mxu0 0.0
          %1138 = vmatpush2.msra.mxu0 0.0
          %1139 = vmatprep.mubr.f32.mxu0 0.0
          %1140 = vmatmul.mubr.f32.gmra.mxu0 %v1051
          %v1141 = vpop.f32.mrf.mxu0
          %v1142 = vadd.f32 %v1073, %v1141
          %v1143 = vpop.f32.mrf.mxu0
          %1144 = vdwg.mxu0
          %vm1145 = vcmask 9216
          %1146 = vst.msk [vmem:[#allocation3] sm:$0x3] %vm1145, %v1142
        $region48: #{cnn1_forward.7} parent=39 // pred_fallthru
          _
        // Predicated region
        $region49: #{cnn1_forward.7} parent=39 // pred_check
          %p1147 = pneg %p145
        $region50: #{cnn1_forward.7} parent=39 // pred_check_branch
          %1149 = sbr.rel (%p1147) target = $region52
        $region51: #{cnn1_forward.7} parent=39 // pred_region
          %s1151 = ssub.s32 32, 32
          %1152 = vsyncadd [#allocation4], %s1151
          %s1154 = sshll.u32 [#allocation3], 4
          %s1155 = int_to_ptr.vmem [resolvable:$true] %s1154
          %1157 = dma.vmem_to_hbm [thread:$0]  %s1155, 32, %s5, [#allocation4]
        $region52: #{cnn1_forward.7} parent=39 // pred_fallthru
          _
        // Predicated region
        $region53: #{cnn1_forward.7} parent=39 // pred_check
          %p1158 = pneg %p145
        $region54: #{cnn1_forward.7} parent=39 // pred_check_branch
          %1160 = sbr.rel (%p1158) target = $region56
        $region55: #{cnn1_forward.7} parent=39 // pred_region
          %1161 = dma.done [#allocation4], 32
        $region56: #{cnn1_forward.7} parent=39 // pred_fallthru
          _
      $region40: #{cnn1_forward.7} parent=5 // pred_fallthru
        _
      %p1162 = scmp.le.s32.totalorder 2, %s12
      // Predicated region
      $region57: #{cnn1_forward.7} parent=5 // pred_check
        %p1163 = pneg %p1162
      $region58: #{cnn1_forward.7} parent=5 // pred_check_branch
        %1165 = sbr.rel (%p1163) target = $region60
      $region59: #{cnn1_forward.7} parent=5 // pred_region
        %s1166 = ssub.s32 %s12, 2
      $region60: #{cnn1_forward.7} parent=5 // pred_fallthru
        _
    $region6: #{cnn1_forward.7} parent=1 // loop_footer
      %s16 = sadd.s32 1, %s12
    $region7: #{cnn1_forward.7} parent=1 // loop_footer_branch
      %11 = sbr.rel target = $region3
    $region8: #{cnn1_forward.7} parent=1 // loop_exit
      _
    %1167 = vsyncpa [#allocation4], 1
    %s1168 = scalar_lea.sflag [#allocation4], 1
    %1169 = vsyncpa %s1168, 1

</llo_original>
